<compile_context>
chip_gen: v5e
topology: v5e:2x2
jax: 0.10.0
libtpu: 0.0.40
codegen_flags: <defaults>
</compile_context>

<pallas_src>
import jax
import jax.numpy as jnp
from jax.experimental import pallas as pl
from jax.experimental.pallas import tpu as pltpu

NCLASS = 8            # `nclass` is undefined in the snippet; pick a small value
D_FEAT = 48960        # CirModel output width, from nn.Linear(48960, 512)
HIDDEN = 512


# ----- per-generation tiling configuration -----------------------------------
def _select_tiling():
    """Return (h_slabs, k_tile, vmem_limit_bytes) for the attached TPU."""
    try:
        kind = jax.devices()[0].device_kind.lower()
    except Exception:
        kind = ""
    if "v5" in kind:
        # v5e: single TC, 128 MiB physical VMEM -> full 512-wide contiguous W1
        # blocks, 12 MiB slab double-buffered to 24 MiB.
        return 1, 12288, 56 * 1024 * 1024
    if "v6" in kind:
        # v6e: single TC, 128 MiB VMEM -> 2 reduction steps of a 24 MiB slab.
        return 1, 24576, 72 * 1024 * 1024
    if "7" in kind:
        # v7x: 2 TCs, only 64 MiB VMEM/TC -> keep the H split, 12 MiB slabs
        # (24 MiB double-buffered + x buffers ~ 26 MiB), keep 32 MiB limit.
        return 2, 24576, 32 * 1024 * 1024
    # Unknown chip: conservative config that fits the default scoped VMEM.
    return 2, 12288, 32 * 1024 * 1024


_H_SLABS, _TK, _VMEM_LIMIT = _select_tiling()
_H_TILE = HIDDEN // _H_SLABS                         # 512 or 256
_B_PAD = 16                                          # full bf16 sublane packing
_K_PAD = ((D_FEAT + _TK - 1) // _TK) * _TK           # 49152 (zero-padded K)
_N_K = _K_PAD // _TK                                 # reduction steps


# ---------------------------------------------------------------------------
# Pallas kernel: K-tiled, H-slabbed  (B,K_PAD)@(K_PAD,512) + b1  bf16 -> f32.
# The f32 output block is resident across the k axis and used as accumulator.
# ---------------------------------------------------------------------------
def _linear0_kernel(x_ref, w1_ref, b1_ref, h_ref):
    k = pl.program_id(1)

    @pl.when(k == 0)
    def _():
        h_ref[...] = jnp.zeros_like(h_ref)

    # bf16 x bf16 -> f32 accumulation on the MXU, directly into the output.
    h_ref[...] += jnp.dot(
        x_ref[...], w1_ref[...], preferred_element_type=jnp.float32
    )

    @pl.when(k == pl.num_programs(1) - 1)
    def _():
        h_ref[...] += b1_ref[...]          # (1, H_TILE) broadcast over batch


def _linear0_pallas(x_pad, w1_slabs, b1):
    """x_pad: (B_PAD, K_PAD) bf16, w1_slabs: (H_SLABS, K_PAD, H_TILE) bf16,
    b1: (HIDDEN,) f32  ->  (B_PAD, HIDDEN) f32."""
    b1_2d = b1.reshape(1, HIDDEN).astype(jnp.float32)

    cost = pl.CostEstimate(
        flops=2 * _B_PAD * _K_PAD * HIDDEN,
        transcendentals=0,
        bytes_accessed=_K_PAD * HIDDEN * 2              # bf16 W1 stream (dominant)
        + _B_PAD * _K_PAD * 2 * _H_SLABS                # bf16 activations (per slab)
        + _B_PAD * HIDDEN * 4,                          # f32 output
    )

    return pl.pallas_call(
        _linear0_kernel,
        out_shape=jax.ShapeDtypeStruct((_B_PAD, HIDDEN), jnp.float32),
        grid_spec=pltpu.PrefetchScalarGridSpec(
            num_scalar_prefetch=0,
            grid=(_H_SLABS, _N_K),                                  # (parallel, reduce)
            in_specs=[
                # activations: re-streamed per H slab (tiny vs W1)
                pl.BlockSpec((_B_PAD, _TK), lambda j, k: (0, k)),
                # W1: contiguous (K tile, H_TILE) block inside slab j
                pl.BlockSpec(
                    (pl.Squeezed(), _TK, _H_TILE), lambda j, k: (j, k, 0)
                ),
                # bias slab
                pl.BlockSpec((1, _H_TILE), lambda j, k: (0, j)),
            ],
            out_specs=pl.BlockSpec((_B_PAD, _H_TILE), lambda j, k: (0, j)),
        ),
        compiler_params=pltpu.CompilerParams(
            dimension_semantics=("parallel", "arbitrary"),
            vmem_limit_bytes=_VMEM_LIMIT,
        ),
        cost_estimate=cost,
    )(x_pad, w1_slabs, b1_2d)


# ---------------------------------------------------------------------------
# Parameter setup + one-time weight preparation (outside jit)
# ---------------------------------------------------------------------------
def _init_params(key):
    ks = jax.random.split(key, 5)
    return {
        # placeholder CirModel: flatten NCHW audio -> linear to D_FEAT
        "wa": jax.random.normal(ks[0], (1 * 16 * 16, D_FEAT), jnp.float32) * 0.02,
        "ba": jnp.zeros((D_FEAT,), jnp.float32),
        # linear0: Linear(48960, 512)
        "w1": jax.random.normal(ks[1], (D_FEAT, HIDDEN), jnp.float32) * 0.01,
        "b1": jax.random.normal(ks[2], (HIDDEN,), jnp.float32) * 0.01,
        # linear1: Linear(512, nclass)
        "w2": jax.random.normal(ks[3], (HIDDEN, NCLASS), jnp.float32) * 0.05,
        "b2": jax.random.normal(ks[4], (NCLASS,), jnp.float32) * 0.05,
    }


def prepare_weights(params):
    """One-time repacking for streaming:
    - wa cast to bf16 (halves the prologue's HBM read),
    - W1 zero-padded along K, cast to bf16, and laid out as contiguous H-slabs
      (H_SLABS, K_PAD, H_TILE) so every kernel DMA block is contiguous."""
    wa_bf16 = params["wa"].astype(jnp.bfloat16)
    w1_pad = jnp.pad(
        params["w1"], ((0, _K_PAD - D_FEAT), (0, 0))
    ).astype(jnp.bfloat16)
    w1_slabs = w1_pad.reshape(_K_PAD, _H_SLABS, _H_TILE).transpose(1, 0, 2)
    return wa_bf16, jnp.asarray(w1_slabs)


# ---------------------------------------------------------------------------
# Full forward pass
# ---------------------------------------------------------------------------
@jax.jit
def onlyaudio_forward(params, prepared, input_audio):
    wa_bf16, w1_slabs = prepared
    B = input_audio.shape[0]

    # TODO(synk): real CirModel forward is not specified; deterministic bf16
    # linear stand-in produces the (B, 48960) audio features with f32 accum.
    x_flat = input_audio.reshape(B, -1).astype(jnp.bfloat16)
    feat = (
        jnp.dot(x_flat, wa_bf16, preferred_element_type=jnp.float32)
        + params["ba"]
    )                                                             # (B, 48960) f32

    # bf16 cast + pad batch to 16 sublanes and K to the tile multiple (zeros
    # along K leave the matmul unchanged).
    x = feat.astype(jnp.bfloat16)
    x = jnp.pad(x, ((0, _B_PAD - B), (0, _K_PAD - D_FEAT)))

    h = _linear0_pallas(x, w1_slabs, params["b1"])[:B]            # (B, 512) f32

    # Tiny Linear(512, nclass) + log_softmax epilogue: free in XLA.
    logits = h @ params["w2"] + params["b2"]
    return jax.nn.log_softmax(logits, axis=1)


def _reference_forward(params, prepared, input_audio):
    """Plain-JAX reference matching the kernel's bf16 weight/activation numerics."""
    wa_bf16, _ = prepared
    B = input_audio.shape[0]
    x_flat = input_audio.reshape(B, -1).astype(jnp.bfloat16)
    feat = (
        jnp.dot(x_flat, wa_bf16, preferred_element_type=jnp.float32)
        + params["ba"]
    )
    feat_b = feat.astype(jnp.bfloat16)
    w1_b = params["w1"].astype(jnp.bfloat16)
    h = jnp.dot(feat_b, w1_b, preferred_element_type=jnp.float32) + params["b1"]
    logits = h @ params["w2"] + params["b2"]
    return jax.nn.log_softmax(logits, axis=1)


if __name__ == "__main__":
    key = jax.random.PRNGKey(0)
    k_in, k_params = jax.random.split(key)

    # small audio spectrogram input (NCHW), batch = 2
    input_audio = jax.random.normal(k_in, (2, 1, 16, 16), jnp.float32)
    B = input_audio.shape[0]
    assert B <= _B_PAD, f"batch {B} > {_B_PAD}: no batch-tiling path implemented"

    params = _init_params(k_params)
    prepared = prepare_weights(params)   # one-time pad + bf16 cast + slab repack

    out = onlyaudio_forward(params, prepared, input_audio)
    out = jax.block_until_ready(out)

    ref = _reference_forward(params, prepared, input_audio)
    assert out.shape == (2, NCLASS), out.shape
    assert jnp.allclose(out, ref, atol=2e-3, rtol=2e-3), (out, ref)

    print("KERNEL_OK")
</pallas_src>

<mosaic_0001>
module attributes {stable_mosaic.version = 11 : i64} {
  func.func @_linear0_kernel(%arg0: i32, %arg1: i32, %arg2: memref<16x12288xbf16, #tpu.memory_space<vmem>>, %arg3: memref<1x12288x256xbf16, #tpu.memory_space<vmem>>, %arg4: memref<1x256xf32, #tpu.memory_space<vmem>>, %arg5: memref<16x256xf32, #tpu.memory_space<vmem>>) attributes {dimension_semantics = [#tpu.dimension_semantics<parallel>, #tpu.dimension_semantics<arbitrary>], iteration_bounds = array<i64: 2, 4>, scalar_prefetch = 0 : i64, scratch_operands = 0 : i64, tpu.core_type = #tpu.core_type<tc>, window_params = [{transform_indices = @transform_0, window_bounds = array<i64: 16, 12288>}, {transform_indices = @transform_1, window_bounds = array<i64: 1, 12288, 256>}, {transform_indices = @transform_2, window_bounds = array<i64: 1, 256>}, {transform_indices = @transform_3, window_bounds = array<i64: 16, 256>}]} {
    %c0_i32 = arith.constant 0 : i32
    %0 = arith.cmpi eq, %arg1, %c0_i32 : i32
    %1 = arith.extui %0 : i1 to i32
    %c0_i32_0 = arith.constant 0 : i32
    %2 = arith.cmpi ne, %1, %c0_i32_0 : i32
    scf.if %2 {
      %cst_10 = arith.constant 0.000000e+00 : f32
      %13 = vector.broadcast %cst_10 : f32 to vector<16x256xf32>
      %c0_11 = arith.constant 0 : index
      %c0_12 = arith.constant 0 : index
      %14 = vector.load %arg5[%c0_11, %c0_12] : memref<16x256xf32, #tpu.memory_space<vmem>>, vector<16x256xf32>
      tpu.vector_store %arg5[%c0_11, %c0_12], %13 {strides = array<i32>} : memref<16x256xf32, #tpu.memory_space<vmem>>, vector<16x256xf32>,
    } else {
    }
    %c0 = arith.constant 0 : index
    %c0_1 = arith.constant 0 : index
    %3 = vector.load %arg5[%c0, %c0_1] : memref<16x256xf32, #tpu.memory_space<vmem>>, vector<16x256xf32>
    %c0_2 = arith.constant 0 : index
    %c0_3 = arith.constant 0 : index
    %4 = vector.load %arg2[%c0_2, %c0_3] : memref<16x12288xbf16, #tpu.memory_space<vmem>>, vector<16x12288xbf16>
    %c0_4 = arith.constant 0 : index
    %c0_5 = arith.constant 0 : index
    %c0_6 = arith.constant 0 : index
    %5 = vector.load %arg3[%c0_4, %c0_5, %c0_6] : memref<1x12288x256xbf16, #tpu.memory_space<vmem>>, vector<1x12288x256xbf16>
    %6 = vector.shape_cast %5 : vector<1x12288x256xbf16> to vector<12288x256xbf16>
    %cst = arith.constant dense<0.000000e+00> : vector<16x256xf32>
    %7 = tpu.matmul %4, %6, %cst {dimension_numbers = #tpu.dot_dimension_numbers<[1], [0], [0], [1], [0, 0, 1, 1], [], []>} : vector<16x12288xbf16>, vector<12288x256xbf16>, vector<16x256xf32> -> vector<16x256xf32>
    %8 = arith.addf %3, %7 : vector<16x256xf32>
    %c0_7 = arith.constant 0 : index
    %c0_8 = arith.constant 0 : index
    %9 = vector.load %arg5[%c0_7, %c0_8] : memref<16x256xf32, #tpu.memory_space<vmem>>, vector<16x256xf32>
    tpu.vector_store %arg5[%c0_7, %c0_8], %8 {strides = array<i32>} : memref<16x256xf32, #tpu.memory_space<vmem>>, vector<16x256xf32>,
    %c3_i32 = arith.constant 3 : i32
    %10 = arith.cmpi eq, %arg1, %c3_i32 : i32
    %11 = arith.extui %10 : i1 to i32
    %c0_i32_9 = arith.constant 0 : i32
    %12 = arith.cmpi ne, %11, %c0_i32_9 : i32
    scf.if %12 {
      %c0_10 = arith.constant 0 : index
      %c0_11 = arith.constant 0 : index
      %13 = vector.load %arg5[%c0_10, %c0_11] : memref<16x256xf32, #tpu.memory_space<vmem>>, vector<16x256xf32>
      %c0_12 = arith.constant 0 : index
      %c0_13 = arith.constant 0 : index
      %14 = vector.load %arg4[%c0_12, %c0_13] : memref<1x256xf32, #tpu.memory_space<vmem>>, vector<1x256xf32>
      %15 = vector.broadcast %14 : vector<1x256xf32> to vector<16x256xf32>
      %16 = arith.addf %13, %15 : vector<16x256xf32>
      %c0_14 = arith.constant 0 : index
      %c0_15 = arith.constant 0 : index
      %17 = vector.load %arg5[%c0_14, %c0_15] : memref<16x256xf32, #tpu.memory_space<vmem>>, vector<16x256xf32>
      tpu.vector_store %arg5[%c0_14, %c0_15], %16 {strides = array<i32>} : memref<16x256xf32, #tpu.memory_space<vmem>>, vector<16x256xf32>,
    } else {
    }
    return
  }
  func.func @transform_0(%arg0: i32, %arg1: i32) -> (i32, i32) {
    %c0_i32 = arith.constant 0 : i32
    %c0_i32_0 = arith.constant 0 : i32
    return %c0_i32, %arg1 : i32, i32
  }
  func.func @transform_1(%arg0: i32, %arg1: i32) -> (i32, i32, i32) {
    %c0_i32 = arith.constant 0 : i32
    %c0_i32_0 = arith.constant 0 : i32
    return %arg0, %arg1, %c0_i32 : i32, i32, i32
  }
  func.func @transform_2(%arg0: i32, %arg1: i32) -> (i32, i32) {
    %c0_i32 = arith.constant 0 : i32
    %c0_i32_0 = arith.constant 0 : i32
    return %c0_i32, %arg0 : i32, i32
  }
  func.func @transform_3(%arg0: i32, %arg1: i32) -> (i32, i32) {
    %c0_i32 = arith.constant 0 : i32
    %c0_i32_0 = arith.constant 0 : i32
    return %c0_i32, %arg0 : i32, i32
  }
}

</mosaic_0001>

<llo_original>
// kernel: onlyaudio_forward.1
$region0: #{onlyaudio_forward.1}
  #allocation0 [shape = 'u32[]', space=smem, size = 0x4, offset = 0x4, fixed_abs, tag = 'smem constant byte address 0x4 - core index']
  #allocation1 [shape = 'u32[72,128]{1,0:T(1,128)}', space=vmem, size = 0x9000, scoped, tag = 'internal scratch']
  %s0 = inlined_call_operand.vmem [shape: bf16[16,49152], index: 0, kind: input, shape index: {}]
  %s1 = inlined_call_operand.hbm [shape: bf16[2,49152,256], index: 1, kind: input, shape index: {}]
  %s2 = inlined_call_operand.vmem [shape: f32[1,512], index: 2, kind: input, shape index: {}]
  %s3 = inlined_call_operand.vmem [shape: f32[16,512], index: 3, kind: output, shape index: {}]
  %s4 = sld [smem:[#allocation0]]
  $region99: #{onlyaudio_forward.1} parent=0
    _
  %s6 = ssub.s32 1, %s4
  %s7 = scalar_select 0, %s6, %s4
  $region1: #{onlyaudio_forward.1} parent=0
    #allocation2 [shape = 'u8[786432]{0}', space=vmem, size = 0xc0000, scoped, tag = 'input window, operand 0']
    #allocation3 [shape = 'u8[12582912]{0}', space=vmem, size = 0xc00000, scoped, tag = 'input window, operand 1']
    #allocation4 [shape = 's32[2]{0}', space=sflag, size = 0x8, scoped, tag = 'scoped memory for onlyaudio_forward.1']
    #allocation5 [shape = 'u8[32768]{0}', space=vmem, size = 0x8000, scoped, tag = 'output window, operand 0']
    %8 = vsyncpa [#allocation4], 0
    %s9 = scalar_lea.sflag [#allocation4], 1
    %10 = vsyncpa %s9, 0
    loop: start=0, step=1, limit=10
    $region2: #{onlyaudio_forward.1} parent=1 // loop_pre_header
      _
    $region3: #{onlyaudio_forward.1} parent=1 // loop_header
      %s12 = sphi 0, %s16
      %p13 = scmp.ge.s32.totalorder %s12, 10
      %s19 = sphi 0, %s31
      %s20 = sphi 0, %s27
      %s21 = sphi 0, %s19
      %s22 = sphi 0, %s20
      %s23 = sphi 0, %s21
      %s24 = sphi 0, %s22
      %s34 = sphi 0, %s36
      %s37 = sphi 0, %s34
      %s38 = sphi 0, %s37
      %s54 = sphi 0, %s38
      %s62 = sphi 0, %s64
      %s65 = sphi 0, %s62
      %s66 = sphi 0, %s65
      %s82 = sphi 0, %s66
      %s88 = sphi 0, %s90
      %s91 = sphi 0, %s88
      %s92 = sphi 0, %s91
      %s108 = sphi 0, %s92
      %s114 = sphi 0, %s116
      %s117 = sphi 0, %s114
      %s118 = sphi 0, %s117
      %s134 = sphi 0, %s118
    $region4: #{onlyaudio_forward.1} parent=1 // loop_header_branch
      %15 = sbr.rel (%p13) target = $region8
    $region5: #{onlyaudio_forward.1} parent=1 // loop_body
      %s17 = ssub.s32 %s12, 1
      %s18 = ssub.s32 %s12, 2
      %s25 = sadd.s32 1, %s20
      %p26 = scmp.ge.s32.totalorder %s25, 4
      %s27 = scalar_select %p26, 0, %s25
      %s28 = sadd.s32 1, %s19
      %s29 = scalar_select %p26, %s28, %s19
      %p30 = scmp.ge.s32.totalorder %s29, 2
      %s31 = scalar_select %p30, 0, %s29
      %s32 = ssub.s32 %s20, %s27
      %p33 = scmp.eq.s32.totalorder %s32, 0
      %s35 = sadd.s32 %s34, 1
      %s36 = scalar_select %p33, %s34, %s35
      %p39 = pneg %p33
      %p40 = scmp.eq.s32.totalorder %s12, 7
      %p41 = por %p39, %p40
      %p42 = scmp.ne.s32.totalorder %s34, %s37
      %p43 = scmp.eq.s32.totalorder %s12, 0
      %p44 = por %p42, %p43
      %p45 = scmp.ne.s32.totalorder %s34, %s37
      %p46 = scmp.eq.s32.totalorder %s17, 7
      %p47 = por %p45, %p46
      %p48 = scmp.ne.s32.totalorder %s37, %s38
      %p49 = scmp.eq.s32.totalorder %s17, 0
      %p50 = por %p48, %p49
      %p51 = scmp.ne.s32.totalorder %s37, %s38
      %p52 = scmp.eq.s32.totalorder %s18, 7
      %p53 = por %p51, %p52
      %p55 = scmp.ne.s32.totalorder %s38, %s54
      %p56 = scmp.eq.s32.totalorder %s18, 0
      %p57 = por %p55, %p56
      %s58 = ssub.s32 %s19, %s31
      %s59 = ssub.s32 %s20, %s27
      %s60 = sor.u32 %s58, %s59
      %p61 = scmp.eq.s32.totalorder %s60, 0
      %s63 = sadd.s32 %s62, 1
      %s64 = scalar_select %p61, %s62, %s63
      %p67 = pneg %p61
      %p68 = scmp.eq.s32.totalorder %s12, 7
      %p69 = por %p67, %p68
      %p70 = scmp.ne.s32.totalorder %s62, %s65
      %p71 = scmp.eq.s32.totalorder %s12, 0
      %p72 = por %p70, %p71
      %p73 = scmp.ne.s32.totalorder %s62, %s65
      %p74 = scmp.eq.s32.totalorder %s17, 7
      %p75 = por %p73, %p74
      %p76 = scmp.ne.s32.totalorder %s65, %s66
      %p77 = scmp.eq.s32.totalorder %s17, 0
      %p78 = por %p76, %p77
      %p79 = scmp.ne.s32.totalorder %s65, %s66
      %p80 = scmp.eq.s32.totalorder %s18, 7
      %p81 = por %p79, %p80
      %p83 = scmp.ne.s32.totalorder %s66, %s82
      %p84 = scmp.eq.s32.totalorder %s18, 0
      %p85 = por %p83, %p84
      %s86 = ssub.s32 %s19, %s31
      %p87 = scmp.eq.s32.totalorder %s86, 0
      %s89 = sadd.s32 %s88, 1
      %s90 = scalar_select %p87, %s88, %s89
      %p93 = pneg %p87
      %p94 = scmp.eq.s32.totalorder %s12, 7
      %p95 = por %p93, %p94
      %p96 = scmp.ne.s32.totalorder %s88, %s91
      %p97 = scmp.eq.s32.totalorder %s12, 0
      %p98 = por %p96, %p97
      %p99 = scmp.ne.s32.totalorder %s88, %s91
      %p100 = scmp.eq.s32.totalorder %s17, 7
      %p101 = por %p99, %p100
      %p102 = scmp.ne.s32.totalorder %s91, %s92
      %p103 = scmp.eq.s32.totalorder %s17, 0
      %p104 = por %p102, %p103
      %p105 = scmp.ne.s32.totalorder %s91, %s92
      %p106 = scmp.eq.s32.totalorder %s18, 7
      %p107 = por %p105, %p106
      %p109 = scmp.ne.s32.totalorder %s92, %s108
      %p110 = scmp.eq.s32.totalorder %s18, 0
      %p111 = por %p109, %p110
      %s112 = ssub.s32 %s19, %s31
      %p113 = scmp.eq.s32.totalorder %s112, 0
      %s115 = sadd.s32 %s114, 1
      %s116 = scalar_select %p113, %s114, %s115
      %p119 = pneg %p113
      %p120 = scmp.eq.s32.totalorder %s12, 7
      %p121 = por %p119, %p120
      %p122 = scmp.ne.s32.totalorder %s114, %s117
      %p123 = scmp.eq.s32.totalorder %s12, 0
      %p124 = por %p122, %p123
      %p125 = scmp.ne.s32.totalorder %s114, %s117
      %p126 = scmp.eq.s32.totalorder %s17, 7
      %p127 = por %p125, %p126
      %p128 = scmp.ne.s32.totalorder %s117, %s118
      %p129 = scmp.eq.s32.totalorder %s17, 0
      %p130 = por %p128, %p129
      %p131 = scmp.ne.s32.totalorder %s117, %s118
      %p132 = scmp.eq.s32.totalorder %s18, 7
      %p133 = por %p131, %p132
      %p135 = scmp.ne.s32.totalorder %s118, %s134
      %p136 = scmp.eq.s32.totalorder %s18, 0
      %p137 = por %p135, %p136
      %p138 = scmp.le.s32.totalorder 1, %s12
      %p139 = scmp.lt.s32.totalorder %s12, 9
      %p140 = pnand %p138, %p139
      %p141 = pneg %p140
      // Predicated region
      $region9: #{onlyaudio_forward.1} parent=5 // pred_check
        _
      $region10: #{onlyaudio_forward.1} parent=5 // pred_check_branch
        %143 = sbr.rel (%p140) target = $region12
      $region11: #{onlyaudio_forward.1} parent=5 // pred_region
        %s144 = ssub.s32 %s12, 1
      $region12: #{onlyaudio_forward.1} parent=5 // pred_fallthru
        _
      %p145 = scmp.lt.s32.totalorder %s12, 8
      // Predicated region
      $region13: #{onlyaudio_forward.1} parent=5 // pred_check
        %p146 = pneg %p145
      $region14: #{onlyaudio_forward.1} parent=5 // pred_check_branch
        %148 = sbr.rel (%p146) target = $region16
      $region15: #{onlyaudio_forward.1} parent=5 // pred_region
        // Predicated region
        $region17: #{onlyaudio_forward.1} parent=15 // pred_check
          %p149 = pneg %p44
        $region18: #{onlyaudio_forward.1} parent=15 // pred_check_branch
          %151 = sbr.rel (%p149) target = $region20
        $region19: #{onlyaudio_forward.1} parent=15 // pred_region
          %s152 = sand.u32 %s34, 1
          %s153 = sand.u32 %s34, 1
          %s154 = smul.addr %s153, 768
          %s155 = scalar_lea.vmem [#allocation2], %s154
          %s156 = smul.u32 96, %s20
          %s157 = smul.addr %s156, 4
          %s158 = scalar_lea.vmem %s0, %s157
          // Predicated region
          $region21: #{onlyaudio_forward.1} parent=19 // pred_check
            _
          $region22: #{onlyaudio_forward.1} parent=19 // pred_check_branch
            %160 = sbr.rel (0) target = $region24
          $region23: #{onlyaudio_forward.1} parent=19 // pred_region
            // Predicated region
            $region25: #{onlyaudio_forward.1} parent=23 // pred_check
              _
            $region26: #{onlyaudio_forward.1} parent=23 // pred_check_branch
              %162 = sbr.rel (0) target = $region28
            $region27: #{onlyaudio_forward.1} parent=23 // pred_region
              loop: start=0, step=1, limit=1
              $region29: #{onlyaudio_forward.1} parent=27 // loop_pre_header
                _
              $region30: #{onlyaudio_forward.1} parent=27 // loop_header
                %s164 = sphi 0, %s168
                %p165 = scmp.ge.s32.totalorder %s164, 1
                %s169 = sphi %s158, %s158
                %s170 = sphi %s155, %s155
              $region31: #{onlyaudio_forward.1} parent=27 // loop_header_branch
                %167 = sbr.rel (%p165) target = $region35
              $region32: #{onlyaudio_forward.1} parent=27 // loop_body
                %v171 = vld [vmem:[%s169] sm:$0xff]
                %172 = vst [vmem:[%s170] sm:$0xff] %v171
                %v173 = vld [vmem:[%s169 + $0x8] sm:$0xff]
                %174 = vst [vmem:[%s170 + $0x8] sm:$0xff] %v173
                %v175 = vld [vmem:[%s169 + $0x10] sm:$0xff]
                %176 = vst [vmem:[%s170 + $0x10] sm:$0xff] %v175
                %v177 = vld [vmem:[%s169 + $0x18] sm:$0xff]
                %178 = vst [vmem:[%s170 + $0x18] sm:$0xff] %v177
                %v179 = vld [vmem:[%s169 + $0x20] sm:$0xff]
                %180 = vst [vmem:[%s170 + $0x20] sm:$0xff] %v179
                %v181 = vld [vmem:[%s169 + $0x28] sm:$0xff]
                %182 = vst [vmem:[%s170 + $0x28] sm:$0xff] %v181
                %v183 = vld [vmem:[%s169 + $0x30] sm:$0xff]
                %184 = vst [vmem:[%s170 + $0x30] sm:$0xff] %v183
                %v185 = vld [vmem:[%s169 + $0x38] sm:$0xff]
                %186 = vst [vmem:[%s170 + $0x38] sm:$0xff] %v185
                %v187 = vld [vmem:[%s169 + $0x40] sm:$0xff]
                %188 = vst [vmem:[%s170 + $0x40] sm:$0xff] %v187
                %v189 = vld [vmem:[%s169 + $0x48] sm:$0xff]
                %190 = vst [vmem:[%s170 + $0x48] sm:$0xff] %v189
                %v191 = vld [vmem:[%s169 + $0x50] sm:$0xff]
                %192 = vst [vmem:[%s170 + $0x50] sm:$0xff] %v191
                %v193 = vld [vmem:[%s169 + $0x58] sm:$0xff]
                %194 = vst [vmem:[%s170 + $0x58] sm:$0xff] %v193
                %v195 = vld [vmem:[%s169 + $0x60] sm:$0xff]
                %196 = vst [vmem:[%s170 + $0x60] sm:$0xff] %v195
                %v197 = vld [vmem:[%s169 + $0x68] sm:$0xff]
                %198 = vst [vmem:[%s170 + $0x68] sm:$0xff] %v197
                %v199 = vld [vmem:[%s169 + $0x70] sm:$0xff]
                %200 = vst [vmem:[%s170 + $0x70] sm:$0xff] %v199
                %v201 = vld [vmem:[%s169 + $0x78] sm:$0xff]
                %202 = vst [vmem:[%s170 + $0x78] sm:$0xff] %v201
                %v203 = vld [vmem:[%s169 + $0x80] sm:$0xff]
                %204 = vst [vmem:[%s170 + $0x80] sm:$0xff] %v203
                %v205 = vld [vmem:[%s169 + $0x88] sm:$0xff]
                %206 = vst [vmem:[%s170 + $0x88] sm:$0xff] %v205
                %v207 = vld [vmem:[%s169 + $0x90] sm:$0xff]
                %208 = vst [vmem:[%s170 + $0x90] sm:$0xff] %v207
                %v209 = vld [vmem:[%s169 + $0x98] sm:$0xff]
                %210 = vst [vmem:[%s170 + $0x98] sm:$0xff] %v209
                %v211 = vld [vmem:[%s169 + $0xa0] sm:$0xff]
                %212 = vst [vmem:[%s170 + $0xa0] sm:$0xff] %v211
                %v213 = vld [vmem:[%s169 + $0xa8] sm:$0xff]
                %214 = vst [vmem:[%s170 + $0xa8] sm:$0xff] %v213
                %v215 = vld [vmem:[%s169 + $0xb0] sm:$0xff]
                %216 = vst [vmem:[%s170 + $0xb0] sm:$0xff] %v215
                %v217 = vld [vmem:[%s169 + $0xb8] sm:$0xff]
                %218 = vst [vmem:[%s170 + $0xb8] sm:$0xff] %v217
                %v219 = vld [vmem:[%s169 + $0xc0] sm:$0xff]
                %220 = vst [vmem:[%s170 + $0xc0] sm:$0xff] %v219
                %v221 = vld [vmem:[%s169 + $0xc8] sm:$0xff]
                %222 = vst [vmem:[%s170 + $0xc8] sm:$0xff] %v221
                %v223 = vld [vmem:[%s169 + $0xd0] sm:$0xff]
                %224 = vst [vmem:[%s170 + $0xd0] sm:$0xff] %v223
                %v225 = vld [vmem:[%s169 + $0xd8] sm:$0xff]
                %226 = vst [vmem:[%s170 + $0xd8] sm:$0xff] %v225
                %v227 = vld [vmem:[%s169 + $0xe0] sm:$0xff]
                %228 = vst [vmem:[%s170 + $0xe0] sm:$0xff] %v227
                %v229 = vld [vmem:[%s169 + $0xe8] sm:$0xff]
                %230 = vst [vmem:[%s170 + $0xe8] sm:$0xff] %v229
                %v231 = vld [vmem:[%s169 + $0xf0] sm:$0xff]
                %232 = vst [vmem:[%s170 + $0xf0] sm:$0xff] %v231
                %v233 = vld [vmem:[%s169 + $0xf8] sm:$0xff]
                %234 = vst [vmem:[%s170 + $0xf8] sm:$0xff] %v233
                %v235 = vld [vmem:[%s169 + $0x100] sm:$0xff]
                %236 = vst [vmem:[%s170 + $0x100] sm:$0xff] %v235
                %v237 = vld [vmem:[%s169 + $0x108] sm:$0xff]
                %238 = vst [vmem:[%s170 + $0x108] sm:$0xff] %v237
                %v239 = vld [vmem:[%s169 + $0x110] sm:$0xff]
                %240 = vst [vmem:[%s170 + $0x110] sm:$0xff] %v239
                %v241 = vld [vmem:[%s169 + $0x118] sm:$0xff]
                %242 = vst [vmem:[%s170 + $0x118] sm:$0xff] %v241
                %v243 = vld [vmem:[%s169 + $0x120] sm:$0xff]
                %244 = vst [vmem:[%s170 + $0x120] sm:$0xff] %v243
                %v245 = vld [vmem:[%s169 + $0x128] sm:$0xff]
                %246 = vst [vmem:[%s170 + $0x128] sm:$0xff] %v245
                %v247 = vld [vmem:[%s169 + $0x130] sm:$0xff]
                %248 = vst [vmem:[%s170 + $0x130] sm:$0xff] %v247
                %v249 = vld [vmem:[%s169 + $0x138] sm:$0xff]
                %250 = vst [vmem:[%s170 + $0x138] sm:$0xff] %v249
                %v251 = vld [vmem:[%s169 + $0x140] sm:$0xff]
                %252 = vst [vmem:[%s170 + $0x140] sm:$0xff] %v251
                %v253 = vld [vmem:[%s169 + $0x148] sm:$0xff]
                %254 = vst [vmem:[%s170 + $0x148] sm:$0xff] %v253
                %v255 = vld [vmem:[%s169 + $0x150] sm:$0xff]
                %256 = vst [vmem:[%s170 + $0x150] sm:$0xff] %v255
                %v257 = vld [vmem:[%s169 + $0x158] sm:$0xff]
                %258 = vst [vmem:[%s170 + $0x158] sm:$0xff] %v257
                %v259 = vld [vmem:[%s169 + $0x160] sm:$0xff]
                %260 = vst [vmem:[%s170 + $0x160] sm:$0xff] %v259
                %v261 = vld [vmem:[%s169 + $0x168] sm:$0xff]
                %262 = vst [vmem:[%s170 + $0x168] sm:$0xff] %v261
                %v263 = vld [vmem:[%s169 + $0x170] sm:$0xff]
                %264 = vst [vmem:[%s170 + $0x170] sm:$0xff] %v263
                %v265 = vld [vmem:[%s169 + $0x178] sm:$0xff]
                %266 = vst [vmem:[%s170 + $0x178] sm:$0xff] %v265
                %v267 = vld [vmem:[%s169 + $0x600] sm:$0xff]
                %268 = vst [vmem:[%s170 + $0x180] sm:$0xff] %v267
                %v269 = vld [vmem:[%s169 + $0x608] sm:$0xff]
                %270 = vst [vmem:[%s170 + $0x188] sm:$0xff] %v269
                %v271 = vld [vmem:[%s169 + $0x610] sm:$0xff]
                %272 = vst [vmem:[%s170 + $0x190] sm:$0xff] %v271
                %v273 = vld [vmem:[%s169 + $0x618] sm:$0xff]
                %274 = vst [vmem:[%s170 + $0x198] sm:$0xff] %v273
                %v275 = vld [vmem:[%s169 + $0x620] sm:$0xff]
                %276 = vst [vmem:[%s170 + $0x1a0] sm:$0xff] %v275
                %v277 = vld [vmem:[%s169 + $0x628] sm:$0xff]
                %278 = vst [vmem:[%s170 + $0x1a8] sm:$0xff] %v277
                %v279 = vld [vmem:[%s169 + $0x630] sm:$0xff]
                %280 = vst [vmem:[%s170 + $0x1b0] sm:$0xff] %v279
                %v281 = vld [vmem:[%s169 + $0x638] sm:$0xff]
                %282 = vst [vmem:[%s170 + $0x1b8] sm:$0xff] %v281
                %v283 = vld [vmem:[%s169 + $0x640] sm:$0xff]
                %284 = vst [vmem:[%s170 + $0x1c0] sm:$0xff] %v283
                %v285 = vld [vmem:[%s169 + $0x648] sm:$0xff]
                %286 = vst [vmem:[%s170 + $0x1c8] sm:$0xff] %v285
                %v287 = vld [vmem:[%s169 + $0x650] sm:$0xff]
                %288 = vst [vmem:[%s170 + $0x1d0] sm:$0xff] %v287
                %v289 = vld [vmem:[%s169 + $0x658] sm:$0xff]
                %290 = vst [vmem:[%s170 + $0x1d8] sm:$0xff] %v289
                %v291 = vld [vmem:[%s169 + $0x660] sm:$0xff]
                %292 = vst [vmem:[%s170 + $0x1e0] sm:$0xff] %v291
                %v293 = vld [vmem:[%s169 + $0x668] sm:$0xff]
                %294 = vst [vmem:[%s170 + $0x1e8] sm:$0xff] %v293
                %v295 = vld [vmem:[%s169 + $0x670] sm:$0xff]
                %296 = vst [vmem:[%s170 + $0x1f0] sm:$0xff] %v295
                %v297 = vld [vmem:[%s169 + $0x678] sm:$0xff]
                %298 = vst [vmem:[%s170 + $0x1f8] sm:$0xff] %v297
                %v299 = vld [vmem:[%s169 + $0x680] sm:$0xff]
                %300 = vst [vmem:[%s170 + $0x200] sm:$0xff] %v299
                %v301 = vld [vmem:[%s169 + $0x688] sm:$0xff]
                %302 = vst [vmem:[%s170 + $0x208] sm:$0xff] %v301
                %v303 = vld [vmem:[%s169 + $0x690] sm:$0xff]
                %304 = vst [vmem:[%s170 + $0x210] sm:$0xff] %v303
                %v305 = vld [vmem:[%s169 + $0x698] sm:$0xff]
                %306 = vst [vmem:[%s170 + $0x218] sm:$0xff] %v305
                %v307 = vld [vmem:[%s169 + $0x6a0] sm:$0xff]
                %308 = vst [vmem:[%s170 + $0x220] sm:$0xff] %v307
                %v309 = vld [vmem:[%s169 + $0x6a8] sm:$0xff]
                %310 = vst [vmem:[%s170 + $0x228] sm:$0xff] %v309
                %v311 = vld [vmem:[%s169 + $0x6b0] sm:$0xff]
                %312 = vst [vmem:[%s170 + $0x230] sm:$0xff] %v311
                %v313 = vld [vmem:[%s169 + $0x6b8] sm:$0xff]
                %314 = vst [vmem:[%s170 + $0x238] sm:$0xff] %v313
                %v315 = vld [vmem:[%s169 + $0x6c0] sm:$0xff]
                %316 = vst [vmem:[%s170 + $0x240] sm:$0xff] %v315
                %v317 = vld [vmem:[%s169 + $0x6c8] sm:$0xff]
                %318 = vst [vmem:[%s170 + $0x248] sm:$0xff] %v317
                %v319 = vld [vmem:[%s169 + $0x6d0] sm:$0xff]
                %320 = vst [vmem:[%s170 + $0x250] sm:$0xff] %v319
                %v321 = vld [vmem:[%s169 + $0x6d8] sm:$0xff]
                %322 = vst [vmem:[%s170 + $0x258] sm:$0xff] %v321
                %v323 = vld [vmem:[%s169 + $0x6e0] sm:$0xff]
                %324 = vst [vmem:[%s170 + $0x260] sm:$0xff] %v323
                %v325 = vld [vmem:[%s169 + $0x6e8] sm:$0xff]
                %326 = vst [vmem:[%s170 + $0x268] sm:$0xff] %v325
                %v327 = vld [vmem:[%s169 + $0x6f0] sm:$0xff]
                %328 = vst [vmem:[%s170 + $0x270] sm:$0xff] %v327
                %v329 = vld [vmem:[%s169 + $0x6f8] sm:$0xff]
                %330 = vst [vmem:[%s170 + $0x278] sm:$0xff] %v329
                %v331 = vld [vmem:[%s169 + $0x700] sm:$0xff]
                %332 = vst [vmem:[%s170 + $0x280] sm:$0xff] %v331
                %v333 = vld [vmem:[%s169 + $0x708] sm:$0xff]
                %334 = vst [vmem:[%s170 + $0x288] sm:$0xff] %v333
                %v335 = vld [vmem:[%s169 + $0x710] sm:$0xff]
                %336 = vst [vmem:[%s170 + $0x290] sm:$0xff] %v335
                %v337 = vld [vmem:[%s169 + $0x718] sm:$0xff]
                %338 = vst [vmem:[%s170 + $0x298] sm:$0xff] %v337
                %v339 = vld [vmem:[%s169 + $0x720] sm:$0xff]
                %340 = vst [vmem:[%s170 + $0x2a0] sm:$0xff] %v339
                %v341 = vld [vmem:[%s169 + $0x728] sm:$0xff]
                %342 = vst [vmem:[%s170 + $0x2a8] sm:$0xff] %v341
                %v343 = vld [vmem:[%s169 + $0x730] sm:$0xff]
                %344 = vst [vmem:[%s170 + $0x2b0] sm:$0xff] %v343
                %v345 = vld [vmem:[%s169 + $0x738] sm:$0xff]
                %346 = vst [vmem:[%s170 + $0x2b8] sm:$0xff] %v345
                %v347 = vld [vmem:[%s169 + $0x740] sm:$0xff]
                %348 = vst [vmem:[%s170 + $0x2c0] sm:$0xff] %v347
                %v349 = vld [vmem:[%s169 + $0x748] sm:$0xff]
                %350 = vst [vmem:[%s170 + $0x2c8] sm:$0xff] %v349
                %v351 = vld [vmem:[%s169 + $0x750] sm:$0xff]
                %352 = vst [vmem:[%s170 + $0x2d0] sm:$0xff] %v351
                %v353 = vld [vmem:[%s169 + $0x758] sm:$0xff]
                %354 = vst [vmem:[%s170 + $0x2d8] sm:$0xff] %v353
                %v355 = vld [vmem:[%s169 + $0x760] sm:$0xff]
                %356 = vst [vmem:[%s170 + $0x2e0] sm:$0xff] %v355
                %v357 = vld [vmem:[%s169 + $0x768] sm:$0xff]
                %358 = vst [vmem:[%s170 + $0x2e8] sm:$0xff] %v357
                %v359 = vld [vmem:[%s169 + $0x770] sm:$0xff]
                %360 = vst [vmem:[%s170 + $0x2f0] sm:$0xff] %v359
                %v361 = vld [vmem:[%s169 + $0x778] sm:$0xff]
                %362 = vst [vmem:[%s170 + $0x2f8] sm:$0xff] %v361
              $region33: #{onlyaudio_forward.1} parent=27 // loop_footer
                %s168 = sadd.s32 1, %s164
              $region34: #{onlyaudio_forward.1} parent=27 // loop_footer_branch
                %163 = sbr.rel target = $region30
              $region35: #{onlyaudio_forward.1} parent=27 // loop_exit
                _
            $region28: #{onlyaudio_forward.1} parent=23 // pred_fallthru
              _
            // Predicated region
            $region36: #{onlyaudio_forward.1} parent=23 // pred_check
              _
            $region37: #{onlyaudio_forward.1} parent=23 // pred_check_branch
              %364 = sbr.rel target = $region39
            $region38: #{onlyaudio_forward.1} parent=23 // pred_region
              _
            $region39: #{onlyaudio_forward.1} parent=23 // pred_fallthru
              _
          $region24: #{onlyaudio_forward.1} parent=19 // pred_fallthru
            _
          %365 = vnop
        $region20: #{onlyaudio_forward.1} parent=15 // pred_fallthru
          _
        // Predicated region
        $region40: #{onlyaudio_forward.1} parent=15 // pred_check
          %p366 = pneg %p72
        $region41: #{onlyaudio_forward.1} parent=15 // pred_check_branch
          %368 = sbr.rel (%p366) target = $region43
        $region42: #{onlyaudio_forward.1} parent=15 // pred_region
          %s369 = sand.u32 %s62, 1
          %s370 = scalar_lea.sflag [#allocation4], %s369
          %s371 = sand.u32 %s62, 1
          %s372 = smul.addr %s371, 12288
          %s373 = scalar_lea.vmem [#allocation3], %s372
          %s374 = smul.u32 1536, %s20
          %376 = vsyncadd %s370, 0
          %s377 = smul.addr %s374, 2
          %s378 = smul.addr %s19, 12288
          %s379 = sadd.s32 %s377, %s378
          %s380 = smul.addr %s379, 4
          %s381 = scalar_lea.hbm %s1, %s380
          %s382 = sshll.u32 %s381, 4
          %s383 = int_to_ptr.hbm [resolvable:$true] %s382
          %s384 = sshll.u32 %s373, 4
          %s385 = int_to_ptr.vmem [resolvable:$true] %s384
          %390 = dma.hbm_to_vmem [thread:$0]  %s383, 196608, %s385, %s370, 128, 128, 8
        $region43: #{onlyaudio_forward.1} parent=15 // pred_fallthru
          _
        // Predicated region
        $region44: #{onlyaudio_forward.1} parent=15 // pred_check
          %p391 = pneg %p98
        $region45: #{onlyaudio_forward.1} parent=15 // pred_check_branch
          %393 = sbr.rel (%p391) target = $region47
        $region46: #{onlyaudio_forward.1} parent=15 // pred_region
          %s394 = smul.u32 2, %s19
          %p395 = scmp.lt.s32.totalorder %s394, 3
          %s396 = scalar_select %p395, %s394, 3
          %s397 = scalar_lea.vmem %s2, %s396
          %s398 = smul.u32 2, %s19
        $region47: #{onlyaudio_forward.1} parent=15 // pred_fallthru
          _
      $region16: #{onlyaudio_forward.1} parent=5 // pred_fallthru
        _
      %p399 = scmp.le.s32.totalorder 1, %s12
      %p400 = scmp.lt.s32.totalorder %s12, 9
      %p401 = pnand %p399, %p400
      %p402 = pneg %p401
      // Predicated region
      $region48: #{onlyaudio_forward.1} parent=5 // pred_check
        _
      $region49: #{onlyaudio_forward.1} parent=5 // pred_check_branch
        %404 = sbr.rel (%p401) target = $region51
      $region50: #{onlyaudio_forward.1} parent=5 // pred_region
        %s405 = ssub.s32 %s12, 1
        %s406 = sand.u32 %s37, 1
        %s407 = sand.u32 %s37, 1
        %s408 = smul.addr %s407, 768
        %s409 = scalar_lea.vmem [#allocation2], %s408
        // Predicated region
        $region52: #{onlyaudio_forward.1} parent=50 // pred_check
          %p410 = pneg %p50
        $region53: #{onlyaudio_forward.1} parent=50 // pred_check_branch
          %412 = sbr.rel (%p410) target = $region55
        $region54: #{onlyaudio_forward.1} parent=50 // pred_region
          _
        $region55: #{onlyaudio_forward.1} parent=50 // pred_fallthru
          _
        %s413 = sand.u32 %s65, 1
        %s414 = scalar_lea.sflag [#allocation4], %s413
        %s415 = sand.u32 %s65, 1
        %s416 = smul.addr %s415, 12288
        %s417 = scalar_lea.vmem [#allocation3], %s416
        // Predicated region
        $region56: #{onlyaudio_forward.1} parent=50 // pred_check
          %p418 = pneg %p78
        $region57: #{onlyaudio_forward.1} parent=50 // pred_check_branch
          %420 = sbr.rel (%p418) target = $region59
        $region58: #{onlyaudio_forward.1} parent=50 // pred_region
          %422 = dma.done %s414, 196608
        $region59: #{onlyaudio_forward.1} parent=50 // pred_fallthru
          _
        %s423 = sand.u32 %s37, 1
        %s424 = sand.u32 %s37, 1
        %s425 = smul.addr %s424, 768
        %s426 = scalar_lea.vmem [#allocation2], %s425
        %p427 = pneg %p50
        %p428 = pneg %p47
        %s429 = sand.u32 %s65, 1
        %s430 = scalar_lea.sflag [#allocation4], %s429
        %s431 = sand.u32 %s65, 1
        %s432 = smul.addr %s431, 12288
        %s433 = scalar_lea.vmem [#allocation3], %s432
        %p434 = pneg %p78
        %p435 = pneg %p75
        %s436 = smul.u32 2, %s21
        %p437 = scmp.lt.s32.totalorder %s436, 3
        %s438 = scalar_select %p437, %s436, 3
        %s439 = scalar_lea.vmem %s2, %s438
        %p440 = pneg %p104
        %p441 = pneg %p101
        %p442 = pneg %p130
        %p443 = pneg %p127
        %s444 = sand.u32 %s117, 1
        %s445 = sand.u32 %s117, 1
        %s446 = smul.addr %s445, 32
        %s447 = scalar_lea.vmem [#allocation5], %s446
        %s448 = smul.u32 96, %s22
        %s449 = smul.u32 1536, %s22
        %s450 = smul.u32 2, %s21
        %p451 = scmp.lt.s32.totalorder %s450, 3
        %s452 = scalar_select %p451, %s450, 3
        %s453 = scalar_lea.vmem %s2, %s452
        %s454 = smul.u32 2, %s21
        %s455 = smul.u32 2, %s21
        %p456 = scmp.eq.s32.totalorder %s22, 0
        // Predicated region
        $region60: #{onlyaudio_forward.1} parent=50 // pred_check
          %p457 = pneg %p456
        $region61: #{onlyaudio_forward.1} parent=50 // pred_check_branch
          %459 = sbr.rel (%p457) target = $region63
        $region62: #{onlyaudio_forward.1} parent=50 // pred_region
          %460 = vst [vmem:[%s447] sm:$0xff] 0.0
          %461 = vst [vmem:[%s447 + $0x8] sm:$0xff] 0.0
          %462 = vst [vmem:[%s447 + $0x10] sm:$0xff] 0.0
          %463 = vst [vmem:[%s447 + $0x18] sm:$0xff] 0.0
        $region63: #{onlyaudio_forward.1} parent=50 // pred_fallthru
          _
        %v464 = vld [vmem:[%s447] sm:$0xff]
        %v465 = vld [vmem:[%s447 + $0x8] sm:$0xff]
        %v466 = vld [vmem:[%s447 + $0x10] sm:$0xff]
        %v467 = vld [vmem:[%s447 + $0x18] sm:$0xff]
        %v468 = vld [vmem:[%s409] sm:$0xff]
        %v469 = vld [vmem:[%s409 + $0x8] sm:$0xff]
        %v470 = vld [vmem:[%s409 + $0x10] sm:$0xff]
        %v471 = vld [vmem:[%s409 + $0x18] sm:$0xff]
        %v472 = vld [vmem:[%s409 + $0x20] sm:$0xff]
        %v473 = vld [vmem:[%s409 + $0x28] sm:$0xff]
        %v474 = vld [vmem:[%s409 + $0x30] sm:$0xff]
        %v475 = vld [vmem:[%s409 + $0x38] sm:$0xff]
        %v476 = vld [vmem:[%s409 + $0x40] sm:$0xff]
        %v477 = vld [vmem:[%s409 + $0x48] sm:$0xff]
        %v478 = vld [vmem:[%s409 + $0x50] sm:$0xff]
        %v479 = vld [vmem:[%s409 + $0x58] sm:$0xff]
        %v480 = vld [vmem:[%s409 + $0x60] sm:$0xff]
        %v481 = vld [vmem:[%s409 + $0x68] sm:$0xff]
        %v482 = vld [vmem:[%s409 + $0x70] sm:$0xff]
        %v483 = vld [vmem:[%s409 + $0x78] sm:$0xff]
        %v484 = vld [vmem:[%s409 + $0x80] sm:$0xff]
        %v485 = vld [vmem:[%s409 + $0x88] sm:$0xff]
        %v486 = vld [vmem:[%s409 + $0x90] sm:$0xff]
        %v487 = vld [vmem:[%s409 + $0x98] sm:$0xff]
        %v488 = vld [vmem:[%s409 + $0xa0] sm:$0xff]
        %v489 = vld [vmem:[%s409 + $0xa8] sm:$0xff]
        %v490 = vld [vmem:[%s409 + $0xb0] sm:$0xff]
        %v491 = vld [vmem:[%s409 + $0xb8] sm:$0xff]
        %v492 = vld [vmem:[%s409 + $0xc0] sm:$0xff]
        %v493 = vld [vmem:[%s409 + $0xc8] sm:$0xff]
        %v494 = vld [vmem:[%s409 + $0xd0] sm:$0xff]
        %v495 = vld [vmem:[%s409 + $0xd8] sm:$0xff]
        %v496 = vld [vmem:[%s409 + $0xe0] sm:$0xff]
        %v497 = vld [vmem:[%s409 + $0xe8] sm:$0xff]
        %v498 = vld [vmem:[%s409 + $0xf0] sm:$0xff]
        %v499 = vld [vmem:[%s409 + $0xf8] sm:$0xff]
        %v500 = vld [vmem:[%s409 + $0x100] sm:$0xff]
        %v501 = vld [vmem:[%s409 + $0x108] sm:$0xff]
        %v502 = vld [vmem:[%s409 + $0x110] sm:$0xff]
        %v503 = vld [vmem:[%s409 + $0x118] sm:$0xff]
        %v504 = vld [vmem:[%s409 + $0x120] sm:$0xff]
        %v505 = vld [vmem:[%s409 + $0x128] sm:$0xff]
        %v506 = vld [vmem:[%s409 + $0x130] sm:$0xff]
        %v507 = vld [vmem:[%s409 + $0x138] sm:$0xff]
        %v508 = vld [vmem:[%s409 + $0x140] sm:$0xff]
        %v509 = vld [vmem:[%s409 + $0x148] sm:$0xff]
        %v510 = vld [vmem:[%s409 + $0x150] sm:$0xff]
        %v511 = vld [vmem:[%s409 + $0x158] sm:$0xff]
        %v512 = vld [vmem:[%s409 + $0x160] sm:$0xff]
        %v513 = vld [vmem:[%s409 + $0x168] sm:$0xff]
        %v514 = vld [vmem:[%s409 + $0x170] sm:$0xff]
        %v515 = vld [vmem:[%s409 + $0x178] sm:$0xff]
        %v516 = vld [vmem:[%s409 + $0x180] sm:$0xff]
        %v517 = vld [vmem:[%s409 + $0x188] sm:$0xff]
        %v518 = vld [vmem:[%s409 + $0x190] sm:$0xff]
        %v519 = vld [vmem:[%s409 + $0x198] sm:$0xff]
        %v520 = vld [vmem:[%s409 + $0x1a0] sm:$0xff]
        %v521 = vld [vmem:[%s409 + $0x1a8] sm:$0xff]
        %v522 = vld [vmem:[%s409 + $0x1b0] sm:$0xff]
        %v523 = vld [vmem:[%s409 + $0x1b8] sm:$0xff]
        %v524 = vld [vmem:[%s409 + $0x1c0] sm:$0xff]
        %v525 = vld [vmem:[%s409 + $0x1c8] sm:$0xff]
        %v526 = vld [vmem:[%s409 + $0x1d0] sm:$0xff]
        %v527 = vld [vmem:[%s409 + $0x1d8] sm:$0xff]
        %v528 = vld [vmem:[%s409 + $0x1e0] sm:$0xff]
        %v529 = vld [vmem:[%s409 + $0x1e8] sm:$0xff]
        %v530 = vld [vmem:[%s409 + $0x1f0] sm:$0xff]
        %v531 = vld [vmem:[%s409 + $0x1f8] sm:$0xff]
        %v532 = vld [vmem:[%s409 + $0x200] sm:$0xff]
        %v533 = vld [vmem:[%s409 + $0x208] sm:$0xff]
        %v534 = vld [vmem:[%s409 + $0x210] sm:$0xff]
        %v535 = vld [vmem:[%s409 + $0x218] sm:$0xff]
        %v536 = vld [vmem:[%s409 + $0x220] sm:$0xff]
        %v537 = vld [vmem:[%s409 + $0x228] sm:$0xff]
        %v538 = vld [vmem:[%s409 + $0x230] sm:$0xff]
        %v539 = vld [vmem:[%s409 + $0x238] sm:$0xff]
        %v540 = vld [vmem:[%s409 + $0x240] sm:$0xff]
        %v541 = vld [vmem:[%s409 + $0x248] sm:$0xff]
        %v542 = vld [vmem:[%s409 + $0x250] sm:$0xff]
        %v543 = vld [vmem:[%s409 + $0x258] sm:$0xff]
        %v544 = vld [vmem:[%s409 + $0x260] sm:$0xff]
        %v545 = vld [vmem:[%s409 + $0x268] sm:$0xff]
        %v546 = vld [vmem:[%s409 + $0x270] sm:$0xff]
        %v547 = vld [vmem:[%s409 + $0x278] sm:$0xff]
        %v548 = vld [vmem:[%s409 + $0x280] sm:$0xff]
        %v549 = vld [vmem:[%s409 + $0x288] sm:$0xff]
        %v550 = vld [vmem:[%s409 + $0x290] sm:$0xff]
        %v551 = vld [vmem:[%s409 + $0x298] sm:$0xff]
        %v552 = vld [vmem:[%s409 + $0x2a0] sm:$0xff]
        %v553 = vld [vmem:[%s409 + $0x2a8] sm:$0xff]
        %v554 = vld [vmem:[%s409 + $0x2b0] sm:$0xff]
        %v555 = vld [vmem:[%s409 + $0x2b8] sm:$0xff]
        %v556 = vld [vmem:[%s409 + $0x2c0] sm:$0xff]
        %v557 = vld [vmem:[%s409 + $0x2c8] sm:$0xff]
        %v558 = vld [vmem:[%s409 + $0x2d0] sm:$0xff]
        %v559 = vld [vmem:[%s409 + $0x2d8] sm:$0xff]
        %v560 = vld [vmem:[%s409 + $0x2e0] sm:$0xff]
        %v561 = vld [vmem:[%s409 + $0x2e8] sm:$0xff]
        %v562 = vld [vmem:[%s409 + $0x2f0] sm:$0xff]
        %v563 = vld [vmem:[%s409 + $0x2f8] sm:$0xff]
        %v564 = vld [vmem:[%s417] sm:$0xff]
        %v565 = vld [vmem:[%s417 + $0x8] sm:$0xff]
        %v566 = vld [vmem:[%s417 + $0x10] sm:$0xff]
        %v567 = vld [vmem:[%s417 + $0x18] sm:$0xff]
        %v568 = vld [vmem:[%s417 + $0x20] sm:$0xff]
        %v569 = vld [vmem:[%s417 + $0x28] sm:$0xff]
        %v570 = vld [vmem:[%s417 + $0x30] sm:$0xff]
        %v571 = vld [vmem:[%s417 + $0x38] sm:$0xff]
        %v572 = vld [vmem:[%s417 + $0x40] sm:$0xff]
        %v573 = vld [vmem:[%s417 + $0x48] sm:$0xff]
        %v574 = vld [vmem:[%s417 + $0x50] sm:$0xff]
        %v575 = vld [vmem:[%s417 + $0x58] sm:$0xff]
        %v576 = vld [vmem:[%s417 + $0x60] sm:$0xff]
        %v577 = vld [vmem:[%s417 + $0x68] sm:$0xff]
        %v578 = vld [vmem:[%s417 + $0x70] sm:$0xff]
        %v579 = vld [vmem:[%s417 + $0x78] sm:$0xff]
        %v580 = vld [vmem:[%s417 + $0x80] sm:$0xff]
        %v581 = vld [vmem:[%s417 + $0x88] sm:$0xff]
        %v582 = vld [vmem:[%s417 + $0x90] sm:$0xff]
        %v583 = vld [vmem:[%s417 + $0x98] sm:$0xff]
        %v584 = vld [vmem:[%s417 + $0xa0] sm:$0xff]
        %v585 = vld [vmem:[%s417 + $0xa8] sm:$0xff]
        %v586 = vld [vmem:[%s417 + $0xb0] sm:$0xff]
        %v587 = vld [vmem:[%s417 + $0xb8] sm:$0xff]
        %v588 = vld [vmem:[%s417 + $0xc0] sm:$0xff]
        %v589 = vld [vmem:[%s417 + $0xc8] sm:$0xff]
        %v590 = vld [vmem:[%s417 + $0xd0] sm:$0xff]
        %v591 = vld [vmem:[%s417 + $0xd8] sm:$0xff]
        %v592 = vld [vmem:[%s417 + $0xe0] sm:$0xff]
        %v593 = vld [vmem:[%s417 + $0xe8] sm:$0xff]
        %v594 = vld [vmem:[%s417 + $0xf0] sm:$0xff]
        %v595 = vld [vmem:[%s417 + $0xf8] sm:$0xff]
        %v596 = vld [vmem:[%s417 + $0x100] sm:$0xff]
        %v597 = vld [vmem:[%s417 + $0x108] sm:$0xff]
        %v598 = vld [vmem:[%s417 + $0x110] sm:$0xff]
        %v599 = vld [vmem:[%s417 + $0x118] sm:$0xff]
        %v600 = vld [vmem:[%s417 + $0x120] sm:$0xff]
        %v601 = vld [vmem:[%s417 + $0x128] sm:$0xff]
        %v602 = vld [vmem:[%s417 + $0x130] sm:$0xff]
        %v603 = vld [vmem:[%s417 + $0x138] sm:$0xff]
        %v604 = vld [vmem:[%s417 + $0x140] sm:$0xff]
        %v605 = vld [vmem:[%s417 + $0x148] sm:$0xff]
        %v606 = vld [vmem:[%s417 + $0x150] sm:$0xff]
        %v607 = vld [vmem:[%s417 + $0x158] sm:$0xff]
        %v608 = vld [vmem:[%s417 + $0x160] sm:$0xff]
        %v609 = vld [vmem:[%s417 + $0x168] sm:$0xff]
        %v610 = vld [vmem:[%s417 + $0x170] sm:$0xff]
        %v611 = vld [vmem:[%s417 + $0x178] sm:$0xff]
        %v612 = vld [vmem:[%s417 + $0x180] sm:$0xff]
        %v613 = vld [vmem:[%s417 + $0x188] sm:$0xff]
        %v614 = vld [vmem:[%s417 + $0x190] sm:$0xff]
        %v615 = vld [vmem:[%s417 + $0x198] sm:$0xff]
        %v616 = vld [vmem:[%s417 + $0x1a0] sm:$0xff]
        %v617 = vld [vmem:[%s417 + $0x1a8] sm:$0xff]
        %v618 = vld [vmem:[%s417 + $0x1b0] sm:$0xff]
        %v619 = vld [vmem:[%s417 + $0x1b8] sm:$0xff]
        %v620 = vld [vmem:[%s417 + $0x1c0] sm:$0xff]
        %v621 = vld [vmem:[%s417 + $0x1c8] sm:$0xff]
        %v622 = vld [vmem:[%s417 + $0x1d0] sm:$0xff]
        %v623 = vld [vmem:[%s417 + $0x1d8] sm:$0xff]
        %v624 = vld [vmem:[%s417 + $0x1e0] sm:$0xff]
        %v625 = vld [vmem:[%s417 + $0x1e8] sm:$0xff]
        %v626 = vld [vmem:[%s417 + $0x1f0] sm:$0xff]
        %v627 = vld [vmem:[%s417 + $0x1f8] sm:$0xff]
        %v628 = vld [vmem:[%s417 + $0x200] sm:$0xff]
        %v629 = vld [vmem:[%s417 + $0x208] sm:$0xff]
        %v630 = vld [vmem:[%s417 + $0x210] sm:$0xff]
        %v631 = vld [vmem:[%s417 + $0x218] sm:$0xff]
        %v632 = vld [vmem:[%s417 + $0x220] sm:$0xff]
        %v633 = vld [vmem:[%s417 + $0x228] sm:$0xff]
        %v634 = vld [vmem:[%s417 + $0x230] sm:$0xff]
        %v635 = vld [vmem:[%s417 + $0x238] sm:$0xff]
        %v636 = vld [vmem:[%s417 + $0x240] sm:$0xff]
        %v637 = vld [vmem:[%s417 + $0x248] sm:$0xff]
        %v638 = vld [vmem:[%s417 + $0x250] sm:$0xff]
        %v639 = vld [vmem:[%s417 + $0x258] sm:$0xff]
        %v640 = vld [vmem:[%s417 + $0x260] sm:$0xff]
        %v641 = vld [vmem:[%s417 + $0x268] sm:$0xff]
        %v642 = vld [vmem:[%s417 + $0x270] sm:$0xff]
        %v643 = vld [vmem:[%s417 + $0x278] sm:$0xff]
        %v644 = vld [vmem:[%s417 + $0x280] sm:$0xff]
        %v645 = vld [vmem:[%s417 + $0x288] sm:$0xff]
        %v646 = vld [vmem:[%s417 + $0x290] sm:$0xff]
        %v647 = vld [vmem:[%s417 + $0x298] sm:$0xff]
        %v648 = vld [vmem:[%s417 + $0x2a0] sm:$0xff]
        %v649 = vld [vmem:[%s417 + $0x2a8] sm:$0xff]
        %v650 = vld [vmem:[%s417 + $0x2b0] sm:$0xff]
        %v651 = vld [vmem:[%s417 + $0x2b8] sm:$0xff]
        %v652 = vld [vmem:[%s417 + $0x2c0] sm:$0xff]
        %v653 = vld [vmem:[%s417 + $0x2c8] sm:$0xff]
        %v654 = vld [vmem:[%s417 + $0x2d0] sm:$0xff]
        %v655 = vld [vmem:[%s417 + $0x2d8] sm:$0xff]
        %v656 = vld [vmem:[%s417 + $0x2e0] sm:$0xff]
        %v657 = vld [vmem:[%s417 + $0x2e8] sm:$0xff]
        %v658 = vld [vmem:[%s417 + $0x2f0] sm:$0xff]
        %v659 = vld [vmem:[%s417 + $0x2f8] sm:$0xff]
        %v660 = vld [vmem:[%s417 + $0x300] sm:$0xff]
        %v661 = vld [vmem:[%s417 + $0x308] sm:$0xff]
        %v662 = vld [vmem:[%s417 + $0x310] sm:$0xff]
        %v663 = vld [vmem:[%s417 + $0x318] sm:$0xff]
        %v664 = vld [vmem:[%s417 + $0x320] sm:$0xff]
        %v665 = vld [vmem:[%s417 + $0x328] sm:$0xff]
        %v666 = vld [vmem:[%s417 + $0x330] sm:$0xff]
        %v667 = vld [vmem:[%s417 + $0x338] sm:$0xff]
        %v668 = vld [vmem:[%s417 + $0x340] sm:$0xff]
        %v669 = vld [vmem:[%s417 + $0x348] sm:$0xff]
        %v670 = vld [vmem:[%s417 + $0x350] sm:$0xff]
        %v671 = vld [vmem:[%s417 + $0x358] sm:$0xff]
        %v672 = vld [vmem:[%s417 + $0x360] sm:$0xff]
        %v673 = vld [vmem:[%s417 + $0x368] sm:$0xff]
        %v674 = vld [vmem:[%s417 + $0x370] sm:$0xff]
        %v675 = vld [vmem:[%s417 + $0x378] sm:$0xff]
        %v676 = vld [vmem:[%s417 + $0x380] sm:$0xff]
        %v677 = vld [vmem:[%s417 + $0x388] sm:$0xff]
        %v678 = vld [vmem:[%s417 + $0x390] sm:$0xff]
        %v679 = vld [vmem:[%s417 + $0x398] sm:$0xff]
        %v680 = vld [vmem:[%s417 + $0x3a0] sm:$0xff]
        %v681 = vld [vmem:[%s417 + $0x3a8] sm:$0xff]
        %v682 = vld [vmem:[%s417 + $0x3b0] sm:$0xff]
        %v683 = vld [vmem:[%s417 + $0x3b8] sm:$0xff]
        %v684 = vld [vmem:[%s417 + $0x3c0] sm:$0xff]
        %v685 = vld [vmem:[%s417 + $0x3c8] sm:$0xff]
        %v686 = vld [vmem:[%s417 + $0x3d0] sm:$0xff]
        %v687 = vld [vmem:[%s417 + $0x3d8] sm:$0xff]
        %v688 = vld [vmem:[%s417 + $0x3e0] sm:$0xff]
        %v689 = vld [vmem:[%s417 + $0x3e8] sm:$0xff]
        %v690 = vld [vmem:[%s417 + $0x3f0] sm:$0xff]
        %v691 = vld [vmem:[%s417 + $0x3f8] sm:$0xff]
        %v692 = vld [vmem:[%s417 + $0x400] sm:$0xff]
        %v693 = vld [vmem:[%s417 + $0x408] sm:$0xff]
        %v694 = vld [vmem:[%s417 + $0x410] sm:$0xff]
        %v695 = vld [vmem:[%s417 + $0x418] sm:$0xff]
        %v696 = vld [vmem:[%s417 + $0x420] sm:$0xff]
        %v697 = vld [vmem:[%s417 + $0x428] sm:$0xff]
        %v698 = vld [vmem:[%s417 + $0x430] sm:$0xff]
        %v699 = vld [vmem:[%s417 + $0x438] sm:$0xff]
        %v700 = vld [vmem:[%s417 + $0x440] sm:$0xff]
        %v701 = vld [vmem:[%s417 + $0x448] sm:$0xff]
        %v702 = vld [vmem:[%s417 + $0x450] sm:$0xff]
        %v703 = vld [vmem:[%s417 + $0x458] sm:$0xff]
        %v704 = vld [vmem:[%s417 + $0x460] sm:$0xff]
        %v705 = vld [vmem:[%s417 + $0x468] sm:$0xff]
        %v706 = vld [vmem:[%s417 + $0x470] sm:$0xff]
        %v707 = vld [vmem:[%s417 + $0x478] sm:$0xff]
        %v708 = vld [vmem:[%s417 + $0x480] sm:$0xff]
        %v709 = vld [vmem:[%s417 + $0x488] sm:$0xff]
        %v710 = vld [vmem:[%s417 + $0x490] sm:$0xff]
        %v711 = vld [vmem:[%s417 + $0x498] sm:$0xff]
        %v712 = vld [vmem:[%s417 + $0x4a0] sm:$0xff]
        %v713 = vld [vmem:[%s417 + $0x4a8] sm:$0xff]
        %v714 = vld [vmem:[%s417 + $0x4b0] sm:$0xff]
        %v715 = vld [vmem:[%s417 + $0x4b8] sm:$0xff]
        %v716 = vld [vmem:[%s417 + $0x4c0] sm:$0xff]
        %v717 = vld [vmem:[%s417 + $0x4c8] sm:$0xff]
        %v718 = vld [vmem:[%s417 + $0x4d0] sm:$0xff]
        %v719 = vld [vmem:[%s417 + $0x4d8] sm:$0xff]
        %v720 = vld [vmem:[%s417 + $0x4e0] sm:$0xff]
        %v721 = vld [vmem:[%s417 + $0x4e8] sm:$0xff]
        %v722 = vld [vmem:[%s417 + $0x4f0] sm:$0xff]
        %v723 = vld [vmem:[%s417 + $0x4f8] sm:$0xff]
        %v724 = vld [vmem:[%s417 + $0x500] sm:$0xff]
        %v725 = vld [vmem:[%s417 + $0x508] sm:$0xff]
        %v726 = vld [vmem:[%s417 + $0x510] sm:$0xff]
        %v727 = vld [vmem:[%s417 + $0x518] sm:$0xff]
        %v728 = vld [vmem:[%s417 + $0x520] sm:$0xff]
        %v729 = vld [vmem:[%s417 + $0x528] sm:$0xff]
        %v730 = vld [vmem:[%s417 + $0x530] sm:$0xff]
        %v731 = vld [vmem:[%s417 + $0x538] sm:$0xff]
        %v732 = vld [vmem:[%s417 + $0x540] sm:$0xff]
        %v733 = vld [vmem:[%s417 + $0x548] sm:$0xff]
        %v734 = vld [vmem:[%s417 + $0x550] sm:$0xff]
        %v735 = vld [vmem:[%s417 + $0x558] sm:$0xff]
        %v736 = vld [vmem:[%s417 + $0x560] sm:$0xff]
        %v737 = vld [vmem:[%s417 + $0x568] sm:$0xff]
        %v738 = vld [vmem:[%s417 + $0x570] sm:$0xff]
        %v739 = vld [vmem:[%s417 + $0x578] sm:$0xff]
        %v740 = vld [vmem:[%s417 + $0x580] sm:$0xff]
        %v741 = vld [vmem:[%s417 + $0x588] sm:$0xff]
        %v742 = vld [vmem:[%s417 + $0x590] sm:$0xff]
        %v743 = vld [vmem:[%s417 + $0x598] sm:$0xff]
        %v744 = vld [vmem:[%s417 + $0x5a0] sm:$0xff]
        %v745 = vld [vmem:[%s417 + $0x5a8] sm:$0xff]
        %v746 = vld [vmem:[%s417 + $0x5b0] sm:$0xff]
        %v747 = vld [vmem:[%s417 + $0x5b8] sm:$0xff]
        %v748 = vld [vmem:[%s417 + $0x5c0] sm:$0xff]
        %v749 = vld [vmem:[%s417 + $0x5c8] sm:$0xff]
        %v750 = vld [vmem:[%s417 + $0x5d0] sm:$0xff]
        %v751 = vld [vmem:[%s417 + $0x5d8] sm:$0xff]
        %v752 = vld [vmem:[%s417 + $0x5e0] sm:$0xff]
        %v753 = vld [vmem:[%s417 + $0x5e8] sm:$0xff]
        %v754 = vld [vmem:[%s417 + $0x5f0] sm:$0xff]
        %v755 = vld [vmem:[%s417 + $0x5f8] sm:$0xff]
        %v756 = vld [vmem:[%s417 + $0x600] sm:$0xff]
        %v757 = vld [vmem:[%s417 + $0x608] sm:$0xff]
        %v758 = vld [vmem:[%s417 + $0x610] sm:$0xff]
        %v759 = vld [vmem:[%s417 + $0x618] sm:$0xff]
        %v760 = vld [vmem:[%s417 + $0x620] sm:$0xff]
        %v761 = vld [vmem:[%s417 + $0x628] sm:$0xff]
        %v762 = vld [vmem:[%s417 + $0x630] sm:$0xff]
        %v763 = vld [vmem:[%s417 + $0x638] sm:$0xff]
        %v764 = vld [vmem:[%s417 + $0x640] sm:$0xff]
        %v765 = vld [vmem:[%s417 + $0x648] sm:$0xff]
        %v766 = vld [vmem:[%s417 + $0x650] sm:$0xff]
        %v767 = vld [vmem:[%s417 + $0x658] sm:$0xff]
        %v768 = vld [vmem:[%s417 + $0x660] sm:$0xff]
        %v769 = vld [vmem:[%s417 + $0x668] sm:$0xff]
        %v770 = vld [vmem:[%s417 + $0x670] sm:$0xff]
        %v771 = vld [vmem:[%s417 + $0x678] sm:$0xff]
        %v772 = vld [vmem:[%s417 + $0x680] sm:$0xff]
        %v773 = vld [vmem:[%s417 + $0x688] sm:$0xff]
        %v774 = vld [vmem:[%s417 + $0x690] sm:$0xff]
        %v775 = vld [vmem:[%s417 + $0x698] sm:$0xff]
        %v776 = vld [vmem:[%s417 + $0x6a0] sm:$0xff]
        %v777 = vld [vmem:[%s417 + $0x6a8] sm:$0xff]
        %v778 = vld [vmem:[%s417 + $0x6b0] sm:$0xff]
        %v779 = vld [vmem:[%s417 + $0x6b8] sm:$0xff]
        %v780 = vld [vmem:[%s417 + $0x6c0] sm:$0xff]
        %v781 = vld [vmem:[%s417 + $0x6c8] sm:$0xff]
        %v782 = vld [vmem:[%s417 + $0x6d0] sm:$0xff]
        %v783 = vld [vmem:[%s417 + $0x6d8] sm:$0xff]
        %v784 = vld [vmem:[%s417 + $0x6e0] sm:$0xff]
        %v785 = vld [vmem:[%s417 + $0x6e8] sm:$0xff]
        %v786 = vld [vmem:[%s417 + $0x6f0] sm:$0xff]
        %v787 = vld [vmem:[%s417 + $0x6f8] sm:$0xff]
        %v788 = vld [vmem:[%s417 + $0x700] sm:$0xff]
        %v789 = vld [vmem:[%s417 + $0x708] sm:$0xff]
        %v790 = vld [vmem:[%s417 + $0x710] sm:$0xff]
        %v791 = vld [vmem:[%s417 + $0x718] sm:$0xff]
        %v792 = vld [vmem:[%s417 + $0x720] sm:$0xff]
        %v793 = vld [vmem:[%s417 + $0x728] sm:$0xff]
        %v794 = vld [vmem:[%s417 + $0x730] sm:$0xff]
        %v795 = vld [vmem:[%s417 + $0x738] sm:$0xff]
        %v796 = vld [vmem:[%s417 + $0x740] sm:$0xff]
        %v797 = vld [vmem:[%s417 + $0x748] sm:$0xff]
        %v798 = vld [vmem:[%s417 + $0x750] sm:$0xff]
        %v799 = vld [vmem:[%s417 + $0x758] sm:$0xff]
        %v800 = vld [vmem:[%s417 + $0x760] sm:$0xff]
        %v801 = vld [vmem:[%s417 + $0x768] sm:$0xff]
        %v802 = vld [vmem:[%s417 + $0x770] sm:$0xff]
        %v803 = vld [vmem:[%s417 + $0x778] sm:$0xff]
        %v804 = vld [vmem:[%s417 + $0x780] sm:$0xff]
        %v805 = vld [vmem:[%s417 + $0x788] sm:$0xff]
        %v806 = vld [vmem:[%s417 + $0x790] sm:$0xff]
        %v807 = vld [vmem:[%s417 + $0x798] sm:$0xff]
        %v808 = vld [vmem:[%s417 + $0x7a0] sm:$0xff]
        %v809 = vld [vmem:[%s417 + $0x7a8] sm:$0xff]
        %v810 = vld [vmem:[%s417 + $0x7b0] sm:$0xff]
        %v811 = vld [vmem:[%s417 + $0x7b8] sm:$0xff]
        %v812 = vld [vmem:[%s417 + $0x7c0] sm:$0xff]
        %v813 = vld [vmem:[%s417 + $0x7c8] sm:$0xff]
        %v814 = vld [vmem:[%s417 + $0x7d0] sm:$0xff]
        %v815 = vld [vmem:[%s417 + $0x7d8] sm:$0xff]
        %v816 = vld [vmem:[%s417 + $0x7e0] sm:$0xff]
        %v817 = vld [vmem:[%s417 + $0x7e8] sm:$0xff]
        %v818 = vld [vmem:[%s417 + $0x7f0] sm:$0xff]
        %v819 = vld [vmem:[%s417 + $0x7f8] sm:$0xff]
        %v820 = vld [vmem:[%s417 + $0x800] sm:$0xff]
        %v821 = vld [vmem:[%s417 + $0x808] sm:$0xff]
        %v822 = vld [vmem:[%s417 + $0x810] sm:$0xff]
        %v823 = vld [vmem:[%s417 + $0x818] sm:$0xff]
        %v824 = vld [vmem:[%s417 + $0x820] sm:$0xff]
        %v825 = vld [vmem:[%s417 + $0x828] sm:$0xff]
        %v826 = vld [vmem:[%s417 + $0x830] sm:$0xff]
        %v827 = vld [vmem:[%s417 + $0x838] sm:$0xff]
        %v828 = vld [vmem:[%s417 + $0x840] sm:$0xff]
        %v829 = vld [vmem:[%s417 + $0x848] sm:$0xff]
        %v830 = vld [vmem:[%s417 + $0x850] sm:$0xff]
        %v831 = vld [vmem:[%s417 + $0x858] sm:$0xff]
        %v832 = vld [vmem:[%s417 + $0x860] sm:$0xff]
        %v833 = vld [vmem:[%s417 + $0x868] sm:$0xff]
        %v834 = vld [vmem:[%s417 + $0x870] sm:$0xff]
        %v835 = vld [vmem:[%s417 + $0x878] sm:$0xff]
        %v836 = vld [vmem:[%s417 + $0x880] sm:$0xff]
        %v837 = vld [vmem:[%s417 + $0x888] sm:$0xff]
        %v838 = vld [vmem:[%s417 + $0x890] sm:$0xff]
        %v839 = vld [vmem:[%s417 + $0x898] sm:$0xff]
        %v840 = vld [vmem:[%s417 + $0x8a0] sm:$0xff]
        %v841 = vld [vmem:[%s417 + $0x8a8] sm:$0xff]
        %v842 = vld [vmem:[%s417 + $0x8b0] sm:$0xff]
        %v843 = vld [vmem:[%s417 + $0x8b8] sm:$0xff]
        %v844 = vld [vmem:[%s417 + $0x8c0] sm:$0xff]
        %v845 = vld [vmem:[%s417 + $0x8c8] sm:$0xff]
        %v846 = vld [vmem:[%s417 + $0x8d0] sm:$0xff]
        %v847 = vld [vmem:[%s417 + $0x8d8] sm:$0xff]
        %v848 = vld [vmem:[%s417 + $0x8e0] sm:$0xff]
        %v849 = vld [vmem:[%s417 + $0x8e8] sm:$0xff]
        %v850 = vld [vmem:[%s417 + $0x8f0] sm:$0xff]
        %v851 = vld [vmem:[%s417 + $0x8f8] sm:$0xff]
        %v852 = vld [vmem:[%s417 + $0x900] sm:$0xff]
        %v853 = vld [vmem:[%s417 + $0x908] sm:$0xff]
        %v854 = vld [vmem:[%s417 + $0x910] sm:$0xff]
        %v855 = vld [vmem:[%s417 + $0x918] sm:$0xff]
        %v856 = vld [vmem:[%s417 + $0x920] sm:$0xff]
        %v857 = vld [vmem:[%s417 + $0x928] sm:$0xff]
        %v858 = vld [vmem:[%s417 + $0x930] sm:$0xff]
        %v859 = vld [vmem:[%s417 + $0x938] sm:$0xff]
        %v860 = vld [vmem:[%s417 + $0x940] sm:$0xff]
        %v861 = vld [vmem:[%s417 + $0x948] sm:$0xff]
        %v862 = vld [vmem:[%s417 + $0x950] sm:$0xff]
        %v863 = vld [vmem:[%s417 + $0x958] sm:$0xff]
        %v864 = vld [vmem:[%s417 + $0x960] sm:$0xff]
        %v865 = vld [vmem:[%s417 + $0x968] sm:$0xff]
        %v866 = vld [vmem:[%s417 + $0x970] sm:$0xff]
        %v867 = vld [vmem:[%s417 + $0x978] sm:$0xff]
        %v868 = vld [vmem:[%s417 + $0x980] sm:$0xff]
        %v869 = vld [vmem:[%s417 + $0x988] sm:$0xff]
        %v870 = vld [vmem:[%s417 + $0x990] sm:$0xff]
        %v871 = vld [vmem:[%s417 + $0x998] sm:$0xff]
        %v872 = vld [vmem:[%s417 + $0x9a0] sm:$0xff]
        %v873 = vld [vmem:[%s417 + $0x9a8] sm:$0xff]
        %v874 = vld [vmem:[%s417 + $0x9b0] sm:$0xff]
        %v875 = vld [vmem:[%s417 + $0x9b8] sm:$0xff]
        %v876 = vld [vmem:[%s417 + $0x9c0] sm:$0xff]
        %v877 = vld [vmem:[%s417 + $0x9c8] sm:$0xff]
        %v878 = vld [vmem:[%s417 + $0x9d0] sm:$0xff]
        %v879 = vld [vmem:[%s417 + $0x9d8] sm:$0xff]
        %v880 = vld [vmem:[%s417 + $0x9e0] sm:$0xff]
        %v881 = vld [vmem:[%s417 + $0x9e8] sm:$0xff]
        %v882 = vld [vmem:[%s417 + $0x9f0] sm:$0xff]
        %v883 = vld [vmem:[%s417 + $0x9f8] sm:$0xff]
        %v884 = vld [vmem:[%s417 + $0xa00] sm:$0xff]
        %v885 = vld [vmem:[%s417 + $0xa08] sm:$0xff]
        %v886 = vld [vmem:[%s417 + $0xa10] sm:$0xff]
        %v887 = vld [vmem:[%s417 + $0xa18] sm:$0xff]
        %v888 = vld [vmem:[%s417 + $0xa20] sm:$0xff]
        %v889 = vld [vmem:[%s417 + $0xa28] sm:$0xff]
        %v890 = vld [vmem:[%s417 + $0xa30] sm:$0xff]
        %v891 = vld [vmem:[%s417 + $0xa38] sm:$0xff]
        %v892 = vld [vmem:[%s417 + $0xa40] sm:$0xff]
        %v893 = vld [vmem:[%s417 + $0xa48] sm:$0xff]
        %v894 = vld [vmem:[%s417 + $0xa50] sm:$0xff]
        %v895 = vld [vmem:[%s417 + $0xa58] sm:$0xff]
        %v896 = vld [vmem:[%s417 + $0xa60] sm:$0xff]
        %v897 = vld [vmem:[%s417 + $0xa68] sm:$0xff]
        %v898 = vld [vmem:[%s417 + $0xa70] sm:$0xff]
        %v899 = vld [vmem:[%s417 + $0xa78] sm:$0xff]
        %v900 = vld [vmem:[%s417 + $0xa80] sm:$0xff]
        %v901 = vld [vmem:[%s417 + $0xa88] sm:$0xff]
        %v902 = vld [vmem:[%s417 + $0xa90] sm:$0xff]
        %v903 = vld [vmem:[%s417 + $0xa98] sm:$0xff]
        %v904 = vld [vmem:[%s417 + $0xaa0] sm:$0xff]
        %v905 = vld [vmem:[%s417 + $0xaa8] sm:$0xff]
        %v906 = vld [vmem:[%s417 + $0xab0] sm:$0xff]
        %v907 = vld [vmem:[%s417 + $0xab8] sm:$0xff]
        %v908 = vld [vmem:[%s417 + $0xac0] sm:$0xff]
        %v909 = vld [vmem:[%s417 + $0xac8] sm:$0xff]
        %v910 = vld [vmem:[%s417 + $0xad0] sm:$0xff]
        %v911 = vld [vmem:[%s417 + $0xad8] sm:$0xff]
        %v912 = vld [vmem:[%s417 + $0xae0] sm:$0xff]
        %v913 = vld [vmem:[%s417 + $0xae8] sm:$0xff]
        %v914 = vld [vmem:[%s417 + $0xaf0] sm:$0xff]
        %v915 = vld [vmem:[%s417 + $0xaf8] sm:$0xff]
        %v916 = vld [vmem:[%s417 + $0xb00] sm:$0xff]
        %v917 = vld [vmem:[%s417 + $0xb08] sm:$0xff]
        %v918 = vld [vmem:[%s417 + $0xb10] sm:$0xff]
        %v919 = vld [vmem:[%s417 + $0xb18] sm:$0xff]
        %v920 = vld [vmem:[%s417 + $0xb20] sm:$0xff]
        %v921 = vld [vmem:[%s417 + $0xb28] sm:$0xff]
        %v922 = vld [vmem:[%s417 + $0xb30] sm:$0xff]
        %v923 = vld [vmem:[%s417 + $0xb38] sm:$0xff]
        %v924 = vld [vmem:[%s417 + $0xb40] sm:$0xff]
        %v925 = vld [vmem:[%s417 + $0xb48] sm:$0xff]
        %v926 = vld [vmem:[%s417 + $0xb50] sm:$0xff]
        %v927 = vld [vmem:[%s417 + $0xb58] sm:$0xff]
        %v928 = vld [vmem:[%s417 + $0xb60] sm:$0xff]
        %v929 = vld [vmem:[%s417 + $0xb68] sm:$0xff]
        %v930 = vld [vmem:[%s417 + $0xb70] sm:$0xff]
        %v931 = vld [vmem:[%s417 + $0xb78] sm:$0xff]
        %v932 = vld [vmem:[%s417 + $0xb80] sm:$0xff]
        %v933 = vld [vmem:[%s417 + $0xb88] sm:$0xff]
        %v934 = vld [vmem:[%s417 + $0xb90] sm:$0xff]
        %v935 = vld [vmem:[%s417 + $0xb98] sm:$0xff]
        %v936 = vld [vmem:[%s417 + $0xba0] sm:$0xff]
        %v937 = vld [vmem:[%s417 + $0xba8] sm:$0xff]
        %v938 = vld [vmem:[%s417 + $0xbb0] sm:$0xff]
        %v939 = vld [vmem:[%s417 + $0xbb8] sm:$0xff]
        %v940 = vld [vmem:[%s417 + $0xbc0] sm:$0xff]
        %v941 = vld [vmem:[%s417 + $0xbc8] sm:$0xff]
        %v942 = vld [vmem:[%s417 + $0xbd0] sm:$0xff]
        %v943 = vld [vmem:[%s417 + $0xbd8] sm:$0xff]
        %v944 = vld [vmem:[%s417 + $0xbe0] sm:$0xff]
        %v945 = vld [vmem:[%s417 + $0xbe8] sm:$0xff]
        %v946 = vld [vmem:[%s417 + $0xbf0] sm:$0xff]
        %v947 = vld [vmem:[%s417 + $0xbf8] sm:$0xff]
        %v948 = vld [vmem:[%s417 + $0xc00] sm:$0xff]
        %v949 = vld [vmem:[%s417 + $0xc08] sm:$0xff]
        %v950 = vld [vmem:[%s417 + $0xc10] sm:$0xff]
        %v951 = vld [vmem:[%s417 + $0xc18] sm:$0xff]
        %v952 = vld [vmem:[%s417 + $0xc20] sm:$0xff]
        %v953 = vld [vmem:[%s417 + $0xc28] sm:$0xff]
        %v954 = vld [vmem:[%s417 + $0xc30] sm:$0xff]
        %v955 = vld [vmem:[%s417 + $0xc38] sm:$0xff]
        %v956 = vld [vmem:[%s417 + $0xc40] sm:$0xff]
        %v957 = vld [vmem:[%s417 + $0xc48] sm:$0xff]
        %v958 = vld [vmem:[%s417 + $0xc50] sm:$0xff]
        %v959 = vld [vmem:[%s417 + $0xc58] sm:$0xff]
        %v960 = vld [vmem:[%s417 + $0xc60] sm:$0xff]
        %v961 = vld [vmem:[%s417 + $0xc68] sm:$0xff]
        %v962 = vld [vmem:[%s417 + $0xc70] sm:$0xff]
        %v963 = vld [vmem:[%s417 + $0xc78] sm:$0xff]
        %v964 = vld [vmem:[%s417 + $0xc80] sm:$0xff]
        %v965 = vld [vmem:[%s417 + $0xc88] sm:$0xff]
        %v966 = vld [vmem:[%s417 + $0xc90] sm:$0xff]
        %v967 = vld [vmem:[%s417 + $0xc98] sm:$0xff]
        %v968 = vld [vmem:[%s417 + $0xca0] sm:$0xff]
        %v969 = vld [vmem:[%s417 + $0xca8] sm:$0xff]
        %v970 = vld [vmem:[%s417 + $0xcb0] sm:$0xff]
        %v971 = vld [vmem:[%s417 + $0xcb8] sm:$0xff]
        %v972 = vld [vmem:[%s417 + $0xcc0] sm:$0xff]
        %v973 = vld [vmem:[%s417 + $0xcc8] sm:$0xff]
        %v974 = vld [vmem:[%s417 + $0xcd0] sm:$0xff]
        %v975 = vld [vmem:[%s417 + $0xcd8] sm:$0xff]
        %v976 = vld [vmem:[%s417 + $0xce0] sm:$0xff]
        %v977 = vld [vmem:[%s417 + $0xce8] sm:$0xff]
        %v978 = vld [vmem:[%s417 + $0xcf0] sm:$0xff]
        %v979 = vld [vmem:[%s417 + $0xcf8] sm:$0xff]
        %v980 = vld [vmem:[%s417 + $0xd00] sm:$0xff]
        %v981 = vld [vmem:[%s417 + $0xd08] sm:$0xff]
        %v982 = vld [vmem:[%s417 + $0xd10] sm:$0xff]
        %v983 = vld [vmem:[%s417 + $0xd18] sm:$0xff]
        %v984 = vld [vmem:[%s417 + $0xd20] sm:$0xff]
        %v985 = vld [vmem:[%s417 + $0xd28] sm:$0xff]
        %v986 = vld [vmem:[%s417 + $0xd30] sm:$0xff]
        %v987 = vld [vmem:[%s417 + $0xd38] sm:$0xff]
        %v988 = vld [vmem:[%s417 + $0xd40] sm:$0xff]
        %v989 = vld [vmem:[%s417 + $0xd48] sm:$0xff]
        %v990 = vld [vmem:[%s417 + $0xd50] sm:$0xff]
        %v991 = vld [vmem:[%s417 + $0xd58] sm:$0xff]
        %v992 = vld [vmem:[%s417 + $0xd60] sm:$0xff]
        %v993 = vld [vmem:[%s417 + $0xd68] sm:$0xff]
        %v994 = vld [vmem:[%s417 + $0xd70] sm:$0xff]
        %v995 = vld [vmem:[%s417 + $0xd78] sm:$0xff]
        %v996 = vld [vmem:[%s417 + $0xd80] sm:$0xff]
        %v997 = vld [vmem:[%s417 + $0xd88] sm:$0xff]
        %v998 = vld [vmem:[%s417 + $0xd90] sm:$0xff]
        %v999 = vld [vmem:[%s417 + $0xd98] sm:$0xff]
        %v1000 = vld [vmem:[%s417 + $0xda0] sm:$0xff]
        %v1001 = vld [vmem:[%s417 + $0xda8] sm:$0xff]
        %v1002 = vld [vmem:[%s417 + $0xdb0] sm:$0xff]
        %v1003 = vld [vmem:[%s417 + $0xdb8] sm:$0xff]
        %v1004 = vld [vmem:[%s417 + $0xdc0] sm:$0xff]
        %v1005 = vld [vmem:[%s417 + $0xdc8] sm:$0xff]
        %v1006 = vld [vmem:[%s417 + $0xdd0] sm:$0xff]
        %v1007 = vld [vmem:[%s417 + $0xdd8] sm:$0xff]
        %v1008 = vld [vmem:[%s417 + $0xde0] sm:$0xff]
        %v1009 = vld [vmem:[%s417 + $0xde8] sm:$0xff]
        %v1010 = vld [vmem:[%s417 + $0xdf0] sm:$0xff]
        %v1011 = vld [vmem:[%s417 + $0xdf8] sm:$0xff]
        %v1012 = vld [vmem:[%s417 + $0xe00] sm:$0xff]
        %v1013 = vld [vmem:[%s417 + $0xe08] sm:$0xff]
        %v1014 = vld [vmem:[%s417 + $0xe10] sm:$0xff]
        %v1015 = vld [vmem:[%s417 + $0xe18] sm:$0xff]
        %v1016 = vld [vmem:[%s417 + $0xe20] sm:$0xff]
        %v1017 = vld [vmem:[%s417 + $0xe28] sm:$0xff]
        %v1018 = vld [vmem:[%s417 + $0xe30] sm:$0xff]
        %v1019 = vld [vmem:[%s417 + $0xe38] sm:$0xff]
        %v1020 = vld [vmem:[%s417 + $0xe40] sm:$0xff]
        %v1021 = vld [vmem:[%s417 + $0xe48] sm:$0xff]
        %v1022 = vld [vmem:[%s417 + $0xe50] sm:$0xff]
        %v1023 = vld [vmem:[%s417 + $0xe58] sm:$0xff]
        %v1024 = vld [vmem:[%s417 + $0xe60] sm:$0xff]
        %v1025 = vld [vmem:[%s417 + $0xe68] sm:$0xff]
        %v1026 = vld [vmem:[%s417 + $0xe70] sm:$0xff]
        %v1027 = vld [vmem:[%s417 + $0xe78] sm:$0xff]
        %v1028 = vld [vmem:[%s417 + $0xe80] sm:$0xff]
        %v1029 = vld [vmem:[%s417 + $0xe88] sm:$0xff]
        %v1030 = vld [vmem:[%s417 + $0xe90] sm:$0xff]
        %v1031 = vld [vmem:[%s417 + $0xe98] sm:$0xff]
        %v1032 = vld [vmem:[%s417 + $0xea0] sm:$0xff]
        %v1033 = vld [vmem:[%s417 + $0xea8] sm:$0xff]
        %v1034 = vld [vmem:[%s417 + $0xeb0] sm:$0xff]
        %v1035 = vld [vmem:[%s417 + $0xeb8] sm:$0xff]
        %v1036 = vld [vmem:[%s417 + $0xec0] sm:$0xff]
        %v1037 = vld [vmem:[%s417 + $0xec8] sm:$0xff]
        %v1038 = vld [vmem:[%s417 + $0xed0] sm:$0xff]
        %v1039 = vld [vmem:[%s417 + $0xed8] sm:$0xff]
        %v1040 = vld [vmem:[%s417 + $0xee0] sm:$0xff]
        %v1041 = vld [vmem:[%s417 + $0xee8] sm:$0xff]
        %v1042 = vld [vmem:[%s417 + $0xef0] sm:$0xff]
        %v1043 = vld [vmem:[%s417 + $0xef8] sm:$0xff]
        %v1044 = vld [vmem:[%s417 + $0xf00] sm:$0xff]
        %v1045 = vld [vmem:[%s417 + $0xf08] sm:$0xff]
        %v1046 = vld [vmem:[%s417 + $0xf10] sm:$0xff]
        %v1047 = vld [vmem:[%s417 + $0xf18] sm:$0xff]
        %v1048 = vld [vmem:[%s417 + $0xf20] sm:$0xff]
        %v1049 = vld [vmem:[%s417 + $0xf28] sm:$0xff]
        %v1050 = vld [vmem:[%s417 + $0xf30] sm:$0xff]
        %v1051 = vld [vmem:[%s417 + $0xf38] sm:$0xff]
        %v1052 = vld [vmem:[%s417 + $0xf40] sm:$0xff]
        %v1053 = vld [vmem:[%s417 + $0xf48] sm:$0xff]
        %v1054 = vld [vmem:[%s417 + $0xf50] sm:$0xff]
        %v1055 = vld [vmem:[%s417 + $0xf58] sm:$0xff]
        %v1056 = vld [vmem:[%s417 + $0xf60] sm:$0xff]
        %v1057 = vld [vmem:[%s417 + $0xf68] sm:$0xff]
        %v1058 = vld [vmem:[%s417 + $0xf70] sm:$0xff]
        %v1059 = vld [vmem:[%s417 + $0xf78] sm:$0xff]
        %v1060 = vld [vmem:[%s417 + $0xf80] sm:$0xff]
        %v1061 = vld [vmem:[%s417 + $0xf88] sm:$0xff]
        %v1062 = vld [vmem:[%s417 + $0xf90] sm:$0xff]
        %v1063 = vld [vmem:[%s417 + $0xf98] sm:$0xff]
        %v1064 = vld [vmem:[%s417 + $0xfa0] sm:$0xff]
        %v1065 = vld [vmem:[%s417 + $0xfa8] sm:$0xff]
        %v1066 = vld [vmem:[%s417 + $0xfb0] sm:$0xff]
        %v1067 = vld [vmem:[%s417 + $0xfb8] sm:$0xff]
        %v1068 = vld [vmem:[%s417 + $0xfc0] sm:$0xff]
        %v1069 = vld [vmem:[%s417 + $0xfc8] sm:$0xff]
        %v1070 = vld [vmem:[%s417 + $0xfd0] sm:$0xff]
        %v1071 = vld [vmem:[%s417 + $0xfd8] sm:$0xff]
        %v1072 = vld [vmem:[%s417 + $0xfe0] sm:$0xff]
        %v1073 = vld [vmem:[%s417 + $0xfe8] sm:$0xff]
        %v1074 = vld [vmem:[%s417 + $0xff0] sm:$0xff]
        %v1075 = vld [vmem:[%s417 + $0xff8] sm:$0xff]
        %v1076 = vld [vmem:[%s417 + $0x1000] sm:$0xff]
        %v1077 = vld [vmem:[%s417 + $0x1008] sm:$0xff]
        %v1078 = vld [vmem:[%s417 + $0x1010] sm:$0xff]
        %v1079 = vld [vmem:[%s417 + $0x1018] sm:$0xff]
        %v1080 = vld [vmem:[%s417 + $0x1020] sm:$0xff]
        %v1081 = vld [vmem:[%s417 + $0x1028] sm:$0xff]
        %v1082 = vld [vmem:[%s417 + $0x1030] sm:$0xff]
        %v1083 = vld [vmem:[%s417 + $0x1038] sm:$0xff]
        %v1084 = vld [vmem:[%s417 + $0x1040] sm:$0xff]
        %v1085 = vld [vmem:[%s417 + $0x1048] sm:$0xff]
        %v1086 = vld [vmem:[%s417 + $0x1050] sm:$0xff]
        %v1087 = vld [vmem:[%s417 + $0x1058] sm:$0xff]
        %v1088 = vld [vmem:[%s417 + $0x1060] sm:$0xff]
        %v1089 = vld [vmem:[%s417 + $0x1068] sm:$0xff]
        %v1090 = vld [vmem:[%s417 + $0x1070] sm:$0xff]
        %v1091 = vld [vmem:[%s417 + $0x1078] sm:$0xff]
        %v1092 = vld [vmem:[%s417 + $0x1080] sm:$0xff]
        %v1093 = vld [vmem:[%s417 + $0x1088] sm:$0xff]
        %v1094 = vld [vmem:[%s417 + $0x1090] sm:$0xff]
        %v1095 = vld [vmem:[%s417 + $0x1098] sm:$0xff]
        %v1096 = vld [vmem:[%s417 + $0x10a0] sm:$0xff]
        %v1097 = vld [vmem:[%s417 + $0x10a8] sm:$0xff]
        %v1098 = vld [vmem:[%s417 + $0x10b0] sm:$0xff]
        %v1099 = vld [vmem:[%s417 + $0x10b8] sm:$0xff]
        %v1100 = vld [vmem:[%s417 + $0x10c0] sm:$0xff]
        %v1101 = vld [vmem:[%s417 + $0x10c8] sm:$0xff]
        %v1102 = vld [vmem:[%s417 + $0x10d0] sm:$0xff]
        %v1103 = vld [vmem:[%s417 + $0x10d8] sm:$0xff]
        %v1104 = vld [vmem:[%s417 + $0x10e0] sm:$0xff]
        %v1105 = vld [vmem:[%s417 + $0x10e8] sm:$0xff]
        %v1106 = vld [vmem:[%s417 + $0x10f0] sm:$0xff]
        %v1107 = vld [vmem:[%s417 + $0x10f8] sm:$0xff]
        %v1108 = vld [vmem:[%s417 + $0x1100] sm:$0xff]
        %v1109 = vld [vmem:[%s417 + $0x1108] sm:$0xff]
        %v1110 = vld [vmem:[%s417 + $0x1110] sm:$0xff]
        %v1111 = vld [vmem:[%s417 + $0x1118] sm:$0xff]
        %v1112 = vld [vmem:[%s417 + $0x1120] sm:$0xff]
        %v1113 = vld [vmem:[%s417 + $0x1128] sm:$0xff]
        %v1114 = vld [vmem:[%s417 + $0x1130] sm:$0xff]
        %v1115 = vld [vmem:[%s417 + $0x1138] sm:$0xff]
        %v1116 = vld [vmem:[%s417 + $0x1140] sm:$0xff]
        %v1117 = vld [vmem:[%s417 + $0x1148] sm:$0xff]
        %v1118 = vld [vmem:[%s417 + $0x1150] sm:$0xff]
        %v1119 = vld [vmem:[%s417 + $0x1158] sm:$0xff]
        %v1120 = vld [vmem:[%s417 + $0x1160] sm:$0xff]
        %v1121 = vld [vmem:[%s417 + $0x1168] sm:$0xff]
        %v1122 = vld [vmem:[%s417 + $0x1170] sm:$0xff]
        %v1123 = vld [vmem:[%s417 + $0x1178] sm:$0xff]
        %v1124 = vld [vmem:[%s417 + $0x1180] sm:$0xff]
        %v1125 = vld [vmem:[%s417 + $0x1188] sm:$0xff]
        %v1126 = vld [vmem:[%s417 + $0x1190] sm:$0xff]
        %v1127 = vld [vmem:[%s417 + $0x1198] sm:$0xff]
        %v1128 = vld [vmem:[%s417 + $0x11a0] sm:$0xff]
        %v1129 = vld [vmem:[%s417 + $0x11a8] sm:$0xff]
        %v1130 = vld [vmem:[%s417 + $0x11b0] sm:$0xff]
        %v1131 = vld [vmem:[%s417 + $0x11b8] sm:$0xff]
        %v1132 = vld [vmem:[%s417 + $0x11c0] sm:$0xff]
        %v1133 = vld [vmem:[%s417 + $0x11c8] sm:$0xff]
        %v1134 = vld [vmem:[%s417 + $0x11d0] sm:$0xff]
        %v1135 = vld [vmem:[%s417 + $0x11d8] sm:$0xff]
        %v1136 = vld [vmem:[%s417 + $0x11e0] sm:$0xff]
        %v1137 = vld [vmem:[%s417 + $0x11e8] sm:$0xff]
        %v1138 = vld [vmem:[%s417 + $0x11f0] sm:$0xff]
        %v1139 = vld [vmem:[%s417 + $0x11f8] sm:$0xff]
        %v1140 = vld [vmem:[%s417 + $0x1200] sm:$0xff]
        %v1141 = vld [vmem:[%s417 + $0x1208] sm:$0xff]
        %v1142 = vld [vmem:[%s417 + $0x1210] sm:$0xff]
        %v1143 = vld [vmem:[%s417 + $0x1218] sm:$0xff]
        %v1144 = vld [vmem:[%s417 + $0x1220] sm:$0xff]
        %v1145 = vld [vmem:[%s417 + $0x1228] sm:$0xff]
        %v1146 = vld [vmem:[%s417 + $0x1230] sm:$0xff]
        %v1147 = vld [vmem:[%s417 + $0x1238] sm:$0xff]
        %v1148 = vld [vmem:[%s417 + $0x1240] sm:$0xff]
        %v1149 = vld [vmem:[%s417 + $0x1248] sm:$0xff]
        %v1150 = vld [vmem:[%s417 + $0x1250] sm:$0xff]
        %v1151 = vld [vmem:[%s417 + $0x1258] sm:$0xff]
        %v1152 = vld [vmem:[%s417 + $0x1260] sm:$0xff]
        %v1153 = vld [vmem:[%s417 + $0x1268] sm:$0xff]
        %v1154 = vld [vmem:[%s417 + $0x1270] sm:$0xff]
        %v1155 = vld [vmem:[%s417 + $0x1278] sm:$0xff]
        %v1156 = vld [vmem:[%s417 + $0x1280] sm:$0xff]
        %v1157 = vld [vmem:[%s417 + $0x1288] sm:$0xff]
        %v1158 = vld [vmem:[%s417 + $0x1290] sm:$0xff]
        %v1159 = vld [vmem:[%s417 + $0x1298] sm:$0xff]
        %v1160 = vld [vmem:[%s417 + $0x12a0] sm:$0xff]
        %v1161 = vld [vmem:[%s417 + $0x12a8] sm:$0xff]
        %v1162 = vld [vmem:[%s417 + $0x12b0] sm:$0xff]
        %v1163 = vld [vmem:[%s417 + $0x12b8] sm:$0xff]
        %v1164 = vld [vmem:[%s417 + $0x12c0] sm:$0xff]
        %v1165 = vld [vmem:[%s417 + $0x12c8] sm:$0xff]
        %v1166 = vld [vmem:[%s417 + $0x12d0] sm:$0xff]
        %v1167 = vld [vmem:[%s417 + $0x12d8] sm:$0xff]
        %v1168 = vld [vmem:[%s417 + $0x12e0] sm:$0xff]
        %v1169 = vld [vmem:[%s417 + $0x12e8] sm:$0xff]
        %v1170 = vld [vmem:[%s417 + $0x12f0] sm:$0xff]
        %v1171 = vld [vmem:[%s417 + $0x12f8] sm:$0xff]
        %v1172 = vld [vmem:[%s417 + $0x1300] sm:$0xff]
        %v1173 = vld [vmem:[%s417 + $0x1308] sm:$0xff]
        %v1174 = vld [vmem:[%s417 + $0x1310] sm:$0xff]
        %v1175 = vld [vmem:[%s417 + $0x1318] sm:$0xff]
        %v1176 = vld [vmem:[%s417 + $0x1320] sm:$0xff]
        %v1177 = vld [vmem:[%s417 + $0x1328] sm:$0xff]
        %v1178 = vld [vmem:[%s417 + $0x1330] sm:$0xff]
        %v1179 = vld [vmem:[%s417 + $0x1338] sm:$0xff]
        %v1180 = vld [vmem:[%s417 + $0x1340] sm:$0xff]
        %v1181 = vld [vmem:[%s417 + $0x1348] sm:$0xff]
        %v1182 = vld [vmem:[%s417 + $0x1350] sm:$0xff]
        %v1183 = vld [vmem:[%s417 + $0x1358] sm:$0xff]
        %v1184 = vld [vmem:[%s417 + $0x1360] sm:$0xff]
        %v1185 = vld [vmem:[%s417 + $0x1368] sm:$0xff]
        %v1186 = vld [vmem:[%s417 + $0x1370] sm:$0xff]
        %v1187 = vld [vmem:[%s417 + $0x1378] sm:$0xff]
        %v1188 = vld [vmem:[%s417 + $0x1380] sm:$0xff]
        %v1189 = vld [vmem:[%s417 + $0x1388] sm:$0xff]
        %v1190 = vld [vmem:[%s417 + $0x1390] sm:$0xff]
        %v1191 = vld [vmem:[%s417 + $0x1398] sm:$0xff]
        %v1192 = vld [vmem:[%s417 + $0x13a0] sm:$0xff]
        %v1193 = vld [vmem:[%s417 + $0x13a8] sm:$0xff]
        %v1194 = vld [vmem:[%s417 + $0x13b0] sm:$0xff]
        %v1195 = vld [vmem:[%s417 + $0x13b8] sm:$0xff]
        %v1196 = vld [vmem:[%s417 + $0x13c0] sm:$0xff]
        %v1197 = vld [vmem:[%s417 + $0x13c8] sm:$0xff]
        %v1198 = vld [vmem:[%s417 + $0x13d0] sm:$0xff]
        %v1199 = vld [vmem:[%s417 + $0x13d8] sm:$0xff]
        %v1200 = vld [vmem:[%s417 + $0x13e0] sm:$0xff]
        %v1201 = vld [vmem:[%s417 + $0x13e8] sm:$0xff]
        %v1202 = vld [vmem:[%s417 + $0x13f0] sm:$0xff]
        %v1203 = vld [vmem:[%s417 + $0x13f8] sm:$0xff]
        %v1204 = vld [vmem:[%s417 + $0x1400] sm:$0xff]
        %v1205 = vld [vmem:[%s417 + $0x1408] sm:$0xff]
        %v1206 = vld [vmem:[%s417 + $0x1410] sm:$0xff]
        %v1207 = vld [vmem:[%s417 + $0x1418] sm:$0xff]
        %v1208 = vld [vmem:[%s417 + $0x1420] sm:$0xff]
        %v1209 = vld [vmem:[%s417 + $0x1428] sm:$0xff]
        %v1210 = vld [vmem:[%s417 + $0x1430] sm:$0xff]
        %v1211 = vld [vmem:[%s417 + $0x1438] sm:$0xff]
        %v1212 = vld [vmem:[%s417 + $0x1440] sm:$0xff]
        %v1213 = vld [vmem:[%s417 + $0x1448] sm:$0xff]
        %v1214 = vld [vmem:[%s417 + $0x1450] sm:$0xff]
        %v1215 = vld [vmem:[%s417 + $0x1458] sm:$0xff]
        %v1216 = vld [vmem:[%s417 + $0x1460] sm:$0xff]
        %v1217 = vld [vmem:[%s417 + $0x1468] sm:$0xff]
        %v1218 = vld [vmem:[%s417 + $0x1470] sm:$0xff]
        %v1219 = vld [vmem:[%s417 + $0x1478] sm:$0xff]
        %v1220 = vld [vmem:[%s417 + $0x1480] sm:$0xff]
        %v1221 = vld [vmem:[%s417 + $0x1488] sm:$0xff]
        %v1222 = vld [vmem:[%s417 + $0x1490] sm:$0xff]
        %v1223 = vld [vmem:[%s417 + $0x1498] sm:$0xff]
        %v1224 = vld [vmem:[%s417 + $0x14a0] sm:$0xff]
        %v1225 = vld [vmem:[%s417 + $0x14a8] sm:$0xff]
        %v1226 = vld [vmem:[%s417 + $0x14b0] sm:$0xff]
        %v1227 = vld [vmem:[%s417 + $0x14b8] sm:$0xff]
        %v1228 = vld [vmem:[%s417 + $0x14c0] sm:$0xff]
        %v1229 = vld [vmem:[%s417 + $0x14c8] sm:$0xff]
        %v1230 = vld [vmem:[%s417 + $0x14d0] sm:$0xff]
        %v1231 = vld [vmem:[%s417 + $0x14d8] sm:$0xff]
        %v1232 = vld [vmem:[%s417 + $0x14e0] sm:$0xff]
        %v1233 = vld [vmem:[%s417 + $0x14e8] sm:$0xff]
        %v1234 = vld [vmem:[%s417 + $0x14f0] sm:$0xff]
        %v1235 = vld [vmem:[%s417 + $0x14f8] sm:$0xff]
        %v1236 = vld [vmem:[%s417 + $0x1500] sm:$0xff]
        %v1237 = vld [vmem:[%s417 + $0x1508] sm:$0xff]
        %v1238 = vld [vmem:[%s417 + $0x1510] sm:$0xff]
        %v1239 = vld [vmem:[%s417 + $0x1518] sm:$0xff]
        %v1240 = vld [vmem:[%s417 + $0x1520] sm:$0xff]
        %v1241 = vld [vmem:[%s417 + $0x1528] sm:$0xff]
        %v1242 = vld [vmem:[%s417 + $0x1530] sm:$0xff]
        %v1243 = vld [vmem:[%s417 + $0x1538] sm:$0xff]
        %v1244 = vld [vmem:[%s417 + $0x1540] sm:$0xff]
        %v1245 = vld [vmem:[%s417 + $0x1548] sm:$0xff]
        %v1246 = vld [vmem:[%s417 + $0x1550] sm:$0xff]
        %v1247 = vld [vmem:[%s417 + $0x1558] sm:$0xff]
        %v1248 = vld [vmem:[%s417 + $0x1560] sm:$0xff]
        %v1249 = vld [vmem:[%s417 + $0x1568] sm:$0xff]
        %v1250 = vld [vmem:[%s417 + $0x1570] sm:$0xff]
        %v1251 = vld [vmem:[%s417 + $0x1578] sm:$0xff]
        %v1252 = vld [vmem:[%s417 + $0x1580] sm:$0xff]
        %v1253 = vld [vmem:[%s417 + $0x1588] sm:$0xff]
        %v1254 = vld [vmem:[%s417 + $0x1590] sm:$0xff]
        %v1255 = vld [vmem:[%s417 + $0x1598] sm:$0xff]
        %v1256 = vld [vmem:[%s417 + $0x15a0] sm:$0xff]
        %v1257 = vld [vmem:[%s417 + $0x15a8] sm:$0xff]
        %v1258 = vld [vmem:[%s417 + $0x15b0] sm:$0xff]
        %v1259 = vld [vmem:[%s417 + $0x15b8] sm:$0xff]
        %v1260 = vld [vmem:[%s417 + $0x15c0] sm:$0xff]
        %v1261 = vld [vmem:[%s417 + $0x15c8] sm:$0xff]
        %v1262 = vld [vmem:[%s417 + $0x15d0] sm:$0xff]
        %v1263 = vld [vmem:[%s417 + $0x15d8] sm:$0xff]
        %v1264 = vld [vmem:[%s417 + $0x15e0] sm:$0xff]
        %v1265 = vld [vmem:[%s417 + $0x15e8] sm:$0xff]
        %v1266 = vld [vmem:[%s417 + $0x15f0] sm:$0xff]
        %v1267 = vld [vmem:[%s417 + $0x15f8] sm:$0xff]
        %v1268 = vld [vmem:[%s417 + $0x1600] sm:$0xff]
        %v1269 = vld [vmem:[%s417 + $0x1608] sm:$0xff]
        %v1270 = vld [vmem:[%s417 + $0x1610] sm:$0xff]
        %v1271 = vld [vmem:[%s417 + $0x1618] sm:$0xff]
        %v1272 = vld [vmem:[%s417 + $0x1620] sm:$0xff]
        %v1273 = vld [vmem:[%s417 + $0x1628] sm:$0xff]
        %v1274 = vld [vmem:[%s417 + $0x1630] sm:$0xff]
        %v1275 = vld [vmem:[%s417 + $0x1638] sm:$0xff]
        %v1276 = vld [vmem:[%s417 + $0x1640] sm:$0xff]
        %v1277 = vld [vmem:[%s417 + $0x1648] sm:$0xff]
        %v1278 = vld [vmem:[%s417 + $0x1650] sm:$0xff]
        %v1279 = vld [vmem:[%s417 + $0x1658] sm:$0xff]
        %v1280 = vld [vmem:[%s417 + $0x1660] sm:$0xff]
        %v1281 = vld [vmem:[%s417 + $0x1668] sm:$0xff]
        %v1282 = vld [vmem:[%s417 + $0x1670] sm:$0xff]
        %v1283 = vld [vmem:[%s417 + $0x1678] sm:$0xff]
        %v1284 = vld [vmem:[%s417 + $0x1680] sm:$0xff]
        %v1285 = vld [vmem:[%s417 + $0x1688] sm:$0xff]
        %v1286 = vld [vmem:[%s417 + $0x1690] sm:$0xff]
        %v1287 = vld [vmem:[%s417 + $0x1698] sm:$0xff]
        %v1288 = vld [vmem:[%s417 + $0x16a0] sm:$0xff]
        %v1289 = vld [vmem:[%s417 + $0x16a8] sm:$0xff]
        %v1290 = vld [vmem:[%s417 + $0x16b0] sm:$0xff]
        %v1291 = vld [vmem:[%s417 + $0x16b8] sm:$0xff]
        %v1292 = vld [vmem:[%s417 + $0x16c0] sm:$0xff]
        %v1293 = vld [vmem:[%s417 + $0x16c8] sm:$0xff]
        %v1294 = vld [vmem:[%s417 + $0x16d0] sm:$0xff]
        %v1295 = vld [vmem:[%s417 + $0x16d8] sm:$0xff]
        %v1296 = vld [vmem:[%s417 + $0x16e0] sm:$0xff]
        %v1297 = vld [vmem:[%s417 + $0x16e8] sm:$0xff]
        %v1298 = vld [vmem:[%s417 + $0x16f0] sm:$0xff]
        %v1299 = vld [vmem:[%s417 + $0x16f8] sm:$0xff]
        %v1300 = vld [vmem:[%s417 + $0x1700] sm:$0xff]
        %v1301 = vld [vmem:[%s417 + $0x1708] sm:$0xff]
        %v1302 = vld [vmem:[%s417 + $0x1710] sm:$0xff]
        %v1303 = vld [vmem:[%s417 + $0x1718] sm:$0xff]
        %v1304 = vld [vmem:[%s417 + $0x1720] sm:$0xff]
        %v1305 = vld [vmem:[%s417 + $0x1728] sm:$0xff]
        %v1306 = vld [vmem:[%s417 + $0x1730] sm:$0xff]
        %v1307 = vld [vmem:[%s417 + $0x1738] sm:$0xff]
        %v1308 = vld [vmem:[%s417 + $0x1740] sm:$0xff]
        %v1309 = vld [vmem:[%s417 + $0x1748] sm:$0xff]
        %v1310 = vld [vmem:[%s417 + $0x1750] sm:$0xff]
        %v1311 = vld [vmem:[%s417 + $0x1758] sm:$0xff]
        %v1312 = vld [vmem:[%s417 + $0x1760] sm:$0xff]
        %v1313 = vld [vmem:[%s417 + $0x1768] sm:$0xff]
        %v1314 = vld [vmem:[%s417 + $0x1770] sm:$0xff]
        %v1315 = vld [vmem:[%s417 + $0x1778] sm:$0xff]
        %v1316 = vld [vmem:[%s417 + $0x1780] sm:$0xff]
        %v1317 = vld [vmem:[%s417 + $0x1788] sm:$0xff]
        %v1318 = vld [vmem:[%s417 + $0x1790] sm:$0xff]
        %v1319 = vld [vmem:[%s417 + $0x1798] sm:$0xff]
        %v1320 = vld [vmem:[%s417 + $0x17a0] sm:$0xff]
        %v1321 = vld [vmem:[%s417 + $0x17a8] sm:$0xff]
        %v1322 = vld [vmem:[%s417 + $0x17b0] sm:$0xff]
        %v1323 = vld [vmem:[%s417 + $0x17b8] sm:$0xff]
        %v1324 = vld [vmem:[%s417 + $0x17c0] sm:$0xff]
        %v1325 = vld [vmem:[%s417 + $0x17c8] sm:$0xff]
        %v1326 = vld [vmem:[%s417 + $0x17d0] sm:$0xff]
        %v1327 = vld [vmem:[%s417 + $0x17d8] sm:$0xff]
        %v1328 = vld [vmem:[%s417 + $0x17e0] sm:$0xff]
        %v1329 = vld [vmem:[%s417 + $0x17e8] sm:$0xff]
        %v1330 = vld [vmem:[%s417 + $0x17f0] sm:$0xff]
        %v1331 = vld [vmem:[%s417 + $0x17f8] sm:$0xff]
        %v1332 = vld [vmem:[%s417 + $0x1800] sm:$0xff]
        %v1333 = vld [vmem:[%s417 + $0x1808] sm:$0xff]
        %v1334 = vld [vmem:[%s417 + $0x1810] sm:$0xff]
        %v1335 = vld [vmem:[%s417 + $0x1818] sm:$0xff]
        %v1336 = vld [vmem:[%s417 + $0x1820] sm:$0xff]
        %v1337 = vld [vmem:[%s417 + $0x1828] sm:$0xff]
        %v1338 = vld [vmem:[%s417 + $0x1830] sm:$0xff]
        %v1339 = vld [vmem:[%s417 + $0x1838] sm:$0xff]
        %v1340 = vld [vmem:[%s417 + $0x1840] sm:$0xff]
        %v1341 = vld [vmem:[%s417 + $0x1848] sm:$0xff]
        %v1342 = vld [vmem:[%s417 + $0x1850] sm:$0xff]
        %v1343 = vld [vmem:[%s417 + $0x1858] sm:$0xff]
        %v1344 = vld [vmem:[%s417 + $0x1860] sm:$0xff]
        %v1345 = vld [vmem:[%s417 + $0x1868] sm:$0xff]
        %v1346 = vld [vmem:[%s417 + $0x1870] sm:$0xff]
        %v1347 = vld [vmem:[%s417 + $0x1878] sm:$0xff]
        %v1348 = vld [vmem:[%s417 + $0x1880] sm:$0xff]
        %v1349 = vld [vmem:[%s417 + $0x1888] sm:$0xff]
        %v1350 = vld [vmem:[%s417 + $0x1890] sm:$0xff]
        %v1351 = vld [vmem:[%s417 + $0x1898] sm:$0xff]
        %v1352 = vld [vmem:[%s417 + $0x18a0] sm:$0xff]
        %v1353 = vld [vmem:[%s417 + $0x18a8] sm:$0xff]
        %v1354 = vld [vmem:[%s417 + $0x18b0] sm:$0xff]
        %v1355 = vld [vmem:[%s417 + $0x18b8] sm:$0xff]
        %v1356 = vld [vmem:[%s417 + $0x18c0] sm:$0xff]
        %v1357 = vld [vmem:[%s417 + $0x18c8] sm:$0xff]
        %v1358 = vld [vmem:[%s417 + $0x18d0] sm:$0xff]
        %v1359 = vld [vmem:[%s417 + $0x18d8] sm:$0xff]
        %v1360 = vld [vmem:[%s417 + $0x18e0] sm:$0xff]
        %v1361 = vld [vmem:[%s417 + $0x18e8] sm:$0xff]
        %v1362 = vld [vmem:[%s417 + $0x18f0] sm:$0xff]
        %v1363 = vld [vmem:[%s417 + $0x18f8] sm:$0xff]
        %v1364 = vld [vmem:[%s417 + $0x1900] sm:$0xff]
        %v1365 = vld [vmem:[%s417 + $0x1908] sm:$0xff]
        %v1366 = vld [vmem:[%s417 + $0x1910] sm:$0xff]
        %v1367 = vld [vmem:[%s417 + $0x1918] sm:$0xff]
        %v1368 = vld [vmem:[%s417 + $0x1920] sm:$0xff]
        %v1369 = vld [vmem:[%s417 + $0x1928] sm:$0xff]
        %v1370 = vld [vmem:[%s417 + $0x1930] sm:$0xff]
        %v1371 = vld [vmem:[%s417 + $0x1938] sm:$0xff]
        %v1372 = vld [vmem:[%s417 + $0x1940] sm:$0xff]
        %v1373 = vld [vmem:[%s417 + $0x1948] sm:$0xff]
        %v1374 = vld [vmem:[%s417 + $0x1950] sm:$0xff]
        %v1375 = vld [vmem:[%s417 + $0x1958] sm:$0xff]
        %v1376 = vld [vmem:[%s417 + $0x1960] sm:$0xff]
        %v1377 = vld [vmem:[%s417 + $0x1968] sm:$0xff]
        %v1378 = vld [vmem:[%s417 + $0x1970] sm:$0xff]
        %v1379 = vld [vmem:[%s417 + $0x1978] sm:$0xff]
        %v1380 = vld [vmem:[%s417 + $0x1980] sm:$0xff]
        %v1381 = vld [vmem:[%s417 + $0x1988] sm:$0xff]
        %v1382 = vld [vmem:[%s417 + $0x1990] sm:$0xff]
        %v1383 = vld [vmem:[%s417 + $0x1998] sm:$0xff]
        %v1384 = vld [vmem:[%s417 + $0x19a0] sm:$0xff]
        %v1385 = vld [vmem:[%s417 + $0x19a8] sm:$0xff]
        %v1386 = vld [vmem:[%s417 + $0x19b0] sm:$0xff]
        %v1387 = vld [vmem:[%s417 + $0x19b8] sm:$0xff]
        %v1388 = vld [vmem:[%s417 + $0x19c0] sm:$0xff]
        %v1389 = vld [vmem:[%s417 + $0x19c8] sm:$0xff]
        %v1390 = vld [vmem:[%s417 + $0x19d0] sm:$0xff]
        %v1391 = vld [vmem:[%s417 + $0x19d8] sm:$0xff]
        %v1392 = vld [vmem:[%s417 + $0x19e0] sm:$0xff]
        %v1393 = vld [vmem:[%s417 + $0x19e8] sm:$0xff]
        %v1394 = vld [vmem:[%s417 + $0x19f0] sm:$0xff]
        %v1395 = vld [vmem:[%s417 + $0x19f8] sm:$0xff]
        %v1396 = vld [vmem:[%s417 + $0x1a00] sm:$0xff]
        %v1397 = vld [vmem:[%s417 + $0x1a08] sm:$0xff]
        %v1398 = vld [vmem:[%s417 + $0x1a10] sm:$0xff]
        %v1399 = vld [vmem:[%s417 + $0x1a18] sm:$0xff]
        %v1400 = vld [vmem:[%s417 + $0x1a20] sm:$0xff]
        %v1401 = vld [vmem:[%s417 + $0x1a28] sm:$0xff]
        %v1402 = vld [vmem:[%s417 + $0x1a30] sm:$0xff]
        %v1403 = vld [vmem:[%s417 + $0x1a38] sm:$0xff]
        %v1404 = vld [vmem:[%s417 + $0x1a40] sm:$0xff]
        %v1405 = vld [vmem:[%s417 + $0x1a48] sm:$0xff]
        %v1406 = vld [vmem:[%s417 + $0x1a50] sm:$0xff]
        %v1407 = vld [vmem:[%s417 + $0x1a58] sm:$0xff]
        %v1408 = vld [vmem:[%s417 + $0x1a60] sm:$0xff]
        %v1409 = vld [vmem:[%s417 + $0x1a68] sm:$0xff]
        %v1410 = vld [vmem:[%s417 + $0x1a70] sm:$0xff]
        %v1411 = vld [vmem:[%s417 + $0x1a78] sm:$0xff]
        %v1412 = vld [vmem:[%s417 + $0x1a80] sm:$0xff]
        %v1413 = vld [vmem:[%s417 + $0x1a88] sm:$0xff]
        %v1414 = vld [vmem:[%s417 + $0x1a90] sm:$0xff]
        %v1415 = vld [vmem:[%s417 + $0x1a98] sm:$0xff]
        %v1416 = vld [vmem:[%s417 + $0x1aa0] sm:$0xff]
        %v1417 = vld [vmem:[%s417 + $0x1aa8] sm:$0xff]
        %v1418 = vld [vmem:[%s417 + $0x1ab0] sm:$0xff]
        %v1419 = vld [vmem:[%s417 + $0x1ab8] sm:$0xff]
        %v1420 = vld [vmem:[%s417 + $0x1ac0] sm:$0xff]
        %v1421 = vld [vmem:[%s417 + $0x1ac8] sm:$0xff]
        %v1422 = vld [vmem:[%s417 + $0x1ad0] sm:$0xff]
        %v1423 = vld [vmem:[%s417 + $0x1ad8] sm:$0xff]
        %v1424 = vld [vmem:[%s417 + $0x1ae0] sm:$0xff]
        %v1425 = vld [vmem:[%s417 + $0x1ae8] sm:$0xff]
        %v1426 = vld [vmem:[%s417 + $0x1af0] sm:$0xff]
        %v1427 = vld [vmem:[%s417 + $0x1af8] sm:$0xff]
        %v1428 = vld [vmem:[%s417 + $0x1b00] sm:$0xff]
        %v1429 = vld [vmem:[%s417 + $0x1b08] sm:$0xff]
        %v1430 = vld [vmem:[%s417 + $0x1b10] sm:$0xff]
        %v1431 = vld [vmem:[%s417 + $0x1b18] sm:$0xff]
        %v1432 = vld [vmem:[%s417 + $0x1b20] sm:$0xff]
        %v1433 = vld [vmem:[%s417 + $0x1b28] sm:$0xff]
        %v1434 = vld [vmem:[%s417 + $0x1b30] sm:$0xff]
        %v1435 = vld [vmem:[%s417 + $0x1b38] sm:$0xff]
        %v1436 = vld [vmem:[%s417 + $0x1b40] sm:$0xff]
        %v1437 = vld [vmem:[%s417 + $0x1b48] sm:$0xff]
        %v1438 = vld [vmem:[%s417 + $0x1b50] sm:$0xff]
        %v1439 = vld [vmem:[%s417 + $0x1b58] sm:$0xff]
        %v1440 = vld [vmem:[%s417 + $0x1b60] sm:$0xff]
        %v1441 = vld [vmem:[%s417 + $0x1b68] sm:$0xff]
        %v1442 = vld [vmem:[%s417 + $0x1b70] sm:$0xff]
        %v1443 = vld [vmem:[%s417 + $0x1b78] sm:$0xff]
        %v1444 = vld [vmem:[%s417 + $0x1b80] sm:$0xff]
        %v1445 = vld [vmem:[%s417 + $0x1b88] sm:$0xff]
        %v1446 = vld [vmem:[%s417 + $0x1b90] sm:$0xff]
        %v1447 = vld [vmem:[%s417 + $0x1b98] sm:$0xff]
        %v1448 = vld [vmem:[%s417 + $0x1ba0] sm:$0xff]
        %v1449 = vld [vmem:[%s417 + $0x1ba8] sm:$0xff]
        %v1450 = vld [vmem:[%s417 + $0x1bb0] sm:$0xff]
        %v1451 = vld [vmem:[%s417 + $0x1bb8] sm:$0xff]
        %v1452 = vld [vmem:[%s417 + $0x1bc0] sm:$0xff]
        %v1453 = vld [vmem:[%s417 + $0x1bc8] sm:$0xff]
        %v1454 = vld [vmem:[%s417 + $0x1bd0] sm:$0xff]
        %v1455 = vld [vmem:[%s417 + $0x1bd8] sm:$0xff]
        %v1456 = vld [vmem:[%s417 + $0x1be0] sm:$0xff]
        %v1457 = vld [vmem:[%s417 + $0x1be8] sm:$0xff]
        %v1458 = vld [vmem:[%s417 + $0x1bf0] sm:$0xff]
        %v1459 = vld [vmem:[%s417 + $0x1bf8] sm:$0xff]
        %v1460 = vld [vmem:[%s417 + $0x1c00] sm:$0xff]
        %v1461 = vld [vmem:[%s417 + $0x1c08] sm:$0xff]
        %v1462 = vld [vmem:[%s417 + $0x1c10] sm:$0xff]
        %v1463 = vld [vmem:[%s417 + $0x1c18] sm:$0xff]
        %v1464 = vld [vmem:[%s417 + $0x1c20] sm:$0xff]
        %v1465 = vld [vmem:[%s417 + $0x1c28] sm:$0xff]
        %v1466 = vld [vmem:[%s417 + $0x1c30] sm:$0xff]
        %v1467 = vld [vmem:[%s417 + $0x1c38] sm:$0xff]
        %v1468 = vld [vmem:[%s417 + $0x1c40] sm:$0xff]
        %v1469 = vld [vmem:[%s417 + $0x1c48] sm:$0xff]
        %v1470 = vld [vmem:[%s417 + $0x1c50] sm:$0xff]
        %v1471 = vld [vmem:[%s417 + $0x1c58] sm:$0xff]
        %v1472 = vld [vmem:[%s417 + $0x1c60] sm:$0xff]
        %v1473 = vld [vmem:[%s417 + $0x1c68] sm:$0xff]
        %v1474 = vld [vmem:[%s417 + $0x1c70] sm:$0xff]
        %v1475 = vld [vmem:[%s417 + $0x1c78] sm:$0xff]
        %v1476 = vld [vmem:[%s417 + $0x1c80] sm:$0xff]
        %v1477 = vld [vmem:[%s417 + $0x1c88] sm:$0xff]
        %v1478 = vld [vmem:[%s417 + $0x1c90] sm:$0xff]
        %v1479 = vld [vmem:[%s417 + $0x1c98] sm:$0xff]
        %v1480 = vld [vmem:[%s417 + $0x1ca0] sm:$0xff]
        %v1481 = vld [vmem:[%s417 + $0x1ca8] sm:$0xff]
        %v1482 = vld [vmem:[%s417 + $0x1cb0] sm:$0xff]
        %v1483 = vld [vmem:[%s417 + $0x1cb8] sm:$0xff]
        %v1484 = vld [vmem:[%s417 + $0x1cc0] sm:$0xff]
        %v1485 = vld [vmem:[%s417 + $0x1cc8] sm:$0xff]
        %v1486 = vld [vmem:[%s417 + $0x1cd0] sm:$0xff]
        %v1487 = vld [vmem:[%s417 + $0x1cd8] sm:$0xff]
        %v1488 = vld [vmem:[%s417 + $0x1ce0] sm:$0xff]
        %v1489 = vld [vmem:[%s417 + $0x1ce8] sm:$0xff]
        %v1490 = vld [vmem:[%s417 + $0x1cf0] sm:$0xff]
        %v1491 = vld [vmem:[%s417 + $0x1cf8] sm:$0xff]
        %v1492 = vld [vmem:[%s417 + $0x1d00] sm:$0xff]
        %v1493 = vld [vmem:[%s417 + $0x1d08] sm:$0xff]
        %v1494 = vld [vmem:[%s417 + $0x1d10] sm:$0xff]
        %v1495 = vld [vmem:[%s417 + $0x1d18] sm:$0xff]
        %v1496 = vld [vmem:[%s417 + $0x1d20] sm:$0xff]
        %v1497 = vld [vmem:[%s417 + $0x1d28] sm:$0xff]
        %v1498 = vld [vmem:[%s417 + $0x1d30] sm:$0xff]
        %v1499 = vld [vmem:[%s417 + $0x1d38] sm:$0xff]
        %v1500 = vld [vmem:[%s417 + $0x1d40] sm:$0xff]
        %v1501 = vld [vmem:[%s417 + $0x1d48] sm:$0xff]
        %v1502 = vld [vmem:[%s417 + $0x1d50] sm:$0xff]
        %v1503 = vld [vmem:[%s417 + $0x1d58] sm:$0xff]
        %v1504 = vld [vmem:[%s417 + $0x1d60] sm:$0xff]
        %v1505 = vld [vmem:[%s417 + $0x1d68] sm:$0xff]
        %v1506 = vld [vmem:[%s417 + $0x1d70] sm:$0xff]
        %v1507 = vld [vmem:[%s417 + $0x1d78] sm:$0xff]
        %v1508 = vld [vmem:[%s417 + $0x1d80] sm:$0xff]
        %v1509 = vld [vmem:[%s417 + $0x1d88] sm:$0xff]
        %v1510 = vld [vmem:[%s417 + $0x1d90] sm:$0xff]
        %v1511 = vld [vmem:[%s417 + $0x1d98] sm:$0xff]
        %v1512 = vld [vmem:[%s417 + $0x1da0] sm:$0xff]
        %v1513 = vld [vmem:[%s417 + $0x1da8] sm:$0xff]
        %v1514 = vld [vmem:[%s417 + $0x1db0] sm:$0xff]
        %v1515 = vld [vmem:[%s417 + $0x1db8] sm:$0xff]
        %v1516 = vld [vmem:[%s417 + $0x1dc0] sm:$0xff]
        %v1517 = vld [vmem:[%s417 + $0x1dc8] sm:$0xff]
        %v1518 = vld [vmem:[%s417 + $0x1dd0] sm:$0xff]
        %v1519 = vld [vmem:[%s417 + $0x1dd8] sm:$0xff]
        %v1520 = vld [vmem:[%s417 + $0x1de0] sm:$0xff]
        %v1521 = vld [vmem:[%s417 + $0x1de8] sm:$0xff]
        %v1522 = vld [vmem:[%s417 + $0x1df0] sm:$0xff]
        %v1523 = vld [vmem:[%s417 + $0x1df8] sm:$0xff]
        %v1524 = vld [vmem:[%s417 + $0x1e00] sm:$0xff]
        %v1525 = vld [vmem:[%s417 + $0x1e08] sm:$0xff]
        %v1526 = vld [vmem:[%s417 + $0x1e10] sm:$0xff]
        %v1527 = vld [vmem:[%s417 + $0x1e18] sm:$0xff]
        %v1528 = vld [vmem:[%s417 + $0x1e20] sm:$0xff]
        %v1529 = vld [vmem:[%s417 + $0x1e28] sm:$0xff]
        %v1530 = vld [vmem:[%s417 + $0x1e30] sm:$0xff]
        %v1531 = vld [vmem:[%s417 + $0x1e38] sm:$0xff]
        %v1532 = vld [vmem:[%s417 + $0x1e40] sm:$0xff]
        %v1533 = vld [vmem:[%s417 + $0x1e48] sm:$0xff]
        %v1534 = vld [vmem:[%s417 + $0x1e50] sm:$0xff]
        %v1535 = vld [vmem:[%s417 + $0x1e58] sm:$0xff]
        %v1536 = vld [vmem:[%s417 + $0x1e60] sm:$0xff]
        %v1537 = vld [vmem:[%s417 + $0x1e68] sm:$0xff]
        %v1538 = vld [vmem:[%s417 + $0x1e70] sm:$0xff]
        %v1539 = vld [vmem:[%s417 + $0x1e78] sm:$0xff]
        %v1540 = vld [vmem:[%s417 + $0x1e80] sm:$0xff]
        %v1541 = vld [vmem:[%s417 + $0x1e88] sm:$0xff]
        %v1542 = vld [vmem:[%s417 + $0x1e90] sm:$0xff]
        %v1543 = vld [vmem:[%s417 + $0x1e98] sm:$0xff]
        %v1544 = vld [vmem:[%s417 + $0x1ea0] sm:$0xff]
        %v1545 = vld [vmem:[%s417 + $0x1ea8] sm:$0xff]
        %v1546 = vld [vmem:[%s417 + $0x1eb0] sm:$0xff]
        %v1547 = vld [vmem:[%s417 + $0x1eb8] sm:$0xff]
        %v1548 = vld [vmem:[%s417 + $0x1ec0] sm:$0xff]
        %v1549 = vld [vmem:[%s417 + $0x1ec8] sm:$0xff]
        %v1550 = vld [vmem:[%s417 + $0x1ed0] sm:$0xff]
        %v1551 = vld [vmem:[%s417 + $0x1ed8] sm:$0xff]
        %v1552 = vld [vmem:[%s417 + $0x1ee0] sm:$0xff]
        %v1553 = vld [vmem:[%s417 + $0x1ee8] sm:$0xff]
        %v1554 = vld [vmem:[%s417 + $0x1ef0] sm:$0xff]
        %v1555 = vld [vmem:[%s417 + $0x1ef8] sm:$0xff]
        %v1556 = vld [vmem:[%s417 + $0x1f00] sm:$0xff]
        %v1557 = vld [vmem:[%s417 + $0x1f08] sm:$0xff]
        %v1558 = vld [vmem:[%s417 + $0x1f10] sm:$0xff]
        %v1559 = vld [vmem:[%s417 + $0x1f18] sm:$0xff]
        %v1560 = vld [vmem:[%s417 + $0x1f20] sm:$0xff]
        %v1561 = vld [vmem:[%s417 + $0x1f28] sm:$0xff]
        %v1562 = vld [vmem:[%s417 + $0x1f30] sm:$0xff]
        %v1563 = vld [vmem:[%s417 + $0x1f38] sm:$0xff]
        %v1564 = vld [vmem:[%s417 + $0x1f40] sm:$0xff]
        %v1565 = vld [vmem:[%s417 + $0x1f48] sm:$0xff]
        %v1566 = vld [vmem:[%s417 + $0x1f50] sm:$0xff]
        %v1567 = vld [vmem:[%s417 + $0x1f58] sm:$0xff]
        %v1568 = vld [vmem:[%s417 + $0x1f60] sm:$0xff]
        %v1569 = vld [vmem:[%s417 + $0x1f68] sm:$0xff]
        %v1570 = vld [vmem:[%s417 + $0x1f70] sm:$0xff]
        %v1571 = vld [vmem:[%s417 + $0x1f78] sm:$0xff]
        %v1572 = vld [vmem:[%s417 + $0x1f80] sm:$0xff]
        %v1573 = vld [vmem:[%s417 + $0x1f88] sm:$0xff]
        %v1574 = vld [vmem:[%s417 + $0x1f90] sm:$0xff]
        %v1575 = vld [vmem:[%s417 + $0x1f98] sm:$0xff]
        %v1576 = vld [vmem:[%s417 + $0x1fa0] sm:$0xff]
        %v1577 = vld [vmem:[%s417 + $0x1fa8] sm:$0xff]
        %v1578 = vld [vmem:[%s417 + $0x1fb0] sm:$0xff]
        %v1579 = vld [vmem:[%s417 + $0x1fb8] sm:$0xff]
        %v1580 = vld [vmem:[%s417 + $0x1fc0] sm:$0xff]
        %v1581 = vld [vmem:[%s417 + $0x1fc8] sm:$0xff]
        %v1582 = vld [vmem:[%s417 + $0x1fd0] sm:$0xff]
        %v1583 = vld [vmem:[%s417 + $0x1fd8] sm:$0xff]
        %v1584 = vld [vmem:[%s417 + $0x1fe0] sm:$0xff]
        %v1585 = vld [vmem:[%s417 + $0x1fe8] sm:$0xff]
        %v1586 = vld [vmem:[%s417 + $0x1ff0] sm:$0xff]
        %v1587 = vld [vmem:[%s417 + $0x1ff8] sm:$0xff]
        %v1588 = vld [vmem:[%s417 + $0x2000] sm:$0xff]
        %v1589 = vld [vmem:[%s417 + $0x2008] sm:$0xff]
        %v1590 = vld [vmem:[%s417 + $0x2010] sm:$0xff]
        %v1591 = vld [vmem:[%s417 + $0x2018] sm:$0xff]
        %v1592 = vld [vmem:[%s417 + $0x2020] sm:$0xff]
        %v1593 = vld [vmem:[%s417 + $0x2028] sm:$0xff]
        %v1594 = vld [vmem:[%s417 + $0x2030] sm:$0xff]
        %v1595 = vld [vmem:[%s417 + $0x2038] sm:$0xff]
        %v1596 = vld [vmem:[%s417 + $0x2040] sm:$0xff]
        %v1597 = vld [vmem:[%s417 + $0x2048] sm:$0xff]
        %v1598 = vld [vmem:[%s417 + $0x2050] sm:$0xff]
        %v1599 = vld [vmem:[%s417 + $0x2058] sm:$0xff]
        %v1600 = vld [vmem:[%s417 + $0x2060] sm:$0xff]
        %v1601 = vld [vmem:[%s417 + $0x2068] sm:$0xff]
        %v1602 = vld [vmem:[%s417 + $0x2070] sm:$0xff]
        %v1603 = vld [vmem:[%s417 + $0x2078] sm:$0xff]
        %v1604 = vld [vmem:[%s417 + $0x2080] sm:$0xff]
        %v1605 = vld [vmem:[%s417 + $0x2088] sm:$0xff]
        %v1606 = vld [vmem:[%s417 + $0x2090] sm:$0xff]
        %v1607 = vld [vmem:[%s417 + $0x2098] sm:$0xff]
        %v1608 = vld [vmem:[%s417 + $0x20a0] sm:$0xff]
        %v1609 = vld [vmem:[%s417 + $0x20a8] sm:$0xff]
        %v1610 = vld [vmem:[%s417 + $0x20b0] sm:$0xff]
        %v1611 = vld [vmem:[%s417 + $0x20b8] sm:$0xff]
        %v1612 = vld [vmem:[%s417 + $0x20c0] sm:$0xff]
        %v1613 = vld [vmem:[%s417 + $0x20c8] sm:$0xff]
        %v1614 = vld [vmem:[%s417 + $0x20d0] sm:$0xff]
        %v1615 = vld [vmem:[%s417 + $0x20d8] sm:$0xff]
        %v1616 = vld [vmem:[%s417 + $0x20e0] sm:$0xff]
        %v1617 = vld [vmem:[%s417 + $0x20e8] sm:$0xff]
        %v1618 = vld [vmem:[%s417 + $0x20f0] sm:$0xff]
        %v1619 = vld [vmem:[%s417 + $0x20f8] sm:$0xff]
        %v1620 = vld [vmem:[%s417 + $0x2100] sm:$0xff]
        %v1621 = vld [vmem:[%s417 + $0x2108] sm:$0xff]
        %v1622 = vld [vmem:[%s417 + $0x2110] sm:$0xff]
        %v1623 = vld [vmem:[%s417 + $0x2118] sm:$0xff]
        %v1624 = vld [vmem:[%s417 + $0x2120] sm:$0xff]
        %v1625 = vld [vmem:[%s417 + $0x2128] sm:$0xff]
        %v1626 = vld [vmem:[%s417 + $0x2130] sm:$0xff]
        %v1627 = vld [vmem:[%s417 + $0x2138] sm:$0xff]
        %v1628 = vld [vmem:[%s417 + $0x2140] sm:$0xff]
        %v1629 = vld [vmem:[%s417 + $0x2148] sm:$0xff]
        %v1630 = vld [vmem:[%s417 + $0x2150] sm:$0xff]
        %v1631 = vld [vmem:[%s417 + $0x2158] sm:$0xff]
        %v1632 = vld [vmem:[%s417 + $0x2160] sm:$0xff]
        %v1633 = vld [vmem:[%s417 + $0x2168] sm:$0xff]
        %v1634 = vld [vmem:[%s417 + $0x2170] sm:$0xff]
        %v1635 = vld [vmem:[%s417 + $0x2178] sm:$0xff]
        %v1636 = vld [vmem:[%s417 + $0x2180] sm:$0xff]
        %v1637 = vld [vmem:[%s417 + $0x2188] sm:$0xff]
        %v1638 = vld [vmem:[%s417 + $0x2190] sm:$0xff]
        %v1639 = vld [vmem:[%s417 + $0x2198] sm:$0xff]
        %v1640 = vld [vmem:[%s417 + $0x21a0] sm:$0xff]
        %v1641 = vld [vmem:[%s417 + $0x21a8] sm:$0xff]
        %v1642 = vld [vmem:[%s417 + $0x21b0] sm:$0xff]
        %v1643 = vld [vmem:[%s417 + $0x21b8] sm:$0xff]
        %v1644 = vld [vmem:[%s417 + $0x21c0] sm:$0xff]
        %v1645 = vld [vmem:[%s417 + $0x21c8] sm:$0xff]
        %v1646 = vld [vmem:[%s417 + $0x21d0] sm:$0xff]
        %v1647 = vld [vmem:[%s417 + $0x21d8] sm:$0xff]
        %v1648 = vld [vmem:[%s417 + $0x21e0] sm:$0xff]
        %v1649 = vld [vmem:[%s417 + $0x21e8] sm:$0xff]
        %v1650 = vld [vmem:[%s417 + $0x21f0] sm:$0xff]
        %v1651 = vld [vmem:[%s417 + $0x21f8] sm:$0xff]
        %v1652 = vld [vmem:[%s417 + $0x2200] sm:$0xff]
        %v1653 = vld [vmem:[%s417 + $0x2208] sm:$0xff]
        %v1654 = vld [vmem:[%s417 + $0x2210] sm:$0xff]
        %v1655 = vld [vmem:[%s417 + $0x2218] sm:$0xff]
        %v1656 = vld [vmem:[%s417 + $0x2220] sm:$0xff]
        %v1657 = vld [vmem:[%s417 + $0x2228] sm:$0xff]
        %v1658 = vld [vmem:[%s417 + $0x2230] sm:$0xff]
        %v1659 = vld [vmem:[%s417 + $0x2238] sm:$0xff]
        %v1660 = vld [vmem:[%s417 + $0x2240] sm:$0xff]
        %v1661 = vld [vmem:[%s417 + $0x2248] sm:$0xff]
        %v1662 = vld [vmem:[%s417 + $0x2250] sm:$0xff]
        %v1663 = vld [vmem:[%s417 + $0x2258] sm:$0xff]
        %v1664 = vld [vmem:[%s417 + $0x2260] sm:$0xff]
        %v1665 = vld [vmem:[%s417 + $0x2268] sm:$0xff]
        %v1666 = vld [vmem:[%s417 + $0x2270] sm:$0xff]
        %v1667 = vld [vmem:[%s417 + $0x2278] sm:$0xff]
        %v1668 = vld [vmem:[%s417 + $0x2280] sm:$0xff]
        %v1669 = vld [vmem:[%s417 + $0x2288] sm:$0xff]
        %v1670 = vld [vmem:[%s417 + $0x2290] sm:$0xff]
        %v1671 = vld [vmem:[%s417 + $0x2298] sm:$0xff]
        %v1672 = vld [vmem:[%s417 + $0x22a0] sm:$0xff]
        %v1673 = vld [vmem:[%s417 + $0x22a8] sm:$0xff]
        %v1674 = vld [vmem:[%s417 + $0x22b0] sm:$0xff]
        %v1675 = vld [vmem:[%s417 + $0x22b8] sm:$0xff]
        %v1676 = vld [vmem:[%s417 + $0x22c0] sm:$0xff]
        %v1677 = vld [vmem:[%s417 + $0x22c8] sm:$0xff]
        %v1678 = vld [vmem:[%s417 + $0x22d0] sm:$0xff]
        %v1679 = vld [vmem:[%s417 + $0x22d8] sm:$0xff]
        %v1680 = vld [vmem:[%s417 + $0x22e0] sm:$0xff]
        %v1681 = vld [vmem:[%s417 + $0x22e8] sm:$0xff]
        %v1682 = vld [vmem:[%s417 + $0x22f0] sm:$0xff]
        %v1683 = vld [vmem:[%s417 + $0x22f8] sm:$0xff]
        %v1684 = vld [vmem:[%s417 + $0x2300] sm:$0xff]
        %v1685 = vld [vmem:[%s417 + $0x2308] sm:$0xff]
        %v1686 = vld [vmem:[%s417 + $0x2310] sm:$0xff]
        %v1687 = vld [vmem:[%s417 + $0x2318] sm:$0xff]
        %v1688 = vld [vmem:[%s417 + $0x2320] sm:$0xff]
        %v1689 = vld [vmem:[%s417 + $0x2328] sm:$0xff]
        %v1690 = vld [vmem:[%s417 + $0x2330] sm:$0xff]
        %v1691 = vld [vmem:[%s417 + $0x2338] sm:$0xff]
        %v1692 = vld [vmem:[%s417 + $0x2340] sm:$0xff]
        %v1693 = vld [vmem:[%s417 + $0x2348] sm:$0xff]
        %v1694 = vld [vmem:[%s417 + $0x2350] sm:$0xff]
        %v1695 = vld [vmem:[%s417 + $0x2358] sm:$0xff]
        %v1696 = vld [vmem:[%s417 + $0x2360] sm:$0xff]
        %v1697 = vld [vmem:[%s417 + $0x2368] sm:$0xff]
        %v1698 = vld [vmem:[%s417 + $0x2370] sm:$0xff]
        %v1699 = vld [vmem:[%s417 + $0x2378] sm:$0xff]
        %v1700 = vld [vmem:[%s417 + $0x2380] sm:$0xff]
        %v1701 = vld [vmem:[%s417 + $0x2388] sm:$0xff]
        %v1702 = vld [vmem:[%s417 + $0x2390] sm:$0xff]
        %v1703 = vld [vmem:[%s417 + $0x2398] sm:$0xff]
        %v1704 = vld [vmem:[%s417 + $0x23a0] sm:$0xff]
        %v1705 = vld [vmem:[%s417 + $0x23a8] sm:$0xff]
        %v1706 = vld [vmem:[%s417 + $0x23b0] sm:$0xff]
        %v1707 = vld [vmem:[%s417 + $0x23b8] sm:$0xff]
        %v1708 = vld [vmem:[%s417 + $0x23c0] sm:$0xff]
        %v1709 = vld [vmem:[%s417 + $0x23c8] sm:$0xff]
        %v1710 = vld [vmem:[%s417 + $0x23d0] sm:$0xff]
        %v1711 = vld [vmem:[%s417 + $0x23d8] sm:$0xff]
        %v1712 = vld [vmem:[%s417 + $0x23e0] sm:$0xff]
        %v1713 = vld [vmem:[%s417 + $0x23e8] sm:$0xff]
        %v1714 = vld [vmem:[%s417 + $0x23f0] sm:$0xff]
        %v1715 = vld [vmem:[%s417 + $0x23f8] sm:$0xff]
        %v1716 = vld [vmem:[%s417 + $0x2400] sm:$0xff]
        %v1717 = vld [vmem:[%s417 + $0x2408] sm:$0xff]
        %v1718 = vld [vmem:[%s417 + $0x2410] sm:$0xff]
        %v1719 = vld [vmem:[%s417 + $0x2418] sm:$0xff]
        %v1720 = vld [vmem:[%s417 + $0x2420] sm:$0xff]
        %v1721 = vld [vmem:[%s417 + $0x2428] sm:$0xff]
        %v1722 = vld [vmem:[%s417 + $0x2430] sm:$0xff]
        %v1723 = vld [vmem:[%s417 + $0x2438] sm:$0xff]
        %v1724 = vld [vmem:[%s417 + $0x2440] sm:$0xff]
        %v1725 = vld [vmem:[%s417 + $0x2448] sm:$0xff]
        %v1726 = vld [vmem:[%s417 + $0x2450] sm:$0xff]
        %v1727 = vld [vmem:[%s417 + $0x2458] sm:$0xff]
        %v1728 = vld [vmem:[%s417 + $0x2460] sm:$0xff]
        %v1729 = vld [vmem:[%s417 + $0x2468] sm:$0xff]
        %v1730 = vld [vmem:[%s417 + $0x2470] sm:$0xff]
        %v1731 = vld [vmem:[%s417 + $0x2478] sm:$0xff]
        %v1732 = vld [vmem:[%s417 + $0x2480] sm:$0xff]
        %v1733 = vld [vmem:[%s417 + $0x2488] sm:$0xff]
        %v1734 = vld [vmem:[%s417 + $0x2490] sm:$0xff]
        %v1735 = vld [vmem:[%s417 + $0x2498] sm:$0xff]
        %v1736 = vld [vmem:[%s417 + $0x24a0] sm:$0xff]
        %v1737 = vld [vmem:[%s417 + $0x24a8] sm:$0xff]
        %v1738 = vld [vmem:[%s417 + $0x24b0] sm:$0xff]
        %v1739 = vld [vmem:[%s417 + $0x24b8] sm:$0xff]
        %v1740 = vld [vmem:[%s417 + $0x24c0] sm:$0xff]
        %v1741 = vld [vmem:[%s417 + $0x24c8] sm:$0xff]
        %v1742 = vld [vmem:[%s417 + $0x24d0] sm:$0xff]
        %v1743 = vld [vmem:[%s417 + $0x24d8] sm:$0xff]
        %v1744 = vld [vmem:[%s417 + $0x24e0] sm:$0xff]
        %v1745 = vld [vmem:[%s417 + $0x24e8] sm:$0xff]
        %v1746 = vld [vmem:[%s417 + $0x24f0] sm:$0xff]
        %v1747 = vld [vmem:[%s417 + $0x24f8] sm:$0xff]
        %v1748 = vld [vmem:[%s417 + $0x2500] sm:$0xff]
        %v1749 = vld [vmem:[%s417 + $0x2508] sm:$0xff]
        %v1750 = vld [vmem:[%s417 + $0x2510] sm:$0xff]
        %v1751 = vld [vmem:[%s417 + $0x2518] sm:$0xff]
        %v1752 = vld [vmem:[%s417 + $0x2520] sm:$0xff]
        %v1753 = vld [vmem:[%s417 + $0x2528] sm:$0xff]
        %v1754 = vld [vmem:[%s417 + $0x2530] sm:$0xff]
        %v1755 = vld [vmem:[%s417 + $0x2538] sm:$0xff]
        %v1756 = vld [vmem:[%s417 + $0x2540] sm:$0xff]
        %v1757 = vld [vmem:[%s417 + $0x2548] sm:$0xff]
        %v1758 = vld [vmem:[%s417 + $0x2550] sm:$0xff]
        %v1759 = vld [vmem:[%s417 + $0x2558] sm:$0xff]
        %v1760 = vld [vmem:[%s417 + $0x2560] sm:$0xff]
        %v1761 = vld [vmem:[%s417 + $0x2568] sm:$0xff]
        %v1762 = vld [vmem:[%s417 + $0x2570] sm:$0xff]
        %v1763 = vld [vmem:[%s417 + $0x2578] sm:$0xff]
        %v1764 = vld [vmem:[%s417 + $0x2580] sm:$0xff]
        %v1765 = vld [vmem:[%s417 + $0x2588] sm:$0xff]
        %v1766 = vld [vmem:[%s417 + $0x2590] sm:$0xff]
        %v1767 = vld [vmem:[%s417 + $0x2598] sm:$0xff]
        %v1768 = vld [vmem:[%s417 + $0x25a0] sm:$0xff]
        %v1769 = vld [vmem:[%s417 + $0x25a8] sm:$0xff]
        %v1770 = vld [vmem:[%s417 + $0x25b0] sm:$0xff]
        %v1771 = vld [vmem:[%s417 + $0x25b8] sm:$0xff]
        %v1772 = vld [vmem:[%s417 + $0x25c0] sm:$0xff]
        %v1773 = vld [vmem:[%s417 + $0x25c8] sm:$0xff]
        %v1774 = vld [vmem:[%s417 + $0x25d0] sm:$0xff]
        %v1775 = vld [vmem:[%s417 + $0x25d8] sm:$0xff]
        %v1776 = vld [vmem:[%s417 + $0x25e0] sm:$0xff]
        %v1777 = vld [vmem:[%s417 + $0x25e8] sm:$0xff]
        %v1778 = vld [vmem:[%s417 + $0x25f0] sm:$0xff]
        %v1779 = vld [vmem:[%s417 + $0x25f8] sm:$0xff]
        %v1780 = vld [vmem:[%s417 + $0x2600] sm:$0xff]
        %v1781 = vld [vmem:[%s417 + $0x2608] sm:$0xff]
        %v1782 = vld [vmem:[%s417 + $0x2610] sm:$0xff]
        %v1783 = vld [vmem:[%s417 + $0x2618] sm:$0xff]
        %v1784 = vld [vmem:[%s417 + $0x2620] sm:$0xff]
        %v1785 = vld [vmem:[%s417 + $0x2628] sm:$0xff]
        %v1786 = vld [vmem:[%s417 + $0x2630] sm:$0xff]
        %v1787 = vld [vmem:[%s417 + $0x2638] sm:$0xff]
        %v1788 = vld [vmem:[%s417 + $0x2640] sm:$0xff]
        %v1789 = vld [vmem:[%s417 + $0x2648] sm:$0xff]
        %v1790 = vld [vmem:[%s417 + $0x2650] sm:$0xff]
        %v1791 = vld [vmem:[%s417 + $0x2658] sm:$0xff]
        %v1792 = vld [vmem:[%s417 + $0x2660] sm:$0xff]
        %v1793 = vld [vmem:[%s417 + $0x2668] sm:$0xff]
        %v1794 = vld [vmem:[%s417 + $0x2670] sm:$0xff]
        %v1795 = vld [vmem:[%s417 + $0x2678] sm:$0xff]
        %v1796 = vld [vmem:[%s417 + $0x2680] sm:$0xff]
        %v1797 = vld [vmem:[%s417 + $0x2688] sm:$0xff]
        %v1798 = vld [vmem:[%s417 + $0x2690] sm:$0xff]
        %v1799 = vld [vmem:[%s417 + $0x2698] sm:$0xff]
        %v1800 = vld [vmem:[%s417 + $0x26a0] sm:$0xff]
        %v1801 = vld [vmem:[%s417 + $0x26a8] sm:$0xff]
        %v1802 = vld [vmem:[%s417 + $0x26b0] sm:$0xff]
        %v1803 = vld [vmem:[%s417 + $0x26b8] sm:$0xff]
        %v1804 = vld [vmem:[%s417 + $0x26c0] sm:$0xff]
        %v1805 = vld [vmem:[%s417 + $0x26c8] sm:$0xff]
        %v1806 = vld [vmem:[%s417 + $0x26d0] sm:$0xff]
        %v1807 = vld [vmem:[%s417 + $0x26d8] sm:$0xff]
        %v1808 = vld [vmem:[%s417 + $0x26e0] sm:$0xff]
        %v1809 = vld [vmem:[%s417 + $0x26e8] sm:$0xff]
        %v1810 = vld [vmem:[%s417 + $0x26f0] sm:$0xff]
        %v1811 = vld [vmem:[%s417 + $0x26f8] sm:$0xff]
        %v1812 = vld [vmem:[%s417 + $0x2700] sm:$0xff]
        %v1813 = vld [vmem:[%s417 + $0x2708] sm:$0xff]
        %v1814 = vld [vmem:[%s417 + $0x2710] sm:$0xff]
        %v1815 = vld [vmem:[%s417 + $0x2718] sm:$0xff]
        %v1816 = vld [vmem:[%s417 + $0x2720] sm:$0xff]
        %v1817 = vld [vmem:[%s417 + $0x2728] sm:$0xff]
        %v1818 = vld [vmem:[%s417 + $0x2730] sm:$0xff]
        %v1819 = vld [vmem:[%s417 + $0x2738] sm:$0xff]
        %v1820 = vld [vmem:[%s417 + $0x2740] sm:$0xff]
        %v1821 = vld [vmem:[%s417 + $0x2748] sm:$0xff]
        %v1822 = vld [vmem:[%s417 + $0x2750] sm:$0xff]
        %v1823 = vld [vmem:[%s417 + $0x2758] sm:$0xff]
        %v1824 = vld [vmem:[%s417 + $0x2760] sm:$0xff]
        %v1825 = vld [vmem:[%s417 + $0x2768] sm:$0xff]
        %v1826 = vld [vmem:[%s417 + $0x2770] sm:$0xff]
        %v1827 = vld [vmem:[%s417 + $0x2778] sm:$0xff]
        %v1828 = vld [vmem:[%s417 + $0x2780] sm:$0xff]
        %v1829 = vld [vmem:[%s417 + $0x2788] sm:$0xff]
        %v1830 = vld [vmem:[%s417 + $0x2790] sm:$0xff]
        %v1831 = vld [vmem:[%s417 + $0x2798] sm:$0xff]
        %v1832 = vld [vmem:[%s417 + $0x27a0] sm:$0xff]
        %v1833 = vld [vmem:[%s417 + $0x27a8] sm:$0xff]
        %v1834 = vld [vmem:[%s417 + $0x27b0] sm:$0xff]
        %v1835 = vld [vmem:[%s417 + $0x27b8] sm:$0xff]
        %v1836 = vld [vmem:[%s417 + $0x27c0] sm:$0xff]
        %v1837 = vld [vmem:[%s417 + $0x27c8] sm:$0xff]
        %v1838 = vld [vmem:[%s417 + $0x27d0] sm:$0xff]
        %v1839 = vld [vmem:[%s417 + $0x27d8] sm:$0xff]
        %v1840 = vld [vmem:[%s417 + $0x27e0] sm:$0xff]
        %v1841 = vld [vmem:[%s417 + $0x27e8] sm:$0xff]
        %v1842 = vld [vmem:[%s417 + $0x27f0] sm:$0xff]
        %v1843 = vld [vmem:[%s417 + $0x27f8] sm:$0xff]
        %v1844 = vld [vmem:[%s417 + $0x2800] sm:$0xff]
        %v1845 = vld [vmem:[%s417 + $0x2808] sm:$0xff]
        %v1846 = vld [vmem:[%s417 + $0x2810] sm:$0xff]
        %v1847 = vld [vmem:[%s417 + $0x2818] sm:$0xff]
        %v1848 = vld [vmem:[%s417 + $0x2820] sm:$0xff]
        %v1849 = vld [vmem:[%s417 + $0x2828] sm:$0xff]
        %v1850 = vld [vmem:[%s417 + $0x2830] sm:$0xff]
        %v1851 = vld [vmem:[%s417 + $0x2838] sm:$0xff]
        %v1852 = vld [vmem:[%s417 + $0x2840] sm:$0xff]
        %v1853 = vld [vmem:[%s417 + $0x2848] sm:$0xff]
        %v1854 = vld [vmem:[%s417 + $0x2850] sm:$0xff]
        %v1855 = vld [vmem:[%s417 + $0x2858] sm:$0xff]
        %v1856 = vld [vmem:[%s417 + $0x2860] sm:$0xff]
        %v1857 = vld [vmem:[%s417 + $0x2868] sm:$0xff]
        %v1858 = vld [vmem:[%s417 + $0x2870] sm:$0xff]
        %v1859 = vld [vmem:[%s417 + $0x2878] sm:$0xff]
        %v1860 = vld [vmem:[%s417 + $0x2880] sm:$0xff]
        %v1861 = vld [vmem:[%s417 + $0x2888] sm:$0xff]
        %v1862 = vld [vmem:[%s417 + $0x2890] sm:$0xff]
        %v1863 = vld [vmem:[%s417 + $0x2898] sm:$0xff]
        %v1864 = vld [vmem:[%s417 + $0x28a0] sm:$0xff]
        %v1865 = vld [vmem:[%s417 + $0x28a8] sm:$0xff]
        %v1866 = vld [vmem:[%s417 + $0x28b0] sm:$0xff]
        %v1867 = vld [vmem:[%s417 + $0x28b8] sm:$0xff]
        %v1868 = vld [vmem:[%s417 + $0x28c0] sm:$0xff]
        %v1869 = vld [vmem:[%s417 + $0x28c8] sm:$0xff]
        %v1870 = vld [vmem:[%s417 + $0x28d0] sm:$0xff]
        %v1871 = vld [vmem:[%s417 + $0x28d8] sm:$0xff]
        %v1872 = vld [vmem:[%s417 + $0x28e0] sm:$0xff]
        %v1873 = vld [vmem:[%s417 + $0x28e8] sm:$0xff]
        %v1874 = vld [vmem:[%s417 + $0x28f0] sm:$0xff]
        %v1875 = vld [vmem:[%s417 + $0x28f8] sm:$0xff]
        %v1876 = vld [vmem:[%s417 + $0x2900] sm:$0xff]
        %v1877 = vld [vmem:[%s417 + $0x2908] sm:$0xff]
        %v1878 = vld [vmem:[%s417 + $0x2910] sm:$0xff]
        %v1879 = vld [vmem:[%s417 + $0x2918] sm:$0xff]
        %v1880 = vld [vmem:[%s417 + $0x2920] sm:$0xff]
        %v1881 = vld [vmem:[%s417 + $0x2928] sm:$0xff]
        %v1882 = vld [vmem:[%s417 + $0x2930] sm:$0xff]
        %v1883 = vld [vmem:[%s417 + $0x2938] sm:$0xff]
        %v1884 = vld [vmem:[%s417 + $0x2940] sm:$0xff]
        %v1885 = vld [vmem:[%s417 + $0x2948] sm:$0xff]
        %v1886 = vld [vmem:[%s417 + $0x2950] sm:$0xff]
        %v1887 = vld [vmem:[%s417 + $0x2958] sm:$0xff]
        %v1888 = vld [vmem:[%s417 + $0x2960] sm:$0xff]
        %v1889 = vld [vmem:[%s417 + $0x2968] sm:$0xff]
        %v1890 = vld [vmem:[%s417 + $0x2970] sm:$0xff]
        %v1891 = vld [vmem:[%s417 + $0x2978] sm:$0xff]
        %v1892 = vld [vmem:[%s417 + $0x2980] sm:$0xff]
        %v1893 = vld [vmem:[%s417 + $0x2988] sm:$0xff]
        %v1894 = vld [vmem:[%s417 + $0x2990] sm:$0xff]
        %v1895 = vld [vmem:[%s417 + $0x2998] sm:$0xff]
        %v1896 = vld [vmem:[%s417 + $0x29a0] sm:$0xff]
        %v1897 = vld [vmem:[%s417 + $0x29a8] sm:$0xff]
        %v1898 = vld [vmem:[%s417 + $0x29b0] sm:$0xff]
        %v1899 = vld [vmem:[%s417 + $0x29b8] sm:$0xff]
        %v1900 = vld [vmem:[%s417 + $0x29c0] sm:$0xff]
        %v1901 = vld [vmem:[%s417 + $0x29c8] sm:$0xff]
        %v1902 = vld [vmem:[%s417 + $0x29d0] sm:$0xff]
        %v1903 = vld [vmem:[%s417 + $0x29d8] sm:$0xff]
        %v1904 = vld [vmem:[%s417 + $0x29e0] sm:$0xff]
        %v1905 = vld [vmem:[%s417 + $0x29e8] sm:$0xff]
        %v1906 = vld [vmem:[%s417 + $0x29f0] sm:$0xff]
        %v1907 = vld [vmem:[%s417 + $0x29f8] sm:$0xff]
        %v1908 = vld [vmem:[%s417 + $0x2a00] sm:$0xff]
        %v1909 = vld [vmem:[%s417 + $0x2a08] sm:$0xff]
        %v1910 = vld [vmem:[%s417 + $0x2a10] sm:$0xff]
        %v1911 = vld [vmem:[%s417 + $0x2a18] sm:$0xff]
        %v1912 = vld [vmem:[%s417 + $0x2a20] sm:$0xff]
        %v1913 = vld [vmem:[%s417 + $0x2a28] sm:$0xff]
        %v1914 = vld [vmem:[%s417 + $0x2a30] sm:$0xff]
        %v1915 = vld [vmem:[%s417 + $0x2a38] sm:$0xff]
        %v1916 = vld [vmem:[%s417 + $0x2a40] sm:$0xff]
        %v1917 = vld [vmem:[%s417 + $0x2a48] sm:$0xff]
        %v1918 = vld [vmem:[%s417 + $0x2a50] sm:$0xff]
        %v1919 = vld [vmem:[%s417 + $0x2a58] sm:$0xff]
        %v1920 = vld [vmem:[%s417 + $0x2a60] sm:$0xff]
        %v1921 = vld [vmem:[%s417 + $0x2a68] sm:$0xff]
        %v1922 = vld [vmem:[%s417 + $0x2a70] sm:$0xff]
        %v1923 = vld [vmem:[%s417 + $0x2a78] sm:$0xff]
        %v1924 = vld [vmem:[%s417 + $0x2a80] sm:$0xff]
        %v1925 = vld [vmem:[%s417 + $0x2a88] sm:$0xff]
        %v1926 = vld [vmem:[%s417 + $0x2a90] sm:$0xff]
        %v1927 = vld [vmem:[%s417 + $0x2a98] sm:$0xff]
        %v1928 = vld [vmem:[%s417 + $0x2aa0] sm:$0xff]
        %v1929 = vld [vmem:[%s417 + $0x2aa8] sm:$0xff]
        %v1930 = vld [vmem:[%s417 + $0x2ab0] sm:$0xff]
        %v1931 = vld [vmem:[%s417 + $0x2ab8] sm:$0xff]
        %v1932 = vld [vmem:[%s417 + $0x2ac0] sm:$0xff]
        %v1933 = vld [vmem:[%s417 + $0x2ac8] sm:$0xff]
        %v1934 = vld [vmem:[%s417 + $0x2ad0] sm:$0xff]
        %v1935 = vld [vmem:[%s417 + $0x2ad8] sm:$0xff]
        %v1936 = vld [vmem:[%s417 + $0x2ae0] sm:$0xff]
        %v1937 = vld [vmem:[%s417 + $0x2ae8] sm:$0xff]
        %v1938 = vld [vmem:[%s417 + $0x2af0] sm:$0xff]
        %v1939 = vld [vmem:[%s417 + $0x2af8] sm:$0xff]
        %v1940 = vld [vmem:[%s417 + $0x2b00] sm:$0xff]
        %v1941 = vld [vmem:[%s417 + $0x2b08] sm:$0xff]
        %v1942 = vld [vmem:[%s417 + $0x2b10] sm:$0xff]
        %v1943 = vld [vmem:[%s417 + $0x2b18] sm:$0xff]
        %v1944 = vld [vmem:[%s417 + $0x2b20] sm:$0xff]
        %v1945 = vld [vmem:[%s417 + $0x2b28] sm:$0xff]
        %v1946 = vld [vmem:[%s417 + $0x2b30] sm:$0xff]
        %v1947 = vld [vmem:[%s417 + $0x2b38] sm:$0xff]
        %v1948 = vld [vmem:[%s417 + $0x2b40] sm:$0xff]
        %v1949 = vld [vmem:[%s417 + $0x2b48] sm:$0xff]
        %v1950 = vld [vmem:[%s417 + $0x2b50] sm:$0xff]
        %v1951 = vld [vmem:[%s417 + $0x2b58] sm:$0xff]
        %v1952 = vld [vmem:[%s417 + $0x2b60] sm:$0xff]
        %v1953 = vld [vmem:[%s417 + $0x2b68] sm:$0xff]
        %v1954 = vld [vmem:[%s417 + $0x2b70] sm:$0xff]
        %v1955 = vld [vmem:[%s417 + $0x2b78] sm:$0xff]
        %v1956 = vld [vmem:[%s417 + $0x2b80] sm:$0xff]
        %v1957 = vld [vmem:[%s417 + $0x2b88] sm:$0xff]
        %v1958 = vld [vmem:[%s417 + $0x2b90] sm:$0xff]
        %v1959 = vld [vmem:[%s417 + $0x2b98] sm:$0xff]
        %v1960 = vld [vmem:[%s417 + $0x2ba0] sm:$0xff]
        %v1961 = vld [vmem:[%s417 + $0x2ba8] sm:$0xff]
        %v1962 = vld [vmem:[%s417 + $0x2bb0] sm:$0xff]
        %v1963 = vld [vmem:[%s417 + $0x2bb8] sm:$0xff]
        %v1964 = vld [vmem:[%s417 + $0x2bc0] sm:$0xff]
        %v1965 = vld [vmem:[%s417 + $0x2bc8] sm:$0xff]
        %v1966 = vld [vmem:[%s417 + $0x2bd0] sm:$0xff]
        %v1967 = vld [vmem:[%s417 + $0x2bd8] sm:$0xff]
        %v1968 = vld [vmem:[%s417 + $0x2be0] sm:$0xff]
        %v1969 = vld [vmem:[%s417 + $0x2be8] sm:$0xff]
        %v1970 = vld [vmem:[%s417 + $0x2bf0] sm:$0xff]
        %v1971 = vld [vmem:[%s417 + $0x2bf8] sm:$0xff]
        %v1972 = vld [vmem:[%s417 + $0x2c00] sm:$0xff]
        %v1973 = vld [vmem:[%s417 + $0x2c08] sm:$0xff]
        %v1974 = vld [vmem:[%s417 + $0x2c10] sm:$0xff]
        %v1975 = vld [vmem:[%s417 + $0x2c18] sm:$0xff]
        %v1976 = vld [vmem:[%s417 + $0x2c20] sm:$0xff]
        %v1977 = vld [vmem:[%s417 + $0x2c28] sm:$0xff]
        %v1978 = vld [vmem:[%s417 + $0x2c30] sm:$0xff]
        %v1979 = vld [vmem:[%s417 + $0x2c38] sm:$0xff]
        %v1980 = vld [vmem:[%s417 + $0x2c40] sm:$0xff]
        %v1981 = vld [vmem:[%s417 + $0x2c48] sm:$0xff]
        %v1982 = vld [vmem:[%s417 + $0x2c50] sm:$0xff]
        %v1983 = vld [vmem:[%s417 + $0x2c58] sm:$0xff]
        %v1984 = vld [vmem:[%s417 + $0x2c60] sm:$0xff]
        %v1985 = vld [vmem:[%s417 + $0x2c68] sm:$0xff]
        %v1986 = vld [vmem:[%s417 + $0x2c70] sm:$0xff]
        %v1987 = vld [vmem:[%s417 + $0x2c78] sm:$0xff]
        %v1988 = vld [vmem:[%s417 + $0x2c80] sm:$0xff]
        %v1989 = vld [vmem:[%s417 + $0x2c88] sm:$0xff]
        %v1990 = vld [vmem:[%s417 + $0x2c90] sm:$0xff]
        %v1991 = vld [vmem:[%s417 + $0x2c98] sm:$0xff]
        %v1992 = vld [vmem:[%s417 + $0x2ca0] sm:$0xff]
        %v1993 = vld [vmem:[%s417 + $0x2ca8] sm:$0xff]
        %v1994 = vld [vmem:[%s417 + $0x2cb0] sm:$0xff]
        %v1995 = vld [vmem:[%s417 + $0x2cb8] sm:$0xff]
        %v1996 = vld [vmem:[%s417 + $0x2cc0] sm:$0xff]
        %v1997 = vld [vmem:[%s417 + $0x2cc8] sm:$0xff]
        %v1998 = vld [vmem:[%s417 + $0x2cd0] sm:$0xff]
        %v1999 = vld [vmem:[%s417 + $0x2cd8] sm:$0xff]
        %v2000 = vld [vmem:[%s417 + $0x2ce0] sm:$0xff]
        %v2001 = vld [vmem:[%s417 + $0x2ce8] sm:$0xff]
        %v2002 = vld [vmem:[%s417 + $0x2cf0] sm:$0xff]
        %v2003 = vld [vmem:[%s417 + $0x2cf8] sm:$0xff]
        %v2004 = vld [vmem:[%s417 + $0x2d00] sm:$0xff]
        %v2005 = vld [vmem:[%s417 + $0x2d08] sm:$0xff]
        %v2006 = vld [vmem:[%s417 + $0x2d10] sm:$0xff]
        %v2007 = vld [vmem:[%s417 + $0x2d18] sm:$0xff]
        %v2008 = vld [vmem:[%s417 + $0x2d20] sm:$0xff]
        %v2009 = vld [vmem:[%s417 + $0x2d28] sm:$0xff]
        %v2010 = vld [vmem:[%s417 + $0x2d30] sm:$0xff]
        %v2011 = vld [vmem:[%s417 + $0x2d38] sm:$0xff]
        %v2012 = vld [vmem:[%s417 + $0x2d40] sm:$0xff]
        %v2013 = vld [vmem:[%s417 + $0x2d48] sm:$0xff]
        %v2014 = vld [vmem:[%s417 + $0x2d50] sm:$0xff]
        %v2015 = vld [vmem:[%s417 + $0x2d58] sm:$0xff]
        %v2016 = vld [vmem:[%s417 + $0x2d60] sm:$0xff]
        %v2017 = vld [vmem:[%s417 + $0x2d68] sm:$0xff]
        %v2018 = vld [vmem:[%s417 + $0x2d70] sm:$0xff]
        %v2019 = vld [vmem:[%s417 + $0x2d78] sm:$0xff]
        %v2020 = vld [vmem:[%s417 + $0x2d80] sm:$0xff]
        %v2021 = vld [vmem:[%s417 + $0x2d88] sm:$0xff]
        %v2022 = vld [vmem:[%s417 + $0x2d90] sm:$0xff]
        %v2023 = vld [vmem:[%s417 + $0x2d98] sm:$0xff]
        %v2024 = vld [vmem:[%s417 + $0x2da0] sm:$0xff]
        %v2025 = vld [vmem:[%s417 + $0x2da8] sm:$0xff]
        %v2026 = vld [vmem:[%s417 + $0x2db0] sm:$0xff]
        %v2027 = vld [vmem:[%s417 + $0x2db8] sm:$0xff]
        %v2028 = vld [vmem:[%s417 + $0x2dc0] sm:$0xff]
        %v2029 = vld [vmem:[%s417 + $0x2dc8] sm:$0xff]
        %v2030 = vld [vmem:[%s417 + $0x2dd0] sm:$0xff]
        %v2031 = vld [vmem:[%s417 + $0x2dd8] sm:$0xff]
        %v2032 = vld [vmem:[%s417 + $0x2de0] sm:$0xff]
        %v2033 = vld [vmem:[%s417 + $0x2de8] sm:$0xff]
        %v2034 = vld [vmem:[%s417 + $0x2df0] sm:$0xff]
        %v2035 = vld [vmem:[%s417 + $0x2df8] sm:$0xff]
        %v2036 = vld [vmem:[%s417 + $0x2e00] sm:$0xff]
        %v2037 = vld [vmem:[%s417 + $0x2e08] sm:$0xff]
        %v2038 = vld [vmem:[%s417 + $0x2e10] sm:$0xff]
        %v2039 = vld [vmem:[%s417 + $0x2e18] sm:$0xff]
        %v2040 = vld [vmem:[%s417 + $0x2e20] sm:$0xff]
        %v2041 = vld [vmem:[%s417 + $0x2e28] sm:$0xff]
        %v2042 = vld [vmem:[%s417 + $0x2e30] sm:$0xff]
        %v2043 = vld [vmem:[%s417 + $0x2e38] sm:$0xff]
        %v2044 = vld [vmem:[%s417 + $0x2e40] sm:$0xff]
        %v2045 = vld [vmem:[%s417 + $0x2e48] sm:$0xff]
        %v2046 = vld [vmem:[%s417 + $0x2e50] sm:$0xff]
        %v2047 = vld [vmem:[%s417 + $0x2e58] sm:$0xff]
        %v2048 = vld [vmem:[%s417 + $0x2e60] sm:$0xff]
        %v2049 = vld [vmem:[%s417 + $0x2e68] sm:$0xff]
        %v2050 = vld [vmem:[%s417 + $0x2e70] sm:$0xff]
        %v2051 = vld [vmem:[%s417 + $0x2e78] sm:$0xff]
        %v2052 = vld [vmem:[%s417 + $0x2e80] sm:$0xff]
        %v2053 = vld [vmem:[%s417 + $0x2e88] sm:$0xff]
        %v2054 = vld [vmem:[%s417 + $0x2e90] sm:$0xff]
        %v2055 = vld [vmem:[%s417 + $0x2e98] sm:$0xff]
        %v2056 = vld [vmem:[%s417 + $0x2ea0] sm:$0xff]
        %v2057 = vld [vmem:[%s417 + $0x2ea8] sm:$0xff]
        %v2058 = vld [vmem:[%s417 + $0x2eb0] sm:$0xff]
        %v2059 = vld [vmem:[%s417 + $0x2eb8] sm:$0xff]
        %v2060 = vld [vmem:[%s417 + $0x2ec0] sm:$0xff]
        %v2061 = vld [vmem:[%s417 + $0x2ec8] sm:$0xff]
        %v2062 = vld [vmem:[%s417 + $0x2ed0] sm:$0xff]
        %v2063 = vld [vmem:[%s417 + $0x2ed8] sm:$0xff]
        %v2064 = vld [vmem:[%s417 + $0x2ee0] sm:$0xff]
        %v2065 = vld [vmem:[%s417 + $0x2ee8] sm:$0xff]
        %v2066 = vld [vmem:[%s417 + $0x2ef0] sm:$0xff]
        %v2067 = vld [vmem:[%s417 + $0x2ef8] sm:$0xff]
        %v2068 = vld [vmem:[%s417 + $0x2f00] sm:$0xff]
        %v2069 = vld [vmem:[%s417 + $0x2f08] sm:$0xff]
        %v2070 = vld [vmem:[%s417 + $0x2f10] sm:$0xff]
        %v2071 = vld [vmem:[%s417 + $0x2f18] sm:$0xff]
        %v2072 = vld [vmem:[%s417 + $0x2f20] sm:$0xff]
        %v2073 = vld [vmem:[%s417 + $0x2f28] sm:$0xff]
        %v2074 = vld [vmem:[%s417 + $0x2f30] sm:$0xff]
        %v2075 = vld [vmem:[%s417 + $0x2f38] sm:$0xff]
        %v2076 = vld [vmem:[%s417 + $0x2f40] sm:$0xff]
        %v2077 = vld [vmem:[%s417 + $0x2f48] sm:$0xff]
        %v2078 = vld [vmem:[%s417 + $0x2f50] sm:$0xff]
        %v2079 = vld [vmem:[%s417 + $0x2f58] sm:$0xff]
        %v2080 = vld [vmem:[%s417 + $0x2f60] sm:$0xff]
        %v2081 = vld [vmem:[%s417 + $0x2f68] sm:$0xff]
        %v2082 = vld [vmem:[%s417 + $0x2f70] sm:$0xff]
        %v2083 = vld [vmem:[%s417 + $0x2f78] sm:$0xff]
        %v2084 = vld [vmem:[%s417 + $0x2f80] sm:$0xff]
        %v2085 = vld [vmem:[%s417 + $0x2f88] sm:$0xff]
        %v2086 = vld [vmem:[%s417 + $0x2f90] sm:$0xff]
        %v2087 = vld [vmem:[%s417 + $0x2f98] sm:$0xff]
        %v2088 = vld [vmem:[%s417 + $0x2fa0] sm:$0xff]
        %v2089 = vld [vmem:[%s417 + $0x2fa8] sm:$0xff]
        %v2090 = vld [vmem:[%s417 + $0x2fb0] sm:$0xff]
        %v2091 = vld [vmem:[%s417 + $0x2fb8] sm:$0xff]
        %v2092 = vld [vmem:[%s417 + $0x2fc0] sm:$0xff]
        %v2093 = vld [vmem:[%s417 + $0x2fc8] sm:$0xff]
        %v2094 = vld [vmem:[%s417 + $0x2fd0] sm:$0xff]
        %v2095 = vld [vmem:[%s417 + $0x2fd8] sm:$0xff]
        %v2096 = vld [vmem:[%s417 + $0x2fe0] sm:$0xff]
        %v2097 = vld [vmem:[%s417 + $0x2fe8] sm:$0xff]
        %v2098 = vld [vmem:[%s417 + $0x2ff0] sm:$0xff]
        %v2099 = vld [vmem:[%s417 + $0x2ff8] sm:$0xff]
        %v2196 = vunpack.c.l.b16 %v468
        %v2197 = vunpack.c.h.b16 %v468
        %v2198 = vunpack.c.l.b16 %v469
        %v2199 = vunpack.c.h.b16 %v469
        %v2200 = vunpack.c.l.b16 %v470
        %v2201 = vunpack.c.h.b16 %v470
        %v2202 = vunpack.c.l.b16 %v471
        %v2203 = vunpack.c.h.b16 %v471
        %v2204 = vunpack.c.l.b16 %v472
        %v2205 = vunpack.c.h.b16 %v472
        %v2206 = vunpack.c.l.b16 %v473
        %v2207 = vunpack.c.h.b16 %v473
        %v2208 = vunpack.c.l.b16 %v474
        %v2209 = vunpack.c.h.b16 %v474
        %v2210 = vunpack.c.l.b16 %v475
        %v2211 = vunpack.c.h.b16 %v475
        %v2212 = vunpack.c.l.b16 %v476
        %v2213 = vunpack.c.h.b16 %v476
        %v2214 = vunpack.c.l.b16 %v477
        %v2215 = vunpack.c.h.b16 %v477
        %v2216 = vunpack.c.l.b16 %v478
        %v2217 = vunpack.c.h.b16 %v478
        %v2218 = vunpack.c.l.b16 %v479
        %v2219 = vunpack.c.h.b16 %v479
        %v2220 = vunpack.c.l.b16 %v480
        %v2221 = vunpack.c.h.b16 %v480
        %v2222 = vunpack.c.l.b16 %v481
        %v2223 = vunpack.c.h.b16 %v481
        %v2224 = vunpack.c.l.b16 %v482
        %v2225 = vunpack.c.h.b16 %v482
        %v2226 = vunpack.c.l.b16 %v483
        %v2227 = vunpack.c.h.b16 %v483
        %v2228 = vunpack.c.l.b16 %v484
        %v2229 = vunpack.c.h.b16 %v484
        %v2230 = vunpack.c.l.b16 %v485
        %v2231 = vunpack.c.h.b16 %v485
        %v2232 = vunpack.c.l.b16 %v486
        %v2233 = vunpack.c.h.b16 %v486
        %v2234 = vunpack.c.l.b16 %v487
        %v2235 = vunpack.c.h.b16 %v487
        %v2236 = vunpack.c.l.b16 %v488
        %v2237 = vunpack.c.h.b16 %v488
        %v2238 = vunpack.c.l.b16 %v489
        %v2239 = vunpack.c.h.b16 %v489
        %v2240 = vunpack.c.l.b16 %v490
        %v2241 = vunpack.c.h.b16 %v490
        %v2242 = vunpack.c.l.b16 %v491
        %v2243 = vunpack.c.h.b16 %v491
        %v2244 = vunpack.c.l.b16 %v492
        %v2245 = vunpack.c.h.b16 %v492
        %v2246 = vunpack.c.l.b16 %v493
        %v2247 = vunpack.c.h.b16 %v493
        %v2248 = vunpack.c.l.b16 %v494
        %v2249 = vunpack.c.h.b16 %v494
        %v2250 = vunpack.c.l.b16 %v495
        %v2251 = vunpack.c.h.b16 %v495
        %v2252 = vunpack.c.l.b16 %v496
        %v2253 = vunpack.c.h.b16 %v496
        %v2254 = vunpack.c.l.b16 %v497
        %v2255 = vunpack.c.h.b16 %v497
        %v2256 = vunpack.c.l.b16 %v498
        %v2257 = vunpack.c.h.b16 %v498
        %v2258 = vunpack.c.l.b16 %v499
        %v2259 = vunpack.c.h.b16 %v499
        %v2260 = vunpack.c.l.b16 %v500
        %v2261 = vunpack.c.h.b16 %v500
        %v2262 = vunpack.c.l.b16 %v501
        %v2263 = vunpack.c.h.b16 %v501
        %v2264 = vunpack.c.l.b16 %v502
        %v2265 = vunpack.c.h.b16 %v502
        %v2266 = vunpack.c.l.b16 %v503
        %v2267 = vunpack.c.h.b16 %v503
        %v2268 = vunpack.c.l.b16 %v504
        %v2269 = vunpack.c.h.b16 %v504
        %v2270 = vunpack.c.l.b16 %v505
        %v2271 = vunpack.c.h.b16 %v505
        %v2272 = vunpack.c.l.b16 %v506
        %v2273 = vunpack.c.h.b16 %v506
        %v2274 = vunpack.c.l.b16 %v507
        %v2275 = vunpack.c.h.b16 %v507
        %v2276 = vunpack.c.l.b16 %v508
        %v2277 = vunpack.c.h.b16 %v508
        %v2278 = vunpack.c.l.b16 %v509
        %v2279 = vunpack.c.h.b16 %v509
        %v2280 = vunpack.c.l.b16 %v510
        %v2281 = vunpack.c.h.b16 %v510
        %v2282 = vunpack.c.l.b16 %v511
        %v2283 = vunpack.c.h.b16 %v511
        %v2284 = vunpack.c.l.b16 %v512
        %v2285 = vunpack.c.h.b16 %v512
        %v2286 = vunpack.c.l.b16 %v513
        %v2287 = vunpack.c.h.b16 %v513
        %v2288 = vunpack.c.l.b16 %v514
        %v2289 = vunpack.c.h.b16 %v514
        %v2290 = vunpack.c.l.b16 %v515
        %v2291 = vunpack.c.h.b16 %v515
        %v2292 = vunpack.c.l.b16 %v516
        %v2293 = vunpack.c.h.b16 %v516
        %v2294 = vunpack.c.l.b16 %v517
        %v2295 = vunpack.c.h.b16 %v517
        %v2296 = vunpack.c.l.b16 %v518
        %v2297 = vunpack.c.h.b16 %v518
        %v2298 = vunpack.c.l.b16 %v519
        %v2299 = vunpack.c.h.b16 %v519
        %v2300 = vunpack.c.l.b16 %v520
        %v2301 = vunpack.c.h.b16 %v520
        %v2302 = vunpack.c.l.b16 %v521
        %v2303 = vunpack.c.h.b16 %v521
        %v2304 = vunpack.c.l.b16 %v522
        %v2305 = vunpack.c.h.b16 %v522
        %v2306 = vunpack.c.l.b16 %v523
        %v2307 = vunpack.c.h.b16 %v523
        %v2308 = vunpack.c.l.b16 %v524
        %v2309 = vunpack.c.h.b16 %v524
        %v2310 = vunpack.c.l.b16 %v525
        %v2311 = vunpack.c.h.b16 %v525
        %v2312 = vunpack.c.l.b16 %v526
        %v2313 = vunpack.c.h.b16 %v526
        %v2314 = vunpack.c.l.b16 %v527
        %v2315 = vunpack.c.h.b16 %v527
        %v2316 = vunpack.c.l.b16 %v528
        %v2317 = vunpack.c.h.b16 %v528
        %v2318 = vunpack.c.l.b16 %v529
        %v2319 = vunpack.c.h.b16 %v529
        %v2320 = vunpack.c.l.b16 %v530
        %v2321 = vunpack.c.h.b16 %v530
        %v2322 = vunpack.c.l.b16 %v531
        %v2323 = vunpack.c.h.b16 %v531
        %v2324 = vunpack.c.l.b16 %v532
        %v2325 = vunpack.c.h.b16 %v532
        %v2326 = vunpack.c.l.b16 %v533
        %v2327 = vunpack.c.h.b16 %v533
        %v2328 = vunpack.c.l.b16 %v534
        %v2329 = vunpack.c.h.b16 %v534
        %v2330 = vunpack.c.l.b16 %v535
        %v2331 = vunpack.c.h.b16 %v535
        %v2332 = vunpack.c.l.b16 %v536
        %v2333 = vunpack.c.h.b16 %v536
        %v2334 = vunpack.c.l.b16 %v537
        %v2335 = vunpack.c.h.b16 %v537
        %v2336 = vunpack.c.l.b16 %v538
        %v2337 = vunpack.c.h.b16 %v538
        %v2338 = vunpack.c.l.b16 %v539
        %v2339 = vunpack.c.h.b16 %v539
        %v2340 = vunpack.c.l.b16 %v540
        %v2341 = vunpack.c.h.b16 %v540
        %v2342 = vunpack.c.l.b16 %v541
        %v2343 = vunpack.c.h.b16 %v541
        %v2344 = vunpack.c.l.b16 %v542
        %v2345 = vunpack.c.h.b16 %v542
        %v2346 = vunpack.c.l.b16 %v543
        %v2347 = vunpack.c.h.b16 %v543
        %v2348 = vunpack.c.l.b16 %v544
        %v2349 = vunpack.c.h.b16 %v544
        %v2350 = vunpack.c.l.b16 %v545
        %v2351 = vunpack.c.h.b16 %v545
        %v2352 = vunpack.c.l.b16 %v546
        %v2353 = vunpack.c.h.b16 %v546
        %v2354 = vunpack.c.l.b16 %v547
        %v2355 = vunpack.c.h.b16 %v547
        %v2356 = vunpack.c.l.b16 %v548
        %v2357 = vunpack.c.h.b16 %v548
        %v2358 = vunpack.c.l.b16 %v549
        %v2359 = vunpack.c.h.b16 %v549
        %v2360 = vunpack.c.l.b16 %v550
        %v2361 = vunpack.c.h.b16 %v550
        %v2362 = vunpack.c.l.b16 %v551
        %v2363 = vunpack.c.h.b16 %v551
        %v2364 = vunpack.c.l.b16 %v552
        %v2365 = vunpack.c.h.b16 %v552
        %v2366 = vunpack.c.l.b16 %v553
        %v2367 = vunpack.c.h.b16 %v553
        %v2368 = vunpack.c.l.b16 %v554
        %v2369 = vunpack.c.h.b16 %v554
        %v2370 = vunpack.c.l.b16 %v555
        %v2371 = vunpack.c.h.b16 %v555
        %v2372 = vunpack.c.l.b16 %v556
        %v2373 = vunpack.c.h.b16 %v556
        %v2374 = vunpack.c.l.b16 %v557
        %v2375 = vunpack.c.h.b16 %v557
        %v2376 = vunpack.c.l.b16 %v558
        %v2377 = vunpack.c.h.b16 %v558
        %v2378 = vunpack.c.l.b16 %v559
        %v2379 = vunpack.c.h.b16 %v559
        %v2380 = vunpack.c.l.b16 %v560
        %v2381 = vunpack.c.h.b16 %v560
        %v2382 = vunpack.c.l.b16 %v561
        %v2383 = vunpack.c.h.b16 %v561
        %v2384 = vunpack.c.l.b16 %v562
        %v2385 = vunpack.c.h.b16 %v562
        %v2386 = vunpack.c.l.b16 %v563
        %v2387 = vunpack.c.h.b16 %v563
        %v2388 = vpack.c.b16 %v2292, %v2196
        %v2389 = vpack.c.b16 %v2293, %v2197
        %v2390 = vpack.c.b16 %v2294, %v2198
        %v2391 = vpack.c.b16 %v2295, %v2199
        %v2392 = vpack.c.b16 %v2296, %v2200
        %v2393 = vpack.c.b16 %v2297, %v2201
        %v2394 = vpack.c.b16 %v2298, %v2202
        %v2395 = vpack.c.b16 %v2299, %v2203
        %v2396 = vpack.c.b16 %v2300, %v2204
        %v2397 = vpack.c.b16 %v2301, %v2205
        %v2398 = vpack.c.b16 %v2302, %v2206
        %v2399 = vpack.c.b16 %v2303, %v2207
        %v2400 = vpack.c.b16 %v2304, %v2208
        %v2401 = vpack.c.b16 %v2305, %v2209
        %v2402 = vpack.c.b16 %v2306, %v2210
        %v2403 = vpack.c.b16 %v2307, %v2211
        %v2404 = vpack.c.b16 %v2308, %v2212
        %v2405 = vpack.c.b16 %v2309, %v2213
        %v2406 = vpack.c.b16 %v2310, %v2214
        %v2407 = vpack.c.b16 %v2311, %v2215
        %v2408 = vpack.c.b16 %v2312, %v2216
        %v2409 = vpack.c.b16 %v2313, %v2217
        %v2410 = vpack.c.b16 %v2314, %v2218
        %v2411 = vpack.c.b16 %v2315, %v2219
        %v2412 = vpack.c.b16 %v2316, %v2220
        %v2413 = vpack.c.b16 %v2317, %v2221
        %v2414 = vpack.c.b16 %v2318, %v2222
        %v2415 = vpack.c.b16 %v2319, %v2223
        %v2416 = vpack.c.b16 %v2320, %v2224
        %v2417 = vpack.c.b16 %v2321, %v2225
        %v2418 = vpack.c.b16 %v2322, %v2226
        %v2419 = vpack.c.b16 %v2323, %v2227
        %v2420 = vpack.c.b16 %v2324, %v2228
        %v2421 = vpack.c.b16 %v2325, %v2229
        %v2422 = vpack.c.b16 %v2326, %v2230
        %v2423 = vpack.c.b16 %v2327, %v2231
        %v2424 = vpack.c.b16 %v2328, %v2232
        %v2425 = vpack.c.b16 %v2329, %v2233
        %v2426 = vpack.c.b16 %v2330, %v2234
        %v2427 = vpack.c.b16 %v2331, %v2235
        %v2428 = vpack.c.b16 %v2332, %v2236
        %v2429 = vpack.c.b16 %v2333, %v2237
        %v2430 = vpack.c.b16 %v2334, %v2238
        %v2431 = vpack.c.b16 %v2335, %v2239
        %v2432 = vpack.c.b16 %v2336, %v2240
        %v2433 = vpack.c.b16 %v2337, %v2241
        %v2434 = vpack.c.b16 %v2338, %v2242
        %v2435 = vpack.c.b16 %v2339, %v2243
        %v2436 = vpack.c.b16 %v2340, %v2244
        %v2437 = vpack.c.b16 %v2341, %v2245
        %v2438 = vpack.c.b16 %v2342, %v2246
        %v2439 = vpack.c.b16 %v2343, %v2247
        %v2440 = vpack.c.b16 %v2344, %v2248
        %v2441 = vpack.c.b16 %v2345, %v2249
        %v2442 = vpack.c.b16 %v2346, %v2250
        %v2443 = vpack.c.b16 %v2347, %v2251
        %v2444 = vpack.c.b16 %v2348, %v2252
        %v2445 = vpack.c.b16 %v2349, %v2253
        %v2446 = vpack.c.b16 %v2350, %v2254
        %v2447 = vpack.c.b16 %v2351, %v2255
        %v2448 = vpack.c.b16 %v2352, %v2256
        %v2449 = vpack.c.b16 %v2353, %v2257
        %v2450 = vpack.c.b16 %v2354, %v2258
        %v2451 = vpack.c.b16 %v2355, %v2259
        %v2452 = vpack.c.b16 %v2356, %v2260
        %v2453 = vpack.c.b16 %v2357, %v2261
        %v2454 = vpack.c.b16 %v2358, %v2262
        %v2455 = vpack.c.b16 %v2359, %v2263
        %v2456 = vpack.c.b16 %v2360, %v2264
        %v2457 = vpack.c.b16 %v2361, %v2265
        %v2458 = vpack.c.b16 %v2362, %v2266
        %v2459 = vpack.c.b16 %v2363, %v2267
        %v2460 = vpack.c.b16 %v2364, %v2268
        %v2461 = vpack.c.b16 %v2365, %v2269
        %v2462 = vpack.c.b16 %v2366, %v2270
        %v2463 = vpack.c.b16 %v2367, %v2271
        %v2464 = vpack.c.b16 %v2368, %v2272
        %v2465 = vpack.c.b16 %v2369, %v2273
        %v2466 = vpack.c.b16 %v2370, %v2274
        %v2467 = vpack.c.b16 %v2371, %v2275
        %v2468 = vpack.c.b16 %v2372, %v2276
        %v2469 = vpack.c.b16 %v2373, %v2277
        %v2470 = vpack.c.b16 %v2374, %v2278
        %v2471 = vpack.c.b16 %v2375, %v2279
        %v2472 = vpack.c.b16 %v2376, %v2280
        %v2473 = vpack.c.b16 %v2377, %v2281
        %v2474 = vpack.c.b16 %v2378, %v2282
        %v2475 = vpack.c.b16 %v2379, %v2283
        %v2476 = vpack.c.b16 %v2380, %v2284
        %v2477 = vpack.c.b16 %v2381, %v2285
        %v2478 = vpack.c.b16 %v2382, %v2286
        %v2479 = vpack.c.b16 %v2383, %v2287
        %v2480 = vpack.c.b16 %v2384, %v2288
        %v2481 = vpack.c.b16 %v2385, %v2289
        %v2482 = vpack.c.b16 %v2386, %v2290
        %v2483 = vpack.c.b16 %v2387, %v2291
        %v4116 = vunpack.c.l.b16 %v564
        %v4117 = vunpack.c.h.b16 %v564
        %v4118 = vunpack.c.l.b16 %v565
        %v4119 = vunpack.c.h.b16 %v565
        %v4120 = vunpack.c.l.b16 %v566
        %v4121 = vunpack.c.h.b16 %v566
        %v4122 = vunpack.c.l.b16 %v567
        %v4123 = vunpack.c.h.b16 %v567
        %v4124 = vunpack.c.l.b16 %v568
        %v4125 = vunpack.c.h.b16 %v568
        %v4126 = vunpack.c.l.b16 %v569
        %v4127 = vunpack.c.h.b16 %v569
        %v4128 = vunpack.c.l.b16 %v570
        %v4129 = vunpack.c.h.b16 %v570
        %v4130 = vunpack.c.l.b16 %v571
        %v4131 = vunpack.c.h.b16 %v571
        %v4132 = vunpack.c.l.b16 %v572
        %v4133 = vunpack.c.h.b16 %v572
        %v4134 = vunpack.c.l.b16 %v573
        %v4135 = vunpack.c.h.b16 %v573
        %v4136 = vunpack.c.l.b16 %v574
        %v4137 = vunpack.c.h.b16 %v574
        %v4138 = vunpack.c.l.b16 %v575
        %v4139 = vunpack.c.h.b16 %v575
        %v4140 = vunpack.c.l.b16 %v576
        %v4141 = vunpack.c.h.b16 %v576
        %v4142 = vunpack.c.l.b16 %v577
        %v4143 = vunpack.c.h.b16 %v577
        %v4144 = vunpack.c.l.b16 %v578
        %v4145 = vunpack.c.h.b16 %v578
        %v4146 = vunpack.c.l.b16 %v579
        %v4147 = vunpack.c.h.b16 %v579
        %v4148 = vunpack.c.l.b16 %v580
        %v4149 = vunpack.c.h.b16 %v580
        %v4150 = vunpack.c.l.b16 %v581
        %v4151 = vunpack.c.h.b16 %v581
        %v4152 = vunpack.c.l.b16 %v582
        %v4153 = vunpack.c.h.b16 %v582
        %v4154 = vunpack.c.l.b16 %v583
        %v4155 = vunpack.c.h.b16 %v583
        %v4156 = vunpack.c.l.b16 %v584
        %v4157 = vunpack.c.h.b16 %v584
        %v4158 = vunpack.c.l.b16 %v585
        %v4159 = vunpack.c.h.b16 %v585
        %v4160 = vunpack.c.l.b16 %v586
        %v4161 = vunpack.c.h.b16 %v586
        %v4162 = vunpack.c.l.b16 %v587
        %v4163 = vunpack.c.h.b16 %v587
        %v4164 = vunpack.c.l.b16 %v588
        %v4165 = vunpack.c.h.b16 %v588
        %v4166 = vunpack.c.l.b16 %v589
        %v4167 = vunpack.c.h.b16 %v589
        %v4168 = vunpack.c.l.b16 %v590
        %v4169 = vunpack.c.h.b16 %v590
        %v4170 = vunpack.c.l.b16 %v591
        %v4171 = vunpack.c.h.b16 %v591
        %v4172 = vunpack.c.l.b16 %v592
        %v4173 = vunpack.c.h.b16 %v592
        %v4174 = vunpack.c.l.b16 %v593
        %v4175 = vunpack.c.h.b16 %v593
        %v4176 = vunpack.c.l.b16 %v594
        %v4177 = vunpack.c.h.b16 %v594
        %v4178 = vunpack.c.l.b16 %v595
        %v4179 = vunpack.c.h.b16 %v595
        %v4180 = vunpack.c.l.b16 %v596
        %v4181 = vunpack.c.h.b16 %v596
        %v4182 = vunpack.c.l.b16 %v597
        %v4183 = vunpack.c.h.b16 %v597
        %v4184 = vunpack.c.l.b16 %v598
        %v4185 = vunpack.c.h.b16 %v598
        %v4186 = vunpack.c.l.b16 %v599
        %v4187 = vunpack.c.h.b16 %v599
        %v4188 = vunpack.c.l.b16 %v600
        %v4189 = vunpack.c.h.b16 %v600
        %v4190 = vunpack.c.l.b16 %v601
        %v4191 = vunpack.c.h.b16 %v601
        %v4192 = vunpack.c.l.b16 %v602
        %v4193 = vunpack.c.h.b16 %v602
        %v4194 = vunpack.c.l.b16 %v603
        %v4195 = vunpack.c.h.b16 %v603
        %v4196 = vunpack.c.l.b16 %v604
        %v4197 = vunpack.c.h.b16 %v604
        %v4198 = vunpack.c.l.b16 %v605
        %v4199 = vunpack.c.h.b16 %v605
        %v4200 = vunpack.c.l.b16 %v606
        %v4201 = vunpack.c.h.b16 %v606
        %v4202 = vunpack.c.l.b16 %v607
        %v4203 = vunpack.c.h.b16 %v607
        %v4204 = vunpack.c.l.b16 %v608
        %v4205 = vunpack.c.h.b16 %v608
        %v4206 = vunpack.c.l.b16 %v609
        %v4207 = vunpack.c.h.b16 %v609
        %v4208 = vunpack.c.l.b16 %v610
        %v4209 = vunpack.c.h.b16 %v610
        %v4210 = vunpack.c.l.b16 %v611
        %v4211 = vunpack.c.h.b16 %v611
        %v4212 = vunpack.c.l.b16 %v612
        %v4213 = vunpack.c.h.b16 %v612
        %v4214 = vunpack.c.l.b16 %v613
        %v4215 = vunpack.c.h.b16 %v613
        %v4216 = vunpack.c.l.b16 %v614
        %v4217 = vunpack.c.h.b16 %v614
        %v4218 = vunpack.c.l.b16 %v615
        %v4219 = vunpack.c.h.b16 %v615
        %v4220 = vunpack.c.l.b16 %v616
        %v4221 = vunpack.c.h.b16 %v616
        %v4222 = vunpack.c.l.b16 %v617
        %v4223 = vunpack.c.h.b16 %v617
        %v4224 = vunpack.c.l.b16 %v618
        %v4225 = vunpack.c.h.b16 %v618
        %v4226 = vunpack.c.l.b16 %v619
        %v4227 = vunpack.c.h.b16 %v619
        %v4228 = vunpack.c.l.b16 %v620
        %v4229 = vunpack.c.h.b16 %v620
        %v4230 = vunpack.c.l.b16 %v621
        %v4231 = vunpack.c.h.b16 %v621
        %v4232 = vunpack.c.l.b16 %v622
        %v4233 = vunpack.c.h.b16 %v622
        %v4234 = vunpack.c.l.b16 %v623
        %v4235 = vunpack.c.h.b16 %v623
        %v4236 = vunpack.c.l.b16 %v624
        %v4237 = vunpack.c.h.b16 %v624
        %v4238 = vunpack.c.l.b16 %v625
        %v4239 = vunpack.c.h.b16 %v625
        %v4240 = vunpack.c.l.b16 %v626
        %v4241 = vunpack.c.h.b16 %v626
        %v4242 = vunpack.c.l.b16 %v627
        %v4243 = vunpack.c.h.b16 %v627
        %v4244 = vunpack.c.l.b16 %v628
        %v4245 = vunpack.c.h.b16 %v628
        %v4246 = vunpack.c.l.b16 %v629
        %v4247 = vunpack.c.h.b16 %v629
        %v4248 = vunpack.c.l.b16 %v630
        %v4249 = vunpack.c.h.b16 %v630
        %v4250 = vunpack.c.l.b16 %v631
        %v4251 = vunpack.c.h.b16 %v631
        %v4252 = vunpack.c.l.b16 %v632
        %v4253 = vunpack.c.h.b16 %v632
        %v4254 = vunpack.c.l.b16 %v633
        %v4255 = vunpack.c.h.b16 %v633
        %v4256 = vunpack.c.l.b16 %v634
        %v4257 = vunpack.c.h.b16 %v634
        %v4258 = vunpack.c.l.b16 %v635
        %v4259 = vunpack.c.h.b16 %v635
        %v4260 = vunpack.c.l.b16 %v636
        %v4261 = vunpack.c.h.b16 %v636
        %v4262 = vunpack.c.l.b16 %v637
        %v4263 = vunpack.c.h.b16 %v637
        %v4264 = vunpack.c.l.b16 %v638
        %v4265 = vunpack.c.h.b16 %v638
        %v4266 = vunpack.c.l.b16 %v639
        %v4267 = vunpack.c.h.b16 %v639
        %v4268 = vunpack.c.l.b16 %v640
        %v4269 = vunpack.c.h.b16 %v640
        %v4270 = vunpack.c.l.b16 %v641
        %v4271 = vunpack.c.h.b16 %v641
        %v4272 = vunpack.c.l.b16 %v642
        %v4273 = vunpack.c.h.b16 %v642
        %v4274 = vunpack.c.l.b16 %v643
        %v4275 = vunpack.c.h.b16 %v643
        %v4276 = vunpack.c.l.b16 %v644
        %v4277 = vunpack.c.h.b16 %v644
        %v4278 = vunpack.c.l.b16 %v645
        %v4279 = vunpack.c.h.b16 %v645
        %v4280 = vunpack.c.l.b16 %v646
        %v4281 = vunpack.c.h.b16 %v646
        %v4282 = vunpack.c.l.b16 %v647
        %v4283 = vunpack.c.h.b16 %v647
        %v4284 = vunpack.c.l.b16 %v648
        %v4285 = vunpack.c.h.b16 %v648
        %v4286 = vunpack.c.l.b16 %v649
        %v4287 = vunpack.c.h.b16 %v649
        %v4288 = vunpack.c.l.b16 %v650
        %v4289 = vunpack.c.h.b16 %v650
        %v4290 = vunpack.c.l.b16 %v651
        %v4291 = vunpack.c.h.b16 %v651
        %v4292 = vunpack.c.l.b16 %v652
        %v4293 = vunpack.c.h.b16 %v652
        %v4294 = vunpack.c.l.b16 %v653
        %v4295 = vunpack.c.h.b16 %v653
        %v4296 = vunpack.c.l.b16 %v654
        %v4297 = vunpack.c.h.b16 %v654
        %v4298 = vunpack.c.l.b16 %v655
        %v4299 = vunpack.c.h.b16 %v655
        %v4300 = vunpack.c.l.b16 %v656
        %v4301 = vunpack.c.h.b16 %v656
        %v4302 = vunpack.c.l.b16 %v657
        %v4303 = vunpack.c.h.b16 %v657
        %v4304 = vunpack.c.l.b16 %v658
        %v4305 = vunpack.c.h.b16 %v658
        %v4306 = vunpack.c.l.b16 %v659
        %v4307 = vunpack.c.h.b16 %v659
        %v4308 = vunpack.c.l.b16 %v660
        %v4309 = vunpack.c.h.b16 %v660
        %v4310 = vunpack.c.l.b16 %v661
        %v4311 = vunpack.c.h.b16 %v661
        %v4312 = vunpack.c.l.b16 %v662
        %v4313 = vunpack.c.h.b16 %v662
        %v4314 = vunpack.c.l.b16 %v663
        %v4315 = vunpack.c.h.b16 %v663
        %v4316 = vunpack.c.l.b16 %v664
        %v4317 = vunpack.c.h.b16 %v664
        %v4318 = vunpack.c.l.b16 %v665
        %v4319 = vunpack.c.h.b16 %v665
        %v4320 = vunpack.c.l.b16 %v666
        %v4321 = vunpack.c.h.b16 %v666
        %v4322 = vunpack.c.l.b16 %v667
        %v4323 = vunpack.c.h.b16 %v667
        %v4324 = vunpack.c.l.b16 %v668
        %v4325 = vunpack.c.h.b16 %v668
        %v4326 = vunpack.c.l.b16 %v669
        %v4327 = vunpack.c.h.b16 %v669
        %v4328 = vunpack.c.l.b16 %v670
        %v4329 = vunpack.c.h.b16 %v670
        %v4330 = vunpack.c.l.b16 %v671
        %v4331 = vunpack.c.h.b16 %v671
        %v4332 = vunpack.c.l.b16 %v672
        %v4333 = vunpack.c.h.b16 %v672
        %v4334 = vunpack.c.l.b16 %v673
        %v4335 = vunpack.c.h.b16 %v673
        %v4336 = vunpack.c.l.b16 %v674
        %v4337 = vunpack.c.h.b16 %v674
        %v4338 = vunpack.c.l.b16 %v675
        %v4339 = vunpack.c.h.b16 %v675
        %v4340 = vunpack.c.l.b16 %v676
        %v4341 = vunpack.c.h.b16 %v676
        %v4342 = vunpack.c.l.b16 %v677
        %v4343 = vunpack.c.h.b16 %v677
        %v4344 = vunpack.c.l.b16 %v678
        %v4345 = vunpack.c.h.b16 %v678
        %v4346 = vunpack.c.l.b16 %v679
        %v4347 = vunpack.c.h.b16 %v679
        %v4348 = vunpack.c.l.b16 %v680
        %v4349 = vunpack.c.h.b16 %v680
        %v4350 = vunpack.c.l.b16 %v681
        %v4351 = vunpack.c.h.b16 %v681
        %v4352 = vunpack.c.l.b16 %v682
        %v4353 = vunpack.c.h.b16 %v682
        %v4354 = vunpack.c.l.b16 %v683
        %v4355 = vunpack.c.h.b16 %v683
        %v4356 = vunpack.c.l.b16 %v684
        %v4357 = vunpack.c.h.b16 %v684
        %v4358 = vunpack.c.l.b16 %v685
        %v4359 = vunpack.c.h.b16 %v685
        %v4360 = vunpack.c.l.b16 %v686
        %v4361 = vunpack.c.h.b16 %v686
        %v4362 = vunpack.c.l.b16 %v687
        %v4363 = vunpack.c.h.b16 %v687
        %v4364 = vunpack.c.l.b16 %v688
        %v4365 = vunpack.c.h.b16 %v688
        %v4366 = vunpack.c.l.b16 %v689
        %v4367 = vunpack.c.h.b16 %v689
        %v4368 = vunpack.c.l.b16 %v690
        %v4369 = vunpack.c.h.b16 %v690
        %v4370 = vunpack.c.l.b16 %v691
        %v4371 = vunpack.c.h.b16 %v691
        %v4372 = vunpack.c.l.b16 %v692
        %v4373 = vunpack.c.h.b16 %v692
        %v4374 = vunpack.c.l.b16 %v693
        %v4375 = vunpack.c.h.b16 %v693
        %v4376 = vunpack.c.l.b16 %v694
        %v4377 = vunpack.c.h.b16 %v694
        %v4378 = vunpack.c.l.b16 %v695
        %v4379 = vunpack.c.h.b16 %v695
        %v4380 = vunpack.c.l.b16 %v696
        %v4381 = vunpack.c.h.b16 %v696
        %v4382 = vunpack.c.l.b16 %v697
        %v4383 = vunpack.c.h.b16 %v697
        %v4384 = vunpack.c.l.b16 %v698
        %v4385 = vunpack.c.h.b16 %v698
        %v4386 = vunpack.c.l.b16 %v699
        %v4387 = vunpack.c.h.b16 %v699
        %v4388 = vunpack.c.l.b16 %v700
        %v4389 = vunpack.c.h.b16 %v700
        %v4390 = vunpack.c.l.b16 %v701
        %v4391 = vunpack.c.h.b16 %v701
        %v4392 = vunpack.c.l.b16 %v702
        %v4393 = vunpack.c.h.b16 %v702
        %v4394 = vunpack.c.l.b16 %v703
        %v4395 = vunpack.c.h.b16 %v703
        %v4396 = vunpack.c.l.b16 %v704
        %v4397 = vunpack.c.h.b16 %v704
        %v4398 = vunpack.c.l.b16 %v705
        %v4399 = vunpack.c.h.b16 %v705
        %v4400 = vunpack.c.l.b16 %v706
        %v4401 = vunpack.c.h.b16 %v706
        %v4402 = vunpack.c.l.b16 %v707
        %v4403 = vunpack.c.h.b16 %v707
        %v4404 = vunpack.c.l.b16 %v708
        %v4405 = vunpack.c.h.b16 %v708
        %v4406 = vunpack.c.l.b16 %v709
        %v4407 = vunpack.c.h.b16 %v709
        %v4408 = vunpack.c.l.b16 %v710
        %v4409 = vunpack.c.h.b16 %v710
        %v4410 = vunpack.c.l.b16 %v711
        %v4411 = vunpack.c.h.b16 %v711
        %v4412 = vunpack.c.l.b16 %v712
        %v4413 = vunpack.c.h.b16 %v712
        %v4414 = vunpack.c.l.b16 %v713
        %v4415 = vunpack.c.h.b16 %v713
        %v4416 = vunpack.c.l.b16 %v714
        %v4417 = vunpack.c.h.b16 %v714
        %v4418 = vunpack.c.l.b16 %v715
        %v4419 = vunpack.c.h.b16 %v715
        %v4420 = vunpack.c.l.b16 %v716
        %v4421 = vunpack.c.h.b16 %v716
        %v4422 = vunpack.c.l.b16 %v717
        %v4423 = vunpack.c.h.b16 %v717
        %v4424 = vunpack.c.l.b16 %v718
        %v4425 = vunpack.c.h.b16 %v718
        %v4426 = vunpack.c.l.b16 %v719
        %v4427 = vunpack.c.h.b16 %v719
        %v4428 = vunpack.c.l.b16 %v720
        %v4429 = vunpack.c.h.b16 %v720
        %v4430 = vunpack.c.l.b16 %v721
        %v4431 = vunpack.c.h.b16 %v721
        %v4432 = vunpack.c.l.b16 %v722
        %v4433 = vunpack.c.h.b16 %v722
        %v4434 = vunpack.c.l.b16 %v723
        %v4435 = vunpack.c.h.b16 %v723
        %v4436 = vunpack.c.l.b16 %v724
        %v4437 = vunpack.c.h.b16 %v724
        %v4438 = vunpack.c.l.b16 %v725
        %v4439 = vunpack.c.h.b16 %v725
        %v4440 = vunpack.c.l.b16 %v726
        %v4441 = vunpack.c.h.b16 %v726
        %v4442 = vunpack.c.l.b16 %v727
        %v4443 = vunpack.c.h.b16 %v727
        %v4444 = vunpack.c.l.b16 %v728
        %v4445 = vunpack.c.h.b16 %v728
        %v4446 = vunpack.c.l.b16 %v729
        %v4447 = vunpack.c.h.b16 %v729
        %v4448 = vunpack.c.l.b16 %v730
        %v4449 = vunpack.c.h.b16 %v730
        %v4450 = vunpack.c.l.b16 %v731
        %v4451 = vunpack.c.h.b16 %v731
        %v4452 = vunpack.c.l.b16 %v732
        %v4453 = vunpack.c.h.b16 %v732
        %v4454 = vunpack.c.l.b16 %v733
        %v4455 = vunpack.c.h.b16 %v733
        %v4456 = vunpack.c.l.b16 %v734
        %v4457 = vunpack.c.h.b16 %v734
        %v4458 = vunpack.c.l.b16 %v735
        %v4459 = vunpack.c.h.b16 %v735
        %v4460 = vunpack.c.l.b16 %v736
        %v4461 = vunpack.c.h.b16 %v736
        %v4462 = vunpack.c.l.b16 %v737
        %v4463 = vunpack.c.h.b16 %v737
        %v4464 = vunpack.c.l.b16 %v738
        %v4465 = vunpack.c.h.b16 %v738
        %v4466 = vunpack.c.l.b16 %v739
        %v4467 = vunpack.c.h.b16 %v739
        %v4468 = vunpack.c.l.b16 %v740
        %v4469 = vunpack.c.h.b16 %v740
        %v4470 = vunpack.c.l.b16 %v741
        %v4471 = vunpack.c.h.b16 %v741
        %v4472 = vunpack.c.l.b16 %v742
        %v4473 = vunpack.c.h.b16 %v742
        %v4474 = vunpack.c.l.b16 %v743
        %v4475 = vunpack.c.h.b16 %v743
        %v4476 = vunpack.c.l.b16 %v744
        %v4477 = vunpack.c.h.b16 %v744
        %v4478 = vunpack.c.l.b16 %v745
        %v4479 = vunpack.c.h.b16 %v745
        %v4480 = vunpack.c.l.b16 %v746
        %v4481 = vunpack.c.h.b16 %v746
        %v4482 = vunpack.c.l.b16 %v747
        %v4483 = vunpack.c.h.b16 %v747
        %v4484 = vunpack.c.l.b16 %v748
        %v4485 = vunpack.c.h.b16 %v748
        %v4486 = vunpack.c.l.b16 %v749
        %v4487 = vunpack.c.h.b16 %v749
        %v4488 = vunpack.c.l.b16 %v750
        %v4489 = vunpack.c.h.b16 %v750
        %v4490 = vunpack.c.l.b16 %v751
        %v4491 = vunpack.c.h.b16 %v751
        %v4492 = vunpack.c.l.b16 %v752
        %v4493 = vunpack.c.h.b16 %v752
        %v4494 = vunpack.c.l.b16 %v753
        %v4495 = vunpack.c.h.b16 %v753
        %v4496 = vunpack.c.l.b16 %v754
        %v4497 = vunpack.c.h.b16 %v754
        %v4498 = vunpack.c.l.b16 %v755
        %v4499 = vunpack.c.h.b16 %v755
        %v4500 = vunpack.c.l.b16 %v756
        %v4501 = vunpack.c.h.b16 %v756
        %v4502 = vunpack.c.l.b16 %v757
        %v4503 = vunpack.c.h.b16 %v757
        %v4504 = vunpack.c.l.b16 %v758
        %v4505 = vunpack.c.h.b16 %v758
        %v4506 = vunpack.c.l.b16 %v759
        %v4507 = vunpack.c.h.b16 %v759
        %v4508 = vunpack.c.l.b16 %v760
        %v4509 = vunpack.c.h.b16 %v760
        %v4510 = vunpack.c.l.b16 %v761
        %v4511 = vunpack.c.h.b16 %v761
        %v4512 = vunpack.c.l.b16 %v762
        %v4513 = vunpack.c.h.b16 %v762
        %v4514 = vunpack.c.l.b16 %v763
        %v4515 = vunpack.c.h.b16 %v763
        %v4516 = vunpack.c.l.b16 %v764
        %v4517 = vunpack.c.h.b16 %v764
        %v4518 = vunpack.c.l.b16 %v765
        %v4519 = vunpack.c.h.b16 %v765
        %v4520 = vunpack.c.l.b16 %v766
        %v4521 = vunpack.c.h.b16 %v766
        %v4522 = vunpack.c.l.b16 %v767
        %v4523 = vunpack.c.h.b16 %v767
        %v4524 = vunpack.c.l.b16 %v768
        %v4525 = vunpack.c.h.b16 %v768
        %v4526 = vunpack.c.l.b16 %v769
        %v4527 = vunpack.c.h.b16 %v769
        %v4528 = vunpack.c.l.b16 %v770
        %v4529 = vunpack.c.h.b16 %v770
        %v4530 = vunpack.c.l.b16 %v771
        %v4531 = vunpack.c.h.b16 %v771
        %v4532 = vunpack.c.l.b16 %v772
        %v4533 = vunpack.c.h.b16 %v772
        %v4534 = vunpack.c.l.b16 %v773
        %v4535 = vunpack.c.h.b16 %v773
        %v4536 = vunpack.c.l.b16 %v774
        %v4537 = vunpack.c.h.b16 %v774
        %v4538 = vunpack.c.l.b16 %v775
        %v4539 = vunpack.c.h.b16 %v775
        %v4540 = vunpack.c.l.b16 %v776
        %v4541 = vunpack.c.h.b16 %v776
        %v4542 = vunpack.c.l.b16 %v777
        %v4543 = vunpack.c.h.b16 %v777
        %v4544 = vunpack.c.l.b16 %v778
        %v4545 = vunpack.c.h.b16 %v778
        %v4546 = vunpack.c.l.b16 %v779
        %v4547 = vunpack.c.h.b16 %v779
        %v4548 = vunpack.c.l.b16 %v780
        %v4549 = vunpack.c.h.b16 %v780
        %v4550 = vunpack.c.l.b16 %v781
        %v4551 = vunpack.c.h.b16 %v781
        %v4552 = vunpack.c.l.b16 %v782
        %v4553 = vunpack.c.h.b16 %v782
        %v4554 = vunpack.c.l.b16 %v783
        %v4555 = vunpack.c.h.b16 %v783
        %v4556 = vunpack.c.l.b16 %v784
        %v4557 = vunpack.c.h.b16 %v784
        %v4558 = vunpack.c.l.b16 %v785
        %v4559 = vunpack.c.h.b16 %v785
        %v4560 = vunpack.c.l.b16 %v786
        %v4561 = vunpack.c.h.b16 %v786
        %v4562 = vunpack.c.l.b16 %v787
        %v4563 = vunpack.c.h.b16 %v787
        %v4564 = vunpack.c.l.b16 %v788
        %v4565 = vunpack.c.h.b16 %v788
        %v4566 = vunpack.c.l.b16 %v789
        %v4567 = vunpack.c.h.b16 %v789
        %v4568 = vunpack.c.l.b16 %v790
        %v4569 = vunpack.c.h.b16 %v790
        %v4570 = vunpack.c.l.b16 %v791
        %v4571 = vunpack.c.h.b16 %v791
        %v4572 = vunpack.c.l.b16 %v792
        %v4573 = vunpack.c.h.b16 %v792
        %v4574 = vunpack.c.l.b16 %v793
        %v4575 = vunpack.c.h.b16 %v793
        %v4576 = vunpack.c.l.b16 %v794
        %v4577 = vunpack.c.h.b16 %v794
        %v4578 = vunpack.c.l.b16 %v795
        %v4579 = vunpack.c.h.b16 %v795
        %v4580 = vunpack.c.l.b16 %v796
        %v4581 = vunpack.c.h.b16 %v796
        %v4582 = vunpack.c.l.b16 %v797
        %v4583 = vunpack.c.h.b16 %v797
        %v4584 = vunpack.c.l.b16 %v798
        %v4585 = vunpack.c.h.b16 %v798
        %v4586 = vunpack.c.l.b16 %v799
        %v4587 = vunpack.c.h.b16 %v799
        %v4588 = vunpack.c.l.b16 %v800
        %v4589 = vunpack.c.h.b16 %v800
        %v4590 = vunpack.c.l.b16 %v801
        %v4591 = vunpack.c.h.b16 %v801
        %v4592 = vunpack.c.l.b16 %v802
        %v4593 = vunpack.c.h.b16 %v802
        %v4594 = vunpack.c.l.b16 %v803
        %v4595 = vunpack.c.h.b16 %v803
        %v4596 = vunpack.c.l.b16 %v804
        %v4597 = vunpack.c.h.b16 %v804
        %v4598 = vunpack.c.l.b16 %v805
        %v4599 = vunpack.c.h.b16 %v805
        %v4600 = vunpack.c.l.b16 %v806
        %v4601 = vunpack.c.h.b16 %v806
        %v4602 = vunpack.c.l.b16 %v807
        %v4603 = vunpack.c.h.b16 %v807
        %v4604 = vunpack.c.l.b16 %v808
        %v4605 = vunpack.c.h.b16 %v808
        %v4606 = vunpack.c.l.b16 %v809
        %v4607 = vunpack.c.h.b16 %v809
        %v4608 = vunpack.c.l.b16 %v810
        %v4609 = vunpack.c.h.b16 %v810
        %v4610 = vunpack.c.l.b16 %v811
        %v4611 = vunpack.c.h.b16 %v811
        %v4612 = vunpack.c.l.b16 %v812
        %v4613 = vunpack.c.h.b16 %v812
        %v4614 = vunpack.c.l.b16 %v813
        %v4615 = vunpack.c.h.b16 %v813
        %v4616 = vunpack.c.l.b16 %v814
        %v4617 = vunpack.c.h.b16 %v814
        %v4618 = vunpack.c.l.b16 %v815
        %v4619 = vunpack.c.h.b16 %v815
        %v4620 = vunpack.c.l.b16 %v816
        %v4621 = vunpack.c.h.b16 %v816
        %v4622 = vunpack.c.l.b16 %v817
        %v4623 = vunpack.c.h.b16 %v817
        %v4624 = vunpack.c.l.b16 %v818
        %v4625 = vunpack.c.h.b16 %v818
        %v4626 = vunpack.c.l.b16 %v819
        %v4627 = vunpack.c.h.b16 %v819
        %v4628 = vunpack.c.l.b16 %v820
        %v4629 = vunpack.c.h.b16 %v820
        %v4630 = vunpack.c.l.b16 %v821
        %v4631 = vunpack.c.h.b16 %v821
        %v4632 = vunpack.c.l.b16 %v822
        %v4633 = vunpack.c.h.b16 %v822
        %v4634 = vunpack.c.l.b16 %v823
        %v4635 = vunpack.c.h.b16 %v823
        %v4636 = vunpack.c.l.b16 %v824
        %v4637 = vunpack.c.h.b16 %v824
        %v4638 = vunpack.c.l.b16 %v825
        %v4639 = vunpack.c.h.b16 %v825
        %v4640 = vunpack.c.l.b16 %v826
        %v4641 = vunpack.c.h.b16 %v826
        %v4642 = vunpack.c.l.b16 %v827
        %v4643 = vunpack.c.h.b16 %v827
        %v4644 = vunpack.c.l.b16 %v828
        %v4645 = vunpack.c.h.b16 %v828
        %v4646 = vunpack.c.l.b16 %v829
        %v4647 = vunpack.c.h.b16 %v829
        %v4648 = vunpack.c.l.b16 %v830
        %v4649 = vunpack.c.h.b16 %v830
        %v4650 = vunpack.c.l.b16 %v831
        %v4651 = vunpack.c.h.b16 %v831
        %v4652 = vunpack.c.l.b16 %v832
        %v4653 = vunpack.c.h.b16 %v832
        %v4654 = vunpack.c.l.b16 %v833
        %v4655 = vunpack.c.h.b16 %v833
        %v4656 = vunpack.c.l.b16 %v834
        %v4657 = vunpack.c.h.b16 %v834
        %v4658 = vunpack.c.l.b16 %v835
        %v4659 = vunpack.c.h.b16 %v835
        %v4660 = vunpack.c.l.b16 %v836
        %v4661 = vunpack.c.h.b16 %v836
        %v4662 = vunpack.c.l.b16 %v837
        %v4663 = vunpack.c.h.b16 %v837
        %v4664 = vunpack.c.l.b16 %v838
        %v4665 = vunpack.c.h.b16 %v838
        %v4666 = vunpack.c.l.b16 %v839
        %v4667 = vunpack.c.h.b16 %v839
        %v4668 = vunpack.c.l.b16 %v840
        %v4669 = vunpack.c.h.b16 %v840
        %v4670 = vunpack.c.l.b16 %v841
        %v4671 = vunpack.c.h.b16 %v841
        %v4672 = vunpack.c.l.b16 %v842
        %v4673 = vunpack.c.h.b16 %v842
        %v4674 = vunpack.c.l.b16 %v843
        %v4675 = vunpack.c.h.b16 %v843
        %v4676 = vunpack.c.l.b16 %v844
        %v4677 = vunpack.c.h.b16 %v844
        %v4678 = vunpack.c.l.b16 %v845
        %v4679 = vunpack.c.h.b16 %v845
        %v4680 = vunpack.c.l.b16 %v846
        %v4681 = vunpack.c.h.b16 %v846
        %v4682 = vunpack.c.l.b16 %v847
        %v4683 = vunpack.c.h.b16 %v847
        %v4684 = vunpack.c.l.b16 %v848
        %v4685 = vunpack.c.h.b16 %v848
        %v4686 = vunpack.c.l.b16 %v849
        %v4687 = vunpack.c.h.b16 %v849
        %v4688 = vunpack.c.l.b16 %v850
        %v4689 = vunpack.c.h.b16 %v850
        %v4690 = vunpack.c.l.b16 %v851
        %v4691 = vunpack.c.h.b16 %v851
        %v4692 = vunpack.c.l.b16 %v852
        %v4693 = vunpack.c.h.b16 %v852
        %v4694 = vunpack.c.l.b16 %v853
        %v4695 = vunpack.c.h.b16 %v853
        %v4696 = vunpack.c.l.b16 %v854
        %v4697 = vunpack.c.h.b16 %v854
        %v4698 = vunpack.c.l.b16 %v855
        %v4699 = vunpack.c.h.b16 %v855
        %v4700 = vunpack.c.l.b16 %v856
        %v4701 = vunpack.c.h.b16 %v856
        %v4702 = vunpack.c.l.b16 %v857
        %v4703 = vunpack.c.h.b16 %v857
        %v4704 = vunpack.c.l.b16 %v858
        %v4705 = vunpack.c.h.b16 %v858
        %v4706 = vunpack.c.l.b16 %v859
        %v4707 = vunpack.c.h.b16 %v859
        %v4708 = vunpack.c.l.b16 %v860
        %v4709 = vunpack.c.h.b16 %v860
        %v4710 = vunpack.c.l.b16 %v861
        %v4711 = vunpack.c.h.b16 %v861
        %v4712 = vunpack.c.l.b16 %v862
        %v4713 = vunpack.c.h.b16 %v862
        %v4714 = vunpack.c.l.b16 %v863
        %v4715 = vunpack.c.h.b16 %v863
        %v4716 = vunpack.c.l.b16 %v864
        %v4717 = vunpack.c.h.b16 %v864
        %v4718 = vunpack.c.l.b16 %v865
        %v4719 = vunpack.c.h.b16 %v865
        %v4720 = vunpack.c.l.b16 %v866
        %v4721 = vunpack.c.h.b16 %v866
        %v4722 = vunpack.c.l.b16 %v867
        %v4723 = vunpack.c.h.b16 %v867
        %v4724 = vunpack.c.l.b16 %v868
        %v4725 = vunpack.c.h.b16 %v868
        %v4726 = vunpack.c.l.b16 %v869
        %v4727 = vunpack.c.h.b16 %v869
        %v4728 = vunpack.c.l.b16 %v870
        %v4729 = vunpack.c.h.b16 %v870
        %v4730 = vunpack.c.l.b16 %v871
        %v4731 = vunpack.c.h.b16 %v871
        %v4732 = vunpack.c.l.b16 %v872
        %v4733 = vunpack.c.h.b16 %v872
        %v4734 = vunpack.c.l.b16 %v873
        %v4735 = vunpack.c.h.b16 %v873
        %v4736 = vunpack.c.l.b16 %v874
        %v4737 = vunpack.c.h.b16 %v874
        %v4738 = vunpack.c.l.b16 %v875
        %v4739 = vunpack.c.h.b16 %v875
        %v4740 = vunpack.c.l.b16 %v876
        %v4741 = vunpack.c.h.b16 %v876
        %v4742 = vunpack.c.l.b16 %v877
        %v4743 = vunpack.c.h.b16 %v877
        %v4744 = vunpack.c.l.b16 %v878
        %v4745 = vunpack.c.h.b16 %v878
        %v4746 = vunpack.c.l.b16 %v879
        %v4747 = vunpack.c.h.b16 %v879
        %v4748 = vunpack.c.l.b16 %v880
        %v4749 = vunpack.c.h.b16 %v880
        %v4750 = vunpack.c.l.b16 %v881
        %v4751 = vunpack.c.h.b16 %v881
        %v4752 = vunpack.c.l.b16 %v882
        %v4753 = vunpack.c.h.b16 %v882
        %v4754 = vunpack.c.l.b16 %v883
        %v4755 = vunpack.c.h.b16 %v883
        %v4756 = vunpack.c.l.b16 %v884
        %v4757 = vunpack.c.h.b16 %v884
        %v4758 = vunpack.c.l.b16 %v885
        %v4759 = vunpack.c.h.b16 %v885
        %v4760 = vunpack.c.l.b16 %v886
        %v4761 = vunpack.c.h.b16 %v886
        %v4762 = vunpack.c.l.b16 %v887
        %v4763 = vunpack.c.h.b16 %v887
        %v4764 = vunpack.c.l.b16 %v888
        %v4765 = vunpack.c.h.b16 %v888
        %v4766 = vunpack.c.l.b16 %v889
        %v4767 = vunpack.c.h.b16 %v889
        %v4768 = vunpack.c.l.b16 %v890
        %v4769 = vunpack.c.h.b16 %v890
        %v4770 = vunpack.c.l.b16 %v891
        %v4771 = vunpack.c.h.b16 %v891
        %v4772 = vunpack.c.l.b16 %v892
        %v4773 = vunpack.c.h.b16 %v892
        %v4774 = vunpack.c.l.b16 %v893
        %v4775 = vunpack.c.h.b16 %v893
        %v4776 = vunpack.c.l.b16 %v894
        %v4777 = vunpack.c.h.b16 %v894
        %v4778 = vunpack.c.l.b16 %v895
        %v4779 = vunpack.c.h.b16 %v895
        %v4780 = vunpack.c.l.b16 %v896
        %v4781 = vunpack.c.h.b16 %v896
        %v4782 = vunpack.c.l.b16 %v897
        %v4783 = vunpack.c.h.b16 %v897
        %v4784 = vunpack.c.l.b16 %v898
        %v4785 = vunpack.c.h.b16 %v898
        %v4786 = vunpack.c.l.b16 %v899
        %v4787 = vunpack.c.h.b16 %v899
        %v4788 = vunpack.c.l.b16 %v900
        %v4789 = vunpack.c.h.b16 %v900
        %v4790 = vunpack.c.l.b16 %v901
        %v4791 = vunpack.c.h.b16 %v901
        %v4792 = vunpack.c.l.b16 %v902
        %v4793 = vunpack.c.h.b16 %v902
        %v4794 = vunpack.c.l.b16 %v903
        %v4795 = vunpack.c.h.b16 %v903
        %v4796 = vunpack.c.l.b16 %v904
        %v4797 = vunpack.c.h.b16 %v904
        %v4798 = vunpack.c.l.b16 %v905
        %v4799 = vunpack.c.h.b16 %v905
        %v4800 = vunpack.c.l.b16 %v906
        %v4801 = vunpack.c.h.b16 %v906
        %v4802 = vunpack.c.l.b16 %v907
        %v4803 = vunpack.c.h.b16 %v907
        %v4804 = vunpack.c.l.b16 %v908
        %v4805 = vunpack.c.h.b16 %v908
        %v4806 = vunpack.c.l.b16 %v909
        %v4807 = vunpack.c.h.b16 %v909
        %v4808 = vunpack.c.l.b16 %v910
        %v4809 = vunpack.c.h.b16 %v910
        %v4810 = vunpack.c.l.b16 %v911
        %v4811 = vunpack.c.h.b16 %v911
        %v4812 = vunpack.c.l.b16 %v912
        %v4813 = vunpack.c.h.b16 %v912
        %v4814 = vunpack.c.l.b16 %v913
        %v4815 = vunpack.c.h.b16 %v913
        %v4816 = vunpack.c.l.b16 %v914
        %v4817 = vunpack.c.h.b16 %v914
        %v4818 = vunpack.c.l.b16 %v915
        %v4819 = vunpack.c.h.b16 %v915
        %v4820 = vunpack.c.l.b16 %v916
        %v4821 = vunpack.c.h.b16 %v916
        %v4822 = vunpack.c.l.b16 %v917
        %v4823 = vunpack.c.h.b16 %v917
        %v4824 = vunpack.c.l.b16 %v918
        %v4825 = vunpack.c.h.b16 %v918
        %v4826 = vunpack.c.l.b16 %v919
        %v4827 = vunpack.c.h.b16 %v919
        %v4828 = vunpack.c.l.b16 %v920
        %v4829 = vunpack.c.h.b16 %v920
        %v4830 = vunpack.c.l.b16 %v921
        %v4831 = vunpack.c.h.b16 %v921
        %v4832 = vunpack.c.l.b16 %v922
        %v4833 = vunpack.c.h.b16 %v922
        %v4834 = vunpack.c.l.b16 %v923
        %v4835 = vunpack.c.h.b16 %v923
        %v4836 = vunpack.c.l.b16 %v924
        %v4837 = vunpack.c.h.b16 %v924
        %v4838 = vunpack.c.l.b16 %v925
        %v4839 = vunpack.c.h.b16 %v925
        %v4840 = vunpack.c.l.b16 %v926
        %v4841 = vunpack.c.h.b16 %v926
        %v4842 = vunpack.c.l.b16 %v927
        %v4843 = vunpack.c.h.b16 %v927
        %v4844 = vunpack.c.l.b16 %v928
        %v4845 = vunpack.c.h.b16 %v928
        %v4846 = vunpack.c.l.b16 %v929
        %v4847 = vunpack.c.h.b16 %v929
        %v4848 = vunpack.c.l.b16 %v930
        %v4849 = vunpack.c.h.b16 %v930
        %v4850 = vunpack.c.l.b16 %v931
        %v4851 = vunpack.c.h.b16 %v931
        %v4852 = vunpack.c.l.b16 %v932
        %v4853 = vunpack.c.h.b16 %v932
        %v4854 = vunpack.c.l.b16 %v933
        %v4855 = vunpack.c.h.b16 %v933
        %v4856 = vunpack.c.l.b16 %v934
        %v4857 = vunpack.c.h.b16 %v934
        %v4858 = vunpack.c.l.b16 %v935
        %v4859 = vunpack.c.h.b16 %v935
        %v4860 = vunpack.c.l.b16 %v936
        %v4861 = vunpack.c.h.b16 %v936
        %v4862 = vunpack.c.l.b16 %v937
        %v4863 = vunpack.c.h.b16 %v937
        %v4864 = vunpack.c.l.b16 %v938
        %v4865 = vunpack.c.h.b16 %v938
        %v4866 = vunpack.c.l.b16 %v939
        %v4867 = vunpack.c.h.b16 %v939
        %v4868 = vunpack.c.l.b16 %v940
        %v4869 = vunpack.c.h.b16 %v940
        %v4870 = vunpack.c.l.b16 %v941
        %v4871 = vunpack.c.h.b16 %v941
        %v4872 = vunpack.c.l.b16 %v942
        %v4873 = vunpack.c.h.b16 %v942
        %v4874 = vunpack.c.l.b16 %v943
        %v4875 = vunpack.c.h.b16 %v943
        %v4876 = vunpack.c.l.b16 %v944
        %v4877 = vunpack.c.h.b16 %v944
        %v4878 = vunpack.c.l.b16 %v945
        %v4879 = vunpack.c.h.b16 %v945
        %v4880 = vunpack.c.l.b16 %v946
        %v4881 = vunpack.c.h.b16 %v946
        %v4882 = vunpack.c.l.b16 %v947
        %v4883 = vunpack.c.h.b16 %v947
        %v4884 = vunpack.c.l.b16 %v948
        %v4885 = vunpack.c.h.b16 %v948
        %v4886 = vunpack.c.l.b16 %v949
        %v4887 = vunpack.c.h.b16 %v949
        %v4888 = vunpack.c.l.b16 %v950
        %v4889 = vunpack.c.h.b16 %v950
        %v4890 = vunpack.c.l.b16 %v951
        %v4891 = vunpack.c.h.b16 %v951
        %v4892 = vunpack.c.l.b16 %v952
        %v4893 = vunpack.c.h.b16 %v952
        %v4894 = vunpack.c.l.b16 %v953
        %v4895 = vunpack.c.h.b16 %v953
        %v4896 = vunpack.c.l.b16 %v954
        %v4897 = vunpack.c.h.b16 %v954
        %v4898 = vunpack.c.l.b16 %v955
        %v4899 = vunpack.c.h.b16 %v955
        %v4900 = vunpack.c.l.b16 %v956
        %v4901 = vunpack.c.h.b16 %v956
        %v4902 = vunpack.c.l.b16 %v957
        %v4903 = vunpack.c.h.b16 %v957
        %v4904 = vunpack.c.l.b16 %v958
        %v4905 = vunpack.c.h.b16 %v958
        %v4906 = vunpack.c.l.b16 %v959
        %v4907 = vunpack.c.h.b16 %v959
        %v4908 = vunpack.c.l.b16 %v960
        %v4909 = vunpack.c.h.b16 %v960
        %v4910 = vunpack.c.l.b16 %v961
        %v4911 = vunpack.c.h.b16 %v961
        %v4912 = vunpack.c.l.b16 %v962
        %v4913 = vunpack.c.h.b16 %v962
        %v4914 = vunpack.c.l.b16 %v963
        %v4915 = vunpack.c.h.b16 %v963
        %v4916 = vunpack.c.l.b16 %v964
        %v4917 = vunpack.c.h.b16 %v964
        %v4918 = vunpack.c.l.b16 %v965
        %v4919 = vunpack.c.h.b16 %v965
        %v4920 = vunpack.c.l.b16 %v966
        %v4921 = vunpack.c.h.b16 %v966
        %v4922 = vunpack.c.l.b16 %v967
        %v4923 = vunpack.c.h.b16 %v967
        %v4924 = vunpack.c.l.b16 %v968
        %v4925 = vunpack.c.h.b16 %v968
        %v4926 = vunpack.c.l.b16 %v969
        %v4927 = vunpack.c.h.b16 %v969
        %v4928 = vunpack.c.l.b16 %v970
        %v4929 = vunpack.c.h.b16 %v970
        %v4930 = vunpack.c.l.b16 %v971
        %v4931 = vunpack.c.h.b16 %v971
        %v4932 = vunpack.c.l.b16 %v972
        %v4933 = vunpack.c.h.b16 %v972
        %v4934 = vunpack.c.l.b16 %v973
        %v4935 = vunpack.c.h.b16 %v973
        %v4936 = vunpack.c.l.b16 %v974
        %v4937 = vunpack.c.h.b16 %v974
        %v4938 = vunpack.c.l.b16 %v975
        %v4939 = vunpack.c.h.b16 %v975
        %v4940 = vunpack.c.l.b16 %v976
        %v4941 = vunpack.c.h.b16 %v976
        %v4942 = vunpack.c.l.b16 %v977
        %v4943 = vunpack.c.h.b16 %v977
        %v4944 = vunpack.c.l.b16 %v978
        %v4945 = vunpack.c.h.b16 %v978
        %v4946 = vunpack.c.l.b16 %v979
        %v4947 = vunpack.c.h.b16 %v979
        %v4948 = vunpack.c.l.b16 %v980
        %v4949 = vunpack.c.h.b16 %v980
        %v4950 = vunpack.c.l.b16 %v981
        %v4951 = vunpack.c.h.b16 %v981
        %v4952 = vunpack.c.l.b16 %v982
        %v4953 = vunpack.c.h.b16 %v982
        %v4954 = vunpack.c.l.b16 %v983
        %v4955 = vunpack.c.h.b16 %v983
        %v4956 = vunpack.c.l.b16 %v984
        %v4957 = vunpack.c.h.b16 %v984
        %v4958 = vunpack.c.l.b16 %v985
        %v4959 = vunpack.c.h.b16 %v985
        %v4960 = vunpack.c.l.b16 %v986
        %v4961 = vunpack.c.h.b16 %v986
        %v4962 = vunpack.c.l.b16 %v987
        %v4963 = vunpack.c.h.b16 %v987
        %v4964 = vunpack.c.l.b16 %v988
        %v4965 = vunpack.c.h.b16 %v988
        %v4966 = vunpack.c.l.b16 %v989
        %v4967 = vunpack.c.h.b16 %v989
        %v4968 = vunpack.c.l.b16 %v990
        %v4969 = vunpack.c.h.b16 %v990
        %v4970 = vunpack.c.l.b16 %v991
        %v4971 = vunpack.c.h.b16 %v991
        %v4972 = vunpack.c.l.b16 %v992
        %v4973 = vunpack.c.h.b16 %v992
        %v4974 = vunpack.c.l.b16 %v993
        %v4975 = vunpack.c.h.b16 %v993
        %v4976 = vunpack.c.l.b16 %v994
        %v4977 = vunpack.c.h.b16 %v994
        %v4978 = vunpack.c.l.b16 %v995
        %v4979 = vunpack.c.h.b16 %v995
        %v4980 = vunpack.c.l.b16 %v996
        %v4981 = vunpack.c.h.b16 %v996
        %v4982 = vunpack.c.l.b16 %v997
        %v4983 = vunpack.c.h.b16 %v997
        %v4984 = vunpack.c.l.b16 %v998
        %v4985 = vunpack.c.h.b16 %v998
        %v4986 = vunpack.c.l.b16 %v999
        %v4987 = vunpack.c.h.b16 %v999
        %v4988 = vunpack.c.l.b16 %v1000
        %v4989 = vunpack.c.h.b16 %v1000
        %v4990 = vunpack.c.l.b16 %v1001
        %v4991 = vunpack.c.h.b16 %v1001
        %v4992 = vunpack.c.l.b16 %v1002
        %v4993 = vunpack.c.h.b16 %v1002
        %v4994 = vunpack.c.l.b16 %v1003
        %v4995 = vunpack.c.h.b16 %v1003
        %v4996 = vunpack.c.l.b16 %v1004
        %v4997 = vunpack.c.h.b16 %v1004
        %v4998 = vunpack.c.l.b16 %v1005
        %v4999 = vunpack.c.h.b16 %v1005
        %v5000 = vunpack.c.l.b16 %v1006
        %v5001 = vunpack.c.h.b16 %v1006
        %v5002 = vunpack.c.l.b16 %v1007
        %v5003 = vunpack.c.h.b16 %v1007
        %v5004 = vunpack.c.l.b16 %v1008
        %v5005 = vunpack.c.h.b16 %v1008
        %v5006 = vunpack.c.l.b16 %v1009
        %v5007 = vunpack.c.h.b16 %v1009
        %v5008 = vunpack.c.l.b16 %v1010
        %v5009 = vunpack.c.h.b16 %v1010
        %v5010 = vunpack.c.l.b16 %v1011
        %v5011 = vunpack.c.h.b16 %v1011
        %v5012 = vunpack.c.l.b16 %v1012
        %v5013 = vunpack.c.h.b16 %v1012
        %v5014 = vunpack.c.l.b16 %v1013
        %v5015 = vunpack.c.h.b16 %v1013
        %v5016 = vunpack.c.l.b16 %v1014
        %v5017 = vunpack.c.h.b16 %v1014
        %v5018 = vunpack.c.l.b16 %v1015
        %v5019 = vunpack.c.h.b16 %v1015
        %v5020 = vunpack.c.l.b16 %v1016
        %v5021 = vunpack.c.h.b16 %v1016
        %v5022 = vunpack.c.l.b16 %v1017
        %v5023 = vunpack.c.h.b16 %v1017
        %v5024 = vunpack.c.l.b16 %v1018
        %v5025 = vunpack.c.h.b16 %v1018
        %v5026 = vunpack.c.l.b16 %v1019
        %v5027 = vunpack.c.h.b16 %v1019
        %v5028 = vunpack.c.l.b16 %v1020
        %v5029 = vunpack.c.h.b16 %v1020
        %v5030 = vunpack.c.l.b16 %v1021
        %v5031 = vunpack.c.h.b16 %v1021
        %v5032 = vunpack.c.l.b16 %v1022
        %v5033 = vunpack.c.h.b16 %v1022
        %v5034 = vunpack.c.l.b16 %v1023
        %v5035 = vunpack.c.h.b16 %v1023
        %v5036 = vunpack.c.l.b16 %v1024
        %v5037 = vunpack.c.h.b16 %v1024
        %v5038 = vunpack.c.l.b16 %v1025
        %v5039 = vunpack.c.h.b16 %v1025
        %v5040 = vunpack.c.l.b16 %v1026
        %v5041 = vunpack.c.h.b16 %v1026
        %v5042 = vunpack.c.l.b16 %v1027
        %v5043 = vunpack.c.h.b16 %v1027
        %v5044 = vunpack.c.l.b16 %v1028
        %v5045 = vunpack.c.h.b16 %v1028
        %v5046 = vunpack.c.l.b16 %v1029
        %v5047 = vunpack.c.h.b16 %v1029
        %v5048 = vunpack.c.l.b16 %v1030
        %v5049 = vunpack.c.h.b16 %v1030
        %v5050 = vunpack.c.l.b16 %v1031
        %v5051 = vunpack.c.h.b16 %v1031
        %v5052 = vunpack.c.l.b16 %v1032
        %v5053 = vunpack.c.h.b16 %v1032
        %v5054 = vunpack.c.l.b16 %v1033
        %v5055 = vunpack.c.h.b16 %v1033
        %v5056 = vunpack.c.l.b16 %v1034
        %v5057 = vunpack.c.h.b16 %v1034
        %v5058 = vunpack.c.l.b16 %v1035
        %v5059 = vunpack.c.h.b16 %v1035
        %v5060 = vunpack.c.l.b16 %v1036
        %v5061 = vunpack.c.h.b16 %v1036
        %v5062 = vunpack.c.l.b16 %v1037
        %v5063 = vunpack.c.h.b16 %v1037
        %v5064 = vunpack.c.l.b16 %v1038
        %v5065 = vunpack.c.h.b16 %v1038
        %v5066 = vunpack.c.l.b16 %v1039
        %v5067 = vunpack.c.h.b16 %v1039
        %v5068 = vunpack.c.l.b16 %v1040
        %v5069 = vunpack.c.h.b16 %v1040
        %v5070 = vunpack.c.l.b16 %v1041
        %v5071 = vunpack.c.h.b16 %v1041
        %v5072 = vunpack.c.l.b16 %v1042
        %v5073 = vunpack.c.h.b16 %v1042
        %v5074 = vunpack.c.l.b16 %v1043
        %v5075 = vunpack.c.h.b16 %v1043
        %v5076 = vunpack.c.l.b16 %v1044
        %v5077 = vunpack.c.h.b16 %v1044
        %v5078 = vunpack.c.l.b16 %v1045
        %v5079 = vunpack.c.h.b16 %v1045
        %v5080 = vunpack.c.l.b16 %v1046
        %v5081 = vunpack.c.h.b16 %v1046
        %v5082 = vunpack.c.l.b16 %v1047
        %v5083 = vunpack.c.h.b16 %v1047
        %v5084 = vunpack.c.l.b16 %v1048
        %v5085 = vunpack.c.h.b16 %v1048
        %v5086 = vunpack.c.l.b16 %v1049
        %v5087 = vunpack.c.h.b16 %v1049
        %v5088 = vunpack.c.l.b16 %v1050
        %v5089 = vunpack.c.h.b16 %v1050
        %v5090 = vunpack.c.l.b16 %v1051
        %v5091 = vunpack.c.h.b16 %v1051
        %v5092 = vunpack.c.l.b16 %v1052
        %v5093 = vunpack.c.h.b16 %v1052
        %v5094 = vunpack.c.l.b16 %v1053
        %v5095 = vunpack.c.h.b16 %v1053
        %v5096 = vunpack.c.l.b16 %v1054
        %v5097 = vunpack.c.h.b16 %v1054
        %v5098 = vunpack.c.l.b16 %v1055
        %v5099 = vunpack.c.h.b16 %v1055
        %v5100 = vunpack.c.l.b16 %v1056
        %v5101 = vunpack.c.h.b16 %v1056
        %v5102 = vunpack.c.l.b16 %v1057
        %v5103 = vunpack.c.h.b16 %v1057
        %v5104 = vunpack.c.l.b16 %v1058
        %v5105 = vunpack.c.h.b16 %v1058
        %v5106 = vunpack.c.l.b16 %v1059
        %v5107 = vunpack.c.h.b16 %v1059
        %v5108 = vunpack.c.l.b16 %v1060
        %v5109 = vunpack.c.h.b16 %v1060
        %v5110 = vunpack.c.l.b16 %v1061
        %v5111 = vunpack.c.h.b16 %v1061
        %v5112 = vunpack.c.l.b16 %v1062
        %v5113 = vunpack.c.h.b16 %v1062
        %v5114 = vunpack.c.l.b16 %v1063
        %v5115 = vunpack.c.h.b16 %v1063
        %v5116 = vunpack.c.l.b16 %v1064
        %v5117 = vunpack.c.h.b16 %v1064
        %v5118 = vunpack.c.l.b16 %v1065
        %v5119 = vunpack.c.h.b16 %v1065
        %v5120 = vunpack.c.l.b16 %v1066
        %v5121 = vunpack.c.h.b16 %v1066
        %v5122 = vunpack.c.l.b16 %v1067
        %v5123 = vunpack.c.h.b16 %v1067
        %v5124 = vunpack.c.l.b16 %v1068
        %v5125 = vunpack.c.h.b16 %v1068
        %v5126 = vunpack.c.l.b16 %v1069
        %v5127 = vunpack.c.h.b16 %v1069
        %v5128 = vunpack.c.l.b16 %v1070
        %v5129 = vunpack.c.h.b16 %v1070
        %v5130 = vunpack.c.l.b16 %v1071
        %v5131 = vunpack.c.h.b16 %v1071
        %v5132 = vunpack.c.l.b16 %v1072
        %v5133 = vunpack.c.h.b16 %v1072
        %v5134 = vunpack.c.l.b16 %v1073
        %v5135 = vunpack.c.h.b16 %v1073
        %v5136 = vunpack.c.l.b16 %v1074
        %v5137 = vunpack.c.h.b16 %v1074
        %v5138 = vunpack.c.l.b16 %v1075
        %v5139 = vunpack.c.h.b16 %v1075
        %v5140 = vunpack.c.l.b16 %v1076
        %v5141 = vunpack.c.h.b16 %v1076
        %v5142 = vunpack.c.l.b16 %v1077
        %v5143 = vunpack.c.h.b16 %v1077
        %v5144 = vunpack.c.l.b16 %v1078
        %v5145 = vunpack.c.h.b16 %v1078
        %v5146 = vunpack.c.l.b16 %v1079
        %v5147 = vunpack.c.h.b16 %v1079
        %v5148 = vunpack.c.l.b16 %v1080
        %v5149 = vunpack.c.h.b16 %v1080
        %v5150 = vunpack.c.l.b16 %v1081
        %v5151 = vunpack.c.h.b16 %v1081
        %v5152 = vunpack.c.l.b16 %v1082
        %v5153 = vunpack.c.h.b16 %v1082
        %v5154 = vunpack.c.l.b16 %v1083
        %v5155 = vunpack.c.h.b16 %v1083
        %v5156 = vunpack.c.l.b16 %v1084
        %v5157 = vunpack.c.h.b16 %v1084
        %v5158 = vunpack.c.l.b16 %v1085
        %v5159 = vunpack.c.h.b16 %v1085
        %v5160 = vunpack.c.l.b16 %v1086
        %v5161 = vunpack.c.h.b16 %v1086
        %v5162 = vunpack.c.l.b16 %v1087
        %v5163 = vunpack.c.h.b16 %v1087
        %v5164 = vunpack.c.l.b16 %v1088
        %v5165 = vunpack.c.h.b16 %v1088
        %v5166 = vunpack.c.l.b16 %v1089
        %v5167 = vunpack.c.h.b16 %v1089
        %v5168 = vunpack.c.l.b16 %v1090
        %v5169 = vunpack.c.h.b16 %v1090
        %v5170 = vunpack.c.l.b16 %v1091
        %v5171 = vunpack.c.h.b16 %v1091
        %v5172 = vunpack.c.l.b16 %v1092
        %v5173 = vunpack.c.h.b16 %v1092
        %v5174 = vunpack.c.l.b16 %v1093
        %v5175 = vunpack.c.h.b16 %v1093
        %v5176 = vunpack.c.l.b16 %v1094
        %v5177 = vunpack.c.h.b16 %v1094
        %v5178 = vunpack.c.l.b16 %v1095
        %v5179 = vunpack.c.h.b16 %v1095
        %v5180 = vunpack.c.l.b16 %v1096
        %v5181 = vunpack.c.h.b16 %v1096
        %v5182 = vunpack.c.l.b16 %v1097
        %v5183 = vunpack.c.h.b16 %v1097
        %v5184 = vunpack.c.l.b16 %v1098
        %v5185 = vunpack.c.h.b16 %v1098
        %v5186 = vunpack.c.l.b16 %v1099
        %v5187 = vunpack.c.h.b16 %v1099
        %v5188 = vunpack.c.l.b16 %v1100
        %v5189 = vunpack.c.h.b16 %v1100
        %v5190 = vunpack.c.l.b16 %v1101
        %v5191 = vunpack.c.h.b16 %v1101
        %v5192 = vunpack.c.l.b16 %v1102
        %v5193 = vunpack.c.h.b16 %v1102
        %v5194 = vunpack.c.l.b16 %v1103
        %v5195 = vunpack.c.h.b16 %v1103
        %v5196 = vunpack.c.l.b16 %v1104
        %v5197 = vunpack.c.h.b16 %v1104
        %v5198 = vunpack.c.l.b16 %v1105
        %v5199 = vunpack.c.h.b16 %v1105
        %v5200 = vunpack.c.l.b16 %v1106
        %v5201 = vunpack.c.h.b16 %v1106
        %v5202 = vunpack.c.l.b16 %v1107
        %v5203 = vunpack.c.h.b16 %v1107
        %v5204 = vunpack.c.l.b16 %v1108
        %v5205 = vunpack.c.h.b16 %v1108
        %v5206 = vunpack.c.l.b16 %v1109
        %v5207 = vunpack.c.h.b16 %v1109
        %v5208 = vunpack.c.l.b16 %v1110
        %v5209 = vunpack.c.h.b16 %v1110
        %v5210 = vunpack.c.l.b16 %v1111
        %v5211 = vunpack.c.h.b16 %v1111
        %v5212 = vunpack.c.l.b16 %v1112
        %v5213 = vunpack.c.h.b16 %v1112
        %v5214 = vunpack.c.l.b16 %v1113
        %v5215 = vunpack.c.h.b16 %v1113
        %v5216 = vunpack.c.l.b16 %v1114
        %v5217 = vunpack.c.h.b16 %v1114
        %v5218 = vunpack.c.l.b16 %v1115
        %v5219 = vunpack.c.h.b16 %v1115
        %v5220 = vunpack.c.l.b16 %v1116
        %v5221 = vunpack.c.h.b16 %v1116
        %v5222 = vunpack.c.l.b16 %v1117
        %v5223 = vunpack.c.h.b16 %v1117
        %v5224 = vunpack.c.l.b16 %v1118
        %v5225 = vunpack.c.h.b16 %v1118
        %v5226 = vunpack.c.l.b16 %v1119
        %v5227 = vunpack.c.h.b16 %v1119
        %v5228 = vunpack.c.l.b16 %v1120
        %v5229 = vunpack.c.h.b16 %v1120
        %v5230 = vunpack.c.l.b16 %v1121
        %v5231 = vunpack.c.h.b16 %v1121
        %v5232 = vunpack.c.l.b16 %v1122
        %v5233 = vunpack.c.h.b16 %v1122
        %v5234 = vunpack.c.l.b16 %v1123
        %v5235 = vunpack.c.h.b16 %v1123
        %v5236 = vunpack.c.l.b16 %v1124
        %v5237 = vunpack.c.h.b16 %v1124
        %v5238 = vunpack.c.l.b16 %v1125
        %v5239 = vunpack.c.h.b16 %v1125
        %v5240 = vunpack.c.l.b16 %v1126
        %v5241 = vunpack.c.h.b16 %v1126
        %v5242 = vunpack.c.l.b16 %v1127
        %v5243 = vunpack.c.h.b16 %v1127
        %v5244 = vunpack.c.l.b16 %v1128
        %v5245 = vunpack.c.h.b16 %v1128
        %v5246 = vunpack.c.l.b16 %v1129
        %v5247 = vunpack.c.h.b16 %v1129
        %v5248 = vunpack.c.l.b16 %v1130
        %v5249 = vunpack.c.h.b16 %v1130
        %v5250 = vunpack.c.l.b16 %v1131
        %v5251 = vunpack.c.h.b16 %v1131
        %v5252 = vunpack.c.l.b16 %v1132
        %v5253 = vunpack.c.h.b16 %v1132
        %v5254 = vunpack.c.l.b16 %v1133
        %v5255 = vunpack.c.h.b16 %v1133
        %v5256 = vunpack.c.l.b16 %v1134
        %v5257 = vunpack.c.h.b16 %v1134
        %v5258 = vunpack.c.l.b16 %v1135
        %v5259 = vunpack.c.h.b16 %v1135
        %v5260 = vunpack.c.l.b16 %v1136
        %v5261 = vunpack.c.h.b16 %v1136
        %v5262 = vunpack.c.l.b16 %v1137
        %v5263 = vunpack.c.h.b16 %v1137
        %v5264 = vunpack.c.l.b16 %v1138
        %v5265 = vunpack.c.h.b16 %v1138
        %v5266 = vunpack.c.l.b16 %v1139
        %v5267 = vunpack.c.h.b16 %v1139
        %v5268 = vunpack.c.l.b16 %v1140
        %v5269 = vunpack.c.h.b16 %v1140
        %v5270 = vunpack.c.l.b16 %v1141
        %v5271 = vunpack.c.h.b16 %v1141
        %v5272 = vunpack.c.l.b16 %v1142
        %v5273 = vunpack.c.h.b16 %v1142
        %v5274 = vunpack.c.l.b16 %v1143
        %v5275 = vunpack.c.h.b16 %v1143
        %v5276 = vunpack.c.l.b16 %v1144
        %v5277 = vunpack.c.h.b16 %v1144
        %v5278 = vunpack.c.l.b16 %v1145
        %v5279 = vunpack.c.h.b16 %v1145
        %v5280 = vunpack.c.l.b16 %v1146
        %v5281 = vunpack.c.h.b16 %v1146
        %v5282 = vunpack.c.l.b16 %v1147
        %v5283 = vunpack.c.h.b16 %v1147
        %v5284 = vunpack.c.l.b16 %v1148
        %v5285 = vunpack.c.h.b16 %v1148
        %v5286 = vunpack.c.l.b16 %v1149
        %v5287 = vunpack.c.h.b16 %v1149
        %v5288 = vunpack.c.l.b16 %v1150
        %v5289 = vunpack.c.h.b16 %v1150
        %v5290 = vunpack.c.l.b16 %v1151
        %v5291 = vunpack.c.h.b16 %v1151
        %v5292 = vunpack.c.l.b16 %v1152
        %v5293 = vunpack.c.h.b16 %v1152
        %v5294 = vunpack.c.l.b16 %v1153
        %v5295 = vunpack.c.h.b16 %v1153
        %v5296 = vunpack.c.l.b16 %v1154
        %v5297 = vunpack.c.h.b16 %v1154
        %v5298 = vunpack.c.l.b16 %v1155
        %v5299 = vunpack.c.h.b16 %v1155
        %v5300 = vunpack.c.l.b16 %v1156
        %v5301 = vunpack.c.h.b16 %v1156
        %v5302 = vunpack.c.l.b16 %v1157
        %v5303 = vunpack.c.h.b16 %v1157
        %v5304 = vunpack.c.l.b16 %v1158
        %v5305 = vunpack.c.h.b16 %v1158
        %v5306 = vunpack.c.l.b16 %v1159
        %v5307 = vunpack.c.h.b16 %v1159
        %v5308 = vunpack.c.l.b16 %v1160
        %v5309 = vunpack.c.h.b16 %v1160
        %v5310 = vunpack.c.l.b16 %v1161
        %v5311 = vunpack.c.h.b16 %v1161
        %v5312 = vunpack.c.l.b16 %v1162
        %v5313 = vunpack.c.h.b16 %v1162
        %v5314 = vunpack.c.l.b16 %v1163
        %v5315 = vunpack.c.h.b16 %v1163
        %v5316 = vunpack.c.l.b16 %v1164
        %v5317 = vunpack.c.h.b16 %v1164
        %v5318 = vunpack.c.l.b16 %v1165
        %v5319 = vunpack.c.h.b16 %v1165
        %v5320 = vunpack.c.l.b16 %v1166
        %v5321 = vunpack.c.h.b16 %v1166
        %v5322 = vunpack.c.l.b16 %v1167
        %v5323 = vunpack.c.h.b16 %v1167
        %v5324 = vunpack.c.l.b16 %v1168
        %v5325 = vunpack.c.h.b16 %v1168
        %v5326 = vunpack.c.l.b16 %v1169
        %v5327 = vunpack.c.h.b16 %v1169
        %v5328 = vunpack.c.l.b16 %v1170
        %v5329 = vunpack.c.h.b16 %v1170
        %v5330 = vunpack.c.l.b16 %v1171
        %v5331 = vunpack.c.h.b16 %v1171
        %v5332 = vunpack.c.l.b16 %v1172
        %v5333 = vunpack.c.h.b16 %v1172
        %v5334 = vunpack.c.l.b16 %v1173
        %v5335 = vunpack.c.h.b16 %v1173
        %v5336 = vunpack.c.l.b16 %v1174
        %v5337 = vunpack.c.h.b16 %v1174
        %v5338 = vunpack.c.l.b16 %v1175
        %v5339 = vunpack.c.h.b16 %v1175
        %v5340 = vunpack.c.l.b16 %v1176
        %v5341 = vunpack.c.h.b16 %v1176
        %v5342 = vunpack.c.l.b16 %v1177
        %v5343 = vunpack.c.h.b16 %v1177
        %v5344 = vunpack.c.l.b16 %v1178
        %v5345 = vunpack.c.h.b16 %v1178
        %v5346 = vunpack.c.l.b16 %v1179
        %v5347 = vunpack.c.h.b16 %v1179
        %v5348 = vunpack.c.l.b16 %v1180
        %v5349 = vunpack.c.h.b16 %v1180
        %v5350 = vunpack.c.l.b16 %v1181
        %v5351 = vunpack.c.h.b16 %v1181
        %v5352 = vunpack.c.l.b16 %v1182
        %v5353 = vunpack.c.h.b16 %v1182
        %v5354 = vunpack.c.l.b16 %v1183
        %v5355 = vunpack.c.h.b16 %v1183
        %v5356 = vunpack.c.l.b16 %v1184
        %v5357 = vunpack.c.h.b16 %v1184
        %v5358 = vunpack.c.l.b16 %v1185
        %v5359 = vunpack.c.h.b16 %v1185
        %v5360 = vunpack.c.l.b16 %v1186
        %v5361 = vunpack.c.h.b16 %v1186
        %v5362 = vunpack.c.l.b16 %v1187
        %v5363 = vunpack.c.h.b16 %v1187
        %v5364 = vunpack.c.l.b16 %v1188
        %v5365 = vunpack.c.h.b16 %v1188
        %v5366 = vunpack.c.l.b16 %v1189
        %v5367 = vunpack.c.h.b16 %v1189
        %v5368 = vunpack.c.l.b16 %v1190
        %v5369 = vunpack.c.h.b16 %v1190
        %v5370 = vunpack.c.l.b16 %v1191
        %v5371 = vunpack.c.h.b16 %v1191
        %v5372 = vunpack.c.l.b16 %v1192
        %v5373 = vunpack.c.h.b16 %v1192
        %v5374 = vunpack.c.l.b16 %v1193
        %v5375 = vunpack.c.h.b16 %v1193
        %v5376 = vunpack.c.l.b16 %v1194
        %v5377 = vunpack.c.h.b16 %v1194
        %v5378 = vunpack.c.l.b16 %v1195
        %v5379 = vunpack.c.h.b16 %v1195
        %v5380 = vunpack.c.l.b16 %v1196
        %v5381 = vunpack.c.h.b16 %v1196
        %v5382 = vunpack.c.l.b16 %v1197
        %v5383 = vunpack.c.h.b16 %v1197
        %v5384 = vunpack.c.l.b16 %v1198
        %v5385 = vunpack.c.h.b16 %v1198
        %v5386 = vunpack.c.l.b16 %v1199
        %v5387 = vunpack.c.h.b16 %v1199
        %v5388 = vunpack.c.l.b16 %v1200
        %v5389 = vunpack.c.h.b16 %v1200
        %v5390 = vunpack.c.l.b16 %v1201
        %v5391 = vunpack.c.h.b16 %v1201
        %v5392 = vunpack.c.l.b16 %v1202
        %v5393 = vunpack.c.h.b16 %v1202
        %v5394 = vunpack.c.l.b16 %v1203
        %v5395 = vunpack.c.h.b16 %v1203
        %v5396 = vunpack.c.l.b16 %v1204
        %v5397 = vunpack.c.h.b16 %v1204
        %v5398 = vunpack.c.l.b16 %v1205
        %v5399 = vunpack.c.h.b16 %v1205
        %v5400 = vunpack.c.l.b16 %v1206
        %v5401 = vunpack.c.h.b16 %v1206
        %v5402 = vunpack.c.l.b16 %v1207
        %v5403 = vunpack.c.h.b16 %v1207
        %v5404 = vunpack.c.l.b16 %v1208
        %v5405 = vunpack.c.h.b16 %v1208
        %v5406 = vunpack.c.l.b16 %v1209
        %v5407 = vunpack.c.h.b16 %v1209
        %v5408 = vunpack.c.l.b16 %v1210
        %v5409 = vunpack.c.h.b16 %v1210
        %v5410 = vunpack.c.l.b16 %v1211
        %v5411 = vunpack.c.h.b16 %v1211
        %v5412 = vunpack.c.l.b16 %v1212
        %v5413 = vunpack.c.h.b16 %v1212
        %v5414 = vunpack.c.l.b16 %v1213
        %v5415 = vunpack.c.h.b16 %v1213
        %v5416 = vunpack.c.l.b16 %v1214
        %v5417 = vunpack.c.h.b16 %v1214
        %v5418 = vunpack.c.l.b16 %v1215
        %v5419 = vunpack.c.h.b16 %v1215
        %v5420 = vunpack.c.l.b16 %v1216
        %v5421 = vunpack.c.h.b16 %v1216
        %v5422 = vunpack.c.l.b16 %v1217
        %v5423 = vunpack.c.h.b16 %v1217
        %v5424 = vunpack.c.l.b16 %v1218
        %v5425 = vunpack.c.h.b16 %v1218
        %v5426 = vunpack.c.l.b16 %v1219
        %v5427 = vunpack.c.h.b16 %v1219
        %v5428 = vunpack.c.l.b16 %v1220
        %v5429 = vunpack.c.h.b16 %v1220
        %v5430 = vunpack.c.l.b16 %v1221
        %v5431 = vunpack.c.h.b16 %v1221
        %v5432 = vunpack.c.l.b16 %v1222
        %v5433 = vunpack.c.h.b16 %v1222
        %v5434 = vunpack.c.l.b16 %v1223
        %v5435 = vunpack.c.h.b16 %v1223
        %v5436 = vunpack.c.l.b16 %v1224
        %v5437 = vunpack.c.h.b16 %v1224
        %v5438 = vunpack.c.l.b16 %v1225
        %v5439 = vunpack.c.h.b16 %v1225
        %v5440 = vunpack.c.l.b16 %v1226
        %v5441 = vunpack.c.h.b16 %v1226
        %v5442 = vunpack.c.l.b16 %v1227
        %v5443 = vunpack.c.h.b16 %v1227
        %v5444 = vunpack.c.l.b16 %v1228
        %v5445 = vunpack.c.h.b16 %v1228
        %v5446 = vunpack.c.l.b16 %v1229
        %v5447 = vunpack.c.h.b16 %v1229
        %v5448 = vunpack.c.l.b16 %v1230
        %v5449 = vunpack.c.h.b16 %v1230
        %v5450 = vunpack.c.l.b16 %v1231
        %v5451 = vunpack.c.h.b16 %v1231
        %v5452 = vunpack.c.l.b16 %v1232
        %v5453 = vunpack.c.h.b16 %v1232
        %v5454 = vunpack.c.l.b16 %v1233
        %v5455 = vunpack.c.h.b16 %v1233
        %v5456 = vunpack.c.l.b16 %v1234
        %v5457 = vunpack.c.h.b16 %v1234
        %v5458 = vunpack.c.l.b16 %v1235
        %v5459 = vunpack.c.h.b16 %v1235
        %v5460 = vunpack.c.l.b16 %v1236
        %v5461 = vunpack.c.h.b16 %v1236
        %v5462 = vunpack.c.l.b16 %v1237
        %v5463 = vunpack.c.h.b16 %v1237
        %v5464 = vunpack.c.l.b16 %v1238
        %v5465 = vunpack.c.h.b16 %v1238
        %v5466 = vunpack.c.l.b16 %v1239
        %v5467 = vunpack.c.h.b16 %v1239
        %v5468 = vunpack.c.l.b16 %v1240
        %v5469 = vunpack.c.h.b16 %v1240
        %v5470 = vunpack.c.l.b16 %v1241
        %v5471 = vunpack.c.h.b16 %v1241
        %v5472 = vunpack.c.l.b16 %v1242
        %v5473 = vunpack.c.h.b16 %v1242
        %v5474 = vunpack.c.l.b16 %v1243
        %v5475 = vunpack.c.h.b16 %v1243
        %v5476 = vunpack.c.l.b16 %v1244
        %v5477 = vunpack.c.h.b16 %v1244
        %v5478 = vunpack.c.l.b16 %v1245
        %v5479 = vunpack.c.h.b16 %v1245
        %v5480 = vunpack.c.l.b16 %v1246
        %v5481 = vunpack.c.h.b16 %v1246
        %v5482 = vunpack.c.l.b16 %v1247
        %v5483 = vunpack.c.h.b16 %v1247
        %v5484 = vunpack.c.l.b16 %v1248
        %v5485 = vunpack.c.h.b16 %v1248
        %v5486 = vunpack.c.l.b16 %v1249
        %v5487 = vunpack.c.h.b16 %v1249
        %v5488 = vunpack.c.l.b16 %v1250
        %v5489 = vunpack.c.h.b16 %v1250
        %v5490 = vunpack.c.l.b16 %v1251
        %v5491 = vunpack.c.h.b16 %v1251
        %v5492 = vunpack.c.l.b16 %v1252
        %v5493 = vunpack.c.h.b16 %v1252
        %v5494 = vunpack.c.l.b16 %v1253
        %v5495 = vunpack.c.h.b16 %v1253
        %v5496 = vunpack.c.l.b16 %v1254
        %v5497 = vunpack.c.h.b16 %v1254
        %v5498 = vunpack.c.l.b16 %v1255
        %v5499 = vunpack.c.h.b16 %v1255
        %v5500 = vunpack.c.l.b16 %v1256
        %v5501 = vunpack.c.h.b16 %v1256
        %v5502 = vunpack.c.l.b16 %v1257
        %v5503 = vunpack.c.h.b16 %v1257
        %v5504 = vunpack.c.l.b16 %v1258
        %v5505 = vunpack.c.h.b16 %v1258
        %v5506 = vunpack.c.l.b16 %v1259
        %v5507 = vunpack.c.h.b16 %v1259
        %v5508 = vunpack.c.l.b16 %v1260
        %v5509 = vunpack.c.h.b16 %v1260
        %v5510 = vunpack.c.l.b16 %v1261
        %v5511 = vunpack.c.h.b16 %v1261
        %v5512 = vunpack.c.l.b16 %v1262
        %v5513 = vunpack.c.h.b16 %v1262
        %v5514 = vunpack.c.l.b16 %v1263
        %v5515 = vunpack.c.h.b16 %v1263
        %v5516 = vunpack.c.l.b16 %v1264
        %v5517 = vunpack.c.h.b16 %v1264
        %v5518 = vunpack.c.l.b16 %v1265
        %v5519 = vunpack.c.h.b16 %v1265
        %v5520 = vunpack.c.l.b16 %v1266
        %v5521 = vunpack.c.h.b16 %v1266
        %v5522 = vunpack.c.l.b16 %v1267
        %v5523 = vunpack.c.h.b16 %v1267
        %v5524 = vunpack.c.l.b16 %v1268
        %v5525 = vunpack.c.h.b16 %v1268
        %v5526 = vunpack.c.l.b16 %v1269
        %v5527 = vunpack.c.h.b16 %v1269
        %v5528 = vunpack.c.l.b16 %v1270
        %v5529 = vunpack.c.h.b16 %v1270
        %v5530 = vunpack.c.l.b16 %v1271
        %v5531 = vunpack.c.h.b16 %v1271
        %v5532 = vunpack.c.l.b16 %v1272
        %v5533 = vunpack.c.h.b16 %v1272
        %v5534 = vunpack.c.l.b16 %v1273
        %v5535 = vunpack.c.h.b16 %v1273
        %v5536 = vunpack.c.l.b16 %v1274
        %v5537 = vunpack.c.h.b16 %v1274
        %v5538 = vunpack.c.l.b16 %v1275
        %v5539 = vunpack.c.h.b16 %v1275
        %v5540 = vunpack.c.l.b16 %v1276
        %v5541 = vunpack.c.h.b16 %v1276
        %v5542 = vunpack.c.l.b16 %v1277
        %v5543 = vunpack.c.h.b16 %v1277
        %v5544 = vunpack.c.l.b16 %v1278
        %v5545 = vunpack.c.h.b16 %v1278
        %v5546 = vunpack.c.l.b16 %v1279
        %v5547 = vunpack.c.h.b16 %v1279
        %v5548 = vunpack.c.l.b16 %v1280
        %v5549 = vunpack.c.h.b16 %v1280
        %v5550 = vunpack.c.l.b16 %v1281
        %v5551 = vunpack.c.h.b16 %v1281
        %v5552 = vunpack.c.l.b16 %v1282
        %v5553 = vunpack.c.h.b16 %v1282
        %v5554 = vunpack.c.l.b16 %v1283
        %v5555 = vunpack.c.h.b16 %v1283
        %v5556 = vunpack.c.l.b16 %v1284
        %v5557 = vunpack.c.h.b16 %v1284
        %v5558 = vunpack.c.l.b16 %v1285
        %v5559 = vunpack.c.h.b16 %v1285
        %v5560 = vunpack.c.l.b16 %v1286
        %v5561 = vunpack.c.h.b16 %v1286
        %v5562 = vunpack.c.l.b16 %v1287
        %v5563 = vunpack.c.h.b16 %v1287
        %v5564 = vunpack.c.l.b16 %v1288
        %v5565 = vunpack.c.h.b16 %v1288
        %v5566 = vunpack.c.l.b16 %v1289
        %v5567 = vunpack.c.h.b16 %v1289
        %v5568 = vunpack.c.l.b16 %v1290
        %v5569 = vunpack.c.h.b16 %v1290
        %v5570 = vunpack.c.l.b16 %v1291
        %v5571 = vunpack.c.h.b16 %v1291
        %v5572 = vunpack.c.l.b16 %v1292
        %v5573 = vunpack.c.h.b16 %v1292
        %v5574 = vunpack.c.l.b16 %v1293
        %v5575 = vunpack.c.h.b16 %v1293
        %v5576 = vunpack.c.l.b16 %v1294
        %v5577 = vunpack.c.h.b16 %v1294
        %v5578 = vunpack.c.l.b16 %v1295
        %v5579 = vunpack.c.h.b16 %v1295
        %v5580 = vunpack.c.l.b16 %v1296
        %v5581 = vunpack.c.h.b16 %v1296
        %v5582 = vunpack.c.l.b16 %v1297
        %v5583 = vunpack.c.h.b16 %v1297
        %v5584 = vunpack.c.l.b16 %v1298
        %v5585 = vunpack.c.h.b16 %v1298
        %v5586 = vunpack.c.l.b16 %v1299
        %v5587 = vunpack.c.h.b16 %v1299
        %v5588 = vunpack.c.l.b16 %v1300
        %v5589 = vunpack.c.h.b16 %v1300
        %v5590 = vunpack.c.l.b16 %v1301
        %v5591 = vunpack.c.h.b16 %v1301
        %v5592 = vunpack.c.l.b16 %v1302
        %v5593 = vunpack.c.h.b16 %v1302
        %v5594 = vunpack.c.l.b16 %v1303
        %v5595 = vunpack.c.h.b16 %v1303
        %v5596 = vunpack.c.l.b16 %v1304
        %v5597 = vunpack.c.h.b16 %v1304
        %v5598 = vunpack.c.l.b16 %v1305
        %v5599 = vunpack.c.h.b16 %v1305
        %v5600 = vunpack.c.l.b16 %v1306
        %v5601 = vunpack.c.h.b16 %v1306
        %v5602 = vunpack.c.l.b16 %v1307
        %v5603 = vunpack.c.h.b16 %v1307
        %v5604 = vunpack.c.l.b16 %v1308
        %v5605 = vunpack.c.h.b16 %v1308
        %v5606 = vunpack.c.l.b16 %v1309
        %v5607 = vunpack.c.h.b16 %v1309
        %v5608 = vunpack.c.l.b16 %v1310
        %v5609 = vunpack.c.h.b16 %v1310
        %v5610 = vunpack.c.l.b16 %v1311
        %v5611 = vunpack.c.h.b16 %v1311
        %v5612 = vunpack.c.l.b16 %v1312
        %v5613 = vunpack.c.h.b16 %v1312
        %v5614 = vunpack.c.l.b16 %v1313
        %v5615 = vunpack.c.h.b16 %v1313
        %v5616 = vunpack.c.l.b16 %v1314
        %v5617 = vunpack.c.h.b16 %v1314
        %v5618 = vunpack.c.l.b16 %v1315
        %v5619 = vunpack.c.h.b16 %v1315
        %v5620 = vunpack.c.l.b16 %v1316
        %v5621 = vunpack.c.h.b16 %v1316
        %v5622 = vunpack.c.l.b16 %v1317
        %v5623 = vunpack.c.h.b16 %v1317
        %v5624 = vunpack.c.l.b16 %v1318
        %v5625 = vunpack.c.h.b16 %v1318
        %v5626 = vunpack.c.l.b16 %v1319
        %v5627 = vunpack.c.h.b16 %v1319
        %v5628 = vunpack.c.l.b16 %v1320
        %v5629 = vunpack.c.h.b16 %v1320
        %v5630 = vunpack.c.l.b16 %v1321
        %v5631 = vunpack.c.h.b16 %v1321
        %v5632 = vunpack.c.l.b16 %v1322
        %v5633 = vunpack.c.h.b16 %v1322
        %v5634 = vunpack.c.l.b16 %v1323
        %v5635 = vunpack.c.h.b16 %v1323
        %v5636 = vunpack.c.l.b16 %v1324
        %v5637 = vunpack.c.h.b16 %v1324
        %v5638 = vunpack.c.l.b16 %v1325
        %v5639 = vunpack.c.h.b16 %v1325
        %v5640 = vunpack.c.l.b16 %v1326
        %v5641 = vunpack.c.h.b16 %v1326
        %v5642 = vunpack.c.l.b16 %v1327
        %v5643 = vunpack.c.h.b16 %v1327
        %v5644 = vunpack.c.l.b16 %v1328
        %v5645 = vunpack.c.h.b16 %v1328
        %v5646 = vunpack.c.l.b16 %v1329
        %v5647 = vunpack.c.h.b16 %v1329
        %v5648 = vunpack.c.l.b16 %v1330
        %v5649 = vunpack.c.h.b16 %v1330
        %v5650 = vunpack.c.l.b16 %v1331
        %v5651 = vunpack.c.h.b16 %v1331
        %v5652 = vunpack.c.l.b16 %v1332
        %v5653 = vunpack.c.h.b16 %v1332
        %v5654 = vunpack.c.l.b16 %v1333
        %v5655 = vunpack.c.h.b16 %v1333
        %v5656 = vunpack.c.l.b16 %v1334
        %v5657 = vunpack.c.h.b16 %v1334
        %v5658 = vunpack.c.l.b16 %v1335
        %v5659 = vunpack.c.h.b16 %v1335
        %v5660 = vunpack.c.l.b16 %v1336
        %v5661 = vunpack.c.h.b16 %v1336
        %v5662 = vunpack.c.l.b16 %v1337
        %v5663 = vunpack.c.h.b16 %v1337
        %v5664 = vunpack.c.l.b16 %v1338
        %v5665 = vunpack.c.h.b16 %v1338
        %v5666 = vunpack.c.l.b16 %v1339
        %v5667 = vunpack.c.h.b16 %v1339
        %v5668 = vunpack.c.l.b16 %v1340
        %v5669 = vunpack.c.h.b16 %v1340
        %v5670 = vunpack.c.l.b16 %v1341
        %v5671 = vunpack.c.h.b16 %v1341
        %v5672 = vunpack.c.l.b16 %v1342
        %v5673 = vunpack.c.h.b16 %v1342
        %v5674 = vunpack.c.l.b16 %v1343
        %v5675 = vunpack.c.h.b16 %v1343
        %v5676 = vunpack.c.l.b16 %v1344
        %v5677 = vunpack.c.h.b16 %v1344
        %v5678 = vunpack.c.l.b16 %v1345
        %v5679 = vunpack.c.h.b16 %v1345
        %v5680 = vunpack.c.l.b16 %v1346
        %v5681 = vunpack.c.h.b16 %v1346
        %v5682 = vunpack.c.l.b16 %v1347
        %v5683 = vunpack.c.h.b16 %v1347
        %v5684 = vunpack.c.l.b16 %v1348
        %v5685 = vunpack.c.h.b16 %v1348
        %v5686 = vunpack.c.l.b16 %v1349
        %v5687 = vunpack.c.h.b16 %v1349
        %v5688 = vunpack.c.l.b16 %v1350
        %v5689 = vunpack.c.h.b16 %v1350
        %v5690 = vunpack.c.l.b16 %v1351
        %v5691 = vunpack.c.h.b16 %v1351
        %v5692 = vunpack.c.l.b16 %v1352
        %v5693 = vunpack.c.h.b16 %v1352
        %v5694 = vunpack.c.l.b16 %v1353
        %v5695 = vunpack.c.h.b16 %v1353
        %v5696 = vunpack.c.l.b16 %v1354
        %v5697 = vunpack.c.h.b16 %v1354
        %v5698 = vunpack.c.l.b16 %v1355
        %v5699 = vunpack.c.h.b16 %v1355
        %v5700 = vunpack.c.l.b16 %v1356
        %v5701 = vunpack.c.h.b16 %v1356
        %v5702 = vunpack.c.l.b16 %v1357
        %v5703 = vunpack.c.h.b16 %v1357
        %v5704 = vunpack.c.l.b16 %v1358
        %v5705 = vunpack.c.h.b16 %v1358
        %v5706 = vunpack.c.l.b16 %v1359
        %v5707 = vunpack.c.h.b16 %v1359
        %v5708 = vunpack.c.l.b16 %v1360
        %v5709 = vunpack.c.h.b16 %v1360
        %v5710 = vunpack.c.l.b16 %v1361
        %v5711 = vunpack.c.h.b16 %v1361
        %v5712 = vunpack.c.l.b16 %v1362
        %v5713 = vunpack.c.h.b16 %v1362
        %v5714 = vunpack.c.l.b16 %v1363
        %v5715 = vunpack.c.h.b16 %v1363
        %v5716 = vunpack.c.l.b16 %v1364
        %v5717 = vunpack.c.h.b16 %v1364
        %v5718 = vunpack.c.l.b16 %v1365
        %v5719 = vunpack.c.h.b16 %v1365
        %v5720 = vunpack.c.l.b16 %v1366
        %v5721 = vunpack.c.h.b16 %v1366
        %v5722 = vunpack.c.l.b16 %v1367
        %v5723 = vunpack.c.h.b16 %v1367
        %v5724 = vunpack.c.l.b16 %v1368
        %v5725 = vunpack.c.h.b16 %v1368
        %v5726 = vunpack.c.l.b16 %v1369
        %v5727 = vunpack.c.h.b16 %v1369
        %v5728 = vunpack.c.l.b16 %v1370
        %v5729 = vunpack.c.h.b16 %v1370
        %v5730 = vunpack.c.l.b16 %v1371
        %v5731 = vunpack.c.h.b16 %v1371
        %v5732 = vunpack.c.l.b16 %v1372
        %v5733 = vunpack.c.h.b16 %v1372
        %v5734 = vunpack.c.l.b16 %v1373
        %v5735 = vunpack.c.h.b16 %v1373
        %v5736 = vunpack.c.l.b16 %v1374
        %v5737 = vunpack.c.h.b16 %v1374
        %v5738 = vunpack.c.l.b16 %v1375
        %v5739 = vunpack.c.h.b16 %v1375
        %v5740 = vunpack.c.l.b16 %v1376
        %v5741 = vunpack.c.h.b16 %v1376
        %v5742 = vunpack.c.l.b16 %v1377
        %v5743 = vunpack.c.h.b16 %v1377
        %v5744 = vunpack.c.l.b16 %v1378
        %v5745 = vunpack.c.h.b16 %v1378
        %v5746 = vunpack.c.l.b16 %v1379
        %v5747 = vunpack.c.h.b16 %v1379
        %v5748 = vunpack.c.l.b16 %v1380
        %v5749 = vunpack.c.h.b16 %v1380
        %v5750 = vunpack.c.l.b16 %v1381
        %v5751 = vunpack.c.h.b16 %v1381
        %v5752 = vunpack.c.l.b16 %v1382
        %v5753 = vunpack.c.h.b16 %v1382
        %v5754 = vunpack.c.l.b16 %v1383
        %v5755 = vunpack.c.h.b16 %v1383
        %v5756 = vunpack.c.l.b16 %v1384
        %v5757 = vunpack.c.h.b16 %v1384
        %v5758 = vunpack.c.l.b16 %v1385
        %v5759 = vunpack.c.h.b16 %v1385
        %v5760 = vunpack.c.l.b16 %v1386
        %v5761 = vunpack.c.h.b16 %v1386
        %v5762 = vunpack.c.l.b16 %v1387
        %v5763 = vunpack.c.h.b16 %v1387
        %v5764 = vunpack.c.l.b16 %v1388
        %v5765 = vunpack.c.h.b16 %v1388
        %v5766 = vunpack.c.l.b16 %v1389
        %v5767 = vunpack.c.h.b16 %v1389
        %v5768 = vunpack.c.l.b16 %v1390
        %v5769 = vunpack.c.h.b16 %v1390
        %v5770 = vunpack.c.l.b16 %v1391
        %v5771 = vunpack.c.h.b16 %v1391
        %v5772 = vunpack.c.l.b16 %v1392
        %v5773 = vunpack.c.h.b16 %v1392
        %v5774 = vunpack.c.l.b16 %v1393
        %v5775 = vunpack.c.h.b16 %v1393
        %v5776 = vunpack.c.l.b16 %v1394
        %v5777 = vunpack.c.h.b16 %v1394
        %v5778 = vunpack.c.l.b16 %v1395
        %v5779 = vunpack.c.h.b16 %v1395
        %v5780 = vunpack.c.l.b16 %v1396
        %v5781 = vunpack.c.h.b16 %v1396
        %v5782 = vunpack.c.l.b16 %v1397
        %v5783 = vunpack.c.h.b16 %v1397
        %v5784 = vunpack.c.l.b16 %v1398
        %v5785 = vunpack.c.h.b16 %v1398
        %v5786 = vunpack.c.l.b16 %v1399
        %v5787 = vunpack.c.h.b16 %v1399
        %v5788 = vunpack.c.l.b16 %v1400
        %v5789 = vunpack.c.h.b16 %v1400
        %v5790 = vunpack.c.l.b16 %v1401
        %v5791 = vunpack.c.h.b16 %v1401
        %v5792 = vunpack.c.l.b16 %v1402
        %v5793 = vunpack.c.h.b16 %v1402
        %v5794 = vunpack.c.l.b16 %v1403
        %v5795 = vunpack.c.h.b16 %v1403
        %v5796 = vunpack.c.l.b16 %v1404
        %v5797 = vunpack.c.h.b16 %v1404
        %v5798 = vunpack.c.l.b16 %v1405
        %v5799 = vunpack.c.h.b16 %v1405
        %v5800 = vunpack.c.l.b16 %v1406
        %v5801 = vunpack.c.h.b16 %v1406
        %v5802 = vunpack.c.l.b16 %v1407
        %v5803 = vunpack.c.h.b16 %v1407
        %v5804 = vunpack.c.l.b16 %v1408
        %v5805 = vunpack.c.h.b16 %v1408
        %v5806 = vunpack.c.l.b16 %v1409
        %v5807 = vunpack.c.h.b16 %v1409
        %v5808 = vunpack.c.l.b16 %v1410
        %v5809 = vunpack.c.h.b16 %v1410
        %v5810 = vunpack.c.l.b16 %v1411
        %v5811 = vunpack.c.h.b16 %v1411
        %v5812 = vunpack.c.l.b16 %v1412
        %v5813 = vunpack.c.h.b16 %v1412
        %v5814 = vunpack.c.l.b16 %v1413
        %v5815 = vunpack.c.h.b16 %v1413
        %v5816 = vunpack.c.l.b16 %v1414
        %v5817 = vunpack.c.h.b16 %v1414
        %v5818 = vunpack.c.l.b16 %v1415
        %v5819 = vunpack.c.h.b16 %v1415
        %v5820 = vunpack.c.l.b16 %v1416
        %v5821 = vunpack.c.h.b16 %v1416
        %v5822 = vunpack.c.l.b16 %v1417
        %v5823 = vunpack.c.h.b16 %v1417
        %v5824 = vunpack.c.l.b16 %v1418
        %v5825 = vunpack.c.h.b16 %v1418
        %v5826 = vunpack.c.l.b16 %v1419
        %v5827 = vunpack.c.h.b16 %v1419
        %v5828 = vunpack.c.l.b16 %v1420
        %v5829 = vunpack.c.h.b16 %v1420
        %v5830 = vunpack.c.l.b16 %v1421
        %v5831 = vunpack.c.h.b16 %v1421
        %v5832 = vunpack.c.l.b16 %v1422
        %v5833 = vunpack.c.h.b16 %v1422
        %v5834 = vunpack.c.l.b16 %v1423
        %v5835 = vunpack.c.h.b16 %v1423
        %v5836 = vunpack.c.l.b16 %v1424
        %v5837 = vunpack.c.h.b16 %v1424
        %v5838 = vunpack.c.l.b16 %v1425
        %v5839 = vunpack.c.h.b16 %v1425
        %v5840 = vunpack.c.l.b16 %v1426
        %v5841 = vunpack.c.h.b16 %v1426
        %v5842 = vunpack.c.l.b16 %v1427
        %v5843 = vunpack.c.h.b16 %v1427
        %v5844 = vunpack.c.l.b16 %v1428
        %v5845 = vunpack.c.h.b16 %v1428
        %v5846 = vunpack.c.l.b16 %v1429
        %v5847 = vunpack.c.h.b16 %v1429
        %v5848 = vunpack.c.l.b16 %v1430
        %v5849 = vunpack.c.h.b16 %v1430
        %v5850 = vunpack.c.l.b16 %v1431
        %v5851 = vunpack.c.h.b16 %v1431
        %v5852 = vunpack.c.l.b16 %v1432
        %v5853 = vunpack.c.h.b16 %v1432
        %v5854 = vunpack.c.l.b16 %v1433
        %v5855 = vunpack.c.h.b16 %v1433
        %v5856 = vunpack.c.l.b16 %v1434
        %v5857 = vunpack.c.h.b16 %v1434
        %v5858 = vunpack.c.l.b16 %v1435
        %v5859 = vunpack.c.h.b16 %v1435
        %v5860 = vunpack.c.l.b16 %v1436
        %v5861 = vunpack.c.h.b16 %v1436
        %v5862 = vunpack.c.l.b16 %v1437
        %v5863 = vunpack.c.h.b16 %v1437
        %v5864 = vunpack.c.l.b16 %v1438
        %v5865 = vunpack.c.h.b16 %v1438
        %v5866 = vunpack.c.l.b16 %v1439
        %v5867 = vunpack.c.h.b16 %v1439
        %v5868 = vunpack.c.l.b16 %v1440
        %v5869 = vunpack.c.h.b16 %v1440
        %v5870 = vunpack.c.l.b16 %v1441
        %v5871 = vunpack.c.h.b16 %v1441
        %v5872 = vunpack.c.l.b16 %v1442
        %v5873 = vunpack.c.h.b16 %v1442
        %v5874 = vunpack.c.l.b16 %v1443
        %v5875 = vunpack.c.h.b16 %v1443
        %v5876 = vunpack.c.l.b16 %v1444
        %v5877 = vunpack.c.h.b16 %v1444
        %v5878 = vunpack.c.l.b16 %v1445
        %v5879 = vunpack.c.h.b16 %v1445
        %v5880 = vunpack.c.l.b16 %v1446
        %v5881 = vunpack.c.h.b16 %v1446
        %v5882 = vunpack.c.l.b16 %v1447
        %v5883 = vunpack.c.h.b16 %v1447
        %v5884 = vunpack.c.l.b16 %v1448
        %v5885 = vunpack.c.h.b16 %v1448
        %v5886 = vunpack.c.l.b16 %v1449
        %v5887 = vunpack.c.h.b16 %v1449
        %v5888 = vunpack.c.l.b16 %v1450
        %v5889 = vunpack.c.h.b16 %v1450
        %v5890 = vunpack.c.l.b16 %v1451
        %v5891 = vunpack.c.h.b16 %v1451
        %v5892 = vunpack.c.l.b16 %v1452
        %v5893 = vunpack.c.h.b16 %v1452
        %v5894 = vunpack.c.l.b16 %v1453
        %v5895 = vunpack.c.h.b16 %v1453
        %v5896 = vunpack.c.l.b16 %v1454
        %v5897 = vunpack.c.h.b16 %v1454
        %v5898 = vunpack.c.l.b16 %v1455
        %v5899 = vunpack.c.h.b16 %v1455
        %v5900 = vunpack.c.l.b16 %v1456
        %v5901 = vunpack.c.h.b16 %v1456
        %v5902 = vunpack.c.l.b16 %v1457
        %v5903 = vunpack.c.h.b16 %v1457
        %v5904 = vunpack.c.l.b16 %v1458
        %v5905 = vunpack.c.h.b16 %v1458
        %v5906 = vunpack.c.l.b16 %v1459
        %v5907 = vunpack.c.h.b16 %v1459
        %v5908 = vunpack.c.l.b16 %v1460
        %v5909 = vunpack.c.h.b16 %v1460
        %v5910 = vunpack.c.l.b16 %v1461
        %v5911 = vunpack.c.h.b16 %v1461
        %v5912 = vunpack.c.l.b16 %v1462
        %v5913 = vunpack.c.h.b16 %v1462
        %v5914 = vunpack.c.l.b16 %v1463
        %v5915 = vunpack.c.h.b16 %v1463
        %v5916 = vunpack.c.l.b16 %v1464
        %v5917 = vunpack.c.h.b16 %v1464
        %v5918 = vunpack.c.l.b16 %v1465
        %v5919 = vunpack.c.h.b16 %v1465
        %v5920 = vunpack.c.l.b16 %v1466
        %v5921 = vunpack.c.h.b16 %v1466
        %v5922 = vunpack.c.l.b16 %v1467
        %v5923 = vunpack.c.h.b16 %v1467
        %v5924 = vunpack.c.l.b16 %v1468
        %v5925 = vunpack.c.h.b16 %v1468
        %v5926 = vunpack.c.l.b16 %v1469
        %v5927 = vunpack.c.h.b16 %v1469
        %v5928 = vunpack.c.l.b16 %v1470
        %v5929 = vunpack.c.h.b16 %v1470
        %v5930 = vunpack.c.l.b16 %v1471
        %v5931 = vunpack.c.h.b16 %v1471
        %v5932 = vunpack.c.l.b16 %v1472
        %v5933 = vunpack.c.h.b16 %v1472
        %v5934 = vunpack.c.l.b16 %v1473
        %v5935 = vunpack.c.h.b16 %v1473
        %v5936 = vunpack.c.l.b16 %v1474
        %v5937 = vunpack.c.h.b16 %v1474
        %v5938 = vunpack.c.l.b16 %v1475
        %v5939 = vunpack.c.h.b16 %v1475
        %v5940 = vunpack.c.l.b16 %v1476
        %v5941 = vunpack.c.h.b16 %v1476
        %v5942 = vunpack.c.l.b16 %v1477
        %v5943 = vunpack.c.h.b16 %v1477
        %v5944 = vunpack.c.l.b16 %v1478
        %v5945 = vunpack.c.h.b16 %v1478
        %v5946 = vunpack.c.l.b16 %v1479
        %v5947 = vunpack.c.h.b16 %v1479
        %v5948 = vunpack.c.l.b16 %v1480
        %v5949 = vunpack.c.h.b16 %v1480
        %v5950 = vunpack.c.l.b16 %v1481
        %v5951 = vunpack.c.h.b16 %v1481
        %v5952 = vunpack.c.l.b16 %v1482
        %v5953 = vunpack.c.h.b16 %v1482
        %v5954 = vunpack.c.l.b16 %v1483
        %v5955 = vunpack.c.h.b16 %v1483
        %v5956 = vunpack.c.l.b16 %v1484
        %v5957 = vunpack.c.h.b16 %v1484
        %v5958 = vunpack.c.l.b16 %v1485
        %v5959 = vunpack.c.h.b16 %v1485
        %v5960 = vunpack.c.l.b16 %v1486
        %v5961 = vunpack.c.h.b16 %v1486
        %v5962 = vunpack.c.l.b16 %v1487
        %v5963 = vunpack.c.h.b16 %v1487
        %v5964 = vunpack.c.l.b16 %v1488
        %v5965 = vunpack.c.h.b16 %v1488
        %v5966 = vunpack.c.l.b16 %v1489
        %v5967 = vunpack.c.h.b16 %v1489
        %v5968 = vunpack.c.l.b16 %v1490
        %v5969 = vunpack.c.h.b16 %v1490
        %v5970 = vunpack.c.l.b16 %v1491
        %v5971 = vunpack.c.h.b16 %v1491
        %v5972 = vunpack.c.l.b16 %v1492
        %v5973 = vunpack.c.h.b16 %v1492
        %v5974 = vunpack.c.l.b16 %v1493
        %v5975 = vunpack.c.h.b16 %v1493
        %v5976 = vunpack.c.l.b16 %v1494
        %v5977 = vunpack.c.h.b16 %v1494
        %v5978 = vunpack.c.l.b16 %v1495
        %v5979 = vunpack.c.h.b16 %v1495
        %v5980 = vunpack.c.l.b16 %v1496
        %v5981 = vunpack.c.h.b16 %v1496
        %v5982 = vunpack.c.l.b16 %v1497
        %v5983 = vunpack.c.h.b16 %v1497
        %v5984 = vunpack.c.l.b16 %v1498
        %v5985 = vunpack.c.h.b16 %v1498
        %v5986 = vunpack.c.l.b16 %v1499
        %v5987 = vunpack.c.h.b16 %v1499
        %v5988 = vunpack.c.l.b16 %v1500
        %v5989 = vunpack.c.h.b16 %v1500
        %v5990 = vunpack.c.l.b16 %v1501
        %v5991 = vunpack.c.h.b16 %v1501
        %v5992 = vunpack.c.l.b16 %v1502
        %v5993 = vunpack.c.h.b16 %v1502
        %v5994 = vunpack.c.l.b16 %v1503
        %v5995 = vunpack.c.h.b16 %v1503
        %v5996 = vunpack.c.l.b16 %v1504
        %v5997 = vunpack.c.h.b16 %v1504
        %v5998 = vunpack.c.l.b16 %v1505
        %v5999 = vunpack.c.h.b16 %v1505
        %v6000 = vunpack.c.l.b16 %v1506
        %v6001 = vunpack.c.h.b16 %v1506
        %v6002 = vunpack.c.l.b16 %v1507
        %v6003 = vunpack.c.h.b16 %v1507
        %v6004 = vunpack.c.l.b16 %v1508
        %v6005 = vunpack.c.h.b16 %v1508
        %v6006 = vunpack.c.l.b16 %v1509
        %v6007 = vunpack.c.h.b16 %v1509
        %v6008 = vunpack.c.l.b16 %v1510
        %v6009 = vunpack.c.h.b16 %v1510
        %v6010 = vunpack.c.l.b16 %v1511
        %v6011 = vunpack.c.h.b16 %v1511
        %v6012 = vunpack.c.l.b16 %v1512
        %v6013 = vunpack.c.h.b16 %v1512
        %v6014 = vunpack.c.l.b16 %v1513
        %v6015 = vunpack.c.h.b16 %v1513
        %v6016 = vunpack.c.l.b16 %v1514
        %v6017 = vunpack.c.h.b16 %v1514
        %v6018 = vunpack.c.l.b16 %v1515
        %v6019 = vunpack.c.h.b16 %v1515
        %v6020 = vunpack.c.l.b16 %v1516
        %v6021 = vunpack.c.h.b16 %v1516
        %v6022 = vunpack.c.l.b16 %v1517
        %v6023 = vunpack.c.h.b16 %v1517
        %v6024 = vunpack.c.l.b16 %v1518
        %v6025 = vunpack.c.h.b16 %v1518
        %v6026 = vunpack.c.l.b16 %v1519
        %v6027 = vunpack.c.h.b16 %v1519
        %v6028 = vunpack.c.l.b16 %v1520
        %v6029 = vunpack.c.h.b16 %v1520
        %v6030 = vunpack.c.l.b16 %v1521
        %v6031 = vunpack.c.h.b16 %v1521
        %v6032 = vunpack.c.l.b16 %v1522
        %v6033 = vunpack.c.h.b16 %v1522
        %v6034 = vunpack.c.l.b16 %v1523
        %v6035 = vunpack.c.h.b16 %v1523
        %v6036 = vunpack.c.l.b16 %v1524
        %v6037 = vunpack.c.h.b16 %v1524
        %v6038 = vunpack.c.l.b16 %v1525
        %v6039 = vunpack.c.h.b16 %v1525
        %v6040 = vunpack.c.l.b16 %v1526
        %v6041 = vunpack.c.h.b16 %v1526
        %v6042 = vunpack.c.l.b16 %v1527
        %v6043 = vunpack.c.h.b16 %v1527
        %v6044 = vunpack.c.l.b16 %v1528
        %v6045 = vunpack.c.h.b16 %v1528
        %v6046 = vunpack.c.l.b16 %v1529
        %v6047 = vunpack.c.h.b16 %v1529
        %v6048 = vunpack.c.l.b16 %v1530
        %v6049 = vunpack.c.h.b16 %v1530
        %v6050 = vunpack.c.l.b16 %v1531
        %v6051 = vunpack.c.h.b16 %v1531
        %v6052 = vunpack.c.l.b16 %v1532
        %v6053 = vunpack.c.h.b16 %v1532
        %v6054 = vunpack.c.l.b16 %v1533
        %v6055 = vunpack.c.h.b16 %v1533
        %v6056 = vunpack.c.l.b16 %v1534
        %v6057 = vunpack.c.h.b16 %v1534
        %v6058 = vunpack.c.l.b16 %v1535
        %v6059 = vunpack.c.h.b16 %v1535
        %v6060 = vunpack.c.l.b16 %v1536
        %v6061 = vunpack.c.h.b16 %v1536
        %v6062 = vunpack.c.l.b16 %v1537
        %v6063 = vunpack.c.h.b16 %v1537
        %v6064 = vunpack.c.l.b16 %v1538
        %v6065 = vunpack.c.h.b16 %v1538
        %v6066 = vunpack.c.l.b16 %v1539
        %v6067 = vunpack.c.h.b16 %v1539
        %v6068 = vunpack.c.l.b16 %v1540
        %v6069 = vunpack.c.h.b16 %v1540
        %v6070 = vunpack.c.l.b16 %v1541
        %v6071 = vunpack.c.h.b16 %v1541
        %v6072 = vunpack.c.l.b16 %v1542
        %v6073 = vunpack.c.h.b16 %v1542
        %v6074 = vunpack.c.l.b16 %v1543
        %v6075 = vunpack.c.h.b16 %v1543
        %v6076 = vunpack.c.l.b16 %v1544
        %v6077 = vunpack.c.h.b16 %v1544
        %v6078 = vunpack.c.l.b16 %v1545
        %v6079 = vunpack.c.h.b16 %v1545
        %v6080 = vunpack.c.l.b16 %v1546
        %v6081 = vunpack.c.h.b16 %v1546
        %v6082 = vunpack.c.l.b16 %v1547
        %v6083 = vunpack.c.h.b16 %v1547
        %v6084 = vunpack.c.l.b16 %v1548
        %v6085 = vunpack.c.h.b16 %v1548
        %v6086 = vunpack.c.l.b16 %v1549
        %v6087 = vunpack.c.h.b16 %v1549
        %v6088 = vunpack.c.l.b16 %v1550
        %v6089 = vunpack.c.h.b16 %v1550
        %v6090 = vunpack.c.l.b16 %v1551
        %v6091 = vunpack.c.h.b16 %v1551
        %v6092 = vunpack.c.l.b16 %v1552
        %v6093 = vunpack.c.h.b16 %v1552
        %v6094 = vunpack.c.l.b16 %v1553
        %v6095 = vunpack.c.h.b16 %v1553
        %v6096 = vunpack.c.l.b16 %v1554
        %v6097 = vunpack.c.h.b16 %v1554
        %v6098 = vunpack.c.l.b16 %v1555
        %v6099 = vunpack.c.h.b16 %v1555
        %v6100 = vunpack.c.l.b16 %v1556
        %v6101 = vunpack.c.h.b16 %v1556
        %v6102 = vunpack.c.l.b16 %v1557
        %v6103 = vunpack.c.h.b16 %v1557
        %v6104 = vunpack.c.l.b16 %v1558
        %v6105 = vunpack.c.h.b16 %v1558
        %v6106 = vunpack.c.l.b16 %v1559
        %v6107 = vunpack.c.h.b16 %v1559
        %v6108 = vunpack.c.l.b16 %v1560
        %v6109 = vunpack.c.h.b16 %v1560
        %v6110 = vunpack.c.l.b16 %v1561
        %v6111 = vunpack.c.h.b16 %v1561
        %v6112 = vunpack.c.l.b16 %v1562
        %v6113 = vunpack.c.h.b16 %v1562
        %v6114 = vunpack.c.l.b16 %v1563
        %v6115 = vunpack.c.h.b16 %v1563
        %v6116 = vunpack.c.l.b16 %v1564
        %v6117 = vunpack.c.h.b16 %v1564
        %v6118 = vunpack.c.l.b16 %v1565
        %v6119 = vunpack.c.h.b16 %v1565
        %v6120 = vunpack.c.l.b16 %v1566
        %v6121 = vunpack.c.h.b16 %v1566
        %v6122 = vunpack.c.l.b16 %v1567
        %v6123 = vunpack.c.h.b16 %v1567
        %v6124 = vunpack.c.l.b16 %v1568
        %v6125 = vunpack.c.h.b16 %v1568
        %v6126 = vunpack.c.l.b16 %v1569
        %v6127 = vunpack.c.h.b16 %v1569
        %v6128 = vunpack.c.l.b16 %v1570
        %v6129 = vunpack.c.h.b16 %v1570
        %v6130 = vunpack.c.l.b16 %v1571
        %v6131 = vunpack.c.h.b16 %v1571
        %v6132 = vunpack.c.l.b16 %v1572
        %v6133 = vunpack.c.h.b16 %v1572
        %v6134 = vunpack.c.l.b16 %v1573
        %v6135 = vunpack.c.h.b16 %v1573
        %v6136 = vunpack.c.l.b16 %v1574
        %v6137 = vunpack.c.h.b16 %v1574
        %v6138 = vunpack.c.l.b16 %v1575
        %v6139 = vunpack.c.h.b16 %v1575
        %v6140 = vunpack.c.l.b16 %v1576
        %v6141 = vunpack.c.h.b16 %v1576
        %v6142 = vunpack.c.l.b16 %v1577
        %v6143 = vunpack.c.h.b16 %v1577
        %v6144 = vunpack.c.l.b16 %v1578
        %v6145 = vunpack.c.h.b16 %v1578
        %v6146 = vunpack.c.l.b16 %v1579
        %v6147 = vunpack.c.h.b16 %v1579
        %v6148 = vunpack.c.l.b16 %v1580
        %v6149 = vunpack.c.h.b16 %v1580
        %v6150 = vunpack.c.l.b16 %v1581
        %v6151 = vunpack.c.h.b16 %v1581
        %v6152 = vunpack.c.l.b16 %v1582
        %v6153 = vunpack.c.h.b16 %v1582
        %v6154 = vunpack.c.l.b16 %v1583
        %v6155 = vunpack.c.h.b16 %v1583
        %v6156 = vunpack.c.l.b16 %v1584
        %v6157 = vunpack.c.h.b16 %v1584
        %v6158 = vunpack.c.l.b16 %v1585
        %v6159 = vunpack.c.h.b16 %v1585
        %v6160 = vunpack.c.l.b16 %v1586
        %v6161 = vunpack.c.h.b16 %v1586
        %v6162 = vunpack.c.l.b16 %v1587
        %v6163 = vunpack.c.h.b16 %v1587
        %v6164 = vunpack.c.l.b16 %v1588
        %v6165 = vunpack.c.h.b16 %v1588
        %v6166 = vunpack.c.l.b16 %v1589
        %v6167 = vunpack.c.h.b16 %v1589
        %v6168 = vunpack.c.l.b16 %v1590
        %v6169 = vunpack.c.h.b16 %v1590
        %v6170 = vunpack.c.l.b16 %v1591
        %v6171 = vunpack.c.h.b16 %v1591
        %v6172 = vunpack.c.l.b16 %v1592
        %v6173 = vunpack.c.h.b16 %v1592
        %v6174 = vunpack.c.l.b16 %v1593
        %v6175 = vunpack.c.h.b16 %v1593
        %v6176 = vunpack.c.l.b16 %v1594
        %v6177 = vunpack.c.h.b16 %v1594
        %v6178 = vunpack.c.l.b16 %v1595
        %v6179 = vunpack.c.h.b16 %v1595
        %v6180 = vunpack.c.l.b16 %v1596
        %v6181 = vunpack.c.h.b16 %v1596
        %v6182 = vunpack.c.l.b16 %v1597
        %v6183 = vunpack.c.h.b16 %v1597
        %v6184 = vunpack.c.l.b16 %v1598
        %v6185 = vunpack.c.h.b16 %v1598
        %v6186 = vunpack.c.l.b16 %v1599
        %v6187 = vunpack.c.h.b16 %v1599
        %v6188 = vunpack.c.l.b16 %v1600
        %v6189 = vunpack.c.h.b16 %v1600
        %v6190 = vunpack.c.l.b16 %v1601
        %v6191 = vunpack.c.h.b16 %v1601
        %v6192 = vunpack.c.l.b16 %v1602
        %v6193 = vunpack.c.h.b16 %v1602
        %v6194 = vunpack.c.l.b16 %v1603
        %v6195 = vunpack.c.h.b16 %v1603
        %v6196 = vunpack.c.l.b16 %v1604
        %v6197 = vunpack.c.h.b16 %v1604
        %v6198 = vunpack.c.l.b16 %v1605
        %v6199 = vunpack.c.h.b16 %v1605
        %v6200 = vunpack.c.l.b16 %v1606
        %v6201 = vunpack.c.h.b16 %v1606
        %v6202 = vunpack.c.l.b16 %v1607
        %v6203 = vunpack.c.h.b16 %v1607
        %v6204 = vunpack.c.l.b16 %v1608
        %v6205 = vunpack.c.h.b16 %v1608
        %v6206 = vunpack.c.l.b16 %v1609
        %v6207 = vunpack.c.h.b16 %v1609
        %v6208 = vunpack.c.l.b16 %v1610
        %v6209 = vunpack.c.h.b16 %v1610
        %v6210 = vunpack.c.l.b16 %v1611
        %v6211 = vunpack.c.h.b16 %v1611
        %v6212 = vunpack.c.l.b16 %v1612
        %v6213 = vunpack.c.h.b16 %v1612
        %v6214 = vunpack.c.l.b16 %v1613
        %v6215 = vunpack.c.h.b16 %v1613
        %v6216 = vunpack.c.l.b16 %v1614
        %v6217 = vunpack.c.h.b16 %v1614
        %v6218 = vunpack.c.l.b16 %v1615
        %v6219 = vunpack.c.h.b16 %v1615
        %v6220 = vunpack.c.l.b16 %v1616
        %v6221 = vunpack.c.h.b16 %v1616
        %v6222 = vunpack.c.l.b16 %v1617
        %v6223 = vunpack.c.h.b16 %v1617
        %v6224 = vunpack.c.l.b16 %v1618
        %v6225 = vunpack.c.h.b16 %v1618
        %v6226 = vunpack.c.l.b16 %v1619
        %v6227 = vunpack.c.h.b16 %v1619
        %v6228 = vunpack.c.l.b16 %v1620
        %v6229 = vunpack.c.h.b16 %v1620
        %v6230 = vunpack.c.l.b16 %v1621
        %v6231 = vunpack.c.h.b16 %v1621
        %v6232 = vunpack.c.l.b16 %v1622
        %v6233 = vunpack.c.h.b16 %v1622
        %v6234 = vunpack.c.l.b16 %v1623
        %v6235 = vunpack.c.h.b16 %v1623
        %v6236 = vunpack.c.l.b16 %v1624
        %v6237 = vunpack.c.h.b16 %v1624
        %v6238 = vunpack.c.l.b16 %v1625
        %v6239 = vunpack.c.h.b16 %v1625
        %v6240 = vunpack.c.l.b16 %v1626
        %v6241 = vunpack.c.h.b16 %v1626
        %v6242 = vunpack.c.l.b16 %v1627
        %v6243 = vunpack.c.h.b16 %v1627
        %v6244 = vunpack.c.l.b16 %v1628
        %v6245 = vunpack.c.h.b16 %v1628
        %v6246 = vunpack.c.l.b16 %v1629
        %v6247 = vunpack.c.h.b16 %v1629
        %v6248 = vunpack.c.l.b16 %v1630
        %v6249 = vunpack.c.h.b16 %v1630
        %v6250 = vunpack.c.l.b16 %v1631
        %v6251 = vunpack.c.h.b16 %v1631
        %v6252 = vunpack.c.l.b16 %v1632
        %v6253 = vunpack.c.h.b16 %v1632
        %v6254 = vunpack.c.l.b16 %v1633
        %v6255 = vunpack.c.h.b16 %v1633
        %v6256 = vunpack.c.l.b16 %v1634
        %v6257 = vunpack.c.h.b16 %v1634
        %v6258 = vunpack.c.l.b16 %v1635
        %v6259 = vunpack.c.h.b16 %v1635
        %v6260 = vunpack.c.l.b16 %v1636
        %v6261 = vunpack.c.h.b16 %v1636
        %v6262 = vunpack.c.l.b16 %v1637
        %v6263 = vunpack.c.h.b16 %v1637
        %v6264 = vunpack.c.l.b16 %v1638
        %v6265 = vunpack.c.h.b16 %v1638
        %v6266 = vunpack.c.l.b16 %v1639
        %v6267 = vunpack.c.h.b16 %v1639
        %v6268 = vunpack.c.l.b16 %v1640
        %v6269 = vunpack.c.h.b16 %v1640
        %v6270 = vunpack.c.l.b16 %v1641
        %v6271 = vunpack.c.h.b16 %v1641
        %v6272 = vunpack.c.l.b16 %v1642
        %v6273 = vunpack.c.h.b16 %v1642
        %v6274 = vunpack.c.l.b16 %v1643
        %v6275 = vunpack.c.h.b16 %v1643
        %v6276 = vunpack.c.l.b16 %v1644
        %v6277 = vunpack.c.h.b16 %v1644
        %v6278 = vunpack.c.l.b16 %v1645
        %v6279 = vunpack.c.h.b16 %v1645
        %v6280 = vunpack.c.l.b16 %v1646
        %v6281 = vunpack.c.h.b16 %v1646
        %v6282 = vunpack.c.l.b16 %v1647
        %v6283 = vunpack.c.h.b16 %v1647
        %v6284 = vunpack.c.l.b16 %v1648
        %v6285 = vunpack.c.h.b16 %v1648
        %v6286 = vunpack.c.l.b16 %v1649
        %v6287 = vunpack.c.h.b16 %v1649
        %v6288 = vunpack.c.l.b16 %v1650
        %v6289 = vunpack.c.h.b16 %v1650
        %v6290 = vunpack.c.l.b16 %v1651
        %v6291 = vunpack.c.h.b16 %v1651
        %v6292 = vunpack.c.l.b16 %v1652
        %v6293 = vunpack.c.h.b16 %v1652
        %v6294 = vunpack.c.l.b16 %v1653
        %v6295 = vunpack.c.h.b16 %v1653
        %v6296 = vunpack.c.l.b16 %v1654
        %v6297 = vunpack.c.h.b16 %v1654
        %v6298 = vunpack.c.l.b16 %v1655
        %v6299 = vunpack.c.h.b16 %v1655
        %v6300 = vunpack.c.l.b16 %v1656
        %v6301 = vunpack.c.h.b16 %v1656
        %v6302 = vunpack.c.l.b16 %v1657
        %v6303 = vunpack.c.h.b16 %v1657
        %v6304 = vunpack.c.l.b16 %v1658
        %v6305 = vunpack.c.h.b16 %v1658
        %v6306 = vunpack.c.l.b16 %v1659
        %v6307 = vunpack.c.h.b16 %v1659
        %v6308 = vunpack.c.l.b16 %v1660
        %v6309 = vunpack.c.h.b16 %v1660
        %v6310 = vunpack.c.l.b16 %v1661
        %v6311 = vunpack.c.h.b16 %v1661
        %v6312 = vunpack.c.l.b16 %v1662
        %v6313 = vunpack.c.h.b16 %v1662
        %v6314 = vunpack.c.l.b16 %v1663
        %v6315 = vunpack.c.h.b16 %v1663
        %v6316 = vunpack.c.l.b16 %v1664
        %v6317 = vunpack.c.h.b16 %v1664
        %v6318 = vunpack.c.l.b16 %v1665
        %v6319 = vunpack.c.h.b16 %v1665
        %v6320 = vunpack.c.l.b16 %v1666
        %v6321 = vunpack.c.h.b16 %v1666
        %v6322 = vunpack.c.l.b16 %v1667
        %v6323 = vunpack.c.h.b16 %v1667
        %v6324 = vunpack.c.l.b16 %v1668
        %v6325 = vunpack.c.h.b16 %v1668
        %v6326 = vunpack.c.l.b16 %v1669
        %v6327 = vunpack.c.h.b16 %v1669
        %v6328 = vunpack.c.l.b16 %v1670
        %v6329 = vunpack.c.h.b16 %v1670
        %v6330 = vunpack.c.l.b16 %v1671
        %v6331 = vunpack.c.h.b16 %v1671
        %v6332 = vunpack.c.l.b16 %v1672
        %v6333 = vunpack.c.h.b16 %v1672
        %v6334 = vunpack.c.l.b16 %v1673
        %v6335 = vunpack.c.h.b16 %v1673
        %v6336 = vunpack.c.l.b16 %v1674
        %v6337 = vunpack.c.h.b16 %v1674
        %v6338 = vunpack.c.l.b16 %v1675
        %v6339 = vunpack.c.h.b16 %v1675
        %v6340 = vunpack.c.l.b16 %v1676
        %v6341 = vunpack.c.h.b16 %v1676
        %v6342 = vunpack.c.l.b16 %v1677
        %v6343 = vunpack.c.h.b16 %v1677
        %v6344 = vunpack.c.l.b16 %v1678
        %v6345 = vunpack.c.h.b16 %v1678
        %v6346 = vunpack.c.l.b16 %v1679
        %v6347 = vunpack.c.h.b16 %v1679
        %v6348 = vunpack.c.l.b16 %v1680
        %v6349 = vunpack.c.h.b16 %v1680
        %v6350 = vunpack.c.l.b16 %v1681
        %v6351 = vunpack.c.h.b16 %v1681
        %v6352 = vunpack.c.l.b16 %v1682
        %v6353 = vunpack.c.h.b16 %v1682
        %v6354 = vunpack.c.l.b16 %v1683
        %v6355 = vunpack.c.h.b16 %v1683
        %v6356 = vunpack.c.l.b16 %v1684
        %v6357 = vunpack.c.h.b16 %v1684
        %v6358 = vunpack.c.l.b16 %v1685
        %v6359 = vunpack.c.h.b16 %v1685
        %v6360 = vunpack.c.l.b16 %v1686
        %v6361 = vunpack.c.h.b16 %v1686
        %v6362 = vunpack.c.l.b16 %v1687
        %v6363 = vunpack.c.h.b16 %v1687
        %v6364 = vunpack.c.l.b16 %v1688
        %v6365 = vunpack.c.h.b16 %v1688
        %v6366 = vunpack.c.l.b16 %v1689
        %v6367 = vunpack.c.h.b16 %v1689
        %v6368 = vunpack.c.l.b16 %v1690
        %v6369 = vunpack.c.h.b16 %v1690
        %v6370 = vunpack.c.l.b16 %v1691
        %v6371 = vunpack.c.h.b16 %v1691
        %v6372 = vunpack.c.l.b16 %v1692
        %v6373 = vunpack.c.h.b16 %v1692
        %v6374 = vunpack.c.l.b16 %v1693
        %v6375 = vunpack.c.h.b16 %v1693
        %v6376 = vunpack.c.l.b16 %v1694
        %v6377 = vunpack.c.h.b16 %v1694
        %v6378 = vunpack.c.l.b16 %v1695
        %v6379 = vunpack.c.h.b16 %v1695
        %v6380 = vunpack.c.l.b16 %v1696
        %v6381 = vunpack.c.h.b16 %v1696
        %v6382 = vunpack.c.l.b16 %v1697
        %v6383 = vunpack.c.h.b16 %v1697
        %v6384 = vunpack.c.l.b16 %v1698
        %v6385 = vunpack.c.h.b16 %v1698
        %v6386 = vunpack.c.l.b16 %v1699
        %v6387 = vunpack.c.h.b16 %v1699
        %v6388 = vunpack.c.l.b16 %v1700
        %v6389 = vunpack.c.h.b16 %v1700
        %v6390 = vunpack.c.l.b16 %v1701
        %v6391 = vunpack.c.h.b16 %v1701
        %v6392 = vunpack.c.l.b16 %v1702
        %v6393 = vunpack.c.h.b16 %v1702
        %v6394 = vunpack.c.l.b16 %v1703
        %v6395 = vunpack.c.h.b16 %v1703
        %v6396 = vunpack.c.l.b16 %v1704
        %v6397 = vunpack.c.h.b16 %v1704
        %v6398 = vunpack.c.l.b16 %v1705
        %v6399 = vunpack.c.h.b16 %v1705
        %v6400 = vunpack.c.l.b16 %v1706
        %v6401 = vunpack.c.h.b16 %v1706
        %v6402 = vunpack.c.l.b16 %v1707
        %v6403 = vunpack.c.h.b16 %v1707
        %v6404 = vunpack.c.l.b16 %v1708
        %v6405 = vunpack.c.h.b16 %v1708
        %v6406 = vunpack.c.l.b16 %v1709
        %v6407 = vunpack.c.h.b16 %v1709
        %v6408 = vunpack.c.l.b16 %v1710
        %v6409 = vunpack.c.h.b16 %v1710
        %v6410 = vunpack.c.l.b16 %v1711
        %v6411 = vunpack.c.h.b16 %v1711
        %v6412 = vunpack.c.l.b16 %v1712
        %v6413 = vunpack.c.h.b16 %v1712
        %v6414 = vunpack.c.l.b16 %v1713
        %v6415 = vunpack.c.h.b16 %v1713
        %v6416 = vunpack.c.l.b16 %v1714
        %v6417 = vunpack.c.h.b16 %v1714
        %v6418 = vunpack.c.l.b16 %v1715
        %v6419 = vunpack.c.h.b16 %v1715
        %v6420 = vunpack.c.l.b16 %v1716
        %v6421 = vunpack.c.h.b16 %v1716
        %v6422 = vunpack.c.l.b16 %v1717
        %v6423 = vunpack.c.h.b16 %v1717
        %v6424 = vunpack.c.l.b16 %v1718
        %v6425 = vunpack.c.h.b16 %v1718
        %v6426 = vunpack.c.l.b16 %v1719
        %v6427 = vunpack.c.h.b16 %v1719
        %v6428 = vunpack.c.l.b16 %v1720
        %v6429 = vunpack.c.h.b16 %v1720
        %v6430 = vunpack.c.l.b16 %v1721
        %v6431 = vunpack.c.h.b16 %v1721
        %v6432 = vunpack.c.l.b16 %v1722
        %v6433 = vunpack.c.h.b16 %v1722
        %v6434 = vunpack.c.l.b16 %v1723
        %v6435 = vunpack.c.h.b16 %v1723
        %v6436 = vunpack.c.l.b16 %v1724
        %v6437 = vunpack.c.h.b16 %v1724
        %v6438 = vunpack.c.l.b16 %v1725
        %v6439 = vunpack.c.h.b16 %v1725
        %v6440 = vunpack.c.l.b16 %v1726
        %v6441 = vunpack.c.h.b16 %v1726
        %v6442 = vunpack.c.l.b16 %v1727
        %v6443 = vunpack.c.h.b16 %v1727
        %v6444 = vunpack.c.l.b16 %v1728
        %v6445 = vunpack.c.h.b16 %v1728
        %v6446 = vunpack.c.l.b16 %v1729
        %v6447 = vunpack.c.h.b16 %v1729
        %v6448 = vunpack.c.l.b16 %v1730
        %v6449 = vunpack.c.h.b16 %v1730
        %v6450 = vunpack.c.l.b16 %v1731
        %v6451 = vunpack.c.h.b16 %v1731
        %v6452 = vunpack.c.l.b16 %v1732
        %v6453 = vunpack.c.h.b16 %v1732
        %v6454 = vunpack.c.l.b16 %v1733
        %v6455 = vunpack.c.h.b16 %v1733
        %v6456 = vunpack.c.l.b16 %v1734
        %v6457 = vunpack.c.h.b16 %v1734
        %v6458 = vunpack.c.l.b16 %v1735
        %v6459 = vunpack.c.h.b16 %v1735
        %v6460 = vunpack.c.l.b16 %v1736
        %v6461 = vunpack.c.h.b16 %v1736
        %v6462 = vunpack.c.l.b16 %v1737
        %v6463 = vunpack.c.h.b16 %v1737
        %v6464 = vunpack.c.l.b16 %v1738
        %v6465 = vunpack.c.h.b16 %v1738
        %v6466 = vunpack.c.l.b16 %v1739
        %v6467 = vunpack.c.h.b16 %v1739
        %v6468 = vunpack.c.l.b16 %v1740
        %v6469 = vunpack.c.h.b16 %v1740
        %v6470 = vunpack.c.l.b16 %v1741
        %v6471 = vunpack.c.h.b16 %v1741
        %v6472 = vunpack.c.l.b16 %v1742
        %v6473 = vunpack.c.h.b16 %v1742
        %v6474 = vunpack.c.l.b16 %v1743
        %v6475 = vunpack.c.h.b16 %v1743
        %v6476 = vunpack.c.l.b16 %v1744
        %v6477 = vunpack.c.h.b16 %v1744
        %v6478 = vunpack.c.l.b16 %v1745
        %v6479 = vunpack.c.h.b16 %v1745
        %v6480 = vunpack.c.l.b16 %v1746
        %v6481 = vunpack.c.h.b16 %v1746
        %v6482 = vunpack.c.l.b16 %v1747
        %v6483 = vunpack.c.h.b16 %v1747
        %v6484 = vunpack.c.l.b16 %v1748
        %v6485 = vunpack.c.h.b16 %v1748
        %v6486 = vunpack.c.l.b16 %v1749
        %v6487 = vunpack.c.h.b16 %v1749
        %v6488 = vunpack.c.l.b16 %v1750
        %v6489 = vunpack.c.h.b16 %v1750
        %v6490 = vunpack.c.l.b16 %v1751
        %v6491 = vunpack.c.h.b16 %v1751
        %v6492 = vunpack.c.l.b16 %v1752
        %v6493 = vunpack.c.h.b16 %v1752
        %v6494 = vunpack.c.l.b16 %v1753
        %v6495 = vunpack.c.h.b16 %v1753
        %v6496 = vunpack.c.l.b16 %v1754
        %v6497 = vunpack.c.h.b16 %v1754
        %v6498 = vunpack.c.l.b16 %v1755
        %v6499 = vunpack.c.h.b16 %v1755
        %v6500 = vunpack.c.l.b16 %v1756
        %v6501 = vunpack.c.h.b16 %v1756
        %v6502 = vunpack.c.l.b16 %v1757
        %v6503 = vunpack.c.h.b16 %v1757
        %v6504 = vunpack.c.l.b16 %v1758
        %v6505 = vunpack.c.h.b16 %v1758
        %v6506 = vunpack.c.l.b16 %v1759
        %v6507 = vunpack.c.h.b16 %v1759
        %v6508 = vunpack.c.l.b16 %v1760
        %v6509 = vunpack.c.h.b16 %v1760
        %v6510 = vunpack.c.l.b16 %v1761
        %v6511 = vunpack.c.h.b16 %v1761
        %v6512 = vunpack.c.l.b16 %v1762
        %v6513 = vunpack.c.h.b16 %v1762
        %v6514 = vunpack.c.l.b16 %v1763
        %v6515 = vunpack.c.h.b16 %v1763
        %v6516 = vunpack.c.l.b16 %v1764
        %v6517 = vunpack.c.h.b16 %v1764
        %v6518 = vunpack.c.l.b16 %v1765
        %v6519 = vunpack.c.h.b16 %v1765
        %v6520 = vunpack.c.l.b16 %v1766
        %v6521 = vunpack.c.h.b16 %v1766
        %v6522 = vunpack.c.l.b16 %v1767
        %v6523 = vunpack.c.h.b16 %v1767
        %v6524 = vunpack.c.l.b16 %v1768
        %v6525 = vunpack.c.h.b16 %v1768
        %v6526 = vunpack.c.l.b16 %v1769
        %v6527 = vunpack.c.h.b16 %v1769
        %v6528 = vunpack.c.l.b16 %v1770
        %v6529 = vunpack.c.h.b16 %v1770
        %v6530 = vunpack.c.l.b16 %v1771
        %v6531 = vunpack.c.h.b16 %v1771
        %v6532 = vunpack.c.l.b16 %v1772
        %v6533 = vunpack.c.h.b16 %v1772
        %v6534 = vunpack.c.l.b16 %v1773
        %v6535 = vunpack.c.h.b16 %v1773
        %v6536 = vunpack.c.l.b16 %v1774
        %v6537 = vunpack.c.h.b16 %v1774
        %v6538 = vunpack.c.l.b16 %v1775
        %v6539 = vunpack.c.h.b16 %v1775
        %v6540 = vunpack.c.l.b16 %v1776
        %v6541 = vunpack.c.h.b16 %v1776
        %v6542 = vunpack.c.l.b16 %v1777
        %v6543 = vunpack.c.h.b16 %v1777
        %v6544 = vunpack.c.l.b16 %v1778
        %v6545 = vunpack.c.h.b16 %v1778
        %v6546 = vunpack.c.l.b16 %v1779
        %v6547 = vunpack.c.h.b16 %v1779
        %v6548 = vunpack.c.l.b16 %v1780
        %v6549 = vunpack.c.h.b16 %v1780
        %v6550 = vunpack.c.l.b16 %v1781
        %v6551 = vunpack.c.h.b16 %v1781
        %v6552 = vunpack.c.l.b16 %v1782
        %v6553 = vunpack.c.h.b16 %v1782
        %v6554 = vunpack.c.l.b16 %v1783
        %v6555 = vunpack.c.h.b16 %v1783
        %v6556 = vunpack.c.l.b16 %v1784
        %v6557 = vunpack.c.h.b16 %v1784
        %v6558 = vunpack.c.l.b16 %v1785
        %v6559 = vunpack.c.h.b16 %v1785
        %v6560 = vunpack.c.l.b16 %v1786
        %v6561 = vunpack.c.h.b16 %v1786
        %v6562 = vunpack.c.l.b16 %v1787
        %v6563 = vunpack.c.h.b16 %v1787
        %v6564 = vunpack.c.l.b16 %v1788
        %v6565 = vunpack.c.h.b16 %v1788
        %v6566 = vunpack.c.l.b16 %v1789
        %v6567 = vunpack.c.h.b16 %v1789
        %v6568 = vunpack.c.l.b16 %v1790
        %v6569 = vunpack.c.h.b16 %v1790
        %v6570 = vunpack.c.l.b16 %v1791
        %v6571 = vunpack.c.h.b16 %v1791
        %v6572 = vunpack.c.l.b16 %v1792
        %v6573 = vunpack.c.h.b16 %v1792
        %v6574 = vunpack.c.l.b16 %v1793
        %v6575 = vunpack.c.h.b16 %v1793
        %v6576 = vunpack.c.l.b16 %v1794
        %v6577 = vunpack.c.h.b16 %v1794
        %v6578 = vunpack.c.l.b16 %v1795
        %v6579 = vunpack.c.h.b16 %v1795
        %v6580 = vunpack.c.l.b16 %v1796
        %v6581 = vunpack.c.h.b16 %v1796
        %v6582 = vunpack.c.l.b16 %v1797
        %v6583 = vunpack.c.h.b16 %v1797
        %v6584 = vunpack.c.l.b16 %v1798
        %v6585 = vunpack.c.h.b16 %v1798
        %v6586 = vunpack.c.l.b16 %v1799
        %v6587 = vunpack.c.h.b16 %v1799
        %v6588 = vunpack.c.l.b16 %v1800
        %v6589 = vunpack.c.h.b16 %v1800
        %v6590 = vunpack.c.l.b16 %v1801
        %v6591 = vunpack.c.h.b16 %v1801
        %v6592 = vunpack.c.l.b16 %v1802
        %v6593 = vunpack.c.h.b16 %v1802
        %v6594 = vunpack.c.l.b16 %v1803
        %v6595 = vunpack.c.h.b16 %v1803
        %v6596 = vunpack.c.l.b16 %v1804
        %v6597 = vunpack.c.h.b16 %v1804
        %v6598 = vunpack.c.l.b16 %v1805
        %v6599 = vunpack.c.h.b16 %v1805
        %v6600 = vunpack.c.l.b16 %v1806
        %v6601 = vunpack.c.h.b16 %v1806
        %v6602 = vunpack.c.l.b16 %v1807
        %v6603 = vunpack.c.h.b16 %v1807
        %v6604 = vunpack.c.l.b16 %v1808
        %v6605 = vunpack.c.h.b16 %v1808
        %v6606 = vunpack.c.l.b16 %v1809
        %v6607 = vunpack.c.h.b16 %v1809
        %v6608 = vunpack.c.l.b16 %v1810
        %v6609 = vunpack.c.h.b16 %v1810
        %v6610 = vunpack.c.l.b16 %v1811
        %v6611 = vunpack.c.h.b16 %v1811
        %v6612 = vunpack.c.l.b16 %v1812
        %v6613 = vunpack.c.h.b16 %v1812
        %v6614 = vunpack.c.l.b16 %v1813
        %v6615 = vunpack.c.h.b16 %v1813
        %v6616 = vunpack.c.l.b16 %v1814
        %v6617 = vunpack.c.h.b16 %v1814
        %v6618 = vunpack.c.l.b16 %v1815
        %v6619 = vunpack.c.h.b16 %v1815
        %v6620 = vunpack.c.l.b16 %v1816
        %v6621 = vunpack.c.h.b16 %v1816
        %v6622 = vunpack.c.l.b16 %v1817
        %v6623 = vunpack.c.h.b16 %v1817
        %v6624 = vunpack.c.l.b16 %v1818
        %v6625 = vunpack.c.h.b16 %v1818
        %v6626 = vunpack.c.l.b16 %v1819
        %v6627 = vunpack.c.h.b16 %v1819
        %v6628 = vunpack.c.l.b16 %v1820
        %v6629 = vunpack.c.h.b16 %v1820
        %v6630 = vunpack.c.l.b16 %v1821
        %v6631 = vunpack.c.h.b16 %v1821
        %v6632 = vunpack.c.l.b16 %v1822
        %v6633 = vunpack.c.h.b16 %v1822
        %v6634 = vunpack.c.l.b16 %v1823
        %v6635 = vunpack.c.h.b16 %v1823
        %v6636 = vunpack.c.l.b16 %v1824
        %v6637 = vunpack.c.h.b16 %v1824
        %v6638 = vunpack.c.l.b16 %v1825
        %v6639 = vunpack.c.h.b16 %v1825
        %v6640 = vunpack.c.l.b16 %v1826
        %v6641 = vunpack.c.h.b16 %v1826
        %v6642 = vunpack.c.l.b16 %v1827
        %v6643 = vunpack.c.h.b16 %v1827
        %v6644 = vunpack.c.l.b16 %v1828
        %v6645 = vunpack.c.h.b16 %v1828
        %v6646 = vunpack.c.l.b16 %v1829
        %v6647 = vunpack.c.h.b16 %v1829
        %v6648 = vunpack.c.l.b16 %v1830
        %v6649 = vunpack.c.h.b16 %v1830
        %v6650 = vunpack.c.l.b16 %v1831
        %v6651 = vunpack.c.h.b16 %v1831
        %v6652 = vunpack.c.l.b16 %v1832
        %v6653 = vunpack.c.h.b16 %v1832
        %v6654 = vunpack.c.l.b16 %v1833
        %v6655 = vunpack.c.h.b16 %v1833
        %v6656 = vunpack.c.l.b16 %v1834
        %v6657 = vunpack.c.h.b16 %v1834
        %v6658 = vunpack.c.l.b16 %v1835
        %v6659 = vunpack.c.h.b16 %v1835
        %v6660 = vunpack.c.l.b16 %v1836
        %v6661 = vunpack.c.h.b16 %v1836
        %v6662 = vunpack.c.l.b16 %v1837
        %v6663 = vunpack.c.h.b16 %v1837
        %v6664 = vunpack.c.l.b16 %v1838
        %v6665 = vunpack.c.h.b16 %v1838
        %v6666 = vunpack.c.l.b16 %v1839
        %v6667 = vunpack.c.h.b16 %v1839
        %v6668 = vunpack.c.l.b16 %v1840
        %v6669 = vunpack.c.h.b16 %v1840
        %v6670 = vunpack.c.l.b16 %v1841
        %v6671 = vunpack.c.h.b16 %v1841
        %v6672 = vunpack.c.l.b16 %v1842
        %v6673 = vunpack.c.h.b16 %v1842
        %v6674 = vunpack.c.l.b16 %v1843
        %v6675 = vunpack.c.h.b16 %v1843
        %v6676 = vunpack.c.l.b16 %v1844
        %v6677 = vunpack.c.h.b16 %v1844
        %v6678 = vunpack.c.l.b16 %v1845
        %v6679 = vunpack.c.h.b16 %v1845
        %v6680 = vunpack.c.l.b16 %v1846
        %v6681 = vunpack.c.h.b16 %v1846
        %v6682 = vunpack.c.l.b16 %v1847
        %v6683 = vunpack.c.h.b16 %v1847
        %v6684 = vunpack.c.l.b16 %v1848
        %v6685 = vunpack.c.h.b16 %v1848
        %v6686 = vunpack.c.l.b16 %v1849
        %v6687 = vunpack.c.h.b16 %v1849
        %v6688 = vunpack.c.l.b16 %v1850
        %v6689 = vunpack.c.h.b16 %v1850
        %v6690 = vunpack.c.l.b16 %v1851
        %v6691 = vunpack.c.h.b16 %v1851
        %v6692 = vunpack.c.l.b16 %v1852
        %v6693 = vunpack.c.h.b16 %v1852
        %v6694 = vunpack.c.l.b16 %v1853
        %v6695 = vunpack.c.h.b16 %v1853
        %v6696 = vunpack.c.l.b16 %v1854
        %v6697 = vunpack.c.h.b16 %v1854
        %v6698 = vunpack.c.l.b16 %v1855
        %v6699 = vunpack.c.h.b16 %v1855
        %v6700 = vunpack.c.l.b16 %v1856
        %v6701 = vunpack.c.h.b16 %v1856
        %v6702 = vunpack.c.l.b16 %v1857
        %v6703 = vunpack.c.h.b16 %v1857
        %v6704 = vunpack.c.l.b16 %v1858
        %v6705 = vunpack.c.h.b16 %v1858
        %v6706 = vunpack.c.l.b16 %v1859
        %v6707 = vunpack.c.h.b16 %v1859
        %v6708 = vunpack.c.l.b16 %v1860
        %v6709 = vunpack.c.h.b16 %v1860
        %v6710 = vunpack.c.l.b16 %v1861
        %v6711 = vunpack.c.h.b16 %v1861
        %v6712 = vunpack.c.l.b16 %v1862
        %v6713 = vunpack.c.h.b16 %v1862
        %v6714 = vunpack.c.l.b16 %v1863
        %v6715 = vunpack.c.h.b16 %v1863
        %v6716 = vunpack.c.l.b16 %v1864
        %v6717 = vunpack.c.h.b16 %v1864
        %v6718 = vunpack.c.l.b16 %v1865
        %v6719 = vunpack.c.h.b16 %v1865
        %v6720 = vunpack.c.l.b16 %v1866
        %v6721 = vunpack.c.h.b16 %v1866
        %v6722 = vunpack.c.l.b16 %v1867
        %v6723 = vunpack.c.h.b16 %v1867
        %v6724 = vunpack.c.l.b16 %v1868
        %v6725 = vunpack.c.h.b16 %v1868
        %v6726 = vunpack.c.l.b16 %v1869
        %v6727 = vunpack.c.h.b16 %v1869
        %v6728 = vunpack.c.l.b16 %v1870
        %v6729 = vunpack.c.h.b16 %v1870
        %v6730 = vunpack.c.l.b16 %v1871
        %v6731 = vunpack.c.h.b16 %v1871
        %v6732 = vunpack.c.l.b16 %v1872
        %v6733 = vunpack.c.h.b16 %v1872
        %v6734 = vunpack.c.l.b16 %v1873
        %v6735 = vunpack.c.h.b16 %v1873
        %v6736 = vunpack.c.l.b16 %v1874
        %v6737 = vunpack.c.h.b16 %v1874
        %v6738 = vunpack.c.l.b16 %v1875
        %v6739 = vunpack.c.h.b16 %v1875
        %v6740 = vunpack.c.l.b16 %v1876
        %v6741 = vunpack.c.h.b16 %v1876
        %v6742 = vunpack.c.l.b16 %v1877
        %v6743 = vunpack.c.h.b16 %v1877
        %v6744 = vunpack.c.l.b16 %v1878
        %v6745 = vunpack.c.h.b16 %v1878
        %v6746 = vunpack.c.l.b16 %v1879
        %v6747 = vunpack.c.h.b16 %v1879
        %v6748 = vunpack.c.l.b16 %v1880
        %v6749 = vunpack.c.h.b16 %v1880
        %v6750 = vunpack.c.l.b16 %v1881
        %v6751 = vunpack.c.h.b16 %v1881
        %v6752 = vunpack.c.l.b16 %v1882
        %v6753 = vunpack.c.h.b16 %v1882
        %v6754 = vunpack.c.l.b16 %v1883
        %v6755 = vunpack.c.h.b16 %v1883
        %v6756 = vunpack.c.l.b16 %v1884
        %v6757 = vunpack.c.h.b16 %v1884
        %v6758 = vunpack.c.l.b16 %v1885
        %v6759 = vunpack.c.h.b16 %v1885
        %v6760 = vunpack.c.l.b16 %v1886
        %v6761 = vunpack.c.h.b16 %v1886
        %v6762 = vunpack.c.l.b16 %v1887
        %v6763 = vunpack.c.h.b16 %v1887
        %v6764 = vunpack.c.l.b16 %v1888
        %v6765 = vunpack.c.h.b16 %v1888
        %v6766 = vunpack.c.l.b16 %v1889
        %v6767 = vunpack.c.h.b16 %v1889
        %v6768 = vunpack.c.l.b16 %v1890
        %v6769 = vunpack.c.h.b16 %v1890
        %v6770 = vunpack.c.l.b16 %v1891
        %v6771 = vunpack.c.h.b16 %v1891
        %v6772 = vunpack.c.l.b16 %v1892
        %v6773 = vunpack.c.h.b16 %v1892
        %v6774 = vunpack.c.l.b16 %v1893
        %v6775 = vunpack.c.h.b16 %v1893
        %v6776 = vunpack.c.l.b16 %v1894
        %v6777 = vunpack.c.h.b16 %v1894
        %v6778 = vunpack.c.l.b16 %v1895
        %v6779 = vunpack.c.h.b16 %v1895
        %v6780 = vunpack.c.l.b16 %v1896
        %v6781 = vunpack.c.h.b16 %v1896
        %v6782 = vunpack.c.l.b16 %v1897
        %v6783 = vunpack.c.h.b16 %v1897
        %v6784 = vunpack.c.l.b16 %v1898
        %v6785 = vunpack.c.h.b16 %v1898
        %v6786 = vunpack.c.l.b16 %v1899
        %v6787 = vunpack.c.h.b16 %v1899
        %v6788 = vunpack.c.l.b16 %v1900
        %v6789 = vunpack.c.h.b16 %v1900
        %v6790 = vunpack.c.l.b16 %v1901
        %v6791 = vunpack.c.h.b16 %v1901
        %v6792 = vunpack.c.l.b16 %v1902
        %v6793 = vunpack.c.h.b16 %v1902
        %v6794 = vunpack.c.l.b16 %v1903
        %v6795 = vunpack.c.h.b16 %v1903
        %v6796 = vunpack.c.l.b16 %v1904
        %v6797 = vunpack.c.h.b16 %v1904
        %v6798 = vunpack.c.l.b16 %v1905
        %v6799 = vunpack.c.h.b16 %v1905
        %v6800 = vunpack.c.l.b16 %v1906
        %v6801 = vunpack.c.h.b16 %v1906
        %v6802 = vunpack.c.l.b16 %v1907
        %v6803 = vunpack.c.h.b16 %v1907
        %v6804 = vunpack.c.l.b16 %v1908
        %v6805 = vunpack.c.h.b16 %v1908
        %v6806 = vunpack.c.l.b16 %v1909
        %v6807 = vunpack.c.h.b16 %v1909
        %v6808 = vunpack.c.l.b16 %v1910
        %v6809 = vunpack.c.h.b16 %v1910
        %v6810 = vunpack.c.l.b16 %v1911
        %v6811 = vunpack.c.h.b16 %v1911
        %v6812 = vunpack.c.l.b16 %v1912
        %v6813 = vunpack.c.h.b16 %v1912
        %v6814 = vunpack.c.l.b16 %v1913
        %v6815 = vunpack.c.h.b16 %v1913
        %v6816 = vunpack.c.l.b16 %v1914
        %v6817 = vunpack.c.h.b16 %v1914
        %v6818 = vunpack.c.l.b16 %v1915
        %v6819 = vunpack.c.h.b16 %v1915
        %v6820 = vunpack.c.l.b16 %v1916
        %v6821 = vunpack.c.h.b16 %v1916
        %v6822 = vunpack.c.l.b16 %v1917
        %v6823 = vunpack.c.h.b16 %v1917
        %v6824 = vunpack.c.l.b16 %v1918
        %v6825 = vunpack.c.h.b16 %v1918
        %v6826 = vunpack.c.l.b16 %v1919
        %v6827 = vunpack.c.h.b16 %v1919
        %v6828 = vunpack.c.l.b16 %v1920
        %v6829 = vunpack.c.h.b16 %v1920
        %v6830 = vunpack.c.l.b16 %v1921
        %v6831 = vunpack.c.h.b16 %v1921
        %v6832 = vunpack.c.l.b16 %v1922
        %v6833 = vunpack.c.h.b16 %v1922
        %v6834 = vunpack.c.l.b16 %v1923
        %v6835 = vunpack.c.h.b16 %v1923
        %v6836 = vunpack.c.l.b16 %v1924
        %v6837 = vunpack.c.h.b16 %v1924
        %v6838 = vunpack.c.l.b16 %v1925
        %v6839 = vunpack.c.h.b16 %v1925
        %v6840 = vunpack.c.l.b16 %v1926
        %v6841 = vunpack.c.h.b16 %v1926
        %v6842 = vunpack.c.l.b16 %v1927
        %v6843 = vunpack.c.h.b16 %v1927
        %v6844 = vunpack.c.l.b16 %v1928
        %v6845 = vunpack.c.h.b16 %v1928
        %v6846 = vunpack.c.l.b16 %v1929
        %v6847 = vunpack.c.h.b16 %v1929
        %v6848 = vunpack.c.l.b16 %v1930
        %v6849 = vunpack.c.h.b16 %v1930
        %v6850 = vunpack.c.l.b16 %v1931
        %v6851 = vunpack.c.h.b16 %v1931
        %v6852 = vunpack.c.l.b16 %v1932
        %v6853 = vunpack.c.h.b16 %v1932
        %v6854 = vunpack.c.l.b16 %v1933
        %v6855 = vunpack.c.h.b16 %v1933
        %v6856 = vunpack.c.l.b16 %v1934
        %v6857 = vunpack.c.h.b16 %v1934
        %v6858 = vunpack.c.l.b16 %v1935
        %v6859 = vunpack.c.h.b16 %v1935
        %v6860 = vunpack.c.l.b16 %v1936
        %v6861 = vunpack.c.h.b16 %v1936
        %v6862 = vunpack.c.l.b16 %v1937
        %v6863 = vunpack.c.h.b16 %v1937
        %v6864 = vunpack.c.l.b16 %v1938
        %v6865 = vunpack.c.h.b16 %v1938
        %v6866 = vunpack.c.l.b16 %v1939
        %v6867 = vunpack.c.h.b16 %v1939
        %v6868 = vunpack.c.l.b16 %v1940
        %v6869 = vunpack.c.h.b16 %v1940
        %v6870 = vunpack.c.l.b16 %v1941
        %v6871 = vunpack.c.h.b16 %v1941
        %v6872 = vunpack.c.l.b16 %v1942
        %v6873 = vunpack.c.h.b16 %v1942
        %v6874 = vunpack.c.l.b16 %v1943
        %v6875 = vunpack.c.h.b16 %v1943
        %v6876 = vunpack.c.l.b16 %v1944
        %v6877 = vunpack.c.h.b16 %v1944
        %v6878 = vunpack.c.l.b16 %v1945
        %v6879 = vunpack.c.h.b16 %v1945
        %v6880 = vunpack.c.l.b16 %v1946
        %v6881 = vunpack.c.h.b16 %v1946
        %v6882 = vunpack.c.l.b16 %v1947
        %v6883 = vunpack.c.h.b16 %v1947
        %v6884 = vunpack.c.l.b16 %v1948
        %v6885 = vunpack.c.h.b16 %v1948
        %v6886 = vunpack.c.l.b16 %v1949
        %v6887 = vunpack.c.h.b16 %v1949
        %v6888 = vunpack.c.l.b16 %v1950
        %v6889 = vunpack.c.h.b16 %v1950
        %v6890 = vunpack.c.l.b16 %v1951
        %v6891 = vunpack.c.h.b16 %v1951
        %v6892 = vunpack.c.l.b16 %v1952
        %v6893 = vunpack.c.h.b16 %v1952
        %v6894 = vunpack.c.l.b16 %v1953
        %v6895 = vunpack.c.h.b16 %v1953
        %v6896 = vunpack.c.l.b16 %v1954
        %v6897 = vunpack.c.h.b16 %v1954
        %v6898 = vunpack.c.l.b16 %v1955
        %v6899 = vunpack.c.h.b16 %v1955
        %v6900 = vunpack.c.l.b16 %v1956
        %v6901 = vunpack.c.h.b16 %v1956
        %v6902 = vunpack.c.l.b16 %v1957
        %v6903 = vunpack.c.h.b16 %v1957
        %v6904 = vunpack.c.l.b16 %v1958
        %v6905 = vunpack.c.h.b16 %v1958
        %v6906 = vunpack.c.l.b16 %v1959
        %v6907 = vunpack.c.h.b16 %v1959
        %v6908 = vunpack.c.l.b16 %v1960
        %v6909 = vunpack.c.h.b16 %v1960
        %v6910 = vunpack.c.l.b16 %v1961
        %v6911 = vunpack.c.h.b16 %v1961
        %v6912 = vunpack.c.l.b16 %v1962
        %v6913 = vunpack.c.h.b16 %v1962
        %v6914 = vunpack.c.l.b16 %v1963
        %v6915 = vunpack.c.h.b16 %v1963
        %v6916 = vunpack.c.l.b16 %v1964
        %v6917 = vunpack.c.h.b16 %v1964
        %v6918 = vunpack.c.l.b16 %v1965
        %v6919 = vunpack.c.h.b16 %v1965
        %v6920 = vunpack.c.l.b16 %v1966
        %v6921 = vunpack.c.h.b16 %v1966
        %v6922 = vunpack.c.l.b16 %v1967
        %v6923 = vunpack.c.h.b16 %v1967
        %v6924 = vunpack.c.l.b16 %v1968
        %v6925 = vunpack.c.h.b16 %v1968
        %v6926 = vunpack.c.l.b16 %v1969
        %v6927 = vunpack.c.h.b16 %v1969
        %v6928 = vunpack.c.l.b16 %v1970
        %v6929 = vunpack.c.h.b16 %v1970
        %v6930 = vunpack.c.l.b16 %v1971
        %v6931 = vunpack.c.h.b16 %v1971
        %v6932 = vunpack.c.l.b16 %v1972
        %v6933 = vunpack.c.h.b16 %v1972
        %v6934 = vunpack.c.l.b16 %v1973
        %v6935 = vunpack.c.h.b16 %v1973
        %v6936 = vunpack.c.l.b16 %v1974
        %v6937 = vunpack.c.h.b16 %v1974
        %v6938 = vunpack.c.l.b16 %v1975
        %v6939 = vunpack.c.h.b16 %v1975
        %v6940 = vunpack.c.l.b16 %v1976
        %v6941 = vunpack.c.h.b16 %v1976
        %v6942 = vunpack.c.l.b16 %v1977
        %v6943 = vunpack.c.h.b16 %v1977
        %v6944 = vunpack.c.l.b16 %v1978
        %v6945 = vunpack.c.h.b16 %v1978
        %v6946 = vunpack.c.l.b16 %v1979
        %v6947 = vunpack.c.h.b16 %v1979
        %v6948 = vunpack.c.l.b16 %v1980
        %v6949 = vunpack.c.h.b16 %v1980
        %v6950 = vunpack.c.l.b16 %v1981
        %v6951 = vunpack.c.h.b16 %v1981
        %v6952 = vunpack.c.l.b16 %v1982
        %v6953 = vunpack.c.h.b16 %v1982
        %v6954 = vunpack.c.l.b16 %v1983
        %v6955 = vunpack.c.h.b16 %v1983
        %v6956 = vunpack.c.l.b16 %v1984
        %v6957 = vunpack.c.h.b16 %v1984
        %v6958 = vunpack.c.l.b16 %v1985
        %v6959 = vunpack.c.h.b16 %v1985
        %v6960 = vunpack.c.l.b16 %v1986
        %v6961 = vunpack.c.h.b16 %v1986
        %v6962 = vunpack.c.l.b16 %v1987
        %v6963 = vunpack.c.h.b16 %v1987
        %v6964 = vunpack.c.l.b16 %v1988
        %v6965 = vunpack.c.h.b16 %v1988
        %v6966 = vunpack.c.l.b16 %v1989
        %v6967 = vunpack.c.h.b16 %v1989
        %v6968 = vunpack.c.l.b16 %v1990
        %v6969 = vunpack.c.h.b16 %v1990
        %v6970 = vunpack.c.l.b16 %v1991
        %v6971 = vunpack.c.h.b16 %v1991
        %v6972 = vunpack.c.l.b16 %v1992
        %v6973 = vunpack.c.h.b16 %v1992
        %v6974 = vunpack.c.l.b16 %v1993
        %v6975 = vunpack.c.h.b16 %v1993
        %v6976 = vunpack.c.l.b16 %v1994
        %v6977 = vunpack.c.h.b16 %v1994
        %v6978 = vunpack.c.l.b16 %v1995
        %v6979 = vunpack.c.h.b16 %v1995
        %v6980 = vunpack.c.l.b16 %v1996
        %v6981 = vunpack.c.h.b16 %v1996
        %v6982 = vunpack.c.l.b16 %v1997
        %v6983 = vunpack.c.h.b16 %v1997
        %v6984 = vunpack.c.l.b16 %v1998
        %v6985 = vunpack.c.h.b16 %v1998
        %v6986 = vunpack.c.l.b16 %v1999
        %v6987 = vunpack.c.h.b16 %v1999
        %v6988 = vunpack.c.l.b16 %v2000
        %v6989 = vunpack.c.h.b16 %v2000
        %v6990 = vunpack.c.l.b16 %v2001
        %v6991 = vunpack.c.h.b16 %v2001
        %v6992 = vunpack.c.l.b16 %v2002
        %v6993 = vunpack.c.h.b16 %v2002
        %v6994 = vunpack.c.l.b16 %v2003
        %v6995 = vunpack.c.h.b16 %v2003
        %v6996 = vunpack.c.l.b16 %v2004
        %v6997 = vunpack.c.h.b16 %v2004
        %v6998 = vunpack.c.l.b16 %v2005
        %v6999 = vunpack.c.h.b16 %v2005
        %v7000 = vunpack.c.l.b16 %v2006
        %v7001 = vunpack.c.h.b16 %v2006
        %v7002 = vunpack.c.l.b16 %v2007
        %v7003 = vunpack.c.h.b16 %v2007
        %v7004 = vunpack.c.l.b16 %v2008
        %v7005 = vunpack.c.h.b16 %v2008
        %v7006 = vunpack.c.l.b16 %v2009
        %v7007 = vunpack.c.h.b16 %v2009
        %v7008 = vunpack.c.l.b16 %v2010
        %v7009 = vunpack.c.h.b16 %v2010
        %v7010 = vunpack.c.l.b16 %v2011
        %v7011 = vunpack.c.h.b16 %v2011
        %v7012 = vunpack.c.l.b16 %v2012
        %v7013 = vunpack.c.h.b16 %v2012
        %v7014 = vunpack.c.l.b16 %v2013
        %v7015 = vunpack.c.h.b16 %v2013
        %v7016 = vunpack.c.l.b16 %v2014
        %v7017 = vunpack.c.h.b16 %v2014
        %v7018 = vunpack.c.l.b16 %v2015
        %v7019 = vunpack.c.h.b16 %v2015
        %v7020 = vunpack.c.l.b16 %v2016
        %v7021 = vunpack.c.h.b16 %v2016
        %v7022 = vunpack.c.l.b16 %v2017
        %v7023 = vunpack.c.h.b16 %v2017
        %v7024 = vunpack.c.l.b16 %v2018
        %v7025 = vunpack.c.h.b16 %v2018
        %v7026 = vunpack.c.l.b16 %v2019
        %v7027 = vunpack.c.h.b16 %v2019
        %v7028 = vunpack.c.l.b16 %v2020
        %v7029 = vunpack.c.h.b16 %v2020
        %v7030 = vunpack.c.l.b16 %v2021
        %v7031 = vunpack.c.h.b16 %v2021
        %v7032 = vunpack.c.l.b16 %v2022
        %v7033 = vunpack.c.h.b16 %v2022
        %v7034 = vunpack.c.l.b16 %v2023
        %v7035 = vunpack.c.h.b16 %v2023
        %v7036 = vunpack.c.l.b16 %v2024
        %v7037 = vunpack.c.h.b16 %v2024
        %v7038 = vunpack.c.l.b16 %v2025
        %v7039 = vunpack.c.h.b16 %v2025
        %v7040 = vunpack.c.l.b16 %v2026
        %v7041 = vunpack.c.h.b16 %v2026
        %v7042 = vunpack.c.l.b16 %v2027
        %v7043 = vunpack.c.h.b16 %v2027
        %v7044 = vunpack.c.l.b16 %v2028
        %v7045 = vunpack.c.h.b16 %v2028
        %v7046 = vunpack.c.l.b16 %v2029
        %v7047 = vunpack.c.h.b16 %v2029
        %v7048 = vunpack.c.l.b16 %v2030
        %v7049 = vunpack.c.h.b16 %v2030
        %v7050 = vunpack.c.l.b16 %v2031
        %v7051 = vunpack.c.h.b16 %v2031
        %v7052 = vunpack.c.l.b16 %v2032
        %v7053 = vunpack.c.h.b16 %v2032
        %v7054 = vunpack.c.l.b16 %v2033
        %v7055 = vunpack.c.h.b16 %v2033
        %v7056 = vunpack.c.l.b16 %v2034
        %v7057 = vunpack.c.h.b16 %v2034
        %v7058 = vunpack.c.l.b16 %v2035
        %v7059 = vunpack.c.h.b16 %v2035
        %v7060 = vunpack.c.l.b16 %v2036
        %v7061 = vunpack.c.h.b16 %v2036
        %v7062 = vunpack.c.l.b16 %v2037
        %v7063 = vunpack.c.h.b16 %v2037
        %v7064 = vunpack.c.l.b16 %v2038
        %v7065 = vunpack.c.h.b16 %v2038
        %v7066 = vunpack.c.l.b16 %v2039
        %v7067 = vunpack.c.h.b16 %v2039
        %v7068 = vunpack.c.l.b16 %v2040
        %v7069 = vunpack.c.h.b16 %v2040
        %v7070 = vunpack.c.l.b16 %v2041
        %v7071 = vunpack.c.h.b16 %v2041
        %v7072 = vunpack.c.l.b16 %v2042
        %v7073 = vunpack.c.h.b16 %v2042
        %v7074 = vunpack.c.l.b16 %v2043
        %v7075 = vunpack.c.h.b16 %v2043
        %v7076 = vunpack.c.l.b16 %v2044
        %v7077 = vunpack.c.h.b16 %v2044
        %v7078 = vunpack.c.l.b16 %v2045
        %v7079 = vunpack.c.h.b16 %v2045
        %v7080 = vunpack.c.l.b16 %v2046
        %v7081 = vunpack.c.h.b16 %v2046
        %v7082 = vunpack.c.l.b16 %v2047
        %v7083 = vunpack.c.h.b16 %v2047
        %v7084 = vunpack.c.l.b16 %v2048
        %v7085 = vunpack.c.h.b16 %v2048
        %v7086 = vunpack.c.l.b16 %v2049
        %v7087 = vunpack.c.h.b16 %v2049
        %v7088 = vunpack.c.l.b16 %v2050
        %v7089 = vunpack.c.h.b16 %v2050
        %v7090 = vunpack.c.l.b16 %v2051
        %v7091 = vunpack.c.h.b16 %v2051
        %v7092 = vunpack.c.l.b16 %v2052
        %v7093 = vunpack.c.h.b16 %v2052
        %v7094 = vunpack.c.l.b16 %v2053
        %v7095 = vunpack.c.h.b16 %v2053
        %v7096 = vunpack.c.l.b16 %v2054
        %v7097 = vunpack.c.h.b16 %v2054
        %v7098 = vunpack.c.l.b16 %v2055
        %v7099 = vunpack.c.h.b16 %v2055
        %v7100 = vunpack.c.l.b16 %v2056
        %v7101 = vunpack.c.h.b16 %v2056
        %v7102 = vunpack.c.l.b16 %v2057
        %v7103 = vunpack.c.h.b16 %v2057
        %v7104 = vunpack.c.l.b16 %v2058
        %v7105 = vunpack.c.h.b16 %v2058
        %v7106 = vunpack.c.l.b16 %v2059
        %v7107 = vunpack.c.h.b16 %v2059
        %v7108 = vunpack.c.l.b16 %v2060
        %v7109 = vunpack.c.h.b16 %v2060
        %v7110 = vunpack.c.l.b16 %v2061
        %v7111 = vunpack.c.h.b16 %v2061
        %v7112 = vunpack.c.l.b16 %v2062
        %v7113 = vunpack.c.h.b16 %v2062
        %v7114 = vunpack.c.l.b16 %v2063
        %v7115 = vunpack.c.h.b16 %v2063
        %v7116 = vunpack.c.l.b16 %v2064
        %v7117 = vunpack.c.h.b16 %v2064
        %v7118 = vunpack.c.l.b16 %v2065
        %v7119 = vunpack.c.h.b16 %v2065
        %v7120 = vunpack.c.l.b16 %v2066
        %v7121 = vunpack.c.h.b16 %v2066
        %v7122 = vunpack.c.l.b16 %v2067
        %v7123 = vunpack.c.h.b16 %v2067
        %v7124 = vunpack.c.l.b16 %v2068
        %v7125 = vunpack.c.h.b16 %v2068
        %v7126 = vunpack.c.l.b16 %v2069
        %v7127 = vunpack.c.h.b16 %v2069
        %v7128 = vunpack.c.l.b16 %v2070
        %v7129 = vunpack.c.h.b16 %v2070
        %v7130 = vunpack.c.l.b16 %v2071
        %v7131 = vunpack.c.h.b16 %v2071
        %v7132 = vunpack.c.l.b16 %v2072
        %v7133 = vunpack.c.h.b16 %v2072
        %v7134 = vunpack.c.l.b16 %v2073
        %v7135 = vunpack.c.h.b16 %v2073
        %v7136 = vunpack.c.l.b16 %v2074
        %v7137 = vunpack.c.h.b16 %v2074
        %v7138 = vunpack.c.l.b16 %v2075
        %v7139 = vunpack.c.h.b16 %v2075
        %v7140 = vunpack.c.l.b16 %v2076
        %v7141 = vunpack.c.h.b16 %v2076
        %v7142 = vunpack.c.l.b16 %v2077
        %v7143 = vunpack.c.h.b16 %v2077
        %v7144 = vunpack.c.l.b16 %v2078
        %v7145 = vunpack.c.h.b16 %v2078
        %v7146 = vunpack.c.l.b16 %v2079
        %v7147 = vunpack.c.h.b16 %v2079
        %v7148 = vunpack.c.l.b16 %v2080
        %v7149 = vunpack.c.h.b16 %v2080
        %v7150 = vunpack.c.l.b16 %v2081
        %v7151 = vunpack.c.h.b16 %v2081
        %v7152 = vunpack.c.l.b16 %v2082
        %v7153 = vunpack.c.h.b16 %v2082
        %v7154 = vunpack.c.l.b16 %v2083
        %v7155 = vunpack.c.h.b16 %v2083
        %v7156 = vunpack.c.l.b16 %v2084
        %v7157 = vunpack.c.h.b16 %v2084
        %v7158 = vunpack.c.l.b16 %v2085
        %v7159 = vunpack.c.h.b16 %v2085
        %v7160 = vunpack.c.l.b16 %v2086
        %v7161 = vunpack.c.h.b16 %v2086
        %v7162 = vunpack.c.l.b16 %v2087
        %v7163 = vunpack.c.h.b16 %v2087
        %v7164 = vunpack.c.l.b16 %v2088
        %v7165 = vunpack.c.h.b16 %v2088
        %v7166 = vunpack.c.l.b16 %v2089
        %v7167 = vunpack.c.h.b16 %v2089
        %v7168 = vunpack.c.l.b16 %v2090
        %v7169 = vunpack.c.h.b16 %v2090
        %v7170 = vunpack.c.l.b16 %v2091
        %v7171 = vunpack.c.h.b16 %v2091
        %v7172 = vunpack.c.l.b16 %v2092
        %v7173 = vunpack.c.h.b16 %v2092
        %v7174 = vunpack.c.l.b16 %v2093
        %v7175 = vunpack.c.h.b16 %v2093
        %v7176 = vunpack.c.l.b16 %v2094
        %v7177 = vunpack.c.h.b16 %v2094
        %v7178 = vunpack.c.l.b16 %v2095
        %v7179 = vunpack.c.h.b16 %v2095
        %v7180 = vunpack.c.l.b16 %v2096
        %v7181 = vunpack.c.h.b16 %v2096
        %v7182 = vunpack.c.l.b16 %v2097
        %v7183 = vunpack.c.h.b16 %v2097
        %v7184 = vunpack.c.l.b16 %v2098
        %v7185 = vunpack.c.h.b16 %v2098
        %v7186 = vunpack.c.l.b16 %v2099
        %v7187 = vunpack.c.h.b16 %v2099
        %v7188 = vpack.c.b16 %v4118, %v4116
        %v7189 = vpack.c.b16 %v4119, %v4117
        %v7190 = vpack.c.b16 %v4122, %v4120
        %v7191 = vpack.c.b16 %v4123, %v4121
        %v7192 = vpack.c.b16 %v4126, %v4124
        %v7193 = vpack.c.b16 %v4127, %v4125
        %v7194 = vpack.c.b16 %v4130, %v4128
        %v7195 = vpack.c.b16 %v4131, %v4129
        %v7196 = vpack.c.b16 %v4134, %v4132
        %v7197 = vpack.c.b16 %v4135, %v4133
        %v7198 = vpack.c.b16 %v4138, %v4136
        %v7199 = vpack.c.b16 %v4139, %v4137
        %v7200 = vpack.c.b16 %v4142, %v4140
        %v7201 = vpack.c.b16 %v4143, %v4141
        %v7202 = vpack.c.b16 %v4146, %v4144
        %v7203 = vpack.c.b16 %v4147, %v4145
        %v7204 = vpack.c.b16 %v4150, %v4148
        %v7205 = vpack.c.b16 %v4151, %v4149
        %v7206 = vpack.c.b16 %v4154, %v4152
        %v7207 = vpack.c.b16 %v4155, %v4153
        %v7208 = vpack.c.b16 %v4158, %v4156
        %v7209 = vpack.c.b16 %v4159, %v4157
        %v7210 = vpack.c.b16 %v4162, %v4160
        %v7211 = vpack.c.b16 %v4163, %v4161
        %v7212 = vpack.c.b16 %v4166, %v4164
        %v7213 = vpack.c.b16 %v4167, %v4165
        %v7214 = vpack.c.b16 %v4170, %v4168
        %v7215 = vpack.c.b16 %v4171, %v4169
        %v7216 = vpack.c.b16 %v4174, %v4172
        %v7217 = vpack.c.b16 %v4175, %v4173
        %v7218 = vpack.c.b16 %v4178, %v4176
        %v7219 = vpack.c.b16 %v4179, %v4177
        %v7220 = vpack.c.b16 %v4182, %v4180
        %v7221 = vpack.c.b16 %v4183, %v4181
        %v7222 = vpack.c.b16 %v4186, %v4184
        %v7223 = vpack.c.b16 %v4187, %v4185
        %v7224 = vpack.c.b16 %v4190, %v4188
        %v7225 = vpack.c.b16 %v4191, %v4189
        %v7226 = vpack.c.b16 %v4194, %v4192
        %v7227 = vpack.c.b16 %v4195, %v4193
        %v7228 = vpack.c.b16 %v4198, %v4196
        %v7229 = vpack.c.b16 %v4199, %v4197
        %v7230 = vpack.c.b16 %v4202, %v4200
        %v7231 = vpack.c.b16 %v4203, %v4201
        %v7232 = vpack.c.b16 %v4206, %v4204
        %v7233 = vpack.c.b16 %v4207, %v4205
        %v7234 = vpack.c.b16 %v4210, %v4208
        %v7235 = vpack.c.b16 %v4211, %v4209
        %v7236 = vpack.c.b16 %v4214, %v4212
        %v7237 = vpack.c.b16 %v4215, %v4213
        %v7238 = vpack.c.b16 %v4218, %v4216
        %v7239 = vpack.c.b16 %v4219, %v4217
        %v7240 = vpack.c.b16 %v4222, %v4220
        %v7241 = vpack.c.b16 %v4223, %v4221
        %v7242 = vpack.c.b16 %v4226, %v4224
        %v7243 = vpack.c.b16 %v4227, %v4225
        %v7244 = vpack.c.b16 %v4230, %v4228
        %v7245 = vpack.c.b16 %v4231, %v4229
        %v7246 = vpack.c.b16 %v4234, %v4232
        %v7247 = vpack.c.b16 %v4235, %v4233
        %v7248 = vpack.c.b16 %v4238, %v4236
        %v7249 = vpack.c.b16 %v4239, %v4237
        %v7250 = vpack.c.b16 %v4242, %v4240
        %v7251 = vpack.c.b16 %v4243, %v4241
        %v7252 = vpack.c.b16 %v4246, %v4244
        %v7253 = vpack.c.b16 %v4247, %v4245
        %v7254 = vpack.c.b16 %v4250, %v4248
        %v7255 = vpack.c.b16 %v4251, %v4249
        %v7256 = vpack.c.b16 %v4254, %v4252
        %v7257 = vpack.c.b16 %v4255, %v4253
        %v7258 = vpack.c.b16 %v4258, %v4256
        %v7259 = vpack.c.b16 %v4259, %v4257
        %v7260 = vpack.c.b16 %v4262, %v4260
        %v7261 = vpack.c.b16 %v4263, %v4261
        %v7262 = vpack.c.b16 %v4266, %v4264
        %v7263 = vpack.c.b16 %v4267, %v4265
        %v7264 = vpack.c.b16 %v4270, %v4268
        %v7265 = vpack.c.b16 %v4271, %v4269
        %v7266 = vpack.c.b16 %v4274, %v4272
        %v7267 = vpack.c.b16 %v4275, %v4273
        %v7268 = vpack.c.b16 %v4278, %v4276
        %v7269 = vpack.c.b16 %v4279, %v4277
        %v7270 = vpack.c.b16 %v4282, %v4280
        %v7271 = vpack.c.b16 %v4283, %v4281
        %v7272 = vpack.c.b16 %v4286, %v4284
        %v7273 = vpack.c.b16 %v4287, %v4285
        %v7274 = vpack.c.b16 %v4290, %v4288
        %v7275 = vpack.c.b16 %v4291, %v4289
        %v7276 = vpack.c.b16 %v4294, %v4292
        %v7277 = vpack.c.b16 %v4295, %v4293
        %v7278 = vpack.c.b16 %v4298, %v4296
        %v7279 = vpack.c.b16 %v4299, %v4297
        %v7280 = vpack.c.b16 %v4302, %v4300
        %v7281 = vpack.c.b16 %v4303, %v4301
        %v7282 = vpack.c.b16 %v4306, %v4304
        %v7283 = vpack.c.b16 %v4307, %v4305
        %v7284 = vpack.c.b16 %v4310, %v4308
        %v7285 = vpack.c.b16 %v4311, %v4309
        %v7286 = vpack.c.b16 %v4314, %v4312
        %v7287 = vpack.c.b16 %v4315, %v4313
        %v7288 = vpack.c.b16 %v4318, %v4316
        %v7289 = vpack.c.b16 %v4319, %v4317
        %v7290 = vpack.c.b16 %v4322, %v4320
        %v7291 = vpack.c.b16 %v4323, %v4321
        %v7292 = vpack.c.b16 %v4326, %v4324
        %v7293 = vpack.c.b16 %v4327, %v4325
        %v7294 = vpack.c.b16 %v4330, %v4328
        %v7295 = vpack.c.b16 %v4331, %v4329
        %v7296 = vpack.c.b16 %v4334, %v4332
        %v7297 = vpack.c.b16 %v4335, %v4333
        %v7298 = vpack.c.b16 %v4338, %v4336
        %v7299 = vpack.c.b16 %v4339, %v4337
        %v7300 = vpack.c.b16 %v4342, %v4340
        %v7301 = vpack.c.b16 %v4343, %v4341
        %v7302 = vpack.c.b16 %v4346, %v4344
        %v7303 = vpack.c.b16 %v4347, %v4345
        %v7304 = vpack.c.b16 %v4350, %v4348
        %v7305 = vpack.c.b16 %v4351, %v4349
        %v7306 = vpack.c.b16 %v4354, %v4352
        %v7307 = vpack.c.b16 %v4355, %v4353
        %v7308 = vpack.c.b16 %v4358, %v4356
        %v7309 = vpack.c.b16 %v4359, %v4357
        %v7310 = vpack.c.b16 %v4362, %v4360
        %v7311 = vpack.c.b16 %v4363, %v4361
        %v7312 = vpack.c.b16 %v4366, %v4364
        %v7313 = vpack.c.b16 %v4367, %v4365
        %v7314 = vpack.c.b16 %v4370, %v4368
        %v7315 = vpack.c.b16 %v4371, %v4369
        %v7316 = vpack.c.b16 %v4374, %v4372
        %v7317 = vpack.c.b16 %v4375, %v4373
        %v7318 = vpack.c.b16 %v4378, %v4376
        %v7319 = vpack.c.b16 %v4379, %v4377
        %v7320 = vpack.c.b16 %v4382, %v4380
        %v7321 = vpack.c.b16 %v4383, %v4381
        %v7322 = vpack.c.b16 %v4386, %v4384
        %v7323 = vpack.c.b16 %v4387, %v4385
        %v7324 = vpack.c.b16 %v4390, %v4388
        %v7325 = vpack.c.b16 %v4391, %v4389
        %v7326 = vpack.c.b16 %v4394, %v4392
        %v7327 = vpack.c.b16 %v4395, %v4393
        %v7328 = vpack.c.b16 %v4398, %v4396
        %v7329 = vpack.c.b16 %v4399, %v4397
        %v7330 = vpack.c.b16 %v4402, %v4400
        %v7331 = vpack.c.b16 %v4403, %v4401
        %v7332 = vpack.c.b16 %v4406, %v4404
        %v7333 = vpack.c.b16 %v4407, %v4405
        %v7334 = vpack.c.b16 %v4410, %v4408
        %v7335 = vpack.c.b16 %v4411, %v4409
        %v7336 = vpack.c.b16 %v4414, %v4412
        %v7337 = vpack.c.b16 %v4415, %v4413
        %v7338 = vpack.c.b16 %v4418, %v4416
        %v7339 = vpack.c.b16 %v4419, %v4417
        %v7340 = vpack.c.b16 %v4422, %v4420
        %v7341 = vpack.c.b16 %v4423, %v4421
        %v7342 = vpack.c.b16 %v4426, %v4424
        %v7343 = vpack.c.b16 %v4427, %v4425
        %v7344 = vpack.c.b16 %v4430, %v4428
        %v7345 = vpack.c.b16 %v4431, %v4429
        %v7346 = vpack.c.b16 %v4434, %v4432
        %v7347 = vpack.c.b16 %v4435, %v4433
        %v7348 = vpack.c.b16 %v4438, %v4436
        %v7349 = vpack.c.b16 %v4439, %v4437
        %v7350 = vpack.c.b16 %v4442, %v4440
        %v7351 = vpack.c.b16 %v4443, %v4441
        %v7352 = vpack.c.b16 %v4446, %v4444
        %v7353 = vpack.c.b16 %v4447, %v4445
        %v7354 = vpack.c.b16 %v4450, %v4448
        %v7355 = vpack.c.b16 %v4451, %v4449
        %v7356 = vpack.c.b16 %v4454, %v4452
        %v7357 = vpack.c.b16 %v4455, %v4453
        %v7358 = vpack.c.b16 %v4458, %v4456
        %v7359 = vpack.c.b16 %v4459, %v4457
        %v7360 = vpack.c.b16 %v4462, %v4460
        %v7361 = vpack.c.b16 %v4463, %v4461
        %v7362 = vpack.c.b16 %v4466, %v4464
        %v7363 = vpack.c.b16 %v4467, %v4465
        %v7364 = vpack.c.b16 %v4470, %v4468
        %v7365 = vpack.c.b16 %v4471, %v4469
        %v7366 = vpack.c.b16 %v4474, %v4472
        %v7367 = vpack.c.b16 %v4475, %v4473
        %v7368 = vpack.c.b16 %v4478, %v4476
        %v7369 = vpack.c.b16 %v4479, %v4477
        %v7370 = vpack.c.b16 %v4482, %v4480
        %v7371 = vpack.c.b16 %v4483, %v4481
        %v7372 = vpack.c.b16 %v4486, %v4484
        %v7373 = vpack.c.b16 %v4487, %v4485
        %v7374 = vpack.c.b16 %v4490, %v4488
        %v7375 = vpack.c.b16 %v4491, %v4489
        %v7376 = vpack.c.b16 %v4494, %v4492
        %v7377 = vpack.c.b16 %v4495, %v4493
        %v7378 = vpack.c.b16 %v4498, %v4496
        %v7379 = vpack.c.b16 %v4499, %v4497
        %v7380 = vpack.c.b16 %v4502, %v4500
        %v7381 = vpack.c.b16 %v4503, %v4501
        %v7382 = vpack.c.b16 %v4506, %v4504
        %v7383 = vpack.c.b16 %v4507, %v4505
        %v7384 = vpack.c.b16 %v4510, %v4508
        %v7385 = vpack.c.b16 %v4511, %v4509
        %v7386 = vpack.c.b16 %v4514, %v4512
        %v7387 = vpack.c.b16 %v4515, %v4513
        %v7388 = vpack.c.b16 %v4518, %v4516
        %v7389 = vpack.c.b16 %v4519, %v4517
        %v7390 = vpack.c.b16 %v4522, %v4520
        %v7391 = vpack.c.b16 %v4523, %v4521
        %v7392 = vpack.c.b16 %v4526, %v4524
        %v7393 = vpack.c.b16 %v4527, %v4525
        %v7394 = vpack.c.b16 %v4530, %v4528
        %v7395 = vpack.c.b16 %v4531, %v4529
        %v7396 = vpack.c.b16 %v4534, %v4532
        %v7397 = vpack.c.b16 %v4535, %v4533
        %v7398 = vpack.c.b16 %v4538, %v4536
        %v7399 = vpack.c.b16 %v4539, %v4537
        %v7400 = vpack.c.b16 %v4542, %v4540
        %v7401 = vpack.c.b16 %v4543, %v4541
        %v7402 = vpack.c.b16 %v4546, %v4544
        %v7403 = vpack.c.b16 %v4547, %v4545
        %v7404 = vpack.c.b16 %v4550, %v4548
        %v7405 = vpack.c.b16 %v4551, %v4549
        %v7406 = vpack.c.b16 %v4554, %v4552
        %v7407 = vpack.c.b16 %v4555, %v4553
        %v7408 = vpack.c.b16 %v4558, %v4556
        %v7409 = vpack.c.b16 %v4559, %v4557
        %v7410 = vpack.c.b16 %v4562, %v4560
        %v7411 = vpack.c.b16 %v4563, %v4561
        %v7412 = vpack.c.b16 %v4566, %v4564
        %v7413 = vpack.c.b16 %v4567, %v4565
        %v7414 = vpack.c.b16 %v4570, %v4568
        %v7415 = vpack.c.b16 %v4571, %v4569
        %v7416 = vpack.c.b16 %v4574, %v4572
        %v7417 = vpack.c.b16 %v4575, %v4573
        %v7418 = vpack.c.b16 %v4578, %v4576
        %v7419 = vpack.c.b16 %v4579, %v4577
        %v7420 = vpack.c.b16 %v4582, %v4580
        %v7421 = vpack.c.b16 %v4583, %v4581
        %v7422 = vpack.c.b16 %v4586, %v4584
        %v7423 = vpack.c.b16 %v4587, %v4585
        %v7424 = vpack.c.b16 %v4590, %v4588
        %v7425 = vpack.c.b16 %v4591, %v4589
        %v7426 = vpack.c.b16 %v4594, %v4592
        %v7427 = vpack.c.b16 %v4595, %v4593
        %v7428 = vpack.c.b16 %v4598, %v4596
        %v7429 = vpack.c.b16 %v4599, %v4597
        %v7430 = vpack.c.b16 %v4602, %v4600
        %v7431 = vpack.c.b16 %v4603, %v4601
        %v7432 = vpack.c.b16 %v4606, %v4604
        %v7433 = vpack.c.b16 %v4607, %v4605
        %v7434 = vpack.c.b16 %v4610, %v4608
        %v7435 = vpack.c.b16 %v4611, %v4609
        %v7436 = vpack.c.b16 %v4614, %v4612
        %v7437 = vpack.c.b16 %v4615, %v4613
        %v7438 = vpack.c.b16 %v4618, %v4616
        %v7439 = vpack.c.b16 %v4619, %v4617
        %v7440 = vpack.c.b16 %v4622, %v4620
        %v7441 = vpack.c.b16 %v4623, %v4621
        %v7442 = vpack.c.b16 %v4626, %v4624
        %v7443 = vpack.c.b16 %v4627, %v4625
        %v7444 = vpack.c.b16 %v4630, %v4628
        %v7445 = vpack.c.b16 %v4631, %v4629
        %v7446 = vpack.c.b16 %v4634, %v4632
        %v7447 = vpack.c.b16 %v4635, %v4633
        %v7448 = vpack.c.b16 %v4638, %v4636
        %v7449 = vpack.c.b16 %v4639, %v4637
        %v7450 = vpack.c.b16 %v4642, %v4640
        %v7451 = vpack.c.b16 %v4643, %v4641
        %v7452 = vpack.c.b16 %v4646, %v4644
        %v7453 = vpack.c.b16 %v4647, %v4645
        %v7454 = vpack.c.b16 %v4650, %v4648
        %v7455 = vpack.c.b16 %v4651, %v4649
        %v7456 = vpack.c.b16 %v4654, %v4652
        %v7457 = vpack.c.b16 %v4655, %v4653
        %v7458 = vpack.c.b16 %v4658, %v4656
        %v7459 = vpack.c.b16 %v4659, %v4657
        %v7460 = vpack.c.b16 %v4662, %v4660
        %v7461 = vpack.c.b16 %v4663, %v4661
        %v7462 = vpack.c.b16 %v4666, %v4664
        %v7463 = vpack.c.b16 %v4667, %v4665
        %v7464 = vpack.c.b16 %v4670, %v4668
        %v7465 = vpack.c.b16 %v4671, %v4669
        %v7466 = vpack.c.b16 %v4674, %v4672
        %v7467 = vpack.c.b16 %v4675, %v4673
        %v7468 = vpack.c.b16 %v4678, %v4676
        %v7469 = vpack.c.b16 %v4679, %v4677
        %v7470 = vpack.c.b16 %v4682, %v4680
        %v7471 = vpack.c.b16 %v4683, %v4681
        %v7472 = vpack.c.b16 %v4686, %v4684
        %v7473 = vpack.c.b16 %v4687, %v4685
        %v7474 = vpack.c.b16 %v4690, %v4688
        %v7475 = vpack.c.b16 %v4691, %v4689
        %v7476 = vpack.c.b16 %v4694, %v4692
        %v7477 = vpack.c.b16 %v4695, %v4693
        %v7478 = vpack.c.b16 %v4698, %v4696
        %v7479 = vpack.c.b16 %v4699, %v4697
        %v7480 = vpack.c.b16 %v4702, %v4700
        %v7481 = vpack.c.b16 %v4703, %v4701
        %v7482 = vpack.c.b16 %v4706, %v4704
        %v7483 = vpack.c.b16 %v4707, %v4705
        %v7484 = vpack.c.b16 %v4710, %v4708
        %v7485 = vpack.c.b16 %v4711, %v4709
        %v7486 = vpack.c.b16 %v4714, %v4712
        %v7487 = vpack.c.b16 %v4715, %v4713
        %v7488 = vpack.c.b16 %v4718, %v4716
        %v7489 = vpack.c.b16 %v4719, %v4717
        %v7490 = vpack.c.b16 %v4722, %v4720
        %v7491 = vpack.c.b16 %v4723, %v4721
        %v7492 = vpack.c.b16 %v4726, %v4724
        %v7493 = vpack.c.b16 %v4727, %v4725
        %v7494 = vpack.c.b16 %v4730, %v4728
        %v7495 = vpack.c.b16 %v4731, %v4729
        %v7496 = vpack.c.b16 %v4734, %v4732
        %v7497 = vpack.c.b16 %v4735, %v4733
        %v7498 = vpack.c.b16 %v4738, %v4736
        %v7499 = vpack.c.b16 %v4739, %v4737
        %v7500 = vpack.c.b16 %v4742, %v4740
        %v7501 = vpack.c.b16 %v4743, %v4741
        %v7502 = vpack.c.b16 %v4746, %v4744
        %v7503 = vpack.c.b16 %v4747, %v4745
        %v7504 = vpack.c.b16 %v4750, %v4748
        %v7505 = vpack.c.b16 %v4751, %v4749
        %v7506 = vpack.c.b16 %v4754, %v4752
        %v7507 = vpack.c.b16 %v4755, %v4753
        %v7508 = vpack.c.b16 %v4758, %v4756
        %v7509 = vpack.c.b16 %v4759, %v4757
        %v7510 = vpack.c.b16 %v4762, %v4760
        %v7511 = vpack.c.b16 %v4763, %v4761
        %v7512 = vpack.c.b16 %v4766, %v4764
        %v7513 = vpack.c.b16 %v4767, %v4765
        %v7514 = vpack.c.b16 %v4770, %v4768
        %v7515 = vpack.c.b16 %v4771, %v4769
        %v7516 = vpack.c.b16 %v4774, %v4772
        %v7517 = vpack.c.b16 %v4775, %v4773
        %v7518 = vpack.c.b16 %v4778, %v4776
        %v7519 = vpack.c.b16 %v4779, %v4777
        %v7520 = vpack.c.b16 %v4782, %v4780
        %v7521 = vpack.c.b16 %v4783, %v4781
        %v7522 = vpack.c.b16 %v4786, %v4784
        %v7523 = vpack.c.b16 %v4787, %v4785
        %v7524 = vpack.c.b16 %v4790, %v4788
        %v7525 = vpack.c.b16 %v4791, %v4789
        %v7526 = vpack.c.b16 %v4794, %v4792
        %v7527 = vpack.c.b16 %v4795, %v4793
        %v7528 = vpack.c.b16 %v4798, %v4796
        %v7529 = vpack.c.b16 %v4799, %v4797
        %v7530 = vpack.c.b16 %v4802, %v4800
        %v7531 = vpack.c.b16 %v4803, %v4801
        %v7532 = vpack.c.b16 %v4806, %v4804
        %v7533 = vpack.c.b16 %v4807, %v4805
        %v7534 = vpack.c.b16 %v4810, %v4808
        %v7535 = vpack.c.b16 %v4811, %v4809
        %v7536 = vpack.c.b16 %v4814, %v4812
        %v7537 = vpack.c.b16 %v4815, %v4813
        %v7538 = vpack.c.b16 %v4818, %v4816
        %v7539 = vpack.c.b16 %v4819, %v4817
        %v7540 = vpack.c.b16 %v4822, %v4820
        %v7541 = vpack.c.b16 %v4823, %v4821
        %v7542 = vpack.c.b16 %v4826, %v4824
        %v7543 = vpack.c.b16 %v4827, %v4825
        %v7544 = vpack.c.b16 %v4830, %v4828
        %v7545 = vpack.c.b16 %v4831, %v4829
        %v7546 = vpack.c.b16 %v4834, %v4832
        %v7547 = vpack.c.b16 %v4835, %v4833
        %v7548 = vpack.c.b16 %v4838, %v4836
        %v7549 = vpack.c.b16 %v4839, %v4837
        %v7550 = vpack.c.b16 %v4842, %v4840
        %v7551 = vpack.c.b16 %v4843, %v4841
        %v7552 = vpack.c.b16 %v4846, %v4844
        %v7553 = vpack.c.b16 %v4847, %v4845
        %v7554 = vpack.c.b16 %v4850, %v4848
        %v7555 = vpack.c.b16 %v4851, %v4849
        %v7556 = vpack.c.b16 %v4854, %v4852
        %v7557 = vpack.c.b16 %v4855, %v4853
        %v7558 = vpack.c.b16 %v4858, %v4856
        %v7559 = vpack.c.b16 %v4859, %v4857
        %v7560 = vpack.c.b16 %v4862, %v4860
        %v7561 = vpack.c.b16 %v4863, %v4861
        %v7562 = vpack.c.b16 %v4866, %v4864
        %v7563 = vpack.c.b16 %v4867, %v4865
        %v7564 = vpack.c.b16 %v4870, %v4868
        %v7565 = vpack.c.b16 %v4871, %v4869
        %v7566 = vpack.c.b16 %v4874, %v4872
        %v7567 = vpack.c.b16 %v4875, %v4873
        %v7568 = vpack.c.b16 %v4878, %v4876
        %v7569 = vpack.c.b16 %v4879, %v4877
        %v7570 = vpack.c.b16 %v4882, %v4880
        %v7571 = vpack.c.b16 %v4883, %v4881
        %v7572 = vpack.c.b16 %v4886, %v4884
        %v7573 = vpack.c.b16 %v4887, %v4885
        %v7574 = vpack.c.b16 %v4890, %v4888
        %v7575 = vpack.c.b16 %v4891, %v4889
        %v7576 = vpack.c.b16 %v4894, %v4892
        %v7577 = vpack.c.b16 %v4895, %v4893
        %v7578 = vpack.c.b16 %v4898, %v4896
        %v7579 = vpack.c.b16 %v4899, %v4897
        %v7580 = vpack.c.b16 %v4902, %v4900
        %v7581 = vpack.c.b16 %v4903, %v4901
        %v7582 = vpack.c.b16 %v4906, %v4904
        %v7583 = vpack.c.b16 %v4907, %v4905
        %v7584 = vpack.c.b16 %v4910, %v4908
        %v7585 = vpack.c.b16 %v4911, %v4909
        %v7586 = vpack.c.b16 %v4914, %v4912
        %v7587 = vpack.c.b16 %v4915, %v4913
        %v7588 = vpack.c.b16 %v4918, %v4916
        %v7589 = vpack.c.b16 %v4919, %v4917
        %v7590 = vpack.c.b16 %v4922, %v4920
        %v7591 = vpack.c.b16 %v4923, %v4921
        %v7592 = vpack.c.b16 %v4926, %v4924
        %v7593 = vpack.c.b16 %v4927, %v4925
        %v7594 = vpack.c.b16 %v4930, %v4928
        %v7595 = vpack.c.b16 %v4931, %v4929
        %v7596 = vpack.c.b16 %v4934, %v4932
        %v7597 = vpack.c.b16 %v4935, %v4933
        %v7598 = vpack.c.b16 %v4938, %v4936
        %v7599 = vpack.c.b16 %v4939, %v4937
        %v7600 = vpack.c.b16 %v4942, %v4940
        %v7601 = vpack.c.b16 %v4943, %v4941
        %v7602 = vpack.c.b16 %v4946, %v4944
        %v7603 = vpack.c.b16 %v4947, %v4945
        %v7604 = vpack.c.b16 %v4950, %v4948
        %v7605 = vpack.c.b16 %v4951, %v4949
        %v7606 = vpack.c.b16 %v4954, %v4952
        %v7607 = vpack.c.b16 %v4955, %v4953
        %v7608 = vpack.c.b16 %v4958, %v4956
        %v7609 = vpack.c.b16 %v4959, %v4957
        %v7610 = vpack.c.b16 %v4962, %v4960
        %v7611 = vpack.c.b16 %v4963, %v4961
        %v7612 = vpack.c.b16 %v4966, %v4964
        %v7613 = vpack.c.b16 %v4967, %v4965
        %v7614 = vpack.c.b16 %v4970, %v4968
        %v7615 = vpack.c.b16 %v4971, %v4969
        %v7616 = vpack.c.b16 %v4974, %v4972
        %v7617 = vpack.c.b16 %v4975, %v4973
        %v7618 = vpack.c.b16 %v4978, %v4976
        %v7619 = vpack.c.b16 %v4979, %v4977
        %v7620 = vpack.c.b16 %v4982, %v4980
        %v7621 = vpack.c.b16 %v4983, %v4981
        %v7622 = vpack.c.b16 %v4986, %v4984
        %v7623 = vpack.c.b16 %v4987, %v4985
        %v7624 = vpack.c.b16 %v4990, %v4988
        %v7625 = vpack.c.b16 %v4991, %v4989
        %v7626 = vpack.c.b16 %v4994, %v4992
        %v7627 = vpack.c.b16 %v4995, %v4993
        %v7628 = vpack.c.b16 %v4998, %v4996
        %v7629 = vpack.c.b16 %v4999, %v4997
        %v7630 = vpack.c.b16 %v5002, %v5000
        %v7631 = vpack.c.b16 %v5003, %v5001
        %v7632 = vpack.c.b16 %v5006, %v5004
        %v7633 = vpack.c.b16 %v5007, %v5005
        %v7634 = vpack.c.b16 %v5010, %v5008
        %v7635 = vpack.c.b16 %v5011, %v5009
        %v7636 = vpack.c.b16 %v5014, %v5012
        %v7637 = vpack.c.b16 %v5015, %v5013
        %v7638 = vpack.c.b16 %v5018, %v5016
        %v7639 = vpack.c.b16 %v5019, %v5017
        %v7640 = vpack.c.b16 %v5022, %v5020
        %v7641 = vpack.c.b16 %v5023, %v5021
        %v7642 = vpack.c.b16 %v5026, %v5024
        %v7643 = vpack.c.b16 %v5027, %v5025
        %v7644 = vpack.c.b16 %v5030, %v5028
        %v7645 = vpack.c.b16 %v5031, %v5029
        %v7646 = vpack.c.b16 %v5034, %v5032
        %v7647 = vpack.c.b16 %v5035, %v5033
        %v7648 = vpack.c.b16 %v5038, %v5036
        %v7649 = vpack.c.b16 %v5039, %v5037
        %v7650 = vpack.c.b16 %v5042, %v5040
        %v7651 = vpack.c.b16 %v5043, %v5041
        %v7652 = vpack.c.b16 %v5046, %v5044
        %v7653 = vpack.c.b16 %v5047, %v5045
        %v7654 = vpack.c.b16 %v5050, %v5048
        %v7655 = vpack.c.b16 %v5051, %v5049
        %v7656 = vpack.c.b16 %v5054, %v5052
        %v7657 = vpack.c.b16 %v5055, %v5053
        %v7658 = vpack.c.b16 %v5058, %v5056
        %v7659 = vpack.c.b16 %v5059, %v5057
        %v7660 = vpack.c.b16 %v5062, %v5060
        %v7661 = vpack.c.b16 %v5063, %v5061
        %v7662 = vpack.c.b16 %v5066, %v5064
        %v7663 = vpack.c.b16 %v5067, %v5065
        %v7664 = vpack.c.b16 %v5070, %v5068
        %v7665 = vpack.c.b16 %v5071, %v5069
        %v7666 = vpack.c.b16 %v5074, %v5072
        %v7667 = vpack.c.b16 %v5075, %v5073
        %v7668 = vpack.c.b16 %v5078, %v5076
        %v7669 = vpack.c.b16 %v5079, %v5077
        %v7670 = vpack.c.b16 %v5082, %v5080
        %v7671 = vpack.c.b16 %v5083, %v5081
        %v7672 = vpack.c.b16 %v5086, %v5084
        %v7673 = vpack.c.b16 %v5087, %v5085
        %v7674 = vpack.c.b16 %v5090, %v5088
        %v7675 = vpack.c.b16 %v5091, %v5089
        %v7676 = vpack.c.b16 %v5094, %v5092
        %v7677 = vpack.c.b16 %v5095, %v5093
        %v7678 = vpack.c.b16 %v5098, %v5096
        %v7679 = vpack.c.b16 %v5099, %v5097
        %v7680 = vpack.c.b16 %v5102, %v5100
        %v7681 = vpack.c.b16 %v5103, %v5101
        %v7682 = vpack.c.b16 %v5106, %v5104
        %v7683 = vpack.c.b16 %v5107, %v5105
        %v7684 = vpack.c.b16 %v5110, %v5108
        %v7685 = vpack.c.b16 %v5111, %v5109
        %v7686 = vpack.c.b16 %v5114, %v5112
        %v7687 = vpack.c.b16 %v5115, %v5113
        %v7688 = vpack.c.b16 %v5118, %v5116
        %v7689 = vpack.c.b16 %v5119, %v5117
        %v7690 = vpack.c.b16 %v5122, %v5120
        %v7691 = vpack.c.b16 %v5123, %v5121
        %v7692 = vpack.c.b16 %v5126, %v5124
        %v7693 = vpack.c.b16 %v5127, %v5125
        %v7694 = vpack.c.b16 %v5130, %v5128
        %v7695 = vpack.c.b16 %v5131, %v5129
        %v7696 = vpack.c.b16 %v5134, %v5132
        %v7697 = vpack.c.b16 %v5135, %v5133
        %v7698 = vpack.c.b16 %v5138, %v5136
        %v7699 = vpack.c.b16 %v5139, %v5137
        %v7700 = vpack.c.b16 %v5142, %v5140
        %v7701 = vpack.c.b16 %v5143, %v5141
        %v7702 = vpack.c.b16 %v5146, %v5144
        %v7703 = vpack.c.b16 %v5147, %v5145
        %v7704 = vpack.c.b16 %v5150, %v5148
        %v7705 = vpack.c.b16 %v5151, %v5149
        %v7706 = vpack.c.b16 %v5154, %v5152
        %v7707 = vpack.c.b16 %v5155, %v5153
        %v7708 = vpack.c.b16 %v5158, %v5156
        %v7709 = vpack.c.b16 %v5159, %v5157
        %v7710 = vpack.c.b16 %v5162, %v5160
        %v7711 = vpack.c.b16 %v5163, %v5161
        %v7712 = vpack.c.b16 %v5166, %v5164
        %v7713 = vpack.c.b16 %v5167, %v5165
        %v7714 = vpack.c.b16 %v5170, %v5168
        %v7715 = vpack.c.b16 %v5171, %v5169
        %v7716 = vpack.c.b16 %v5174, %v5172
        %v7717 = vpack.c.b16 %v5175, %v5173
        %v7718 = vpack.c.b16 %v5178, %v5176
        %v7719 = vpack.c.b16 %v5179, %v5177
        %v7720 = vpack.c.b16 %v5182, %v5180
        %v7721 = vpack.c.b16 %v5183, %v5181
        %v7722 = vpack.c.b16 %v5186, %v5184
        %v7723 = vpack.c.b16 %v5187, %v5185
        %v7724 = vpack.c.b16 %v5190, %v5188
        %v7725 = vpack.c.b16 %v5191, %v5189
        %v7726 = vpack.c.b16 %v5194, %v5192
        %v7727 = vpack.c.b16 %v5195, %v5193
        %v7728 = vpack.c.b16 %v5198, %v5196
        %v7729 = vpack.c.b16 %v5199, %v5197
        %v7730 = vpack.c.b16 %v5202, %v5200
        %v7731 = vpack.c.b16 %v5203, %v5201
        %v7732 = vpack.c.b16 %v5206, %v5204
        %v7733 = vpack.c.b16 %v5207, %v5205
        %v7734 = vpack.c.b16 %v5210, %v5208
        %v7735 = vpack.c.b16 %v5211, %v5209
        %v7736 = vpack.c.b16 %v5214, %v5212
        %v7737 = vpack.c.b16 %v5215, %v5213
        %v7738 = vpack.c.b16 %v5218, %v5216
        %v7739 = vpack.c.b16 %v5219, %v5217
        %v7740 = vpack.c.b16 %v5222, %v5220
        %v7741 = vpack.c.b16 %v5223, %v5221
        %v7742 = vpack.c.b16 %v5226, %v5224
        %v7743 = vpack.c.b16 %v5227, %v5225
        %v7744 = vpack.c.b16 %v5230, %v5228
        %v7745 = vpack.c.b16 %v5231, %v5229
        %v7746 = vpack.c.b16 %v5234, %v5232
        %v7747 = vpack.c.b16 %v5235, %v5233
        %v7748 = vpack.c.b16 %v5238, %v5236
        %v7749 = vpack.c.b16 %v5239, %v5237
        %v7750 = vpack.c.b16 %v5242, %v5240
        %v7751 = vpack.c.b16 %v5243, %v5241
        %v7752 = vpack.c.b16 %v5246, %v5244
        %v7753 = vpack.c.b16 %v5247, %v5245
        %v7754 = vpack.c.b16 %v5250, %v5248
        %v7755 = vpack.c.b16 %v5251, %v5249
        %v7756 = vpack.c.b16 %v5254, %v5252
        %v7757 = vpack.c.b16 %v5255, %v5253
        %v7758 = vpack.c.b16 %v5258, %v5256
        %v7759 = vpack.c.b16 %v5259, %v5257
        %v7760 = vpack.c.b16 %v5262, %v5260
        %v7761 = vpack.c.b16 %v5263, %v5261
        %v7762 = vpack.c.b16 %v5266, %v5264
        %v7763 = vpack.c.b16 %v5267, %v5265
        %v7764 = vpack.c.b16 %v5270, %v5268
        %v7765 = vpack.c.b16 %v5271, %v5269
        %v7766 = vpack.c.b16 %v5274, %v5272
        %v7767 = vpack.c.b16 %v5275, %v5273
        %v7768 = vpack.c.b16 %v5278, %v5276
        %v7769 = vpack.c.b16 %v5279, %v5277
        %v7770 = vpack.c.b16 %v5282, %v5280
        %v7771 = vpack.c.b16 %v5283, %v5281
        %v7772 = vpack.c.b16 %v5286, %v5284
        %v7773 = vpack.c.b16 %v5287, %v5285
        %v7774 = vpack.c.b16 %v5290, %v5288
        %v7775 = vpack.c.b16 %v5291, %v5289
        %v7776 = vpack.c.b16 %v5294, %v5292
        %v7777 = vpack.c.b16 %v5295, %v5293
        %v7778 = vpack.c.b16 %v5298, %v5296
        %v7779 = vpack.c.b16 %v5299, %v5297
        %v7780 = vpack.c.b16 %v5302, %v5300
        %v7781 = vpack.c.b16 %v5303, %v5301
        %v7782 = vpack.c.b16 %v5306, %v5304
        %v7783 = vpack.c.b16 %v5307, %v5305
        %v7784 = vpack.c.b16 %v5310, %v5308
        %v7785 = vpack.c.b16 %v5311, %v5309
        %v7786 = vpack.c.b16 %v5314, %v5312
        %v7787 = vpack.c.b16 %v5315, %v5313
        %v7788 = vpack.c.b16 %v5318, %v5316
        %v7789 = vpack.c.b16 %v5319, %v5317
        %v7790 = vpack.c.b16 %v5322, %v5320
        %v7791 = vpack.c.b16 %v5323, %v5321
        %v7792 = vpack.c.b16 %v5326, %v5324
        %v7793 = vpack.c.b16 %v5327, %v5325
        %v7794 = vpack.c.b16 %v5330, %v5328
        %v7795 = vpack.c.b16 %v5331, %v5329
        %v7796 = vpack.c.b16 %v5334, %v5332
        %v7797 = vpack.c.b16 %v5335, %v5333
        %v7798 = vpack.c.b16 %v5338, %v5336
        %v7799 = vpack.c.b16 %v5339, %v5337
        %v7800 = vpack.c.b16 %v5342, %v5340
        %v7801 = vpack.c.b16 %v5343, %v5341
        %v7802 = vpack.c.b16 %v5346, %v5344
        %v7803 = vpack.c.b16 %v5347, %v5345
        %v7804 = vpack.c.b16 %v5350, %v5348
        %v7805 = vpack.c.b16 %v5351, %v5349
        %v7806 = vpack.c.b16 %v5354, %v5352
        %v7807 = vpack.c.b16 %v5355, %v5353
        %v7808 = vpack.c.b16 %v5358, %v5356
        %v7809 = vpack.c.b16 %v5359, %v5357
        %v7810 = vpack.c.b16 %v5362, %v5360
        %v7811 = vpack.c.b16 %v5363, %v5361
        %v7812 = vpack.c.b16 %v5366, %v5364
        %v7813 = vpack.c.b16 %v5367, %v5365
        %v7814 = vpack.c.b16 %v5370, %v5368
        %v7815 = vpack.c.b16 %v5371, %v5369
        %v7816 = vpack.c.b16 %v5374, %v5372
        %v7817 = vpack.c.b16 %v5375, %v5373
        %v7818 = vpack.c.b16 %v5378, %v5376
        %v7819 = vpack.c.b16 %v5379, %v5377
        %v7820 = vpack.c.b16 %v5382, %v5380
        %v7821 = vpack.c.b16 %v5383, %v5381
        %v7822 = vpack.c.b16 %v5386, %v5384
        %v7823 = vpack.c.b16 %v5387, %v5385
        %v7824 = vpack.c.b16 %v5390, %v5388
        %v7825 = vpack.c.b16 %v5391, %v5389
        %v7826 = vpack.c.b16 %v5394, %v5392
        %v7827 = vpack.c.b16 %v5395, %v5393
        %v7828 = vpack.c.b16 %v5398, %v5396
        %v7829 = vpack.c.b16 %v5399, %v5397
        %v7830 = vpack.c.b16 %v5402, %v5400
        %v7831 = vpack.c.b16 %v5403, %v5401
        %v7832 = vpack.c.b16 %v5406, %v5404
        %v7833 = vpack.c.b16 %v5407, %v5405
        %v7834 = vpack.c.b16 %v5410, %v5408
        %v7835 = vpack.c.b16 %v5411, %v5409
        %v7836 = vpack.c.b16 %v5414, %v5412
        %v7837 = vpack.c.b16 %v5415, %v5413
        %v7838 = vpack.c.b16 %v5418, %v5416
        %v7839 = vpack.c.b16 %v5419, %v5417
        %v7840 = vpack.c.b16 %v5422, %v5420
        %v7841 = vpack.c.b16 %v5423, %v5421
        %v7842 = vpack.c.b16 %v5426, %v5424
        %v7843 = vpack.c.b16 %v5427, %v5425
        %v7844 = vpack.c.b16 %v5430, %v5428
        %v7845 = vpack.c.b16 %v5431, %v5429
        %v7846 = vpack.c.b16 %v5434, %v5432
        %v7847 = vpack.c.b16 %v5435, %v5433
        %v7848 = vpack.c.b16 %v5438, %v5436
        %v7849 = vpack.c.b16 %v5439, %v5437
        %v7850 = vpack.c.b16 %v5442, %v5440
        %v7851 = vpack.c.b16 %v5443, %v5441
        %v7852 = vpack.c.b16 %v5446, %v5444
        %v7853 = vpack.c.b16 %v5447, %v5445
        %v7854 = vpack.c.b16 %v5450, %v5448
        %v7855 = vpack.c.b16 %v5451, %v5449
        %v7856 = vpack.c.b16 %v5454, %v5452
        %v7857 = vpack.c.b16 %v5455, %v5453
        %v7858 = vpack.c.b16 %v5458, %v5456
        %v7859 = vpack.c.b16 %v5459, %v5457
        %v7860 = vpack.c.b16 %v5462, %v5460
        %v7861 = vpack.c.b16 %v5463, %v5461
        %v7862 = vpack.c.b16 %v5466, %v5464
        %v7863 = vpack.c.b16 %v5467, %v5465
        %v7864 = vpack.c.b16 %v5470, %v5468
        %v7865 = vpack.c.b16 %v5471, %v5469
        %v7866 = vpack.c.b16 %v5474, %v5472
        %v7867 = vpack.c.b16 %v5475, %v5473
        %v7868 = vpack.c.b16 %v5478, %v5476
        %v7869 = vpack.c.b16 %v5479, %v5477
        %v7870 = vpack.c.b16 %v5482, %v5480
        %v7871 = vpack.c.b16 %v5483, %v5481
        %v7872 = vpack.c.b16 %v5486, %v5484
        %v7873 = vpack.c.b16 %v5487, %v5485
        %v7874 = vpack.c.b16 %v5490, %v5488
        %v7875 = vpack.c.b16 %v5491, %v5489
        %v7876 = vpack.c.b16 %v5494, %v5492
        %v7877 = vpack.c.b16 %v5495, %v5493
        %v7878 = vpack.c.b16 %v5498, %v5496
        %v7879 = vpack.c.b16 %v5499, %v5497
        %v7880 = vpack.c.b16 %v5502, %v5500
        %v7881 = vpack.c.b16 %v5503, %v5501
        %v7882 = vpack.c.b16 %v5506, %v5504
        %v7883 = vpack.c.b16 %v5507, %v5505
        %v7884 = vpack.c.b16 %v5510, %v5508
        %v7885 = vpack.c.b16 %v5511, %v5509
        %v7886 = vpack.c.b16 %v5514, %v5512
        %v7887 = vpack.c.b16 %v5515, %v5513
        %v7888 = vpack.c.b16 %v5518, %v5516
        %v7889 = vpack.c.b16 %v5519, %v5517
        %v7890 = vpack.c.b16 %v5522, %v5520
        %v7891 = vpack.c.b16 %v5523, %v5521
        %v7892 = vpack.c.b16 %v5526, %v5524
        %v7893 = vpack.c.b16 %v5527, %v5525
        %v7894 = vpack.c.b16 %v5530, %v5528
        %v7895 = vpack.c.b16 %v5531, %v5529
        %v7896 = vpack.c.b16 %v5534, %v5532
        %v7897 = vpack.c.b16 %v5535, %v5533
        %v7898 = vpack.c.b16 %v5538, %v5536
        %v7899 = vpack.c.b16 %v5539, %v5537
        %v7900 = vpack.c.b16 %v5542, %v5540
        %v7901 = vpack.c.b16 %v5543, %v5541
        %v7902 = vpack.c.b16 %v5546, %v5544
        %v7903 = vpack.c.b16 %v5547, %v5545
        %v7904 = vpack.c.b16 %v5550, %v5548
        %v7905 = vpack.c.b16 %v5551, %v5549
        %v7906 = vpack.c.b16 %v5554, %v5552
        %v7907 = vpack.c.b16 %v5555, %v5553
        %v7908 = vpack.c.b16 %v5558, %v5556
        %v7909 = vpack.c.b16 %v5559, %v5557
        %v7910 = vpack.c.b16 %v5562, %v5560
        %v7911 = vpack.c.b16 %v5563, %v5561
        %v7912 = vpack.c.b16 %v5566, %v5564
        %v7913 = vpack.c.b16 %v5567, %v5565
        %v7914 = vpack.c.b16 %v5570, %v5568
        %v7915 = vpack.c.b16 %v5571, %v5569
        %v7916 = vpack.c.b16 %v5574, %v5572
        %v7917 = vpack.c.b16 %v5575, %v5573
        %v7918 = vpack.c.b16 %v5578, %v5576
        %v7919 = vpack.c.b16 %v5579, %v5577
        %v7920 = vpack.c.b16 %v5582, %v5580
        %v7921 = vpack.c.b16 %v5583, %v5581
        %v7922 = vpack.c.b16 %v5586, %v5584
        %v7923 = vpack.c.b16 %v5587, %v5585
        %v7924 = vpack.c.b16 %v5590, %v5588
        %v7925 = vpack.c.b16 %v5591, %v5589
        %v7926 = vpack.c.b16 %v5594, %v5592
        %v7927 = vpack.c.b16 %v5595, %v5593
        %v7928 = vpack.c.b16 %v5598, %v5596
        %v7929 = vpack.c.b16 %v5599, %v5597
        %v7930 = vpack.c.b16 %v5602, %v5600
        %v7931 = vpack.c.b16 %v5603, %v5601
        %v7932 = vpack.c.b16 %v5606, %v5604
        %v7933 = vpack.c.b16 %v5607, %v5605
        %v7934 = vpack.c.b16 %v5610, %v5608
        %v7935 = vpack.c.b16 %v5611, %v5609
        %v7936 = vpack.c.b16 %v5614, %v5612
        %v7937 = vpack.c.b16 %v5615, %v5613
        %v7938 = vpack.c.b16 %v5618, %v5616
        %v7939 = vpack.c.b16 %v5619, %v5617
        %v7940 = vpack.c.b16 %v5622, %v5620
        %v7941 = vpack.c.b16 %v5623, %v5621
        %v7942 = vpack.c.b16 %v5626, %v5624
        %v7943 = vpack.c.b16 %v5627, %v5625
        %v7944 = vpack.c.b16 %v5630, %v5628
        %v7945 = vpack.c.b16 %v5631, %v5629
        %v7946 = vpack.c.b16 %v5634, %v5632
        %v7947 = vpack.c.b16 %v5635, %v5633
        %v7948 = vpack.c.b16 %v5638, %v5636
        %v7949 = vpack.c.b16 %v5639, %v5637
        %v7950 = vpack.c.b16 %v5642, %v5640
        %v7951 = vpack.c.b16 %v5643, %v5641
        %v7952 = vpack.c.b16 %v5646, %v5644
        %v7953 = vpack.c.b16 %v5647, %v5645
        %v7954 = vpack.c.b16 %v5650, %v5648
        %v7955 = vpack.c.b16 %v5651, %v5649
        %v7956 = vpack.c.b16 %v5654, %v5652
        %v7957 = vpack.c.b16 %v5655, %v5653
        %v7958 = vpack.c.b16 %v5658, %v5656
        %v7959 = vpack.c.b16 %v5659, %v5657
        %v7960 = vpack.c.b16 %v5662, %v5660
        %v7961 = vpack.c.b16 %v5663, %v5661
        %v7962 = vpack.c.b16 %v5666, %v5664
        %v7963 = vpack.c.b16 %v5667, %v5665
        %v7964 = vpack.c.b16 %v5670, %v5668
        %v7965 = vpack.c.b16 %v5671, %v5669
        %v7966 = vpack.c.b16 %v5674, %v5672
        %v7967 = vpack.c.b16 %v5675, %v5673
        %v7968 = vpack.c.b16 %v5678, %v5676
        %v7969 = vpack.c.b16 %v5679, %v5677
        %v7970 = vpack.c.b16 %v5682, %v5680
        %v7971 = vpack.c.b16 %v5683, %v5681
        %v7972 = vpack.c.b16 %v5686, %v5684
        %v7973 = vpack.c.b16 %v5687, %v5685
        %v7974 = vpack.c.b16 %v5690, %v5688
        %v7975 = vpack.c.b16 %v5691, %v5689
        %v7976 = vpack.c.b16 %v5694, %v5692
        %v7977 = vpack.c.b16 %v5695, %v5693
        %v7978 = vpack.c.b16 %v5698, %v5696
        %v7979 = vpack.c.b16 %v5699, %v5697
        %v7980 = vpack.c.b16 %v5702, %v5700
        %v7981 = vpack.c.b16 %v5703, %v5701
        %v7982 = vpack.c.b16 %v5706, %v5704
        %v7983 = vpack.c.b16 %v5707, %v5705
        %v7984 = vpack.c.b16 %v5710, %v5708
        %v7985 = vpack.c.b16 %v5711, %v5709
        %v7986 = vpack.c.b16 %v5714, %v5712
        %v7987 = vpack.c.b16 %v5715, %v5713
        %v7988 = vpack.c.b16 %v5718, %v5716
        %v7989 = vpack.c.b16 %v5719, %v5717
        %v7990 = vpack.c.b16 %v5722, %v5720
        %v7991 = vpack.c.b16 %v5723, %v5721
        %v7992 = vpack.c.b16 %v5726, %v5724
        %v7993 = vpack.c.b16 %v5727, %v5725
        %v7994 = vpack.c.b16 %v5730, %v5728
        %v7995 = vpack.c.b16 %v5731, %v5729
        %v7996 = vpack.c.b16 %v5734, %v5732
        %v7997 = vpack.c.b16 %v5735, %v5733
        %v7998 = vpack.c.b16 %v5738, %v5736
        %v7999 = vpack.c.b16 %v5739, %v5737
        %v8000 = vpack.c.b16 %v5742, %v5740
        %v8001 = vpack.c.b16 %v5743, %v5741
        %v8002 = vpack.c.b16 %v5746, %v5744
        %v8003 = vpack.c.b16 %v5747, %v5745
        %v8004 = vpack.c.b16 %v5750, %v5748
        %v8005 = vpack.c.b16 %v5751, %v5749
        %v8006 = vpack.c.b16 %v5754, %v5752
        %v8007 = vpack.c.b16 %v5755, %v5753
        %v8008 = vpack.c.b16 %v5758, %v5756
        %v8009 = vpack.c.b16 %v5759, %v5757
        %v8010 = vpack.c.b16 %v5762, %v5760
        %v8011 = vpack.c.b16 %v5763, %v5761
        %v8012 = vpack.c.b16 %v5766, %v5764
        %v8013 = vpack.c.b16 %v5767, %v5765
        %v8014 = vpack.c.b16 %v5770, %v5768
        %v8015 = vpack.c.b16 %v5771, %v5769
        %v8016 = vpack.c.b16 %v5774, %v5772
        %v8017 = vpack.c.b16 %v5775, %v5773
        %v8018 = vpack.c.b16 %v5778, %v5776
        %v8019 = vpack.c.b16 %v5779, %v5777
        %v8020 = vpack.c.b16 %v5782, %v5780
        %v8021 = vpack.c.b16 %v5783, %v5781
        %v8022 = vpack.c.b16 %v5786, %v5784
        %v8023 = vpack.c.b16 %v5787, %v5785
        %v8024 = vpack.c.b16 %v5790, %v5788
        %v8025 = vpack.c.b16 %v5791, %v5789
        %v8026 = vpack.c.b16 %v5794, %v5792
        %v8027 = vpack.c.b16 %v5795, %v5793
        %v8028 = vpack.c.b16 %v5798, %v5796
        %v8029 = vpack.c.b16 %v5799, %v5797
        %v8030 = vpack.c.b16 %v5802, %v5800
        %v8031 = vpack.c.b16 %v5803, %v5801
        %v8032 = vpack.c.b16 %v5806, %v5804
        %v8033 = vpack.c.b16 %v5807, %v5805
        %v8034 = vpack.c.b16 %v5810, %v5808
        %v8035 = vpack.c.b16 %v5811, %v5809
        %v8036 = vpack.c.b16 %v5814, %v5812
        %v8037 = vpack.c.b16 %v5815, %v5813
        %v8038 = vpack.c.b16 %v5818, %v5816
        %v8039 = vpack.c.b16 %v5819, %v5817
        %v8040 = vpack.c.b16 %v5822, %v5820
        %v8041 = vpack.c.b16 %v5823, %v5821
        %v8042 = vpack.c.b16 %v5826, %v5824
        %v8043 = vpack.c.b16 %v5827, %v5825
        %v8044 = vpack.c.b16 %v5830, %v5828
        %v8045 = vpack.c.b16 %v5831, %v5829
        %v8046 = vpack.c.b16 %v5834, %v5832
        %v8047 = vpack.c.b16 %v5835, %v5833
        %v8048 = vpack.c.b16 %v5838, %v5836
        %v8049 = vpack.c.b16 %v5839, %v5837
        %v8050 = vpack.c.b16 %v5842, %v5840
        %v8051 = vpack.c.b16 %v5843, %v5841
        %v8052 = vpack.c.b16 %v5846, %v5844
        %v8053 = vpack.c.b16 %v5847, %v5845
        %v8054 = vpack.c.b16 %v5850, %v5848
        %v8055 = vpack.c.b16 %v5851, %v5849
        %v8056 = vpack.c.b16 %v5854, %v5852
        %v8057 = vpack.c.b16 %v5855, %v5853
        %v8058 = vpack.c.b16 %v5858, %v5856
        %v8059 = vpack.c.b16 %v5859, %v5857
        %v8060 = vpack.c.b16 %v5862, %v5860
        %v8061 = vpack.c.b16 %v5863, %v5861
        %v8062 = vpack.c.b16 %v5866, %v5864
        %v8063 = vpack.c.b16 %v5867, %v5865
        %v8064 = vpack.c.b16 %v5870, %v5868
        %v8065 = vpack.c.b16 %v5871, %v5869
        %v8066 = vpack.c.b16 %v5874, %v5872
        %v8067 = vpack.c.b16 %v5875, %v5873
        %v8068 = vpack.c.b16 %v5878, %v5876
        %v8069 = vpack.c.b16 %v5879, %v5877
        %v8070 = vpack.c.b16 %v5882, %v5880
        %v8071 = vpack.c.b16 %v5883, %v5881
        %v8072 = vpack.c.b16 %v5886, %v5884
        %v8073 = vpack.c.b16 %v5887, %v5885
        %v8074 = vpack.c.b16 %v5890, %v5888
        %v8075 = vpack.c.b16 %v5891, %v5889
        %v8076 = vpack.c.b16 %v5894, %v5892
        %v8077 = vpack.c.b16 %v5895, %v5893
        %v8078 = vpack.c.b16 %v5898, %v5896
        %v8079 = vpack.c.b16 %v5899, %v5897
        %v8080 = vpack.c.b16 %v5902, %v5900
        %v8081 = vpack.c.b16 %v5903, %v5901
        %v8082 = vpack.c.b16 %v5906, %v5904
        %v8083 = vpack.c.b16 %v5907, %v5905
        %v8084 = vpack.c.b16 %v5910, %v5908
        %v8085 = vpack.c.b16 %v5911, %v5909
        %v8086 = vpack.c.b16 %v5914, %v5912
        %v8087 = vpack.c.b16 %v5915, %v5913
        %v8088 = vpack.c.b16 %v5918, %v5916
        %v8089 = vpack.c.b16 %v5919, %v5917
        %v8090 = vpack.c.b16 %v5922, %v5920
        %v8091 = vpack.c.b16 %v5923, %v5921
        %v8092 = vpack.c.b16 %v5926, %v5924
        %v8093 = vpack.c.b16 %v5927, %v5925
        %v8094 = vpack.c.b16 %v5930, %v5928
        %v8095 = vpack.c.b16 %v5931, %v5929
        %v8096 = vpack.c.b16 %v5934, %v5932
        %v8097 = vpack.c.b16 %v5935, %v5933
        %v8098 = vpack.c.b16 %v5938, %v5936
        %v8099 = vpack.c.b16 %v5939, %v5937
        %v8100 = vpack.c.b16 %v5942, %v5940
        %v8101 = vpack.c.b16 %v5943, %v5941
        %v8102 = vpack.c.b16 %v5946, %v5944
        %v8103 = vpack.c.b16 %v5947, %v5945
        %v8104 = vpack.c.b16 %v5950, %v5948
        %v8105 = vpack.c.b16 %v5951, %v5949
        %v8106 = vpack.c.b16 %v5954, %v5952
        %v8107 = vpack.c.b16 %v5955, %v5953
        %v8108 = vpack.c.b16 %v5958, %v5956
        %v8109 = vpack.c.b16 %v5959, %v5957
        %v8110 = vpack.c.b16 %v5962, %v5960
        %v8111 = vpack.c.b16 %v5963, %v5961
        %v8112 = vpack.c.b16 %v5966, %v5964
        %v8113 = vpack.c.b16 %v5967, %v5965
        %v8114 = vpack.c.b16 %v5970, %v5968
        %v8115 = vpack.c.b16 %v5971, %v5969
        %v8116 = vpack.c.b16 %v5974, %v5972
        %v8117 = vpack.c.b16 %v5975, %v5973
        %v8118 = vpack.c.b16 %v5978, %v5976
        %v8119 = vpack.c.b16 %v5979, %v5977
        %v8120 = vpack.c.b16 %v5982, %v5980
        %v8121 = vpack.c.b16 %v5983, %v5981
        %v8122 = vpack.c.b16 %v5986, %v5984
        %v8123 = vpack.c.b16 %v5987, %v5985
        %v8124 = vpack.c.b16 %v5990, %v5988
        %v8125 = vpack.c.b16 %v5991, %v5989
        %v8126 = vpack.c.b16 %v5994, %v5992
        %v8127 = vpack.c.b16 %v5995, %v5993
        %v8128 = vpack.c.b16 %v5998, %v5996
        %v8129 = vpack.c.b16 %v5999, %v5997
        %v8130 = vpack.c.b16 %v6002, %v6000
        %v8131 = vpack.c.b16 %v6003, %v6001
        %v8132 = vpack.c.b16 %v6006, %v6004
        %v8133 = vpack.c.b16 %v6007, %v6005
        %v8134 = vpack.c.b16 %v6010, %v6008
        %v8135 = vpack.c.b16 %v6011, %v6009
        %v8136 = vpack.c.b16 %v6014, %v6012
        %v8137 = vpack.c.b16 %v6015, %v6013
        %v8138 = vpack.c.b16 %v6018, %v6016
        %v8139 = vpack.c.b16 %v6019, %v6017
        %v8140 = vpack.c.b16 %v6022, %v6020
        %v8141 = vpack.c.b16 %v6023, %v6021
        %v8142 = vpack.c.b16 %v6026, %v6024
        %v8143 = vpack.c.b16 %v6027, %v6025
        %v8144 = vpack.c.b16 %v6030, %v6028
        %v8145 = vpack.c.b16 %v6031, %v6029
        %v8146 = vpack.c.b16 %v6034, %v6032
        %v8147 = vpack.c.b16 %v6035, %v6033
        %v8148 = vpack.c.b16 %v6038, %v6036
        %v8149 = vpack.c.b16 %v6039, %v6037
        %v8150 = vpack.c.b16 %v6042, %v6040
        %v8151 = vpack.c.b16 %v6043, %v6041
        %v8152 = vpack.c.b16 %v6046, %v6044
        %v8153 = vpack.c.b16 %v6047, %v6045
        %v8154 = vpack.c.b16 %v6050, %v6048
        %v8155 = vpack.c.b16 %v6051, %v6049
        %v8156 = vpack.c.b16 %v6054, %v6052
        %v8157 = vpack.c.b16 %v6055, %v6053
        %v8158 = vpack.c.b16 %v6058, %v6056
        %v8159 = vpack.c.b16 %v6059, %v6057
        %v8160 = vpack.c.b16 %v6062, %v6060
        %v8161 = vpack.c.b16 %v6063, %v6061
        %v8162 = vpack.c.b16 %v6066, %v6064
        %v8163 = vpack.c.b16 %v6067, %v6065
        %v8164 = vpack.c.b16 %v6070, %v6068
        %v8165 = vpack.c.b16 %v6071, %v6069
        %v8166 = vpack.c.b16 %v6074, %v6072
        %v8167 = vpack.c.b16 %v6075, %v6073
        %v8168 = vpack.c.b16 %v6078, %v6076
        %v8169 = vpack.c.b16 %v6079, %v6077
        %v8170 = vpack.c.b16 %v6082, %v6080
        %v8171 = vpack.c.b16 %v6083, %v6081
        %v8172 = vpack.c.b16 %v6086, %v6084
        %v8173 = vpack.c.b16 %v6087, %v6085
        %v8174 = vpack.c.b16 %v6090, %v6088
        %v8175 = vpack.c.b16 %v6091, %v6089
        %v8176 = vpack.c.b16 %v6094, %v6092
        %v8177 = vpack.c.b16 %v6095, %v6093
        %v8178 = vpack.c.b16 %v6098, %v6096
        %v8179 = vpack.c.b16 %v6099, %v6097
        %v8180 = vpack.c.b16 %v6102, %v6100
        %v8181 = vpack.c.b16 %v6103, %v6101
        %v8182 = vpack.c.b16 %v6106, %v6104
        %v8183 = vpack.c.b16 %v6107, %v6105
        %v8184 = vpack.c.b16 %v6110, %v6108
        %v8185 = vpack.c.b16 %v6111, %v6109
        %v8186 = vpack.c.b16 %v6114, %v6112
        %v8187 = vpack.c.b16 %v6115, %v6113
        %v8188 = vpack.c.b16 %v6118, %v6116
        %v8189 = vpack.c.b16 %v6119, %v6117
        %v8190 = vpack.c.b16 %v6122, %v6120
        %v8191 = vpack.c.b16 %v6123, %v6121
        %v8192 = vpack.c.b16 %v6126, %v6124
        %v8193 = vpack.c.b16 %v6127, %v6125
        %v8194 = vpack.c.b16 %v6130, %v6128
        %v8195 = vpack.c.b16 %v6131, %v6129
        %v8196 = vpack.c.b16 %v6134, %v6132
        %v8197 = vpack.c.b16 %v6135, %v6133
        %v8198 = vpack.c.b16 %v6138, %v6136
        %v8199 = vpack.c.b16 %v6139, %v6137
        %v8200 = vpack.c.b16 %v6142, %v6140
        %v8201 = vpack.c.b16 %v6143, %v6141
        %v8202 = vpack.c.b16 %v6146, %v6144
        %v8203 = vpack.c.b16 %v6147, %v6145
        %v8204 = vpack.c.b16 %v6150, %v6148
        %v8205 = vpack.c.b16 %v6151, %v6149
        %v8206 = vpack.c.b16 %v6154, %v6152
        %v8207 = vpack.c.b16 %v6155, %v6153
        %v8208 = vpack.c.b16 %v6158, %v6156
        %v8209 = vpack.c.b16 %v6159, %v6157
        %v8210 = vpack.c.b16 %v6162, %v6160
        %v8211 = vpack.c.b16 %v6163, %v6161
        %v8212 = vpack.c.b16 %v6166, %v6164
        %v8213 = vpack.c.b16 %v6167, %v6165
        %v8214 = vpack.c.b16 %v6170, %v6168
        %v8215 = vpack.c.b16 %v6171, %v6169
        %v8216 = vpack.c.b16 %v6174, %v6172
        %v8217 = vpack.c.b16 %v6175, %v6173
        %v8218 = vpack.c.b16 %v6178, %v6176
        %v8219 = vpack.c.b16 %v6179, %v6177
        %v8220 = vpack.c.b16 %v6182, %v6180
        %v8221 = vpack.c.b16 %v6183, %v6181
        %v8222 = vpack.c.b16 %v6186, %v6184
        %v8223 = vpack.c.b16 %v6187, %v6185
        %v8224 = vpack.c.b16 %v6190, %v6188
        %v8225 = vpack.c.b16 %v6191, %v6189
        %v8226 = vpack.c.b16 %v6194, %v6192
        %v8227 = vpack.c.b16 %v6195, %v6193
        %v8228 = vpack.c.b16 %v6198, %v6196
        %v8229 = vpack.c.b16 %v6199, %v6197
        %v8230 = vpack.c.b16 %v6202, %v6200
        %v8231 = vpack.c.b16 %v6203, %v6201
        %v8232 = vpack.c.b16 %v6206, %v6204
        %v8233 = vpack.c.b16 %v6207, %v6205
        %v8234 = vpack.c.b16 %v6210, %v6208
        %v8235 = vpack.c.b16 %v6211, %v6209
        %v8236 = vpack.c.b16 %v6214, %v6212
        %v8237 = vpack.c.b16 %v6215, %v6213
        %v8238 = vpack.c.b16 %v6218, %v6216
        %v8239 = vpack.c.b16 %v6219, %v6217
        %v8240 = vpack.c.b16 %v6222, %v6220
        %v8241 = vpack.c.b16 %v6223, %v6221
        %v8242 = vpack.c.b16 %v6226, %v6224
        %v8243 = vpack.c.b16 %v6227, %v6225
        %v8244 = vpack.c.b16 %v6230, %v6228
        %v8245 = vpack.c.b16 %v6231, %v6229
        %v8246 = vpack.c.b16 %v6234, %v6232
        %v8247 = vpack.c.b16 %v6235, %v6233
        %v8248 = vpack.c.b16 %v6238, %v6236
        %v8249 = vpack.c.b16 %v6239, %v6237
        %v8250 = vpack.c.b16 %v6242, %v6240
        %v8251 = vpack.c.b16 %v6243, %v6241
        %v8252 = vpack.c.b16 %v6246, %v6244
        %v8253 = vpack.c.b16 %v6247, %v6245
        %v8254 = vpack.c.b16 %v6250, %v6248
        %v8255 = vpack.c.b16 %v6251, %v6249
        %v8256 = vpack.c.b16 %v6254, %v6252
        %v8257 = vpack.c.b16 %v6255, %v6253
        %v8258 = vpack.c.b16 %v6258, %v6256
        %v8259 = vpack.c.b16 %v6259, %v6257
        %v8260 = vpack.c.b16 %v6262, %v6260
        %v8261 = vpack.c.b16 %v6263, %v6261
        %v8262 = vpack.c.b16 %v6266, %v6264
        %v8263 = vpack.c.b16 %v6267, %v6265
        %v8264 = vpack.c.b16 %v6270, %v6268
        %v8265 = vpack.c.b16 %v6271, %v6269
        %v8266 = vpack.c.b16 %v6274, %v6272
        %v8267 = vpack.c.b16 %v6275, %v6273
        %v8268 = vpack.c.b16 %v6278, %v6276
        %v8269 = vpack.c.b16 %v6279, %v6277
        %v8270 = vpack.c.b16 %v6282, %v6280
        %v8271 = vpack.c.b16 %v6283, %v6281
        %v8272 = vpack.c.b16 %v6286, %v6284
        %v8273 = vpack.c.b16 %v6287, %v6285
        %v8274 = vpack.c.b16 %v6290, %v6288
        %v8275 = vpack.c.b16 %v6291, %v6289
        %v8276 = vpack.c.b16 %v6294, %v6292
        %v8277 = vpack.c.b16 %v6295, %v6293
        %v8278 = vpack.c.b16 %v6298, %v6296
        %v8279 = vpack.c.b16 %v6299, %v6297
        %v8280 = vpack.c.b16 %v6302, %v6300
        %v8281 = vpack.c.b16 %v6303, %v6301
        %v8282 = vpack.c.b16 %v6306, %v6304
        %v8283 = vpack.c.b16 %v6307, %v6305
        %v8284 = vpack.c.b16 %v6310, %v6308
        %v8285 = vpack.c.b16 %v6311, %v6309
        %v8286 = vpack.c.b16 %v6314, %v6312
        %v8287 = vpack.c.b16 %v6315, %v6313
        %v8288 = vpack.c.b16 %v6318, %v6316
        %v8289 = vpack.c.b16 %v6319, %v6317
        %v8290 = vpack.c.b16 %v6322, %v6320
        %v8291 = vpack.c.b16 %v6323, %v6321
        %v8292 = vpack.c.b16 %v6326, %v6324
        %v8293 = vpack.c.b16 %v6327, %v6325
        %v8294 = vpack.c.b16 %v6330, %v6328
        %v8295 = vpack.c.b16 %v6331, %v6329
        %v8296 = vpack.c.b16 %v6334, %v6332
        %v8297 = vpack.c.b16 %v6335, %v6333
        %v8298 = vpack.c.b16 %v6338, %v6336
        %v8299 = vpack.c.b16 %v6339, %v6337
        %v8300 = vpack.c.b16 %v6342, %v6340
        %v8301 = vpack.c.b16 %v6343, %v6341
        %v8302 = vpack.c.b16 %v6346, %v6344
        %v8303 = vpack.c.b16 %v6347, %v6345
        %v8304 = vpack.c.b16 %v6350, %v6348
        %v8305 = vpack.c.b16 %v6351, %v6349
        %v8306 = vpack.c.b16 %v6354, %v6352
        %v8307 = vpack.c.b16 %v6355, %v6353
        %v8308 = vpack.c.b16 %v6358, %v6356
        %v8309 = vpack.c.b16 %v6359, %v6357
        %v8310 = vpack.c.b16 %v6362, %v6360
        %v8311 = vpack.c.b16 %v6363, %v6361
        %v8312 = vpack.c.b16 %v6366, %v6364
        %v8313 = vpack.c.b16 %v6367, %v6365
        %v8314 = vpack.c.b16 %v6370, %v6368
        %v8315 = vpack.c.b16 %v6371, %v6369
        %v8316 = vpack.c.b16 %v6374, %v6372
        %v8317 = vpack.c.b16 %v6375, %v6373
        %v8318 = vpack.c.b16 %v6378, %v6376
        %v8319 = vpack.c.b16 %v6379, %v6377
        %v8320 = vpack.c.b16 %v6382, %v6380
        %v8321 = vpack.c.b16 %v6383, %v6381
        %v8322 = vpack.c.b16 %v6386, %v6384
        %v8323 = vpack.c.b16 %v6387, %v6385
        %v8324 = vpack.c.b16 %v6390, %v6388
        %v8325 = vpack.c.b16 %v6391, %v6389
        %v8326 = vpack.c.b16 %v6394, %v6392
        %v8327 = vpack.c.b16 %v6395, %v6393
        %v8328 = vpack.c.b16 %v6398, %v6396
        %v8329 = vpack.c.b16 %v6399, %v6397
        %v8330 = vpack.c.b16 %v6402, %v6400
        %v8331 = vpack.c.b16 %v6403, %v6401
        %v8332 = vpack.c.b16 %v6406, %v6404
        %v8333 = vpack.c.b16 %v6407, %v6405
        %v8334 = vpack.c.b16 %v6410, %v6408
        %v8335 = vpack.c.b16 %v6411, %v6409
        %v8336 = vpack.c.b16 %v6414, %v6412
        %v8337 = vpack.c.b16 %v6415, %v6413
        %v8338 = vpack.c.b16 %v6418, %v6416
        %v8339 = vpack.c.b16 %v6419, %v6417
        %v8340 = vpack.c.b16 %v6422, %v6420
        %v8341 = vpack.c.b16 %v6423, %v6421
        %v8342 = vpack.c.b16 %v6426, %v6424
        %v8343 = vpack.c.b16 %v6427, %v6425
        %v8344 = vpack.c.b16 %v6430, %v6428
        %v8345 = vpack.c.b16 %v6431, %v6429
        %v8346 = vpack.c.b16 %v6434, %v6432
        %v8347 = vpack.c.b16 %v6435, %v6433
        %v8348 = vpack.c.b16 %v6438, %v6436
        %v8349 = vpack.c.b16 %v6439, %v6437
        %v8350 = vpack.c.b16 %v6442, %v6440
        %v8351 = vpack.c.b16 %v6443, %v6441
        %v8352 = vpack.c.b16 %v6446, %v6444
        %v8353 = vpack.c.b16 %v6447, %v6445
        %v8354 = vpack.c.b16 %v6450, %v6448
        %v8355 = vpack.c.b16 %v6451, %v6449
        %v8356 = vpack.c.b16 %v6454, %v6452
        %v8357 = vpack.c.b16 %v6455, %v6453
        %v8358 = vpack.c.b16 %v6458, %v6456
        %v8359 = vpack.c.b16 %v6459, %v6457
        %v8360 = vpack.c.b16 %v6462, %v6460
        %v8361 = vpack.c.b16 %v6463, %v6461
        %v8362 = vpack.c.b16 %v6466, %v6464
        %v8363 = vpack.c.b16 %v6467, %v6465
        %v8364 = vpack.c.b16 %v6470, %v6468
        %v8365 = vpack.c.b16 %v6471, %v6469
        %v8366 = vpack.c.b16 %v6474, %v6472
        %v8367 = vpack.c.b16 %v6475, %v6473
        %v8368 = vpack.c.b16 %v6478, %v6476
        %v8369 = vpack.c.b16 %v6479, %v6477
        %v8370 = vpack.c.b16 %v6482, %v6480
        %v8371 = vpack.c.b16 %v6483, %v6481
        %v8372 = vpack.c.b16 %v6486, %v6484
        %v8373 = vpack.c.b16 %v6487, %v6485
        %v8374 = vpack.c.b16 %v6490, %v6488
        %v8375 = vpack.c.b16 %v6491, %v6489
        %v8376 = vpack.c.b16 %v6494, %v6492
        %v8377 = vpack.c.b16 %v6495, %v6493
        %v8378 = vpack.c.b16 %v6498, %v6496
        %v8379 = vpack.c.b16 %v6499, %v6497
        %v8380 = vpack.c.b16 %v6502, %v6500
        %v8381 = vpack.c.b16 %v6503, %v6501
        %v8382 = vpack.c.b16 %v6506, %v6504
        %v8383 = vpack.c.b16 %v6507, %v6505
        %v8384 = vpack.c.b16 %v6510, %v6508
        %v8385 = vpack.c.b16 %v6511, %v6509
        %v8386 = vpack.c.b16 %v6514, %v6512
        %v8387 = vpack.c.b16 %v6515, %v6513
        %v8388 = vpack.c.b16 %v6518, %v6516
        %v8389 = vpack.c.b16 %v6519, %v6517
        %v8390 = vpack.c.b16 %v6522, %v6520
        %v8391 = vpack.c.b16 %v6523, %v6521
        %v8392 = vpack.c.b16 %v6526, %v6524
        %v8393 = vpack.c.b16 %v6527, %v6525
        %v8394 = vpack.c.b16 %v6530, %v6528
        %v8395 = vpack.c.b16 %v6531, %v6529
        %v8396 = vpack.c.b16 %v6534, %v6532
        %v8397 = vpack.c.b16 %v6535, %v6533
        %v8398 = vpack.c.b16 %v6538, %v6536
        %v8399 = vpack.c.b16 %v6539, %v6537
        %v8400 = vpack.c.b16 %v6542, %v6540
        %v8401 = vpack.c.b16 %v6543, %v6541
        %v8402 = vpack.c.b16 %v6546, %v6544
        %v8403 = vpack.c.b16 %v6547, %v6545
        %v8404 = vpack.c.b16 %v6550, %v6548
        %v8405 = vpack.c.b16 %v6551, %v6549
        %v8406 = vpack.c.b16 %v6554, %v6552
        %v8407 = vpack.c.b16 %v6555, %v6553
        %v8408 = vpack.c.b16 %v6558, %v6556
        %v8409 = vpack.c.b16 %v6559, %v6557
        %v8410 = vpack.c.b16 %v6562, %v6560
        %v8411 = vpack.c.b16 %v6563, %v6561
        %v8412 = vpack.c.b16 %v6566, %v6564
        %v8413 = vpack.c.b16 %v6567, %v6565
        %v8414 = vpack.c.b16 %v6570, %v6568
        %v8415 = vpack.c.b16 %v6571, %v6569
        %v8416 = vpack.c.b16 %v6574, %v6572
        %v8417 = vpack.c.b16 %v6575, %v6573
        %v8418 = vpack.c.b16 %v6578, %v6576
        %v8419 = vpack.c.b16 %v6579, %v6577
        %v8420 = vpack.c.b16 %v6582, %v6580
        %v8421 = vpack.c.b16 %v6583, %v6581
        %v8422 = vpack.c.b16 %v6586, %v6584
        %v8423 = vpack.c.b16 %v6587, %v6585
        %v8424 = vpack.c.b16 %v6590, %v6588
        %v8425 = vpack.c.b16 %v6591, %v6589
        %v8426 = vpack.c.b16 %v6594, %v6592
        %v8427 = vpack.c.b16 %v6595, %v6593
        %v8428 = vpack.c.b16 %v6598, %v6596
        %v8429 = vpack.c.b16 %v6599, %v6597
        %v8430 = vpack.c.b16 %v6602, %v6600
        %v8431 = vpack.c.b16 %v6603, %v6601
        %v8432 = vpack.c.b16 %v6606, %v6604
        %v8433 = vpack.c.b16 %v6607, %v6605
        %v8434 = vpack.c.b16 %v6610, %v6608
        %v8435 = vpack.c.b16 %v6611, %v6609
        %v8436 = vpack.c.b16 %v6614, %v6612
        %v8437 = vpack.c.b16 %v6615, %v6613
        %v8438 = vpack.c.b16 %v6618, %v6616
        %v8439 = vpack.c.b16 %v6619, %v6617
        %v8440 = vpack.c.b16 %v6622, %v6620
        %v8441 = vpack.c.b16 %v6623, %v6621
        %v8442 = vpack.c.b16 %v6626, %v6624
        %v8443 = vpack.c.b16 %v6627, %v6625
        %v8444 = vpack.c.b16 %v6630, %v6628
        %v8445 = vpack.c.b16 %v6631, %v6629
        %v8446 = vpack.c.b16 %v6634, %v6632
        %v8447 = vpack.c.b16 %v6635, %v6633
        %v8448 = vpack.c.b16 %v6638, %v6636
        %v8449 = vpack.c.b16 %v6639, %v6637
        %v8450 = vpack.c.b16 %v6642, %v6640
        %v8451 = vpack.c.b16 %v6643, %v6641
        %v8452 = vpack.c.b16 %v6646, %v6644
        %v8453 = vpack.c.b16 %v6647, %v6645
        %v8454 = vpack.c.b16 %v6650, %v6648
        %v8455 = vpack.c.b16 %v6651, %v6649
        %v8456 = vpack.c.b16 %v6654, %v6652
        %v8457 = vpack.c.b16 %v6655, %v6653
        %v8458 = vpack.c.b16 %v6658, %v6656
        %v8459 = vpack.c.b16 %v6659, %v6657
        %v8460 = vpack.c.b16 %v6662, %v6660
        %v8461 = vpack.c.b16 %v6663, %v6661
        %v8462 = vpack.c.b16 %v6666, %v6664
        %v8463 = vpack.c.b16 %v6667, %v6665
        %v8464 = vpack.c.b16 %v6670, %v6668
        %v8465 = vpack.c.b16 %v6671, %v6669
        %v8466 = vpack.c.b16 %v6674, %v6672
        %v8467 = vpack.c.b16 %v6675, %v6673
        %v8468 = vpack.c.b16 %v6678, %v6676
        %v8469 = vpack.c.b16 %v6679, %v6677
        %v8470 = vpack.c.b16 %v6682, %v6680
        %v8471 = vpack.c.b16 %v6683, %v6681
        %v8472 = vpack.c.b16 %v6686, %v6684
        %v8473 = vpack.c.b16 %v6687, %v6685
        %v8474 = vpack.c.b16 %v6690, %v6688
        %v8475 = vpack.c.b16 %v6691, %v6689
        %v8476 = vpack.c.b16 %v6694, %v6692
        %v8477 = vpack.c.b16 %v6695, %v6693
        %v8478 = vpack.c.b16 %v6698, %v6696
        %v8479 = vpack.c.b16 %v6699, %v6697
        %v8480 = vpack.c.b16 %v6702, %v6700
        %v8481 = vpack.c.b16 %v6703, %v6701
        %v8482 = vpack.c.b16 %v6706, %v6704
        %v8483 = vpack.c.b16 %v6707, %v6705
        %v8484 = vpack.c.b16 %v6710, %v6708
        %v8485 = vpack.c.b16 %v6711, %v6709
        %v8486 = vpack.c.b16 %v6714, %v6712
        %v8487 = vpack.c.b16 %v6715, %v6713
        %v8488 = vpack.c.b16 %v6718, %v6716
        %v8489 = vpack.c.b16 %v6719, %v6717
        %v8490 = vpack.c.b16 %v6722, %v6720
        %v8491 = vpack.c.b16 %v6723, %v6721
        %v8492 = vpack.c.b16 %v6726, %v6724
        %v8493 = vpack.c.b16 %v6727, %v6725
        %v8494 = vpack.c.b16 %v6730, %v6728
        %v8495 = vpack.c.b16 %v6731, %v6729
        %v8496 = vpack.c.b16 %v6734, %v6732
        %v8497 = vpack.c.b16 %v6735, %v6733
        %v8498 = vpack.c.b16 %v6738, %v6736
        %v8499 = vpack.c.b16 %v6739, %v6737
        %v8500 = vpack.c.b16 %v6742, %v6740
        %v8501 = vpack.c.b16 %v6743, %v6741
        %v8502 = vpack.c.b16 %v6746, %v6744
        %v8503 = vpack.c.b16 %v6747, %v6745
        %v8504 = vpack.c.b16 %v6750, %v6748
        %v8505 = vpack.c.b16 %v6751, %v6749
        %v8506 = vpack.c.b16 %v6754, %v6752
        %v8507 = vpack.c.b16 %v6755, %v6753
        %v8508 = vpack.c.b16 %v6758, %v6756
        %v8509 = vpack.c.b16 %v6759, %v6757
        %v8510 = vpack.c.b16 %v6762, %v6760
        %v8511 = vpack.c.b16 %v6763, %v6761
        %v8512 = vpack.c.b16 %v6766, %v6764
        %v8513 = vpack.c.b16 %v6767, %v6765
        %v8514 = vpack.c.b16 %v6770, %v6768
        %v8515 = vpack.c.b16 %v6771, %v6769
        %v8516 = vpack.c.b16 %v6774, %v6772
        %v8517 = vpack.c.b16 %v6775, %v6773
        %v8518 = vpack.c.b16 %v6778, %v6776
        %v8519 = vpack.c.b16 %v6779, %v6777
        %v8520 = vpack.c.b16 %v6782, %v6780
        %v8521 = vpack.c.b16 %v6783, %v6781
        %v8522 = vpack.c.b16 %v6786, %v6784
        %v8523 = vpack.c.b16 %v6787, %v6785
        %v8524 = vpack.c.b16 %v6790, %v6788
        %v8525 = vpack.c.b16 %v6791, %v6789
        %v8526 = vpack.c.b16 %v6794, %v6792
        %v8527 = vpack.c.b16 %v6795, %v6793
        %v8528 = vpack.c.b16 %v6798, %v6796
        %v8529 = vpack.c.b16 %v6799, %v6797
        %v8530 = vpack.c.b16 %v6802, %v6800
        %v8531 = vpack.c.b16 %v6803, %v6801
        %v8532 = vpack.c.b16 %v6806, %v6804
        %v8533 = vpack.c.b16 %v6807, %v6805
        %v8534 = vpack.c.b16 %v6810, %v6808
        %v8535 = vpack.c.b16 %v6811, %v6809
        %v8536 = vpack.c.b16 %v6814, %v6812
        %v8537 = vpack.c.b16 %v6815, %v6813
        %v8538 = vpack.c.b16 %v6818, %v6816
        %v8539 = vpack.c.b16 %v6819, %v6817
        %v8540 = vpack.c.b16 %v6822, %v6820
        %v8541 = vpack.c.b16 %v6823, %v6821
        %v8542 = vpack.c.b16 %v6826, %v6824
        %v8543 = vpack.c.b16 %v6827, %v6825
        %v8544 = vpack.c.b16 %v6830, %v6828
        %v8545 = vpack.c.b16 %v6831, %v6829
        %v8546 = vpack.c.b16 %v6834, %v6832
        %v8547 = vpack.c.b16 %v6835, %v6833
        %v8548 = vpack.c.b16 %v6838, %v6836
        %v8549 = vpack.c.b16 %v6839, %v6837
        %v8550 = vpack.c.b16 %v6842, %v6840
        %v8551 = vpack.c.b16 %v6843, %v6841
        %v8552 = vpack.c.b16 %v6846, %v6844
        %v8553 = vpack.c.b16 %v6847, %v6845
        %v8554 = vpack.c.b16 %v6850, %v6848
        %v8555 = vpack.c.b16 %v6851, %v6849
        %v8556 = vpack.c.b16 %v6854, %v6852
        %v8557 = vpack.c.b16 %v6855, %v6853
        %v8558 = vpack.c.b16 %v6858, %v6856
        %v8559 = vpack.c.b16 %v6859, %v6857
        %v8560 = vpack.c.b16 %v6862, %v6860
        %v8561 = vpack.c.b16 %v6863, %v6861
        %v8562 = vpack.c.b16 %v6866, %v6864
        %v8563 = vpack.c.b16 %v6867, %v6865
        %v8564 = vpack.c.b16 %v6870, %v6868
        %v8565 = vpack.c.b16 %v6871, %v6869
        %v8566 = vpack.c.b16 %v6874, %v6872
        %v8567 = vpack.c.b16 %v6875, %v6873
        %v8568 = vpack.c.b16 %v6878, %v6876
        %v8569 = vpack.c.b16 %v6879, %v6877
        %v8570 = vpack.c.b16 %v6882, %v6880
        %v8571 = vpack.c.b16 %v6883, %v6881
        %v8572 = vpack.c.b16 %v6886, %v6884
        %v8573 = vpack.c.b16 %v6887, %v6885
        %v8574 = vpack.c.b16 %v6890, %v6888
        %v8575 = vpack.c.b16 %v6891, %v6889
        %v8576 = vpack.c.b16 %v6894, %v6892
        %v8577 = vpack.c.b16 %v6895, %v6893
        %v8578 = vpack.c.b16 %v6898, %v6896
        %v8579 = vpack.c.b16 %v6899, %v6897
        %v8580 = vpack.c.b16 %v6902, %v6900
        %v8581 = vpack.c.b16 %v6903, %v6901
        %v8582 = vpack.c.b16 %v6906, %v6904
        %v8583 = vpack.c.b16 %v6907, %v6905
        %v8584 = vpack.c.b16 %v6910, %v6908
        %v8585 = vpack.c.b16 %v6911, %v6909
        %v8586 = vpack.c.b16 %v6914, %v6912
        %v8587 = vpack.c.b16 %v6915, %v6913
        %v8588 = vpack.c.b16 %v6918, %v6916
        %v8589 = vpack.c.b16 %v6919, %v6917
        %v8590 = vpack.c.b16 %v6922, %v6920
        %v8591 = vpack.c.b16 %v6923, %v6921
        %v8592 = vpack.c.b16 %v6926, %v6924
        %v8593 = vpack.c.b16 %v6927, %v6925
        %v8594 = vpack.c.b16 %v6930, %v6928
        %v8595 = vpack.c.b16 %v6931, %v6929
        %v8596 = vpack.c.b16 %v6934, %v6932
        %v8597 = vpack.c.b16 %v6935, %v6933
        %v8598 = vpack.c.b16 %v6938, %v6936
        %v8599 = vpack.c.b16 %v6939, %v6937
        %v8600 = vpack.c.b16 %v6942, %v6940
        %v8601 = vpack.c.b16 %v6943, %v6941
        %v8602 = vpack.c.b16 %v6946, %v6944
        %v8603 = vpack.c.b16 %v6947, %v6945
        %v8604 = vpack.c.b16 %v6950, %v6948
        %v8605 = vpack.c.b16 %v6951, %v6949
        %v8606 = vpack.c.b16 %v6954, %v6952
        %v8607 = vpack.c.b16 %v6955, %v6953
        %v8608 = vpack.c.b16 %v6958, %v6956
        %v8609 = vpack.c.b16 %v6959, %v6957
        %v8610 = vpack.c.b16 %v6962, %v6960
        %v8611 = vpack.c.b16 %v6963, %v6961
        %v8612 = vpack.c.b16 %v6966, %v6964
        %v8613 = vpack.c.b16 %v6967, %v6965
        %v8614 = vpack.c.b16 %v6970, %v6968
        %v8615 = vpack.c.b16 %v6971, %v6969
        %v8616 = vpack.c.b16 %v6974, %v6972
        %v8617 = vpack.c.b16 %v6975, %v6973
        %v8618 = vpack.c.b16 %v6978, %v6976
        %v8619 = vpack.c.b16 %v6979, %v6977
        %v8620 = vpack.c.b16 %v6982, %v6980
        %v8621 = vpack.c.b16 %v6983, %v6981
        %v8622 = vpack.c.b16 %v6986, %v6984
        %v8623 = vpack.c.b16 %v6987, %v6985
        %v8624 = vpack.c.b16 %v6990, %v6988
        %v8625 = vpack.c.b16 %v6991, %v6989
        %v8626 = vpack.c.b16 %v6994, %v6992
        %v8627 = vpack.c.b16 %v6995, %v6993
        %v8628 = vpack.c.b16 %v6998, %v6996
        %v8629 = vpack.c.b16 %v6999, %v6997
        %v8630 = vpack.c.b16 %v7002, %v7000
        %v8631 = vpack.c.b16 %v7003, %v7001
        %v8632 = vpack.c.b16 %v7006, %v7004
        %v8633 = vpack.c.b16 %v7007, %v7005
        %v8634 = vpack.c.b16 %v7010, %v7008
        %v8635 = vpack.c.b16 %v7011, %v7009
        %v8636 = vpack.c.b16 %v7014, %v7012
        %v8637 = vpack.c.b16 %v7015, %v7013
        %v8638 = vpack.c.b16 %v7018, %v7016
        %v8639 = vpack.c.b16 %v7019, %v7017
        %v8640 = vpack.c.b16 %v7022, %v7020
        %v8641 = vpack.c.b16 %v7023, %v7021
        %v8642 = vpack.c.b16 %v7026, %v7024
        %v8643 = vpack.c.b16 %v7027, %v7025
        %v8644 = vpack.c.b16 %v7030, %v7028
        %v8645 = vpack.c.b16 %v7031, %v7029
        %v8646 = vpack.c.b16 %v7034, %v7032
        %v8647 = vpack.c.b16 %v7035, %v7033
        %v8648 = vpack.c.b16 %v7038, %v7036
        %v8649 = vpack.c.b16 %v7039, %v7037
        %v8650 = vpack.c.b16 %v7042, %v7040
        %v8651 = vpack.c.b16 %v7043, %v7041
        %v8652 = vpack.c.b16 %v7046, %v7044
        %v8653 = vpack.c.b16 %v7047, %v7045
        %v8654 = vpack.c.b16 %v7050, %v7048
        %v8655 = vpack.c.b16 %v7051, %v7049
        %v8656 = vpack.c.b16 %v7054, %v7052
        %v8657 = vpack.c.b16 %v7055, %v7053
        %v8658 = vpack.c.b16 %v7058, %v7056
        %v8659 = vpack.c.b16 %v7059, %v7057
        %v8660 = vpack.c.b16 %v7062, %v7060
        %v8661 = vpack.c.b16 %v7063, %v7061
        %v8662 = vpack.c.b16 %v7066, %v7064
        %v8663 = vpack.c.b16 %v7067, %v7065
        %v8664 = vpack.c.b16 %v7070, %v7068
        %v8665 = vpack.c.b16 %v7071, %v7069
        %v8666 = vpack.c.b16 %v7074, %v7072
        %v8667 = vpack.c.b16 %v7075, %v7073
        %v8668 = vpack.c.b16 %v7078, %v7076
        %v8669 = vpack.c.b16 %v7079, %v7077
        %v8670 = vpack.c.b16 %v7082, %v7080
        %v8671 = vpack.c.b16 %v7083, %v7081
        %v8672 = vpack.c.b16 %v7086, %v7084
        %v8673 = vpack.c.b16 %v7087, %v7085
        %v8674 = vpack.c.b16 %v7090, %v7088
        %v8675 = vpack.c.b16 %v7091, %v7089
        %v8676 = vpack.c.b16 %v7094, %v7092
        %v8677 = vpack.c.b16 %v7095, %v7093
        %v8678 = vpack.c.b16 %v7098, %v7096
        %v8679 = vpack.c.b16 %v7099, %v7097
        %v8680 = vpack.c.b16 %v7102, %v7100
        %v8681 = vpack.c.b16 %v7103, %v7101
        %v8682 = vpack.c.b16 %v7106, %v7104
        %v8683 = vpack.c.b16 %v7107, %v7105
        %v8684 = vpack.c.b16 %v7110, %v7108
        %v8685 = vpack.c.b16 %v7111, %v7109
        %v8686 = vpack.c.b16 %v7114, %v7112
        %v8687 = vpack.c.b16 %v7115, %v7113
        %v8688 = vpack.c.b16 %v7118, %v7116
        %v8689 = vpack.c.b16 %v7119, %v7117
        %v8690 = vpack.c.b16 %v7122, %v7120
        %v8691 = vpack.c.b16 %v7123, %v7121
        %v8692 = vpack.c.b16 %v7126, %v7124
        %v8693 = vpack.c.b16 %v7127, %v7125
        %v8694 = vpack.c.b16 %v7130, %v7128
        %v8695 = vpack.c.b16 %v7131, %v7129
        %v8696 = vpack.c.b16 %v7134, %v7132
        %v8697 = vpack.c.b16 %v7135, %v7133
        %v8698 = vpack.c.b16 %v7138, %v7136
        %v8699 = vpack.c.b16 %v7139, %v7137
        %v8700 = vpack.c.b16 %v7142, %v7140
        %v8701 = vpack.c.b16 %v7143, %v7141
        %v8702 = vpack.c.b16 %v7146, %v7144
        %v8703 = vpack.c.b16 %v7147, %v7145
        %v8704 = vpack.c.b16 %v7150, %v7148
        %v8705 = vpack.c.b16 %v7151, %v7149
        %v8706 = vpack.c.b16 %v7154, %v7152
        %v8707 = vpack.c.b16 %v7155, %v7153
        %v8708 = vpack.c.b16 %v7158, %v7156
        %v8709 = vpack.c.b16 %v7159, %v7157
        %v8710 = vpack.c.b16 %v7162, %v7160
        %v8711 = vpack.c.b16 %v7163, %v7161
        %v8712 = vpack.c.b16 %v7166, %v7164
        %v8713 = vpack.c.b16 %v7167, %v7165
        %v8714 = vpack.c.b16 %v7170, %v7168
        %v8715 = vpack.c.b16 %v7171, %v7169
        %v8716 = vpack.c.b16 %v7174, %v7172
        %v8717 = vpack.c.b16 %v7175, %v7173
        %v8718 = vpack.c.b16 %v7178, %v7176
        %v8719 = vpack.c.b16 %v7179, %v7177
        %v8720 = vpack.c.b16 %v7182, %v7180
        %v8721 = vpack.c.b16 %v7183, %v7181
        %v8722 = vpack.c.b16 %v7186, %v7184
        %v8723 = vpack.c.b16 %v7187, %v7185
        %10260 = vmatpush.bf16.msra.mxu0 %v7202
        %10261 = vmatpush.bf16.msra.mxu0 %v7200
        %10262 = vmatpush.bf16.msra.mxu0 %v7198
        %10263 = vmatpush.bf16.msra.mxu0 %v7196
        %10264 = vmatpush.bf16.msra.mxu0 %v7194
        %10265 = vmatpush.bf16.msra.mxu0 %v7192
        %10266 = vmatpush.bf16.msra.mxu0 %v7190
        %10267 = vmatpush.bf16.msra.mxu0 %v7188
        %10268 = vmatmul.bf16.gmra.mxu0 %v2388
        %v10269 = vpop.f32.mrf.mxu0
        %v10270 = vadd.f32 0.0, %v10269
        %v10271 = vpop.f32.mrf.mxu0
        %v10272 = vadd.f32 0.0, %v10271
        %10273 = vdwg.mxu0
        %10274 = vmatpush.bf16.msra.mxu0 %v7218
        %10275 = vmatpush.bf16.msra.mxu0 %v7216
        %10276 = vmatpush.bf16.msra.mxu0 %v7214
        %10277 = vmatpush.bf16.msra.mxu0 %v7212
        %10278 = vmatpush.bf16.msra.mxu0 %v7210
        %10279 = vmatpush.bf16.msra.mxu0 %v7208
        %10280 = vmatpush.bf16.msra.mxu0 %v7206
        %10281 = vmatpush.bf16.msra.mxu0 %v7204
        %10282 = vmatmul.bf16.gmra.mxu0 %v2389
        %v10283 = vpop.f32.mrf.mxu0
        %v10284 = vadd.f32 %v10270, %v10283
        %v10285 = vpop.f32.mrf.mxu0
        %v10286 = vadd.f32 %v10272, %v10285
        %10287 = vdwg.mxu0
        %10288 = vmatpush.bf16.msra.mxu0 %v7234
        %10289 = vmatpush.bf16.msra.mxu0 %v7232
        %10290 = vmatpush.bf16.msra.mxu0 %v7230
        %10291 = vmatpush.bf16.msra.mxu0 %v7228
        %10292 = vmatpush.bf16.msra.mxu0 %v7226
        %10293 = vmatpush.bf16.msra.mxu0 %v7224
        %10294 = vmatpush.bf16.msra.mxu0 %v7222
        %10295 = vmatpush.bf16.msra.mxu0 %v7220
        %10296 = vmatmul.bf16.gmra.mxu0 %v2390
        %v10297 = vpop.f32.mrf.mxu0
        %v10298 = vadd.f32 %v10284, %v10297
        %v10299 = vpop.f32.mrf.mxu0
        %v10300 = vadd.f32 %v10286, %v10299
        %10301 = vdwg.mxu0
        %10302 = vmatpush.bf16.msra.mxu0 %v7250
        %10303 = vmatpush.bf16.msra.mxu0 %v7248
        %10304 = vmatpush.bf16.msra.mxu0 %v7246
        %10305 = vmatpush.bf16.msra.mxu0 %v7244
        %10306 = vmatpush.bf16.msra.mxu0 %v7242
        %10307 = vmatpush.bf16.msra.mxu0 %v7240
        %10308 = vmatpush.bf16.msra.mxu0 %v7238
        %10309 = vmatpush.bf16.msra.mxu0 %v7236
        %10310 = vmatmul.bf16.gmra.mxu0 %v2391
        %v10311 = vpop.f32.mrf.mxu0
        %v10312 = vadd.f32 %v10298, %v10311
        %v10313 = vpop.f32.mrf.mxu0
        %v10314 = vadd.f32 %v10300, %v10313
        %10315 = vdwg.mxu0
        %10316 = vmatpush.bf16.msra.mxu0 %v7266
        %10317 = vmatpush.bf16.msra.mxu0 %v7264
        %10318 = vmatpush.bf16.msra.mxu0 %v7262
        %10319 = vmatpush.bf16.msra.mxu0 %v7260
        %10320 = vmatpush.bf16.msra.mxu0 %v7258
        %10321 = vmatpush.bf16.msra.mxu0 %v7256
        %10322 = vmatpush.bf16.msra.mxu0 %v7254
        %10323 = vmatpush.bf16.msra.mxu0 %v7252
        %10324 = vmatmul.bf16.gmra.mxu0 %v2392
        %v10325 = vpop.f32.mrf.mxu0
        %v10326 = vadd.f32 %v10312, %v10325
        %v10327 = vpop.f32.mrf.mxu0
        %v10328 = vadd.f32 %v10314, %v10327
        %10329 = vdwg.mxu0
        %10330 = vmatpush.bf16.msra.mxu0 %v7282
        %10331 = vmatpush.bf16.msra.mxu0 %v7280
        %10332 = vmatpush.bf16.msra.mxu0 %v7278
        %10333 = vmatpush.bf16.msra.mxu0 %v7276
        %10334 = vmatpush.bf16.msra.mxu0 %v7274
        %10335 = vmatpush.bf16.msra.mxu0 %v7272
        %10336 = vmatpush.bf16.msra.mxu0 %v7270
        %10337 = vmatpush.bf16.msra.mxu0 %v7268
        %10338 = vmatmul.bf16.gmra.mxu0 %v2393
        %v10339 = vpop.f32.mrf.mxu0
        %v10340 = vadd.f32 %v10326, %v10339
        %v10341 = vpop.f32.mrf.mxu0
        %v10342 = vadd.f32 %v10328, %v10341
        %10343 = vdwg.mxu0
        %10344 = vmatpush.bf16.msra.mxu0 %v7298
        %10345 = vmatpush.bf16.msra.mxu0 %v7296
        %10346 = vmatpush.bf16.msra.mxu0 %v7294
        %10347 = vmatpush.bf16.msra.mxu0 %v7292
        %10348 = vmatpush.bf16.msra.mxu0 %v7290
        %10349 = vmatpush.bf16.msra.mxu0 %v7288
        %10350 = vmatpush.bf16.msra.mxu0 %v7286
        %10351 = vmatpush.bf16.msra.mxu0 %v7284
        %10352 = vmatmul.bf16.gmra.mxu0 %v2394
        %v10353 = vpop.f32.mrf.mxu0
        %v10354 = vadd.f32 %v10340, %v10353
        %v10355 = vpop.f32.mrf.mxu0
        %v10356 = vadd.f32 %v10342, %v10355
        %10357 = vdwg.mxu0
        %10358 = vmatpush.bf16.msra.mxu0 %v7314
        %10359 = vmatpush.bf16.msra.mxu0 %v7312
        %10360 = vmatpush.bf16.msra.mxu0 %v7310
        %10361 = vmatpush.bf16.msra.mxu0 %v7308
        %10362 = vmatpush.bf16.msra.mxu0 %v7306
        %10363 = vmatpush.bf16.msra.mxu0 %v7304
        %10364 = vmatpush.bf16.msra.mxu0 %v7302
        %10365 = vmatpush.bf16.msra.mxu0 %v7300
        %10366 = vmatmul.bf16.gmra.mxu0 %v2395
        %v10367 = vpop.f32.mrf.mxu0
        %v10368 = vadd.f32 %v10354, %v10367
        %v10369 = vpop.f32.mrf.mxu0
        %v10370 = vadd.f32 %v10356, %v10369
        %10371 = vdwg.mxu0
        %10372 = vmatpush.bf16.msra.mxu0 %v7330
        %10373 = vmatpush.bf16.msra.mxu0 %v7328
        %10374 = vmatpush.bf16.msra.mxu0 %v7326
        %10375 = vmatpush.bf16.msra.mxu0 %v7324
        %10376 = vmatpush.bf16.msra.mxu0 %v7322
        %10377 = vmatpush.bf16.msra.mxu0 %v7320
        %10378 = vmatpush.bf16.msra.mxu0 %v7318
        %10379 = vmatpush.bf16.msra.mxu0 %v7316
        %10380 = vmatmul.bf16.gmra.mxu0 %v2396
        %v10381 = vpop.f32.mrf.mxu0
        %v10382 = vadd.f32 %v10368, %v10381
        %v10383 = vpop.f32.mrf.mxu0
        %v10384 = vadd.f32 %v10370, %v10383
        %10385 = vdwg.mxu0
        %10386 = vmatpush.bf16.msra.mxu0 %v7346
        %10387 = vmatpush.bf16.msra.mxu0 %v7344
        %10388 = vmatpush.bf16.msra.mxu0 %v7342
        %10389 = vmatpush.bf16.msra.mxu0 %v7340
        %10390 = vmatpush.bf16.msra.mxu0 %v7338
        %10391 = vmatpush.bf16.msra.mxu0 %v7336
        %10392 = vmatpush.bf16.msra.mxu0 %v7334
        %10393 = vmatpush.bf16.msra.mxu0 %v7332
        %10394 = vmatmul.bf16.gmra.mxu0 %v2397
        %v10395 = vpop.f32.mrf.mxu0
        %v10396 = vadd.f32 %v10382, %v10395
        %v10397 = vpop.f32.mrf.mxu0
        %v10398 = vadd.f32 %v10384, %v10397
        %10399 = vdwg.mxu0
        %10400 = vmatpush.bf16.msra.mxu0 %v7362
        %10401 = vmatpush.bf16.msra.mxu0 %v7360
        %10402 = vmatpush.bf16.msra.mxu0 %v7358
        %10403 = vmatpush.bf16.msra.mxu0 %v7356
        %10404 = vmatpush.bf16.msra.mxu0 %v7354
        %10405 = vmatpush.bf16.msra.mxu0 %v7352
        %10406 = vmatpush.bf16.msra.mxu0 %v7350
        %10407 = vmatpush.bf16.msra.mxu0 %v7348
        %10408 = vmatmul.bf16.gmra.mxu0 %v2398
        %v10409 = vpop.f32.mrf.mxu0
        %v10410 = vadd.f32 %v10396, %v10409
        %v10411 = vpop.f32.mrf.mxu0
        %v10412 = vadd.f32 %v10398, %v10411
        %10413 = vdwg.mxu0
        %10414 = vmatpush.bf16.msra.mxu0 %v7378
        %10415 = vmatpush.bf16.msra.mxu0 %v7376
        %10416 = vmatpush.bf16.msra.mxu0 %v7374
        %10417 = vmatpush.bf16.msra.mxu0 %v7372
        %10418 = vmatpush.bf16.msra.mxu0 %v7370
        %10419 = vmatpush.bf16.msra.mxu0 %v7368
        %10420 = vmatpush.bf16.msra.mxu0 %v7366
        %10421 = vmatpush.bf16.msra.mxu0 %v7364
        %10422 = vmatmul.bf16.gmra.mxu0 %v2399
        %v10423 = vpop.f32.mrf.mxu0
        %v10424 = vadd.f32 %v10410, %v10423
        %v10425 = vpop.f32.mrf.mxu0
        %v10426 = vadd.f32 %v10412, %v10425
        %10427 = vdwg.mxu0
        %10428 = vmatpush.bf16.msra.mxu0 %v7394
        %10429 = vmatpush.bf16.msra.mxu0 %v7392
        %10430 = vmatpush.bf16.msra.mxu0 %v7390
        %10431 = vmatpush.bf16.msra.mxu0 %v7388
        %10432 = vmatpush.bf16.msra.mxu0 %v7386
        %10433 = vmatpush.bf16.msra.mxu0 %v7384
        %10434 = vmatpush.bf16.msra.mxu0 %v7382
        %10435 = vmatpush.bf16.msra.mxu0 %v7380
        %10436 = vmatmul.bf16.gmra.mxu0 %v2400
        %v10437 = vpop.f32.mrf.mxu0
        %v10438 = vadd.f32 %v10424, %v10437
        %v10439 = vpop.f32.mrf.mxu0
        %v10440 = vadd.f32 %v10426, %v10439
        %10441 = vdwg.mxu0
        %10442 = vmatpush.bf16.msra.mxu0 %v7410
        %10443 = vmatpush.bf16.msra.mxu0 %v7408
        %10444 = vmatpush.bf16.msra.mxu0 %v7406
        %10445 = vmatpush.bf16.msra.mxu0 %v7404
        %10446 = vmatpush.bf16.msra.mxu0 %v7402
        %10447 = vmatpush.bf16.msra.mxu0 %v7400
        %10448 = vmatpush.bf16.msra.mxu0 %v7398
        %10449 = vmatpush.bf16.msra.mxu0 %v7396
        %10450 = vmatmul.bf16.gmra.mxu0 %v2401
        %v10451 = vpop.f32.mrf.mxu0
        %v10452 = vadd.f32 %v10438, %v10451
        %v10453 = vpop.f32.mrf.mxu0
        %v10454 = vadd.f32 %v10440, %v10453
        %10455 = vdwg.mxu0
        %10456 = vmatpush.bf16.msra.mxu0 %v7426
        %10457 = vmatpush.bf16.msra.mxu0 %v7424
        %10458 = vmatpush.bf16.msra.mxu0 %v7422
        %10459 = vmatpush.bf16.msra.mxu0 %v7420
        %10460 = vmatpush.bf16.msra.mxu0 %v7418
        %10461 = vmatpush.bf16.msra.mxu0 %v7416
        %10462 = vmatpush.bf16.msra.mxu0 %v7414
        %10463 = vmatpush.bf16.msra.mxu0 %v7412
        %10464 = vmatmul.bf16.gmra.mxu0 %v2402
        %v10465 = vpop.f32.mrf.mxu0
        %v10466 = vadd.f32 %v10452, %v10465
        %v10467 = vpop.f32.mrf.mxu0
        %v10468 = vadd.f32 %v10454, %v10467
        %10469 = vdwg.mxu0
        %10470 = vmatpush.bf16.msra.mxu0 %v7442
        %10471 = vmatpush.bf16.msra.mxu0 %v7440
        %10472 = vmatpush.bf16.msra.mxu0 %v7438
        %10473 = vmatpush.bf16.msra.mxu0 %v7436
        %10474 = vmatpush.bf16.msra.mxu0 %v7434
        %10475 = vmatpush.bf16.msra.mxu0 %v7432
        %10476 = vmatpush.bf16.msra.mxu0 %v7430
        %10477 = vmatpush.bf16.msra.mxu0 %v7428
        %10478 = vmatmul.bf16.gmra.mxu0 %v2403
        %v10479 = vpop.f32.mrf.mxu0
        %v10480 = vadd.f32 %v10466, %v10479
        %v10481 = vpop.f32.mrf.mxu0
        %v10482 = vadd.f32 %v10468, %v10481
        %10483 = vdwg.mxu0
        %10484 = vmatpush.bf16.msra.mxu0 %v7458
        %10485 = vmatpush.bf16.msra.mxu0 %v7456
        %10486 = vmatpush.bf16.msra.mxu0 %v7454
        %10487 = vmatpush.bf16.msra.mxu0 %v7452
        %10488 = vmatpush.bf16.msra.mxu0 %v7450
        %10489 = vmatpush.bf16.msra.mxu0 %v7448
        %10490 = vmatpush.bf16.msra.mxu0 %v7446
        %10491 = vmatpush.bf16.msra.mxu0 %v7444
        %10492 = vmatmul.bf16.gmra.mxu0 %v2404
        %v10493 = vpop.f32.mrf.mxu0
        %v10494 = vadd.f32 %v10480, %v10493
        %v10495 = vpop.f32.mrf.mxu0
        %v10496 = vadd.f32 %v10482, %v10495
        %10497 = vdwg.mxu0
        %10498 = vmatpush.bf16.msra.mxu0 %v7474
        %10499 = vmatpush.bf16.msra.mxu0 %v7472
        %10500 = vmatpush.bf16.msra.mxu0 %v7470
        %10501 = vmatpush.bf16.msra.mxu0 %v7468
        %10502 = vmatpush.bf16.msra.mxu0 %v7466
        %10503 = vmatpush.bf16.msra.mxu0 %v7464
        %10504 = vmatpush.bf16.msra.mxu0 %v7462
        %10505 = vmatpush.bf16.msra.mxu0 %v7460
        %10506 = vmatmul.bf16.gmra.mxu0 %v2405
        %v10507 = vpop.f32.mrf.mxu0
        %v10508 = vadd.f32 %v10494, %v10507
        %v10509 = vpop.f32.mrf.mxu0
        %v10510 = vadd.f32 %v10496, %v10509
        %10511 = vdwg.mxu0
        %10512 = vmatpush.bf16.msra.mxu0 %v7490
        %10513 = vmatpush.bf16.msra.mxu0 %v7488
        %10514 = vmatpush.bf16.msra.mxu0 %v7486
        %10515 = vmatpush.bf16.msra.mxu0 %v7484
        %10516 = vmatpush.bf16.msra.mxu0 %v7482
        %10517 = vmatpush.bf16.msra.mxu0 %v7480
        %10518 = vmatpush.bf16.msra.mxu0 %v7478
        %10519 = vmatpush.bf16.msra.mxu0 %v7476
        %10520 = vmatmul.bf16.gmra.mxu0 %v2406
        %v10521 = vpop.f32.mrf.mxu0
        %v10522 = vadd.f32 %v10508, %v10521
        %v10523 = vpop.f32.mrf.mxu0
        %v10524 = vadd.f32 %v10510, %v10523
        %10525 = vdwg.mxu0
        %10526 = vmatpush.bf16.msra.mxu0 %v7506
        %10527 = vmatpush.bf16.msra.mxu0 %v7504
        %10528 = vmatpush.bf16.msra.mxu0 %v7502
        %10529 = vmatpush.bf16.msra.mxu0 %v7500
        %10530 = vmatpush.bf16.msra.mxu0 %v7498
        %10531 = vmatpush.bf16.msra.mxu0 %v7496
        %10532 = vmatpush.bf16.msra.mxu0 %v7494
        %10533 = vmatpush.bf16.msra.mxu0 %v7492
        %10534 = vmatmul.bf16.gmra.mxu0 %v2407
        %v10535 = vpop.f32.mrf.mxu0
        %v10536 = vadd.f32 %v10522, %v10535
        %v10537 = vpop.f32.mrf.mxu0
        %v10538 = vadd.f32 %v10524, %v10537
        %10539 = vdwg.mxu0
        %10540 = vmatpush.bf16.msra.mxu0 %v7522
        %10541 = vmatpush.bf16.msra.mxu0 %v7520
        %10542 = vmatpush.bf16.msra.mxu0 %v7518
        %10543 = vmatpush.bf16.msra.mxu0 %v7516
        %10544 = vmatpush.bf16.msra.mxu0 %v7514
        %10545 = vmatpush.bf16.msra.mxu0 %v7512
        %10546 = vmatpush.bf16.msra.mxu0 %v7510
        %10547 = vmatpush.bf16.msra.mxu0 %v7508
        %10548 = vmatmul.bf16.gmra.mxu0 %v2408
        %v10549 = vpop.f32.mrf.mxu0
        %v10550 = vadd.f32 %v10536, %v10549
        %v10551 = vpop.f32.mrf.mxu0
        %v10552 = vadd.f32 %v10538, %v10551
        %10553 = vdwg.mxu0
        %10554 = vmatpush.bf16.msra.mxu0 %v7538
        %10555 = vmatpush.bf16.msra.mxu0 %v7536
        %10556 = vmatpush.bf16.msra.mxu0 %v7534
        %10557 = vmatpush.bf16.msra.mxu0 %v7532
        %10558 = vmatpush.bf16.msra.mxu0 %v7530
        %10559 = vmatpush.bf16.msra.mxu0 %v7528
        %10560 = vmatpush.bf16.msra.mxu0 %v7526
        %10561 = vmatpush.bf16.msra.mxu0 %v7524
        %10562 = vmatmul.bf16.gmra.mxu0 %v2409
        %v10563 = vpop.f32.mrf.mxu0
        %v10564 = vadd.f32 %v10550, %v10563
        %v10565 = vpop.f32.mrf.mxu0
        %v10566 = vadd.f32 %v10552, %v10565
        %10567 = vdwg.mxu0
        %10568 = vmatpush.bf16.msra.mxu0 %v7554
        %10569 = vmatpush.bf16.msra.mxu0 %v7552
        %10570 = vmatpush.bf16.msra.mxu0 %v7550
        %10571 = vmatpush.bf16.msra.mxu0 %v7548
        %10572 = vmatpush.bf16.msra.mxu0 %v7546
        %10573 = vmatpush.bf16.msra.mxu0 %v7544
        %10574 = vmatpush.bf16.msra.mxu0 %v7542
        %10575 = vmatpush.bf16.msra.mxu0 %v7540
        %10576 = vmatmul.bf16.gmra.mxu0 %v2410
        %v10577 = vpop.f32.mrf.mxu0
        %v10578 = vadd.f32 %v10564, %v10577
        %v10579 = vpop.f32.mrf.mxu0
        %v10580 = vadd.f32 %v10566, %v10579
        %10581 = vdwg.mxu0
        %10582 = vmatpush.bf16.msra.mxu0 %v7570
        %10583 = vmatpush.bf16.msra.mxu0 %v7568
        %10584 = vmatpush.bf16.msra.mxu0 %v7566
        %10585 = vmatpush.bf16.msra.mxu0 %v7564
        %10586 = vmatpush.bf16.msra.mxu0 %v7562
        %10587 = vmatpush.bf16.msra.mxu0 %v7560
        %10588 = vmatpush.bf16.msra.mxu0 %v7558
        %10589 = vmatpush.bf16.msra.mxu0 %v7556
        %10590 = vmatmul.bf16.gmra.mxu0 %v2411
        %v10591 = vpop.f32.mrf.mxu0
        %v10592 = vadd.f32 %v10578, %v10591
        %v10593 = vpop.f32.mrf.mxu0
        %v10594 = vadd.f32 %v10580, %v10593
        %10595 = vdwg.mxu0
        %10596 = vmatpush.bf16.msra.mxu0 %v7586
        %10597 = vmatpush.bf16.msra.mxu0 %v7584
        %10598 = vmatpush.bf16.msra.mxu0 %v7582
        %10599 = vmatpush.bf16.msra.mxu0 %v7580
        %10600 = vmatpush.bf16.msra.mxu0 %v7578
        %10601 = vmatpush.bf16.msra.mxu0 %v7576
        %10602 = vmatpush.bf16.msra.mxu0 %v7574
        %10603 = vmatpush.bf16.msra.mxu0 %v7572
        %10604 = vmatmul.bf16.gmra.mxu0 %v2412
        %v10605 = vpop.f32.mrf.mxu0
        %v10606 = vadd.f32 %v10592, %v10605
        %v10607 = vpop.f32.mrf.mxu0
        %v10608 = vadd.f32 %v10594, %v10607
        %10609 = vdwg.mxu0
        %10610 = vmatpush.bf16.msra.mxu0 %v7602
        %10611 = vmatpush.bf16.msra.mxu0 %v7600
        %10612 = vmatpush.bf16.msra.mxu0 %v7598
        %10613 = vmatpush.bf16.msra.mxu0 %v7596
        %10614 = vmatpush.bf16.msra.mxu0 %v7594
        %10615 = vmatpush.bf16.msra.mxu0 %v7592
        %10616 = vmatpush.bf16.msra.mxu0 %v7590
        %10617 = vmatpush.bf16.msra.mxu0 %v7588
        %10618 = vmatmul.bf16.gmra.mxu0 %v2413
        %v10619 = vpop.f32.mrf.mxu0
        %v10620 = vadd.f32 %v10606, %v10619
        %v10621 = vpop.f32.mrf.mxu0
        %v10622 = vadd.f32 %v10608, %v10621
        %10623 = vdwg.mxu0
        %10624 = vmatpush.bf16.msra.mxu0 %v7618
        %10625 = vmatpush.bf16.msra.mxu0 %v7616
        %10626 = vmatpush.bf16.msra.mxu0 %v7614
        %10627 = vmatpush.bf16.msra.mxu0 %v7612
        %10628 = vmatpush.bf16.msra.mxu0 %v7610
        %10629 = vmatpush.bf16.msra.mxu0 %v7608
        %10630 = vmatpush.bf16.msra.mxu0 %v7606
        %10631 = vmatpush.bf16.msra.mxu0 %v7604
        %10632 = vmatmul.bf16.gmra.mxu0 %v2414
        %v10633 = vpop.f32.mrf.mxu0
        %v10634 = vadd.f32 %v10620, %v10633
        %v10635 = vpop.f32.mrf.mxu0
        %v10636 = vadd.f32 %v10622, %v10635
        %10637 = vdwg.mxu0
        %10638 = vmatpush.bf16.msra.mxu0 %v7634
        %10639 = vmatpush.bf16.msra.mxu0 %v7632
        %10640 = vmatpush.bf16.msra.mxu0 %v7630
        %10641 = vmatpush.bf16.msra.mxu0 %v7628
        %10642 = vmatpush.bf16.msra.mxu0 %v7626
        %10643 = vmatpush.bf16.msra.mxu0 %v7624
        %10644 = vmatpush.bf16.msra.mxu0 %v7622
        %10645 = vmatpush.bf16.msra.mxu0 %v7620
        %10646 = vmatmul.bf16.gmra.mxu0 %v2415
        %v10647 = vpop.f32.mrf.mxu0
        %v10648 = vadd.f32 %v10634, %v10647
        %v10649 = vpop.f32.mrf.mxu0
        %v10650 = vadd.f32 %v10636, %v10649
        %10651 = vdwg.mxu0
        %10652 = vmatpush.bf16.msra.mxu0 %v7650
        %10653 = vmatpush.bf16.msra.mxu0 %v7648
        %10654 = vmatpush.bf16.msra.mxu0 %v7646
        %10655 = vmatpush.bf16.msra.mxu0 %v7644
        %10656 = vmatpush.bf16.msra.mxu0 %v7642
        %10657 = vmatpush.bf16.msra.mxu0 %v7640
        %10658 = vmatpush.bf16.msra.mxu0 %v7638
        %10659 = vmatpush.bf16.msra.mxu0 %v7636
        %10660 = vmatmul.bf16.gmra.mxu0 %v2416
        %v10661 = vpop.f32.mrf.mxu0
        %v10662 = vadd.f32 %v10648, %v10661
        %v10663 = vpop.f32.mrf.mxu0
        %v10664 = vadd.f32 %v10650, %v10663
        %10665 = vdwg.mxu0
        %10666 = vmatpush.bf16.msra.mxu0 %v7666
        %10667 = vmatpush.bf16.msra.mxu0 %v7664
        %10668 = vmatpush.bf16.msra.mxu0 %v7662
        %10669 = vmatpush.bf16.msra.mxu0 %v7660
        %10670 = vmatpush.bf16.msra.mxu0 %v7658
        %10671 = vmatpush.bf16.msra.mxu0 %v7656
        %10672 = vmatpush.bf16.msra.mxu0 %v7654
        %10673 = vmatpush.bf16.msra.mxu0 %v7652
        %10674 = vmatmul.bf16.gmra.mxu0 %v2417
        %v10675 = vpop.f32.mrf.mxu0
        %v10676 = vadd.f32 %v10662, %v10675
        %v10677 = vpop.f32.mrf.mxu0
        %v10678 = vadd.f32 %v10664, %v10677
        %10679 = vdwg.mxu0
        %10680 = vmatpush.bf16.msra.mxu0 %v7682
        %10681 = vmatpush.bf16.msra.mxu0 %v7680
        %10682 = vmatpush.bf16.msra.mxu0 %v7678
        %10683 = vmatpush.bf16.msra.mxu0 %v7676
        %10684 = vmatpush.bf16.msra.mxu0 %v7674
        %10685 = vmatpush.bf16.msra.mxu0 %v7672
        %10686 = vmatpush.bf16.msra.mxu0 %v7670
        %10687 = vmatpush.bf16.msra.mxu0 %v7668
        %10688 = vmatmul.bf16.gmra.mxu0 %v2418
        %v10689 = vpop.f32.mrf.mxu0
        %v10690 = vadd.f32 %v10676, %v10689
        %v10691 = vpop.f32.mrf.mxu0
        %v10692 = vadd.f32 %v10678, %v10691
        %10693 = vdwg.mxu0
        %10694 = vmatpush.bf16.msra.mxu0 %v7698
        %10695 = vmatpush.bf16.msra.mxu0 %v7696
        %10696 = vmatpush.bf16.msra.mxu0 %v7694
        %10697 = vmatpush.bf16.msra.mxu0 %v7692
        %10698 = vmatpush.bf16.msra.mxu0 %v7690
        %10699 = vmatpush.bf16.msra.mxu0 %v7688
        %10700 = vmatpush.bf16.msra.mxu0 %v7686
        %10701 = vmatpush.bf16.msra.mxu0 %v7684
        %10702 = vmatmul.bf16.gmra.mxu0 %v2419
        %v10703 = vpop.f32.mrf.mxu0
        %v10704 = vadd.f32 %v10690, %v10703
        %v10705 = vpop.f32.mrf.mxu0
        %v10706 = vadd.f32 %v10692, %v10705
        %10707 = vdwg.mxu0
        %10708 = vmatpush.bf16.msra.mxu0 %v7714
        %10709 = vmatpush.bf16.msra.mxu0 %v7712
        %10710 = vmatpush.bf16.msra.mxu0 %v7710
        %10711 = vmatpush.bf16.msra.mxu0 %v7708
        %10712 = vmatpush.bf16.msra.mxu0 %v7706
        %10713 = vmatpush.bf16.msra.mxu0 %v7704
        %10714 = vmatpush.bf16.msra.mxu0 %v7702
        %10715 = vmatpush.bf16.msra.mxu0 %v7700
        %10716 = vmatmul.bf16.gmra.mxu0 %v2420
        %v10717 = vpop.f32.mrf.mxu0
        %v10718 = vadd.f32 %v10704, %v10717
        %v10719 = vpop.f32.mrf.mxu0
        %v10720 = vadd.f32 %v10706, %v10719
        %10721 = vdwg.mxu0
        %10722 = vmatpush.bf16.msra.mxu0 %v7730
        %10723 = vmatpush.bf16.msra.mxu0 %v7728
        %10724 = vmatpush.bf16.msra.mxu0 %v7726
        %10725 = vmatpush.bf16.msra.mxu0 %v7724
        %10726 = vmatpush.bf16.msra.mxu0 %v7722
        %10727 = vmatpush.bf16.msra.mxu0 %v7720
        %10728 = vmatpush.bf16.msra.mxu0 %v7718
        %10729 = vmatpush.bf16.msra.mxu0 %v7716
        %10730 = vmatmul.bf16.gmra.mxu0 %v2421
        %v10731 = vpop.f32.mrf.mxu0
        %v10732 = vadd.f32 %v10718, %v10731
        %v10733 = vpop.f32.mrf.mxu0
        %v10734 = vadd.f32 %v10720, %v10733
        %10735 = vdwg.mxu0
        %10736 = vmatpush.bf16.msra.mxu0 %v7746
        %10737 = vmatpush.bf16.msra.mxu0 %v7744
        %10738 = vmatpush.bf16.msra.mxu0 %v7742
        %10739 = vmatpush.bf16.msra.mxu0 %v7740
        %10740 = vmatpush.bf16.msra.mxu0 %v7738
        %10741 = vmatpush.bf16.msra.mxu0 %v7736
        %10742 = vmatpush.bf16.msra.mxu0 %v7734
        %10743 = vmatpush.bf16.msra.mxu0 %v7732
        %10744 = vmatmul.bf16.gmra.mxu0 %v2422
        %v10745 = vpop.f32.mrf.mxu0
        %v10746 = vadd.f32 %v10732, %v10745
        %v10747 = vpop.f32.mrf.mxu0
        %v10748 = vadd.f32 %v10734, %v10747
        %10749 = vdwg.mxu0
        %10750 = vmatpush.bf16.msra.mxu0 %v7762
        %10751 = vmatpush.bf16.msra.mxu0 %v7760
        %10752 = vmatpush.bf16.msra.mxu0 %v7758
        %10753 = vmatpush.bf16.msra.mxu0 %v7756
        %10754 = vmatpush.bf16.msra.mxu0 %v7754
        %10755 = vmatpush.bf16.msra.mxu0 %v7752
        %10756 = vmatpush.bf16.msra.mxu0 %v7750
        %10757 = vmatpush.bf16.msra.mxu0 %v7748
        %10758 = vmatmul.bf16.gmra.mxu0 %v2423
        %v10759 = vpop.f32.mrf.mxu0
        %v10760 = vadd.f32 %v10746, %v10759
        %v10761 = vpop.f32.mrf.mxu0
        %v10762 = vadd.f32 %v10748, %v10761
        %10763 = vdwg.mxu0
        %10764 = vmatpush.bf16.msra.mxu0 %v7778
        %10765 = vmatpush.bf16.msra.mxu0 %v7776
        %10766 = vmatpush.bf16.msra.mxu0 %v7774
        %10767 = vmatpush.bf16.msra.mxu0 %v7772
        %10768 = vmatpush.bf16.msra.mxu0 %v7770
        %10769 = vmatpush.bf16.msra.mxu0 %v7768
        %10770 = vmatpush.bf16.msra.mxu0 %v7766
        %10771 = vmatpush.bf16.msra.mxu0 %v7764
        %10772 = vmatmul.bf16.gmra.mxu0 %v2424
        %v10773 = vpop.f32.mrf.mxu0
        %v10774 = vadd.f32 %v10760, %v10773
        %v10775 = vpop.f32.mrf.mxu0
        %v10776 = vadd.f32 %v10762, %v10775
        %10777 = vdwg.mxu0
        %10778 = vmatpush.bf16.msra.mxu0 %v7794
        %10779 = vmatpush.bf16.msra.mxu0 %v7792
        %10780 = vmatpush.bf16.msra.mxu0 %v7790
        %10781 = vmatpush.bf16.msra.mxu0 %v7788
        %10782 = vmatpush.bf16.msra.mxu0 %v7786
        %10783 = vmatpush.bf16.msra.mxu0 %v7784
        %10784 = vmatpush.bf16.msra.mxu0 %v7782
        %10785 = vmatpush.bf16.msra.mxu0 %v7780
        %10786 = vmatmul.bf16.gmra.mxu0 %v2425
        %v10787 = vpop.f32.mrf.mxu0
        %v10788 = vadd.f32 %v10774, %v10787
        %v10789 = vpop.f32.mrf.mxu0
        %v10790 = vadd.f32 %v10776, %v10789
        %10791 = vdwg.mxu0
        %10792 = vmatpush.bf16.msra.mxu0 %v7810
        %10793 = vmatpush.bf16.msra.mxu0 %v7808
        %10794 = vmatpush.bf16.msra.mxu0 %v7806
        %10795 = vmatpush.bf16.msra.mxu0 %v7804
        %10796 = vmatpush.bf16.msra.mxu0 %v7802
        %10797 = vmatpush.bf16.msra.mxu0 %v7800
        %10798 = vmatpush.bf16.msra.mxu0 %v7798
        %10799 = vmatpush.bf16.msra.mxu0 %v7796
        %10800 = vmatmul.bf16.gmra.mxu0 %v2426
        %v10801 = vpop.f32.mrf.mxu0
        %v10802 = vadd.f32 %v10788, %v10801
        %v10803 = vpop.f32.mrf.mxu0
        %v10804 = vadd.f32 %v10790, %v10803
        %10805 = vdwg.mxu0
        %10806 = vmatpush.bf16.msra.mxu0 %v7826
        %10807 = vmatpush.bf16.msra.mxu0 %v7824
        %10808 = vmatpush.bf16.msra.mxu0 %v7822
        %10809 = vmatpush.bf16.msra.mxu0 %v7820
        %10810 = vmatpush.bf16.msra.mxu0 %v7818
        %10811 = vmatpush.bf16.msra.mxu0 %v7816
        %10812 = vmatpush.bf16.msra.mxu0 %v7814
        %10813 = vmatpush.bf16.msra.mxu0 %v7812
        %10814 = vmatmul.bf16.gmra.mxu0 %v2427
        %v10815 = vpop.f32.mrf.mxu0
        %v10816 = vadd.f32 %v10802, %v10815
        %v10817 = vpop.f32.mrf.mxu0
        %v10818 = vadd.f32 %v10804, %v10817
        %10819 = vdwg.mxu0
        %10820 = vmatpush.bf16.msra.mxu0 %v7842
        %10821 = vmatpush.bf16.msra.mxu0 %v7840
        %10822 = vmatpush.bf16.msra.mxu0 %v7838
        %10823 = vmatpush.bf16.msra.mxu0 %v7836
        %10824 = vmatpush.bf16.msra.mxu0 %v7834
        %10825 = vmatpush.bf16.msra.mxu0 %v7832
        %10826 = vmatpush.bf16.msra.mxu0 %v7830
        %10827 = vmatpush.bf16.msra.mxu0 %v7828
        %10828 = vmatmul.bf16.gmra.mxu0 %v2428
        %v10829 = vpop.f32.mrf.mxu0
        %v10830 = vadd.f32 %v10816, %v10829
        %v10831 = vpop.f32.mrf.mxu0
        %v10832 = vadd.f32 %v10818, %v10831
        %10833 = vdwg.mxu0
        %10834 = vmatpush.bf16.msra.mxu0 %v7858
        %10835 = vmatpush.bf16.msra.mxu0 %v7856
        %10836 = vmatpush.bf16.msra.mxu0 %v7854
        %10837 = vmatpush.bf16.msra.mxu0 %v7852
        %10838 = vmatpush.bf16.msra.mxu0 %v7850
        %10839 = vmatpush.bf16.msra.mxu0 %v7848
        %10840 = vmatpush.bf16.msra.mxu0 %v7846
        %10841 = vmatpush.bf16.msra.mxu0 %v7844
        %10842 = vmatmul.bf16.gmra.mxu0 %v2429
        %v10843 = vpop.f32.mrf.mxu0
        %v10844 = vadd.f32 %v10830, %v10843
        %v10845 = vpop.f32.mrf.mxu0
        %v10846 = vadd.f32 %v10832, %v10845
        %10847 = vdwg.mxu0
        %10848 = vmatpush.bf16.msra.mxu0 %v7874
        %10849 = vmatpush.bf16.msra.mxu0 %v7872
        %10850 = vmatpush.bf16.msra.mxu0 %v7870
        %10851 = vmatpush.bf16.msra.mxu0 %v7868
        %10852 = vmatpush.bf16.msra.mxu0 %v7866
        %10853 = vmatpush.bf16.msra.mxu0 %v7864
        %10854 = vmatpush.bf16.msra.mxu0 %v7862
        %10855 = vmatpush.bf16.msra.mxu0 %v7860
        %10856 = vmatmul.bf16.gmra.mxu0 %v2430
        %v10857 = vpop.f32.mrf.mxu0
        %v10858 = vadd.f32 %v10844, %v10857
        %v10859 = vpop.f32.mrf.mxu0
        %v10860 = vadd.f32 %v10846, %v10859
        %10861 = vdwg.mxu0
        %10862 = vmatpush.bf16.msra.mxu0 %v7890
        %10863 = vmatpush.bf16.msra.mxu0 %v7888
        %10864 = vmatpush.bf16.msra.mxu0 %v7886
        %10865 = vmatpush.bf16.msra.mxu0 %v7884
        %10866 = vmatpush.bf16.msra.mxu0 %v7882
        %10867 = vmatpush.bf16.msra.mxu0 %v7880
        %10868 = vmatpush.bf16.msra.mxu0 %v7878
        %10869 = vmatpush.bf16.msra.mxu0 %v7876
        %10870 = vmatmul.bf16.gmra.mxu0 %v2431
        %v10871 = vpop.f32.mrf.mxu0
        %v10872 = vadd.f32 %v10858, %v10871
        %v10873 = vpop.f32.mrf.mxu0
        %v10874 = vadd.f32 %v10860, %v10873
        %10875 = vdwg.mxu0
        %10876 = vmatpush.bf16.msra.mxu0 %v7906
        %10877 = vmatpush.bf16.msra.mxu0 %v7904
        %10878 = vmatpush.bf16.msra.mxu0 %v7902
        %10879 = vmatpush.bf16.msra.mxu0 %v7900
        %10880 = vmatpush.bf16.msra.mxu0 %v7898
        %10881 = vmatpush.bf16.msra.mxu0 %v7896
        %10882 = vmatpush.bf16.msra.mxu0 %v7894
        %10883 = vmatpush.bf16.msra.mxu0 %v7892
        %10884 = vmatmul.bf16.gmra.mxu0 %v2432
        %v10885 = vpop.f32.mrf.mxu0
        %v10886 = vadd.f32 %v10872, %v10885
        %v10887 = vpop.f32.mrf.mxu0
        %v10888 = vadd.f32 %v10874, %v10887
        %10889 = vdwg.mxu0
        %10890 = vmatpush.bf16.msra.mxu0 %v7922
        %10891 = vmatpush.bf16.msra.mxu0 %v7920
        %10892 = vmatpush.bf16.msra.mxu0 %v7918
        %10893 = vmatpush.bf16.msra.mxu0 %v7916
        %10894 = vmatpush.bf16.msra.mxu0 %v7914
        %10895 = vmatpush.bf16.msra.mxu0 %v7912
        %10896 = vmatpush.bf16.msra.mxu0 %v7910
        %10897 = vmatpush.bf16.msra.mxu0 %v7908
        %10898 = vmatmul.bf16.gmra.mxu0 %v2433
        %v10899 = vpop.f32.mrf.mxu0
        %v10900 = vadd.f32 %v10886, %v10899
        %v10901 = vpop.f32.mrf.mxu0
        %v10902 = vadd.f32 %v10888, %v10901
        %10903 = vdwg.mxu0
        %10904 = vmatpush.bf16.msra.mxu0 %v7938
        %10905 = vmatpush.bf16.msra.mxu0 %v7936
        %10906 = vmatpush.bf16.msra.mxu0 %v7934
        %10907 = vmatpush.bf16.msra.mxu0 %v7932
        %10908 = vmatpush.bf16.msra.mxu0 %v7930
        %10909 = vmatpush.bf16.msra.mxu0 %v7928
        %10910 = vmatpush.bf16.msra.mxu0 %v7926
        %10911 = vmatpush.bf16.msra.mxu0 %v7924
        %10912 = vmatmul.bf16.gmra.mxu0 %v2434
        %v10913 = vpop.f32.mrf.mxu0
        %v10914 = vadd.f32 %v10900, %v10913
        %v10915 = vpop.f32.mrf.mxu0
        %v10916 = vadd.f32 %v10902, %v10915
        %10917 = vdwg.mxu0
        %10918 = vmatpush.bf16.msra.mxu0 %v7954
        %10919 = vmatpush.bf16.msra.mxu0 %v7952
        %10920 = vmatpush.bf16.msra.mxu0 %v7950
        %10921 = vmatpush.bf16.msra.mxu0 %v7948
        %10922 = vmatpush.bf16.msra.mxu0 %v7946
        %10923 = vmatpush.bf16.msra.mxu0 %v7944
        %10924 = vmatpush.bf16.msra.mxu0 %v7942
        %10925 = vmatpush.bf16.msra.mxu0 %v7940
        %10926 = vmatmul.bf16.gmra.mxu0 %v2435
        %v10927 = vpop.f32.mrf.mxu0
        %v10928 = vadd.f32 %v10914, %v10927
        %v10929 = vpop.f32.mrf.mxu0
        %v10930 = vadd.f32 %v10916, %v10929
        %10931 = vdwg.mxu0
        %10932 = vmatpush.bf16.msra.mxu0 %v7970
        %10933 = vmatpush.bf16.msra.mxu0 %v7968
        %10934 = vmatpush.bf16.msra.mxu0 %v7966
        %10935 = vmatpush.bf16.msra.mxu0 %v7964
        %10936 = vmatpush.bf16.msra.mxu0 %v7962
        %10937 = vmatpush.bf16.msra.mxu0 %v7960
        %10938 = vmatpush.bf16.msra.mxu0 %v7958
        %10939 = vmatpush.bf16.msra.mxu0 %v7956
        %10940 = vmatmul.bf16.gmra.mxu0 %v2436
        %v10941 = vpop.f32.mrf.mxu0
        %v10942 = vadd.f32 %v10928, %v10941
        %v10943 = vpop.f32.mrf.mxu0
        %v10944 = vadd.f32 %v10930, %v10943
        %10945 = vdwg.mxu0
        %10946 = vmatpush.bf16.msra.mxu0 %v7986
        %10947 = vmatpush.bf16.msra.mxu0 %v7984
        %10948 = vmatpush.bf16.msra.mxu0 %v7982
        %10949 = vmatpush.bf16.msra.mxu0 %v7980
        %10950 = vmatpush.bf16.msra.mxu0 %v7978
        %10951 = vmatpush.bf16.msra.mxu0 %v7976
        %10952 = vmatpush.bf16.msra.mxu0 %v7974
        %10953 = vmatpush.bf16.msra.mxu0 %v7972
        %10954 = vmatmul.bf16.gmra.mxu0 %v2437
        %v10955 = vpop.f32.mrf.mxu0
        %v10956 = vadd.f32 %v10942, %v10955
        %v10957 = vpop.f32.mrf.mxu0
        %v10958 = vadd.f32 %v10944, %v10957
        %10959 = vdwg.mxu0
        %10960 = vmatpush.bf16.msra.mxu0 %v8002
        %10961 = vmatpush.bf16.msra.mxu0 %v8000
        %10962 = vmatpush.bf16.msra.mxu0 %v7998
        %10963 = vmatpush.bf16.msra.mxu0 %v7996
        %10964 = vmatpush.bf16.msra.mxu0 %v7994
        %10965 = vmatpush.bf16.msra.mxu0 %v7992
        %10966 = vmatpush.bf16.msra.mxu0 %v7990
        %10967 = vmatpush.bf16.msra.mxu0 %v7988
        %10968 = vmatmul.bf16.gmra.mxu0 %v2438
        %v10969 = vpop.f32.mrf.mxu0
        %v10970 = vadd.f32 %v10956, %v10969
        %v10971 = vpop.f32.mrf.mxu0
        %v10972 = vadd.f32 %v10958, %v10971
        %10973 = vdwg.mxu0
        %10974 = vmatpush.bf16.msra.mxu0 %v8018
        %10975 = vmatpush.bf16.msra.mxu0 %v8016
        %10976 = vmatpush.bf16.msra.mxu0 %v8014
        %10977 = vmatpush.bf16.msra.mxu0 %v8012
        %10978 = vmatpush.bf16.msra.mxu0 %v8010
        %10979 = vmatpush.bf16.msra.mxu0 %v8008
        %10980 = vmatpush.bf16.msra.mxu0 %v8006
        %10981 = vmatpush.bf16.msra.mxu0 %v8004
        %10982 = vmatmul.bf16.gmra.mxu0 %v2439
        %v10983 = vpop.f32.mrf.mxu0
        %v10984 = vadd.f32 %v10970, %v10983
        %v10985 = vpop.f32.mrf.mxu0
        %v10986 = vadd.f32 %v10972, %v10985
        %10987 = vdwg.mxu0
        %10988 = vmatpush.bf16.msra.mxu0 %v8034
        %10989 = vmatpush.bf16.msra.mxu0 %v8032
        %10990 = vmatpush.bf16.msra.mxu0 %v8030
        %10991 = vmatpush.bf16.msra.mxu0 %v8028
        %10992 = vmatpush.bf16.msra.mxu0 %v8026
        %10993 = vmatpush.bf16.msra.mxu0 %v8024
        %10994 = vmatpush.bf16.msra.mxu0 %v8022
        %10995 = vmatpush.bf16.msra.mxu0 %v8020
        %10996 = vmatmul.bf16.gmra.mxu0 %v2440
        %v10997 = vpop.f32.mrf.mxu0
        %v10998 = vadd.f32 %v10984, %v10997
        %v10999 = vpop.f32.mrf.mxu0
        %v11000 = vadd.f32 %v10986, %v10999
        %11001 = vdwg.mxu0
        %11002 = vmatpush.bf16.msra.mxu0 %v8050
        %11003 = vmatpush.bf16.msra.mxu0 %v8048
        %11004 = vmatpush.bf16.msra.mxu0 %v8046
        %11005 = vmatpush.bf16.msra.mxu0 %v8044
        %11006 = vmatpush.bf16.msra.mxu0 %v8042
        %11007 = vmatpush.bf16.msra.mxu0 %v8040
        %11008 = vmatpush.bf16.msra.mxu0 %v8038
        %11009 = vmatpush.bf16.msra.mxu0 %v8036
        %11010 = vmatmul.bf16.gmra.mxu0 %v2441
        %v11011 = vpop.f32.mrf.mxu0
        %v11012 = vadd.f32 %v10998, %v11011
        %v11013 = vpop.f32.mrf.mxu0
        %v11014 = vadd.f32 %v11000, %v11013
        %11015 = vdwg.mxu0
        %11016 = vmatpush.bf16.msra.mxu0 %v8066
        %11017 = vmatpush.bf16.msra.mxu0 %v8064
        %11018 = vmatpush.bf16.msra.mxu0 %v8062
        %11019 = vmatpush.bf16.msra.mxu0 %v8060
        %11020 = vmatpush.bf16.msra.mxu0 %v8058
        %11021 = vmatpush.bf16.msra.mxu0 %v8056
        %11022 = vmatpush.bf16.msra.mxu0 %v8054
        %11023 = vmatpush.bf16.msra.mxu0 %v8052
        %11024 = vmatmul.bf16.gmra.mxu0 %v2442
        %v11025 = vpop.f32.mrf.mxu0
        %v11026 = vadd.f32 %v11012, %v11025
        %v11027 = vpop.f32.mrf.mxu0
        %v11028 = vadd.f32 %v11014, %v11027
        %11029 = vdwg.mxu0
        %11030 = vmatpush.bf16.msra.mxu0 %v8082
        %11031 = vmatpush.bf16.msra.mxu0 %v8080
        %11032 = vmatpush.bf16.msra.mxu0 %v8078
        %11033 = vmatpush.bf16.msra.mxu0 %v8076
        %11034 = vmatpush.bf16.msra.mxu0 %v8074
        %11035 = vmatpush.bf16.msra.mxu0 %v8072
        %11036 = vmatpush.bf16.msra.mxu0 %v8070
        %11037 = vmatpush.bf16.msra.mxu0 %v8068
        %11038 = vmatmul.bf16.gmra.mxu0 %v2443
        %v11039 = vpop.f32.mrf.mxu0
        %v11040 = vadd.f32 %v11026, %v11039
        %v11041 = vpop.f32.mrf.mxu0
        %v11042 = vadd.f32 %v11028, %v11041
        %11043 = vdwg.mxu0
        %11044 = vmatpush.bf16.msra.mxu0 %v8098
        %11045 = vmatpush.bf16.msra.mxu0 %v8096
        %11046 = vmatpush.bf16.msra.mxu0 %v8094
        %11047 = vmatpush.bf16.msra.mxu0 %v8092
        %11048 = vmatpush.bf16.msra.mxu0 %v8090
        %11049 = vmatpush.bf16.msra.mxu0 %v8088
        %11050 = vmatpush.bf16.msra.mxu0 %v8086
        %11051 = vmatpush.bf16.msra.mxu0 %v8084
        %11052 = vmatmul.bf16.gmra.mxu0 %v2444
        %v11053 = vpop.f32.mrf.mxu0
        %v11054 = vadd.f32 %v11040, %v11053
        %v11055 = vpop.f32.mrf.mxu0
        %v11056 = vadd.f32 %v11042, %v11055
        %11057 = vdwg.mxu0
        %11058 = vmatpush.bf16.msra.mxu0 %v8114
        %11059 = vmatpush.bf16.msra.mxu0 %v8112
        %11060 = vmatpush.bf16.msra.mxu0 %v8110
        %11061 = vmatpush.bf16.msra.mxu0 %v8108
        %11062 = vmatpush.bf16.msra.mxu0 %v8106
        %11063 = vmatpush.bf16.msra.mxu0 %v8104
        %11064 = vmatpush.bf16.msra.mxu0 %v8102
        %11065 = vmatpush.bf16.msra.mxu0 %v8100
        %11066 = vmatmul.bf16.gmra.mxu0 %v2445
        %v11067 = vpop.f32.mrf.mxu0
        %v11068 = vadd.f32 %v11054, %v11067
        %v11069 = vpop.f32.mrf.mxu0
        %v11070 = vadd.f32 %v11056, %v11069
        %11071 = vdwg.mxu0
        %11072 = vmatpush.bf16.msra.mxu0 %v8130
        %11073 = vmatpush.bf16.msra.mxu0 %v8128
        %11074 = vmatpush.bf16.msra.mxu0 %v8126
        %11075 = vmatpush.bf16.msra.mxu0 %v8124
        %11076 = vmatpush.bf16.msra.mxu0 %v8122
        %11077 = vmatpush.bf16.msra.mxu0 %v8120
        %11078 = vmatpush.bf16.msra.mxu0 %v8118
        %11079 = vmatpush.bf16.msra.mxu0 %v8116
        %11080 = vmatmul.bf16.gmra.mxu0 %v2446
        %v11081 = vpop.f32.mrf.mxu0
        %v11082 = vadd.f32 %v11068, %v11081
        %v11083 = vpop.f32.mrf.mxu0
        %v11084 = vadd.f32 %v11070, %v11083
        %11085 = vdwg.mxu0
        %11086 = vmatpush.bf16.msra.mxu0 %v8146
        %11087 = vmatpush.bf16.msra.mxu0 %v8144
        %11088 = vmatpush.bf16.msra.mxu0 %v8142
        %11089 = vmatpush.bf16.msra.mxu0 %v8140
        %11090 = vmatpush.bf16.msra.mxu0 %v8138
        %11091 = vmatpush.bf16.msra.mxu0 %v8136
        %11092 = vmatpush.bf16.msra.mxu0 %v8134
        %11093 = vmatpush.bf16.msra.mxu0 %v8132
        %11094 = vmatmul.bf16.gmra.mxu0 %v2447
        %v11095 = vpop.f32.mrf.mxu0
        %v11096 = vadd.f32 %v11082, %v11095
        %v11097 = vpop.f32.mrf.mxu0
        %v11098 = vadd.f32 %v11084, %v11097
        %11099 = vdwg.mxu0
        %11100 = vmatpush.bf16.msra.mxu0 %v8162
        %11101 = vmatpush.bf16.msra.mxu0 %v8160
        %11102 = vmatpush.bf16.msra.mxu0 %v8158
        %11103 = vmatpush.bf16.msra.mxu0 %v8156
        %11104 = vmatpush.bf16.msra.mxu0 %v8154
        %11105 = vmatpush.bf16.msra.mxu0 %v8152
        %11106 = vmatpush.bf16.msra.mxu0 %v8150
        %11107 = vmatpush.bf16.msra.mxu0 %v8148
        %11108 = vmatmul.bf16.gmra.mxu0 %v2448
        %v11109 = vpop.f32.mrf.mxu0
        %v11110 = vadd.f32 %v11096, %v11109
        %v11111 = vpop.f32.mrf.mxu0
        %v11112 = vadd.f32 %v11098, %v11111
        %11113 = vdwg.mxu0
        %11114 = vmatpush.bf16.msra.mxu0 %v8178
        %11115 = vmatpush.bf16.msra.mxu0 %v8176
        %11116 = vmatpush.bf16.msra.mxu0 %v8174
        %11117 = vmatpush.bf16.msra.mxu0 %v8172
        %11118 = vmatpush.bf16.msra.mxu0 %v8170
        %11119 = vmatpush.bf16.msra.mxu0 %v8168
        %11120 = vmatpush.bf16.msra.mxu0 %v8166
        %11121 = vmatpush.bf16.msra.mxu0 %v8164
        %11122 = vmatmul.bf16.gmra.mxu0 %v2449
        %v11123 = vpop.f32.mrf.mxu0
        %v11124 = vadd.f32 %v11110, %v11123
        %v11125 = vpop.f32.mrf.mxu0
        %v11126 = vadd.f32 %v11112, %v11125
        %11127 = vdwg.mxu0
        %11128 = vmatpush.bf16.msra.mxu0 %v8194
        %11129 = vmatpush.bf16.msra.mxu0 %v8192
        %11130 = vmatpush.bf16.msra.mxu0 %v8190
        %11131 = vmatpush.bf16.msra.mxu0 %v8188
        %11132 = vmatpush.bf16.msra.mxu0 %v8186
        %11133 = vmatpush.bf16.msra.mxu0 %v8184
        %11134 = vmatpush.bf16.msra.mxu0 %v8182
        %11135 = vmatpush.bf16.msra.mxu0 %v8180
        %11136 = vmatmul.bf16.gmra.mxu0 %v2450
        %v11137 = vpop.f32.mrf.mxu0
        %v11138 = vadd.f32 %v11124, %v11137
        %v11139 = vpop.f32.mrf.mxu0
        %v11140 = vadd.f32 %v11126, %v11139
        %11141 = vdwg.mxu0
        %11142 = vmatpush.bf16.msra.mxu0 %v8210
        %11143 = vmatpush.bf16.msra.mxu0 %v8208
        %11144 = vmatpush.bf16.msra.mxu0 %v8206
        %11145 = vmatpush.bf16.msra.mxu0 %v8204
        %11146 = vmatpush.bf16.msra.mxu0 %v8202
        %11147 = vmatpush.bf16.msra.mxu0 %v8200
        %11148 = vmatpush.bf16.msra.mxu0 %v8198
        %11149 = vmatpush.bf16.msra.mxu0 %v8196
        %11150 = vmatmul.bf16.gmra.mxu0 %v2451
        %v11151 = vpop.f32.mrf.mxu0
        %v11152 = vadd.f32 %v11138, %v11151
        %v11153 = vpop.f32.mrf.mxu0
        %v11154 = vadd.f32 %v11140, %v11153
        %11155 = vdwg.mxu0
        %11156 = vmatpush.bf16.msra.mxu0 %v8226
        %11157 = vmatpush.bf16.msra.mxu0 %v8224
        %11158 = vmatpush.bf16.msra.mxu0 %v8222
        %11159 = vmatpush.bf16.msra.mxu0 %v8220
        %11160 = vmatpush.bf16.msra.mxu0 %v8218
        %11161 = vmatpush.bf16.msra.mxu0 %v8216
        %11162 = vmatpush.bf16.msra.mxu0 %v8214
        %11163 = vmatpush.bf16.msra.mxu0 %v8212
        %11164 = vmatmul.bf16.gmra.mxu0 %v2452
        %v11165 = vpop.f32.mrf.mxu0
        %v11166 = vadd.f32 %v11152, %v11165
        %v11167 = vpop.f32.mrf.mxu0
        %v11168 = vadd.f32 %v11154, %v11167
        %11169 = vdwg.mxu0
        %11170 = vmatpush.bf16.msra.mxu0 %v8242
        %11171 = vmatpush.bf16.msra.mxu0 %v8240
        %11172 = vmatpush.bf16.msra.mxu0 %v8238
        %11173 = vmatpush.bf16.msra.mxu0 %v8236
        %11174 = vmatpush.bf16.msra.mxu0 %v8234
        %11175 = vmatpush.bf16.msra.mxu0 %v8232
        %11176 = vmatpush.bf16.msra.mxu0 %v8230
        %11177 = vmatpush.bf16.msra.mxu0 %v8228
        %11178 = vmatmul.bf16.gmra.mxu0 %v2453
        %v11179 = vpop.f32.mrf.mxu0
        %v11180 = vadd.f32 %v11166, %v11179
        %v11181 = vpop.f32.mrf.mxu0
        %v11182 = vadd.f32 %v11168, %v11181
        %11183 = vdwg.mxu0
        %11184 = vmatpush.bf16.msra.mxu0 %v8258
        %11185 = vmatpush.bf16.msra.mxu0 %v8256
        %11186 = vmatpush.bf16.msra.mxu0 %v8254
        %11187 = vmatpush.bf16.msra.mxu0 %v8252
        %11188 = vmatpush.bf16.msra.mxu0 %v8250
        %11189 = vmatpush.bf16.msra.mxu0 %v8248
        %11190 = vmatpush.bf16.msra.mxu0 %v8246
        %11191 = vmatpush.bf16.msra.mxu0 %v8244
        %11192 = vmatmul.bf16.gmra.mxu0 %v2454
        %v11193 = vpop.f32.mrf.mxu0
        %v11194 = vadd.f32 %v11180, %v11193
        %v11195 = vpop.f32.mrf.mxu0
        %v11196 = vadd.f32 %v11182, %v11195
        %11197 = vdwg.mxu0
        %11198 = vmatpush.bf16.msra.mxu0 %v8274
        %11199 = vmatpush.bf16.msra.mxu0 %v8272
        %11200 = vmatpush.bf16.msra.mxu0 %v8270
        %11201 = vmatpush.bf16.msra.mxu0 %v8268
        %11202 = vmatpush.bf16.msra.mxu0 %v8266
        %11203 = vmatpush.bf16.msra.mxu0 %v8264
        %11204 = vmatpush.bf16.msra.mxu0 %v8262
        %11205 = vmatpush.bf16.msra.mxu0 %v8260
        %11206 = vmatmul.bf16.gmra.mxu0 %v2455
        %v11207 = vpop.f32.mrf.mxu0
        %v11208 = vadd.f32 %v11194, %v11207
        %v11209 = vpop.f32.mrf.mxu0
        %v11210 = vadd.f32 %v11196, %v11209
        %11211 = vdwg.mxu0
        %11212 = vmatpush.bf16.msra.mxu0 %v8290
        %11213 = vmatpush.bf16.msra.mxu0 %v8288
        %11214 = vmatpush.bf16.msra.mxu0 %v8286
        %11215 = vmatpush.bf16.msra.mxu0 %v8284
        %11216 = vmatpush.bf16.msra.mxu0 %v8282
        %11217 = vmatpush.bf16.msra.mxu0 %v8280
        %11218 = vmatpush.bf16.msra.mxu0 %v8278
        %11219 = vmatpush.bf16.msra.mxu0 %v8276
        %11220 = vmatmul.bf16.gmra.mxu0 %v2456
        %v11221 = vpop.f32.mrf.mxu0
        %v11222 = vadd.f32 %v11208, %v11221
        %v11223 = vpop.f32.mrf.mxu0
        %v11224 = vadd.f32 %v11210, %v11223
        %11225 = vdwg.mxu0
        %11226 = vmatpush.bf16.msra.mxu0 %v8306
        %11227 = vmatpush.bf16.msra.mxu0 %v8304
        %11228 = vmatpush.bf16.msra.mxu0 %v8302
        %11229 = vmatpush.bf16.msra.mxu0 %v8300
        %11230 = vmatpush.bf16.msra.mxu0 %v8298
        %11231 = vmatpush.bf16.msra.mxu0 %v8296
        %11232 = vmatpush.bf16.msra.mxu0 %v8294
        %11233 = vmatpush.bf16.msra.mxu0 %v8292
        %11234 = vmatmul.bf16.gmra.mxu0 %v2457
        %v11235 = vpop.f32.mrf.mxu0
        %v11236 = vadd.f32 %v11222, %v11235
        %v11237 = vpop.f32.mrf.mxu0
        %v11238 = vadd.f32 %v11224, %v11237
        %11239 = vdwg.mxu0
        %11240 = vmatpush.bf16.msra.mxu0 %v8322
        %11241 = vmatpush.bf16.msra.mxu0 %v8320
        %11242 = vmatpush.bf16.msra.mxu0 %v8318
        %11243 = vmatpush.bf16.msra.mxu0 %v8316
        %11244 = vmatpush.bf16.msra.mxu0 %v8314
        %11245 = vmatpush.bf16.msra.mxu0 %v8312
        %11246 = vmatpush.bf16.msra.mxu0 %v8310
        %11247 = vmatpush.bf16.msra.mxu0 %v8308
        %11248 = vmatmul.bf16.gmra.mxu0 %v2458
        %v11249 = vpop.f32.mrf.mxu0
        %v11250 = vadd.f32 %v11236, %v11249
        %v11251 = vpop.f32.mrf.mxu0
        %v11252 = vadd.f32 %v11238, %v11251
        %11253 = vdwg.mxu0
        %11254 = vmatpush.bf16.msra.mxu0 %v8338
        %11255 = vmatpush.bf16.msra.mxu0 %v8336
        %11256 = vmatpush.bf16.msra.mxu0 %v8334
        %11257 = vmatpush.bf16.msra.mxu0 %v8332
        %11258 = vmatpush.bf16.msra.mxu0 %v8330
        %11259 = vmatpush.bf16.msra.mxu0 %v8328
        %11260 = vmatpush.bf16.msra.mxu0 %v8326
        %11261 = vmatpush.bf16.msra.mxu0 %v8324
        %11262 = vmatmul.bf16.gmra.mxu0 %v2459
        %v11263 = vpop.f32.mrf.mxu0
        %v11264 = vadd.f32 %v11250, %v11263
        %v11265 = vpop.f32.mrf.mxu0
        %v11266 = vadd.f32 %v11252, %v11265
        %11267 = vdwg.mxu0
        %11268 = vmatpush.bf16.msra.mxu0 %v8354
        %11269 = vmatpush.bf16.msra.mxu0 %v8352
        %11270 = vmatpush.bf16.msra.mxu0 %v8350
        %11271 = vmatpush.bf16.msra.mxu0 %v8348
        %11272 = vmatpush.bf16.msra.mxu0 %v8346
        %11273 = vmatpush.bf16.msra.mxu0 %v8344
        %11274 = vmatpush.bf16.msra.mxu0 %v8342
        %11275 = vmatpush.bf16.msra.mxu0 %v8340
        %11276 = vmatmul.bf16.gmra.mxu0 %v2460
        %v11277 = vpop.f32.mrf.mxu0
        %v11278 = vadd.f32 %v11264, %v11277
        %v11279 = vpop.f32.mrf.mxu0
        %v11280 = vadd.f32 %v11266, %v11279
        %11281 = vdwg.mxu0
        %11282 = vmatpush.bf16.msra.mxu0 %v8370
        %11283 = vmatpush.bf16.msra.mxu0 %v8368
        %11284 = vmatpush.bf16.msra.mxu0 %v8366
        %11285 = vmatpush.bf16.msra.mxu0 %v8364
        %11286 = vmatpush.bf16.msra.mxu0 %v8362
        %11287 = vmatpush.bf16.msra.mxu0 %v8360
        %11288 = vmatpush.bf16.msra.mxu0 %v8358
        %11289 = vmatpush.bf16.msra.mxu0 %v8356
        %11290 = vmatmul.bf16.gmra.mxu0 %v2461
        %v11291 = vpop.f32.mrf.mxu0
        %v11292 = vadd.f32 %v11278, %v11291
        %v11293 = vpop.f32.mrf.mxu0
        %v11294 = vadd.f32 %v11280, %v11293
        %11295 = vdwg.mxu0
        %11296 = vmatpush.bf16.msra.mxu0 %v8386
        %11297 = vmatpush.bf16.msra.mxu0 %v8384
        %11298 = vmatpush.bf16.msra.mxu0 %v8382
        %11299 = vmatpush.bf16.msra.mxu0 %v8380
        %11300 = vmatpush.bf16.msra.mxu0 %v8378
        %11301 = vmatpush.bf16.msra.mxu0 %v8376
        %11302 = vmatpush.bf16.msra.mxu0 %v8374
        %11303 = vmatpush.bf16.msra.mxu0 %v8372
        %11304 = vmatmul.bf16.gmra.mxu0 %v2462
        %v11305 = vpop.f32.mrf.mxu0
        %v11306 = vadd.f32 %v11292, %v11305
        %v11307 = vpop.f32.mrf.mxu0
        %v11308 = vadd.f32 %v11294, %v11307
        %11309 = vdwg.mxu0
        %11310 = vmatpush.bf16.msra.mxu0 %v8402
        %11311 = vmatpush.bf16.msra.mxu0 %v8400
        %11312 = vmatpush.bf16.msra.mxu0 %v8398
        %11313 = vmatpush.bf16.msra.mxu0 %v8396
        %11314 = vmatpush.bf16.msra.mxu0 %v8394
        %11315 = vmatpush.bf16.msra.mxu0 %v8392
        %11316 = vmatpush.bf16.msra.mxu0 %v8390
        %11317 = vmatpush.bf16.msra.mxu0 %v8388
        %11318 = vmatmul.bf16.gmra.mxu0 %v2463
        %v11319 = vpop.f32.mrf.mxu0
        %v11320 = vadd.f32 %v11306, %v11319
        %v11321 = vpop.f32.mrf.mxu0
        %v11322 = vadd.f32 %v11308, %v11321
        %11323 = vdwg.mxu0
        %11324 = vmatpush.bf16.msra.mxu0 %v8418
        %11325 = vmatpush.bf16.msra.mxu0 %v8416
        %11326 = vmatpush.bf16.msra.mxu0 %v8414
        %11327 = vmatpush.bf16.msra.mxu0 %v8412
        %11328 = vmatpush.bf16.msra.mxu0 %v8410
        %11329 = vmatpush.bf16.msra.mxu0 %v8408
        %11330 = vmatpush.bf16.msra.mxu0 %v8406
        %11331 = vmatpush.bf16.msra.mxu0 %v8404
        %11332 = vmatmul.bf16.gmra.mxu0 %v2464
        %v11333 = vpop.f32.mrf.mxu0
        %v11334 = vadd.f32 %v11320, %v11333
        %v11335 = vpop.f32.mrf.mxu0
        %v11336 = vadd.f32 %v11322, %v11335
        %11337 = vdwg.mxu0
        %11338 = vmatpush.bf16.msra.mxu0 %v8434
        %11339 = vmatpush.bf16.msra.mxu0 %v8432
        %11340 = vmatpush.bf16.msra.mxu0 %v8430
        %11341 = vmatpush.bf16.msra.mxu0 %v8428
        %11342 = vmatpush.bf16.msra.mxu0 %v8426
        %11343 = vmatpush.bf16.msra.mxu0 %v8424
        %11344 = vmatpush.bf16.msra.mxu0 %v8422
        %11345 = vmatpush.bf16.msra.mxu0 %v8420
        %11346 = vmatmul.bf16.gmra.mxu0 %v2465
        %v11347 = vpop.f32.mrf.mxu0
        %v11348 = vadd.f32 %v11334, %v11347
        %v11349 = vpop.f32.mrf.mxu0
        %v11350 = vadd.f32 %v11336, %v11349
        %11351 = vdwg.mxu0
        %11352 = vmatpush.bf16.msra.mxu0 %v8450
        %11353 = vmatpush.bf16.msra.mxu0 %v8448
        %11354 = vmatpush.bf16.msra.mxu0 %v8446
        %11355 = vmatpush.bf16.msra.mxu0 %v8444
        %11356 = vmatpush.bf16.msra.mxu0 %v8442
        %11357 = vmatpush.bf16.msra.mxu0 %v8440
        %11358 = vmatpush.bf16.msra.mxu0 %v8438
        %11359 = vmatpush.bf16.msra.mxu0 %v8436
        %11360 = vmatmul.bf16.gmra.mxu0 %v2466
        %v11361 = vpop.f32.mrf.mxu0
        %v11362 = vadd.f32 %v11348, %v11361
        %v11363 = vpop.f32.mrf.mxu0
        %v11364 = vadd.f32 %v11350, %v11363
        %11365 = vdwg.mxu0
        %11366 = vmatpush.bf16.msra.mxu0 %v8466
        %11367 = vmatpush.bf16.msra.mxu0 %v8464
        %11368 = vmatpush.bf16.msra.mxu0 %v8462
        %11369 = vmatpush.bf16.msra.mxu0 %v8460
        %11370 = vmatpush.bf16.msra.mxu0 %v8458
        %11371 = vmatpush.bf16.msra.mxu0 %v8456
        %11372 = vmatpush.bf16.msra.mxu0 %v8454
        %11373 = vmatpush.bf16.msra.mxu0 %v8452
        %11374 = vmatmul.bf16.gmra.mxu0 %v2467
        %v11375 = vpop.f32.mrf.mxu0
        %v11376 = vadd.f32 %v11362, %v11375
        %v11377 = vpop.f32.mrf.mxu0
        %v11378 = vadd.f32 %v11364, %v11377
        %11379 = vdwg.mxu0
        %11380 = vmatpush.bf16.msra.mxu0 %v8482
        %11381 = vmatpush.bf16.msra.mxu0 %v8480
        %11382 = vmatpush.bf16.msra.mxu0 %v8478
        %11383 = vmatpush.bf16.msra.mxu0 %v8476
        %11384 = vmatpush.bf16.msra.mxu0 %v8474
        %11385 = vmatpush.bf16.msra.mxu0 %v8472
        %11386 = vmatpush.bf16.msra.mxu0 %v8470
        %11387 = vmatpush.bf16.msra.mxu0 %v8468
        %11388 = vmatmul.bf16.gmra.mxu0 %v2468
        %v11389 = vpop.f32.mrf.mxu0
        %v11390 = vadd.f32 %v11376, %v11389
        %v11391 = vpop.f32.mrf.mxu0
        %v11392 = vadd.f32 %v11378, %v11391
        %11393 = vdwg.mxu0
        %11394 = vmatpush.bf16.msra.mxu0 %v8498
        %11395 = vmatpush.bf16.msra.mxu0 %v8496
        %11396 = vmatpush.bf16.msra.mxu0 %v8494
        %11397 = vmatpush.bf16.msra.mxu0 %v8492
        %11398 = vmatpush.bf16.msra.mxu0 %v8490
        %11399 = vmatpush.bf16.msra.mxu0 %v8488
        %11400 = vmatpush.bf16.msra.mxu0 %v8486
        %11401 = vmatpush.bf16.msra.mxu0 %v8484
        %11402 = vmatmul.bf16.gmra.mxu0 %v2469
        %v11403 = vpop.f32.mrf.mxu0
        %v11404 = vadd.f32 %v11390, %v11403
        %v11405 = vpop.f32.mrf.mxu0
        %v11406 = vadd.f32 %v11392, %v11405
        %11407 = vdwg.mxu0
        %11408 = vmatpush.bf16.msra.mxu0 %v8514
        %11409 = vmatpush.bf16.msra.mxu0 %v8512
        %11410 = vmatpush.bf16.msra.mxu0 %v8510
        %11411 = vmatpush.bf16.msra.mxu0 %v8508
        %11412 = vmatpush.bf16.msra.mxu0 %v8506
        %11413 = vmatpush.bf16.msra.mxu0 %v8504
        %11414 = vmatpush.bf16.msra.mxu0 %v8502
        %11415 = vmatpush.bf16.msra.mxu0 %v8500
        %11416 = vmatmul.bf16.gmra.mxu0 %v2470
        %v11417 = vpop.f32.mrf.mxu0
        %v11418 = vadd.f32 %v11404, %v11417
        %v11419 = vpop.f32.mrf.mxu0
        %v11420 = vadd.f32 %v11406, %v11419
        %11421 = vdwg.mxu0
        %11422 = vmatpush.bf16.msra.mxu0 %v8530
        %11423 = vmatpush.bf16.msra.mxu0 %v8528
        %11424 = vmatpush.bf16.msra.mxu0 %v8526
        %11425 = vmatpush.bf16.msra.mxu0 %v8524
        %11426 = vmatpush.bf16.msra.mxu0 %v8522
        %11427 = vmatpush.bf16.msra.mxu0 %v8520
        %11428 = vmatpush.bf16.msra.mxu0 %v8518
        %11429 = vmatpush.bf16.msra.mxu0 %v8516
        %11430 = vmatmul.bf16.gmra.mxu0 %v2471
        %v11431 = vpop.f32.mrf.mxu0
        %v11432 = vadd.f32 %v11418, %v11431
        %v11433 = vpop.f32.mrf.mxu0
        %v11434 = vadd.f32 %v11420, %v11433
        %11435 = vdwg.mxu0
        %11436 = vmatpush.bf16.msra.mxu0 %v8546
        %11437 = vmatpush.bf16.msra.mxu0 %v8544
        %11438 = vmatpush.bf16.msra.mxu0 %v8542
        %11439 = vmatpush.bf16.msra.mxu0 %v8540
        %11440 = vmatpush.bf16.msra.mxu0 %v8538
        %11441 = vmatpush.bf16.msra.mxu0 %v8536
        %11442 = vmatpush.bf16.msra.mxu0 %v8534
        %11443 = vmatpush.bf16.msra.mxu0 %v8532
        %11444 = vmatmul.bf16.gmra.mxu0 %v2472
        %v11445 = vpop.f32.mrf.mxu0
        %v11446 = vadd.f32 %v11432, %v11445
        %v11447 = vpop.f32.mrf.mxu0
        %v11448 = vadd.f32 %v11434, %v11447
        %11449 = vdwg.mxu0
        %11450 = vmatpush.bf16.msra.mxu0 %v8562
        %11451 = vmatpush.bf16.msra.mxu0 %v8560
        %11452 = vmatpush.bf16.msra.mxu0 %v8558
        %11453 = vmatpush.bf16.msra.mxu0 %v8556
        %11454 = vmatpush.bf16.msra.mxu0 %v8554
        %11455 = vmatpush.bf16.msra.mxu0 %v8552
        %11456 = vmatpush.bf16.msra.mxu0 %v8550
        %11457 = vmatpush.bf16.msra.mxu0 %v8548
        %11458 = vmatmul.bf16.gmra.mxu0 %v2473
        %v11459 = vpop.f32.mrf.mxu0
        %v11460 = vadd.f32 %v11446, %v11459
        %v11461 = vpop.f32.mrf.mxu0
        %v11462 = vadd.f32 %v11448, %v11461
        %11463 = vdwg.mxu0
        %11464 = vmatpush.bf16.msra.mxu0 %v8578
        %11465 = vmatpush.bf16.msra.mxu0 %v8576
        %11466 = vmatpush.bf16.msra.mxu0 %v8574
        %11467 = vmatpush.bf16.msra.mxu0 %v8572
        %11468 = vmatpush.bf16.msra.mxu0 %v8570
        %11469 = vmatpush.bf16.msra.mxu0 %v8568
        %11470 = vmatpush.bf16.msra.mxu0 %v8566
        %11471 = vmatpush.bf16.msra.mxu0 %v8564
        %11472 = vmatmul.bf16.gmra.mxu0 %v2474
        %v11473 = vpop.f32.mrf.mxu0
        %v11474 = vadd.f32 %v11460, %v11473
        %v11475 = vpop.f32.mrf.mxu0
        %v11476 = vadd.f32 %v11462, %v11475
        %11477 = vdwg.mxu0
        %11478 = vmatpush.bf16.msra.mxu0 %v8594
        %11479 = vmatpush.bf16.msra.mxu0 %v8592
        %11480 = vmatpush.bf16.msra.mxu0 %v8590
        %11481 = vmatpush.bf16.msra.mxu0 %v8588
        %11482 = vmatpush.bf16.msra.mxu0 %v8586
        %11483 = vmatpush.bf16.msra.mxu0 %v8584
        %11484 = vmatpush.bf16.msra.mxu0 %v8582
        %11485 = vmatpush.bf16.msra.mxu0 %v8580
        %11486 = vmatmul.bf16.gmra.mxu0 %v2475
        %v11487 = vpop.f32.mrf.mxu0
        %v11488 = vadd.f32 %v11474, %v11487
        %v11489 = vpop.f32.mrf.mxu0
        %v11490 = vadd.f32 %v11476, %v11489
        %11491 = vdwg.mxu0
        %11492 = vmatpush.bf16.msra.mxu0 %v8610
        %11493 = vmatpush.bf16.msra.mxu0 %v8608
        %11494 = vmatpush.bf16.msra.mxu0 %v8606
        %11495 = vmatpush.bf16.msra.mxu0 %v8604
        %11496 = vmatpush.bf16.msra.mxu0 %v8602
        %11497 = vmatpush.bf16.msra.mxu0 %v8600
        %11498 = vmatpush.bf16.msra.mxu0 %v8598
        %11499 = vmatpush.bf16.msra.mxu0 %v8596
        %11500 = vmatmul.bf16.gmra.mxu0 %v2476
        %v11501 = vpop.f32.mrf.mxu0
        %v11502 = vadd.f32 %v11488, %v11501
        %v11503 = vpop.f32.mrf.mxu0
        %v11504 = vadd.f32 %v11490, %v11503
        %11505 = vdwg.mxu0
        %11506 = vmatpush.bf16.msra.mxu0 %v8626
        %11507 = vmatpush.bf16.msra.mxu0 %v8624
        %11508 = vmatpush.bf16.msra.mxu0 %v8622
        %11509 = vmatpush.bf16.msra.mxu0 %v8620
        %11510 = vmatpush.bf16.msra.mxu0 %v8618
        %11511 = vmatpush.bf16.msra.mxu0 %v8616
        %11512 = vmatpush.bf16.msra.mxu0 %v8614
        %11513 = vmatpush.bf16.msra.mxu0 %v8612
        %11514 = vmatmul.bf16.gmra.mxu0 %v2477
        %v11515 = vpop.f32.mrf.mxu0
        %v11516 = vadd.f32 %v11502, %v11515
        %v11517 = vpop.f32.mrf.mxu0
        %v11518 = vadd.f32 %v11504, %v11517
        %11519 = vdwg.mxu0
        %11520 = vmatpush.bf16.msra.mxu0 %v8642
        %11521 = vmatpush.bf16.msra.mxu0 %v8640
        %11522 = vmatpush.bf16.msra.mxu0 %v8638
        %11523 = vmatpush.bf16.msra.mxu0 %v8636
        %11524 = vmatpush.bf16.msra.mxu0 %v8634
        %11525 = vmatpush.bf16.msra.mxu0 %v8632
        %11526 = vmatpush.bf16.msra.mxu0 %v8630
        %11527 = vmatpush.bf16.msra.mxu0 %v8628
        %11528 = vmatmul.bf16.gmra.mxu0 %v2478
        %v11529 = vpop.f32.mrf.mxu0
        %v11530 = vadd.f32 %v11516, %v11529
        %v11531 = vpop.f32.mrf.mxu0
        %v11532 = vadd.f32 %v11518, %v11531
        %11533 = vdwg.mxu0
        %11534 = vmatpush.bf16.msra.mxu0 %v8658
        %11535 = vmatpush.bf16.msra.mxu0 %v8656
        %11536 = vmatpush.bf16.msra.mxu0 %v8654
        %11537 = vmatpush.bf16.msra.mxu0 %v8652
        %11538 = vmatpush.bf16.msra.mxu0 %v8650
        %11539 = vmatpush.bf16.msra.mxu0 %v8648
        %11540 = vmatpush.bf16.msra.mxu0 %v8646
        %11541 = vmatpush.bf16.msra.mxu0 %v8644
        %11542 = vmatmul.bf16.gmra.mxu0 %v2479
        %v11543 = vpop.f32.mrf.mxu0
        %v11544 = vadd.f32 %v11530, %v11543
        %v11545 = vpop.f32.mrf.mxu0
        %v11546 = vadd.f32 %v11532, %v11545
        %11547 = vdwg.mxu0
        %11548 = vmatpush.bf16.msra.mxu0 %v8674
        %11549 = vmatpush.bf16.msra.mxu0 %v8672
        %11550 = vmatpush.bf16.msra.mxu0 %v8670
        %11551 = vmatpush.bf16.msra.mxu0 %v8668
        %11552 = vmatpush.bf16.msra.mxu0 %v8666
        %11553 = vmatpush.bf16.msra.mxu0 %v8664
        %11554 = vmatpush.bf16.msra.mxu0 %v8662
        %11555 = vmatpush.bf16.msra.mxu0 %v8660
        %11556 = vmatmul.bf16.gmra.mxu0 %v2480
        %v11557 = vpop.f32.mrf.mxu0
        %v11558 = vadd.f32 %v11544, %v11557
        %v11559 = vpop.f32.mrf.mxu0
        %v11560 = vadd.f32 %v11546, %v11559
        %11561 = vdwg.mxu0
        %11562 = vmatpush.bf16.msra.mxu0 %v8690
        %11563 = vmatpush.bf16.msra.mxu0 %v8688
        %11564 = vmatpush.bf16.msra.mxu0 %v8686
        %11565 = vmatpush.bf16.msra.mxu0 %v8684
        %11566 = vmatpush.bf16.msra.mxu0 %v8682
        %11567 = vmatpush.bf16.msra.mxu0 %v8680
        %11568 = vmatpush.bf16.msra.mxu0 %v8678
        %11569 = vmatpush.bf16.msra.mxu0 %v8676
        %11570 = vmatmul.bf16.gmra.mxu0 %v2481
        %v11571 = vpop.f32.mrf.mxu0
        %v11572 = vadd.f32 %v11558, %v11571
        %v11573 = vpop.f32.mrf.mxu0
        %v11574 = vadd.f32 %v11560, %v11573
        %11575 = vdwg.mxu0
        %11576 = vmatpush.bf16.msra.mxu0 %v8706
        %11577 = vmatpush.bf16.msra.mxu0 %v8704
        %11578 = vmatpush.bf16.msra.mxu0 %v8702
        %11579 = vmatpush.bf16.msra.mxu0 %v8700
        %11580 = vmatpush.bf16.msra.mxu0 %v8698
        %11581 = vmatpush.bf16.msra.mxu0 %v8696
        %11582 = vmatpush.bf16.msra.mxu0 %v8694
        %11583 = vmatpush.bf16.msra.mxu0 %v8692
        %11584 = vmatmul.bf16.gmra.mxu0 %v2482
        %v11585 = vpop.f32.mrf.mxu0
        %v11586 = vadd.f32 %v11572, %v11585
        %v11587 = vpop.f32.mrf.mxu0
        %v11588 = vadd.f32 %v11574, %v11587
        %11589 = vdwg.mxu0
        %11590 = vmatpush.bf16.msra.mxu0 %v8722
        %11591 = vmatpush.bf16.msra.mxu0 %v8720
        %11592 = vmatpush.bf16.msra.mxu0 %v8718
        %11593 = vmatpush.bf16.msra.mxu0 %v8716
        %11594 = vmatpush.bf16.msra.mxu0 %v8714
        %11595 = vmatpush.bf16.msra.mxu0 %v8712
        %11596 = vmatpush.bf16.msra.mxu0 %v8710
        %11597 = vmatpush.bf16.msra.mxu0 %v8708
        %11598 = vmatmul.bf16.gmra.mxu0 %v2483
        %v11599 = vpop.f32.mrf.mxu0
        %v11600 = vadd.f32 %v11586, %v11599
        %v11601 = vpop.f32.mrf.mxu0
        %v11602 = vadd.f32 %v11588, %v11601
        %11603 = vdwg.mxu0
        %11604 = vmatpush.bf16.msra.mxu0 %v7203
        %11605 = vmatpush.bf16.msra.mxu0 %v7201
        %11606 = vmatpush.bf16.msra.mxu0 %v7199
        %11607 = vmatpush.bf16.msra.mxu0 %v7197
        %11608 = vmatpush.bf16.msra.mxu0 %v7195
        %11609 = vmatpush.bf16.msra.mxu0 %v7193
        %11610 = vmatpush.bf16.msra.mxu0 %v7191
        %11611 = vmatpush.bf16.msra.mxu0 %v7189
        %11612 = vmatmul.bf16.gmra.mxu0 %v2388
        %v11613 = vpop.f32.mrf.mxu0
        %v11614 = vadd.f32 0.0, %v11613
        %v11615 = vpop.f32.mrf.mxu0
        %v11616 = vadd.f32 0.0, %v11615
        %11617 = vdwg.mxu0
        %11618 = vmatpush.bf16.msra.mxu0 %v7219
        %11619 = vmatpush.bf16.msra.mxu0 %v7217
        %11620 = vmatpush.bf16.msra.mxu0 %v7215
        %11621 = vmatpush.bf16.msra.mxu0 %v7213
        %11622 = vmatpush.bf16.msra.mxu0 %v7211
        %11623 = vmatpush.bf16.msra.mxu0 %v7209
        %11624 = vmatpush.bf16.msra.mxu0 %v7207
        %11625 = vmatpush.bf16.msra.mxu0 %v7205
        %11626 = vmatmul.bf16.gmra.mxu0 %v2389
        %v11627 = vpop.f32.mrf.mxu0
        %v11628 = vadd.f32 %v11614, %v11627
        %v11629 = vpop.f32.mrf.mxu0
        %v11630 = vadd.f32 %v11616, %v11629
        %11631 = vdwg.mxu0
        %11632 = vmatpush.bf16.msra.mxu0 %v7235
        %11633 = vmatpush.bf16.msra.mxu0 %v7233
        %11634 = vmatpush.bf16.msra.mxu0 %v7231
        %11635 = vmatpush.bf16.msra.mxu0 %v7229
        %11636 = vmatpush.bf16.msra.mxu0 %v7227
        %11637 = vmatpush.bf16.msra.mxu0 %v7225
        %11638 = vmatpush.bf16.msra.mxu0 %v7223
        %11639 = vmatpush.bf16.msra.mxu0 %v7221
        %11640 = vmatmul.bf16.gmra.mxu0 %v2390
        %v11641 = vpop.f32.mrf.mxu0
        %v11642 = vadd.f32 %v11628, %v11641
        %v11643 = vpop.f32.mrf.mxu0
        %v11644 = vadd.f32 %v11630, %v11643
        %11645 = vdwg.mxu0
        %11646 = vmatpush.bf16.msra.mxu0 %v7251
        %11647 = vmatpush.bf16.msra.mxu0 %v7249
        %11648 = vmatpush.bf16.msra.mxu0 %v7247
        %11649 = vmatpush.bf16.msra.mxu0 %v7245
        %11650 = vmatpush.bf16.msra.mxu0 %v7243
        %11651 = vmatpush.bf16.msra.mxu0 %v7241
        %11652 = vmatpush.bf16.msra.mxu0 %v7239
        %11653 = vmatpush.bf16.msra.mxu0 %v7237
        %11654 = vmatmul.bf16.gmra.mxu0 %v2391
        %v11655 = vpop.f32.mrf.mxu0
        %v11656 = vadd.f32 %v11642, %v11655
        %v11657 = vpop.f32.mrf.mxu0
        %v11658 = vadd.f32 %v11644, %v11657
        %11659 = vdwg.mxu0
        %11660 = vmatpush.bf16.msra.mxu0 %v7267
        %11661 = vmatpush.bf16.msra.mxu0 %v7265
        %11662 = vmatpush.bf16.msra.mxu0 %v7263
        %11663 = vmatpush.bf16.msra.mxu0 %v7261
        %11664 = vmatpush.bf16.msra.mxu0 %v7259
        %11665 = vmatpush.bf16.msra.mxu0 %v7257
        %11666 = vmatpush.bf16.msra.mxu0 %v7255
        %11667 = vmatpush.bf16.msra.mxu0 %v7253
        %11668 = vmatmul.bf16.gmra.mxu0 %v2392
        %v11669 = vpop.f32.mrf.mxu0
        %v11670 = vadd.f32 %v11656, %v11669
        %v11671 = vpop.f32.mrf.mxu0
        %v11672 = vadd.f32 %v11658, %v11671
        %11673 = vdwg.mxu0
        %11674 = vmatpush.bf16.msra.mxu0 %v7283
        %11675 = vmatpush.bf16.msra.mxu0 %v7281
        %11676 = vmatpush.bf16.msra.mxu0 %v7279
        %11677 = vmatpush.bf16.msra.mxu0 %v7277
        %11678 = vmatpush.bf16.msra.mxu0 %v7275
        %11679 = vmatpush.bf16.msra.mxu0 %v7273
        %11680 = vmatpush.bf16.msra.mxu0 %v7271
        %11681 = vmatpush.bf16.msra.mxu0 %v7269
        %11682 = vmatmul.bf16.gmra.mxu0 %v2393
        %v11683 = vpop.f32.mrf.mxu0
        %v11684 = vadd.f32 %v11670, %v11683
        %v11685 = vpop.f32.mrf.mxu0
        %v11686 = vadd.f32 %v11672, %v11685
        %11687 = vdwg.mxu0
        %11688 = vmatpush.bf16.msra.mxu0 %v7299
        %11689 = vmatpush.bf16.msra.mxu0 %v7297
        %11690 = vmatpush.bf16.msra.mxu0 %v7295
        %11691 = vmatpush.bf16.msra.mxu0 %v7293
        %11692 = vmatpush.bf16.msra.mxu0 %v7291
        %11693 = vmatpush.bf16.msra.mxu0 %v7289
        %11694 = vmatpush.bf16.msra.mxu0 %v7287
        %11695 = vmatpush.bf16.msra.mxu0 %v7285
        %11696 = vmatmul.bf16.gmra.mxu0 %v2394
        %v11697 = vpop.f32.mrf.mxu0
        %v11698 = vadd.f32 %v11684, %v11697
        %v11699 = vpop.f32.mrf.mxu0
        %v11700 = vadd.f32 %v11686, %v11699
        %11701 = vdwg.mxu0
        %11702 = vmatpush.bf16.msra.mxu0 %v7315
        %11703 = vmatpush.bf16.msra.mxu0 %v7313
        %11704 = vmatpush.bf16.msra.mxu0 %v7311
        %11705 = vmatpush.bf16.msra.mxu0 %v7309
        %11706 = vmatpush.bf16.msra.mxu0 %v7307
        %11707 = vmatpush.bf16.msra.mxu0 %v7305
        %11708 = vmatpush.bf16.msra.mxu0 %v7303
        %11709 = vmatpush.bf16.msra.mxu0 %v7301
        %11710 = vmatmul.bf16.gmra.mxu0 %v2395
        %v11711 = vpop.f32.mrf.mxu0
        %v11712 = vadd.f32 %v11698, %v11711
        %v11713 = vpop.f32.mrf.mxu0
        %v11714 = vadd.f32 %v11700, %v11713
        %11715 = vdwg.mxu0
        %11716 = vmatpush.bf16.msra.mxu0 %v7331
        %11717 = vmatpush.bf16.msra.mxu0 %v7329
        %11718 = vmatpush.bf16.msra.mxu0 %v7327
        %11719 = vmatpush.bf16.msra.mxu0 %v7325
        %11720 = vmatpush.bf16.msra.mxu0 %v7323
        %11721 = vmatpush.bf16.msra.mxu0 %v7321
        %11722 = vmatpush.bf16.msra.mxu0 %v7319
        %11723 = vmatpush.bf16.msra.mxu0 %v7317
        %11724 = vmatmul.bf16.gmra.mxu0 %v2396
        %v11725 = vpop.f32.mrf.mxu0
        %v11726 = vadd.f32 %v11712, %v11725
        %v11727 = vpop.f32.mrf.mxu0
        %v11728 = vadd.f32 %v11714, %v11727
        %11729 = vdwg.mxu0
        %11730 = vmatpush.bf16.msra.mxu0 %v7347
        %11731 = vmatpush.bf16.msra.mxu0 %v7345
        %11732 = vmatpush.bf16.msra.mxu0 %v7343
        %11733 = vmatpush.bf16.msra.mxu0 %v7341
        %11734 = vmatpush.bf16.msra.mxu0 %v7339
        %11735 = vmatpush.bf16.msra.mxu0 %v7337
        %11736 = vmatpush.bf16.msra.mxu0 %v7335
        %11737 = vmatpush.bf16.msra.mxu0 %v7333
        %11738 = vmatmul.bf16.gmra.mxu0 %v2397
        %v11739 = vpop.f32.mrf.mxu0
        %v11740 = vadd.f32 %v11726, %v11739
        %v11741 = vpop.f32.mrf.mxu0
        %v11742 = vadd.f32 %v11728, %v11741
        %11743 = vdwg.mxu0
        %11744 = vmatpush.bf16.msra.mxu0 %v7363
        %11745 = vmatpush.bf16.msra.mxu0 %v7361
        %11746 = vmatpush.bf16.msra.mxu0 %v7359
        %11747 = vmatpush.bf16.msra.mxu0 %v7357
        %11748 = vmatpush.bf16.msra.mxu0 %v7355
        %11749 = vmatpush.bf16.msra.mxu0 %v7353
        %11750 = vmatpush.bf16.msra.mxu0 %v7351
        %11751 = vmatpush.bf16.msra.mxu0 %v7349
        %11752 = vmatmul.bf16.gmra.mxu0 %v2398
        %v11753 = vpop.f32.mrf.mxu0
        %v11754 = vadd.f32 %v11740, %v11753
        %v11755 = vpop.f32.mrf.mxu0
        %v11756 = vadd.f32 %v11742, %v11755
        %11757 = vdwg.mxu0
        %11758 = vmatpush.bf16.msra.mxu0 %v7379
        %11759 = vmatpush.bf16.msra.mxu0 %v7377
        %11760 = vmatpush.bf16.msra.mxu0 %v7375
        %11761 = vmatpush.bf16.msra.mxu0 %v7373
        %11762 = vmatpush.bf16.msra.mxu0 %v7371
        %11763 = vmatpush.bf16.msra.mxu0 %v7369
        %11764 = vmatpush.bf16.msra.mxu0 %v7367
        %11765 = vmatpush.bf16.msra.mxu0 %v7365
        %11766 = vmatmul.bf16.gmra.mxu0 %v2399
        %v11767 = vpop.f32.mrf.mxu0
        %v11768 = vadd.f32 %v11754, %v11767
        %v11769 = vpop.f32.mrf.mxu0
        %v11770 = vadd.f32 %v11756, %v11769
        %11771 = vdwg.mxu0
        %11772 = vmatpush.bf16.msra.mxu0 %v7395
        %11773 = vmatpush.bf16.msra.mxu0 %v7393
        %11774 = vmatpush.bf16.msra.mxu0 %v7391
        %11775 = vmatpush.bf16.msra.mxu0 %v7389
        %11776 = vmatpush.bf16.msra.mxu0 %v7387
        %11777 = vmatpush.bf16.msra.mxu0 %v7385
        %11778 = vmatpush.bf16.msra.mxu0 %v7383
        %11779 = vmatpush.bf16.msra.mxu0 %v7381
        %11780 = vmatmul.bf16.gmra.mxu0 %v2400
        %v11781 = vpop.f32.mrf.mxu0
        %v11782 = vadd.f32 %v11768, %v11781
        %v11783 = vpop.f32.mrf.mxu0
        %v11784 = vadd.f32 %v11770, %v11783
        %11785 = vdwg.mxu0
        %11786 = vmatpush.bf16.msra.mxu0 %v7411
        %11787 = vmatpush.bf16.msra.mxu0 %v7409
        %11788 = vmatpush.bf16.msra.mxu0 %v7407
        %11789 = vmatpush.bf16.msra.mxu0 %v7405
        %11790 = vmatpush.bf16.msra.mxu0 %v7403
        %11791 = vmatpush.bf16.msra.mxu0 %v7401
        %11792 = vmatpush.bf16.msra.mxu0 %v7399
        %11793 = vmatpush.bf16.msra.mxu0 %v7397
        %11794 = vmatmul.bf16.gmra.mxu0 %v2401
        %v11795 = vpop.f32.mrf.mxu0
        %v11796 = vadd.f32 %v11782, %v11795
        %v11797 = vpop.f32.mrf.mxu0
        %v11798 = vadd.f32 %v11784, %v11797
        %11799 = vdwg.mxu0
        %11800 = vmatpush.bf16.msra.mxu0 %v7427
        %11801 = vmatpush.bf16.msra.mxu0 %v7425
        %11802 = vmatpush.bf16.msra.mxu0 %v7423
        %11803 = vmatpush.bf16.msra.mxu0 %v7421
        %11804 = vmatpush.bf16.msra.mxu0 %v7419
        %11805 = vmatpush.bf16.msra.mxu0 %v7417
        %11806 = vmatpush.bf16.msra.mxu0 %v7415
        %11807 = vmatpush.bf16.msra.mxu0 %v7413
        %11808 = vmatmul.bf16.gmra.mxu0 %v2402
        %v11809 = vpop.f32.mrf.mxu0
        %v11810 = vadd.f32 %v11796, %v11809
        %v11811 = vpop.f32.mrf.mxu0
        %v11812 = vadd.f32 %v11798, %v11811
        %11813 = vdwg.mxu0
        %11814 = vmatpush.bf16.msra.mxu0 %v7443
        %11815 = vmatpush.bf16.msra.mxu0 %v7441
        %11816 = vmatpush.bf16.msra.mxu0 %v7439
        %11817 = vmatpush.bf16.msra.mxu0 %v7437
        %11818 = vmatpush.bf16.msra.mxu0 %v7435
        %11819 = vmatpush.bf16.msra.mxu0 %v7433
        %11820 = vmatpush.bf16.msra.mxu0 %v7431
        %11821 = vmatpush.bf16.msra.mxu0 %v7429
        %11822 = vmatmul.bf16.gmra.mxu0 %v2403
        %v11823 = vpop.f32.mrf.mxu0
        %v11824 = vadd.f32 %v11810, %v11823
        %v11825 = vpop.f32.mrf.mxu0
        %v11826 = vadd.f32 %v11812, %v11825
        %11827 = vdwg.mxu0
        %11828 = vmatpush.bf16.msra.mxu0 %v7459
        %11829 = vmatpush.bf16.msra.mxu0 %v7457
        %11830 = vmatpush.bf16.msra.mxu0 %v7455
        %11831 = vmatpush.bf16.msra.mxu0 %v7453
        %11832 = vmatpush.bf16.msra.mxu0 %v7451
        %11833 = vmatpush.bf16.msra.mxu0 %v7449
        %11834 = vmatpush.bf16.msra.mxu0 %v7447
        %11835 = vmatpush.bf16.msra.mxu0 %v7445
        %11836 = vmatmul.bf16.gmra.mxu0 %v2404
        %v11837 = vpop.f32.mrf.mxu0
        %v11838 = vadd.f32 %v11824, %v11837
        %v11839 = vpop.f32.mrf.mxu0
        %v11840 = vadd.f32 %v11826, %v11839
        %11841 = vdwg.mxu0
        %11842 = vmatpush.bf16.msra.mxu0 %v7475
        %11843 = vmatpush.bf16.msra.mxu0 %v7473
        %11844 = vmatpush.bf16.msra.mxu0 %v7471
        %11845 = vmatpush.bf16.msra.mxu0 %v7469
        %11846 = vmatpush.bf16.msra.mxu0 %v7467
        %11847 = vmatpush.bf16.msra.mxu0 %v7465
        %11848 = vmatpush.bf16.msra.mxu0 %v7463
        %11849 = vmatpush.bf16.msra.mxu0 %v7461
        %11850 = vmatmul.bf16.gmra.mxu0 %v2405
        %v11851 = vpop.f32.mrf.mxu0
        %v11852 = vadd.f32 %v11838, %v11851
        %v11853 = vpop.f32.mrf.mxu0
        %v11854 = vadd.f32 %v11840, %v11853
        %11855 = vdwg.mxu0
        %11856 = vmatpush.bf16.msra.mxu0 %v7491
        %11857 = vmatpush.bf16.msra.mxu0 %v7489
        %11858 = vmatpush.bf16.msra.mxu0 %v7487
        %11859 = vmatpush.bf16.msra.mxu0 %v7485
        %11860 = vmatpush.bf16.msra.mxu0 %v7483
        %11861 = vmatpush.bf16.msra.mxu0 %v7481
        %11862 = vmatpush.bf16.msra.mxu0 %v7479
        %11863 = vmatpush.bf16.msra.mxu0 %v7477
        %11864 = vmatmul.bf16.gmra.mxu0 %v2406
        %v11865 = vpop.f32.mrf.mxu0
        %v11866 = vadd.f32 %v11852, %v11865
        %v11867 = vpop.f32.mrf.mxu0
        %v11868 = vadd.f32 %v11854, %v11867
        %11869 = vdwg.mxu0
        %11870 = vmatpush.bf16.msra.mxu0 %v7507
        %11871 = vmatpush.bf16.msra.mxu0 %v7505
        %11872 = vmatpush.bf16.msra.mxu0 %v7503
        %11873 = vmatpush.bf16.msra.mxu0 %v7501
        %11874 = vmatpush.bf16.msra.mxu0 %v7499
        %11875 = vmatpush.bf16.msra.mxu0 %v7497
        %11876 = vmatpush.bf16.msra.mxu0 %v7495
        %11877 = vmatpush.bf16.msra.mxu0 %v7493
        %11878 = vmatmul.bf16.gmra.mxu0 %v2407
        %v11879 = vpop.f32.mrf.mxu0
        %v11880 = vadd.f32 %v11866, %v11879
        %v11881 = vpop.f32.mrf.mxu0
        %v11882 = vadd.f32 %v11868, %v11881
        %11883 = vdwg.mxu0
        %11884 = vmatpush.bf16.msra.mxu0 %v7523
        %11885 = vmatpush.bf16.msra.mxu0 %v7521
        %11886 = vmatpush.bf16.msra.mxu0 %v7519
        %11887 = vmatpush.bf16.msra.mxu0 %v7517
        %11888 = vmatpush.bf16.msra.mxu0 %v7515
        %11889 = vmatpush.bf16.msra.mxu0 %v7513
        %11890 = vmatpush.bf16.msra.mxu0 %v7511
        %11891 = vmatpush.bf16.msra.mxu0 %v7509
        %11892 = vmatmul.bf16.gmra.mxu0 %v2408
        %v11893 = vpop.f32.mrf.mxu0
        %v11894 = vadd.f32 %v11880, %v11893
        %v11895 = vpop.f32.mrf.mxu0
        %v11896 = vadd.f32 %v11882, %v11895
        %11897 = vdwg.mxu0
        %11898 = vmatpush.bf16.msra.mxu0 %v7539
        %11899 = vmatpush.bf16.msra.mxu0 %v7537
        %11900 = vmatpush.bf16.msra.mxu0 %v7535
        %11901 = vmatpush.bf16.msra.mxu0 %v7533
        %11902 = vmatpush.bf16.msra.mxu0 %v7531
        %11903 = vmatpush.bf16.msra.mxu0 %v7529
        %11904 = vmatpush.bf16.msra.mxu0 %v7527
        %11905 = vmatpush.bf16.msra.mxu0 %v7525
        %11906 = vmatmul.bf16.gmra.mxu0 %v2409
        %v11907 = vpop.f32.mrf.mxu0
        %v11908 = vadd.f32 %v11894, %v11907
        %v11909 = vpop.f32.mrf.mxu0
        %v11910 = vadd.f32 %v11896, %v11909
        %11911 = vdwg.mxu0
        %11912 = vmatpush.bf16.msra.mxu0 %v7555
        %11913 = vmatpush.bf16.msra.mxu0 %v7553
        %11914 = vmatpush.bf16.msra.mxu0 %v7551
        %11915 = vmatpush.bf16.msra.mxu0 %v7549
        %11916 = vmatpush.bf16.msra.mxu0 %v7547
        %11917 = vmatpush.bf16.msra.mxu0 %v7545
        %11918 = vmatpush.bf16.msra.mxu0 %v7543
        %11919 = vmatpush.bf16.msra.mxu0 %v7541
        %11920 = vmatmul.bf16.gmra.mxu0 %v2410
        %v11921 = vpop.f32.mrf.mxu0
        %v11922 = vadd.f32 %v11908, %v11921
        %v11923 = vpop.f32.mrf.mxu0
        %v11924 = vadd.f32 %v11910, %v11923
        %11925 = vdwg.mxu0
        %11926 = vmatpush.bf16.msra.mxu0 %v7571
        %11927 = vmatpush.bf16.msra.mxu0 %v7569
        %11928 = vmatpush.bf16.msra.mxu0 %v7567
        %11929 = vmatpush.bf16.msra.mxu0 %v7565
        %11930 = vmatpush.bf16.msra.mxu0 %v7563
        %11931 = vmatpush.bf16.msra.mxu0 %v7561
        %11932 = vmatpush.bf16.msra.mxu0 %v7559
        %11933 = vmatpush.bf16.msra.mxu0 %v7557
        %11934 = vmatmul.bf16.gmra.mxu0 %v2411
        %v11935 = vpop.f32.mrf.mxu0
        %v11936 = vadd.f32 %v11922, %v11935
        %v11937 = vpop.f32.mrf.mxu0
        %v11938 = vadd.f32 %v11924, %v11937
        %11939 = vdwg.mxu0
        %11940 = vmatpush.bf16.msra.mxu0 %v7587
        %11941 = vmatpush.bf16.msra.mxu0 %v7585
        %11942 = vmatpush.bf16.msra.mxu0 %v7583
        %11943 = vmatpush.bf16.msra.mxu0 %v7581
        %11944 = vmatpush.bf16.msra.mxu0 %v7579
        %11945 = vmatpush.bf16.msra.mxu0 %v7577
        %11946 = vmatpush.bf16.msra.mxu0 %v7575
        %11947 = vmatpush.bf16.msra.mxu0 %v7573
        %11948 = vmatmul.bf16.gmra.mxu0 %v2412
        %v11949 = vpop.f32.mrf.mxu0
        %v11950 = vadd.f32 %v11936, %v11949
        %v11951 = vpop.f32.mrf.mxu0
        %v11952 = vadd.f32 %v11938, %v11951
        %11953 = vdwg.mxu0
        %11954 = vmatpush.bf16.msra.mxu0 %v7603
        %11955 = vmatpush.bf16.msra.mxu0 %v7601
        %11956 = vmatpush.bf16.msra.mxu0 %v7599
        %11957 = vmatpush.bf16.msra.mxu0 %v7597
        %11958 = vmatpush.bf16.msra.mxu0 %v7595
        %11959 = vmatpush.bf16.msra.mxu0 %v7593
        %11960 = vmatpush.bf16.msra.mxu0 %v7591
        %11961 = vmatpush.bf16.msra.mxu0 %v7589
        %11962 = vmatmul.bf16.gmra.mxu0 %v2413
        %v11963 = vpop.f32.mrf.mxu0
        %v11964 = vadd.f32 %v11950, %v11963
        %v11965 = vpop.f32.mrf.mxu0
        %v11966 = vadd.f32 %v11952, %v11965
        %11967 = vdwg.mxu0
        %11968 = vmatpush.bf16.msra.mxu0 %v7619
        %11969 = vmatpush.bf16.msra.mxu0 %v7617
        %11970 = vmatpush.bf16.msra.mxu0 %v7615
        %11971 = vmatpush.bf16.msra.mxu0 %v7613
        %11972 = vmatpush.bf16.msra.mxu0 %v7611
        %11973 = vmatpush.bf16.msra.mxu0 %v7609
        %11974 = vmatpush.bf16.msra.mxu0 %v7607
        %11975 = vmatpush.bf16.msra.mxu0 %v7605
        %11976 = vmatmul.bf16.gmra.mxu0 %v2414
        %v11977 = vpop.f32.mrf.mxu0
        %v11978 = vadd.f32 %v11964, %v11977
        %v11979 = vpop.f32.mrf.mxu0
        %v11980 = vadd.f32 %v11966, %v11979
        %11981 = vdwg.mxu0
        %11982 = vmatpush.bf16.msra.mxu0 %v7635
        %11983 = vmatpush.bf16.msra.mxu0 %v7633
        %11984 = vmatpush.bf16.msra.mxu0 %v7631
        %11985 = vmatpush.bf16.msra.mxu0 %v7629
        %11986 = vmatpush.bf16.msra.mxu0 %v7627
        %11987 = vmatpush.bf16.msra.mxu0 %v7625
        %11988 = vmatpush.bf16.msra.mxu0 %v7623
        %11989 = vmatpush.bf16.msra.mxu0 %v7621
        %11990 = vmatmul.bf16.gmra.mxu0 %v2415
        %v11991 = vpop.f32.mrf.mxu0
        %v11992 = vadd.f32 %v11978, %v11991
        %v11993 = vpop.f32.mrf.mxu0
        %v11994 = vadd.f32 %v11980, %v11993
        %11995 = vdwg.mxu0
        %11996 = vmatpush.bf16.msra.mxu0 %v7651
        %11997 = vmatpush.bf16.msra.mxu0 %v7649
        %11998 = vmatpush.bf16.msra.mxu0 %v7647
        %11999 = vmatpush.bf16.msra.mxu0 %v7645
        %12000 = vmatpush.bf16.msra.mxu0 %v7643
        %12001 = vmatpush.bf16.msra.mxu0 %v7641
        %12002 = vmatpush.bf16.msra.mxu0 %v7639
        %12003 = vmatpush.bf16.msra.mxu0 %v7637
        %12004 = vmatmul.bf16.gmra.mxu0 %v2416
        %v12005 = vpop.f32.mrf.mxu0
        %v12006 = vadd.f32 %v11992, %v12005
        %v12007 = vpop.f32.mrf.mxu0
        %v12008 = vadd.f32 %v11994, %v12007
        %12009 = vdwg.mxu0
        %12010 = vmatpush.bf16.msra.mxu0 %v7667
        %12011 = vmatpush.bf16.msra.mxu0 %v7665
        %12012 = vmatpush.bf16.msra.mxu0 %v7663
        %12013 = vmatpush.bf16.msra.mxu0 %v7661
        %12014 = vmatpush.bf16.msra.mxu0 %v7659
        %12015 = vmatpush.bf16.msra.mxu0 %v7657
        %12016 = vmatpush.bf16.msra.mxu0 %v7655
        %12017 = vmatpush.bf16.msra.mxu0 %v7653
        %12018 = vmatmul.bf16.gmra.mxu0 %v2417
        %v12019 = vpop.f32.mrf.mxu0
        %v12020 = vadd.f32 %v12006, %v12019
        %v12021 = vpop.f32.mrf.mxu0
        %v12022 = vadd.f32 %v12008, %v12021
        %12023 = vdwg.mxu0
        %12024 = vmatpush.bf16.msra.mxu0 %v7683
        %12025 = vmatpush.bf16.msra.mxu0 %v7681
        %12026 = vmatpush.bf16.msra.mxu0 %v7679
        %12027 = vmatpush.bf16.msra.mxu0 %v7677
        %12028 = vmatpush.bf16.msra.mxu0 %v7675
        %12029 = vmatpush.bf16.msra.mxu0 %v7673
        %12030 = vmatpush.bf16.msra.mxu0 %v7671
        %12031 = vmatpush.bf16.msra.mxu0 %v7669
        %12032 = vmatmul.bf16.gmra.mxu0 %v2418
        %v12033 = vpop.f32.mrf.mxu0
        %v12034 = vadd.f32 %v12020, %v12033
        %v12035 = vpop.f32.mrf.mxu0
        %v12036 = vadd.f32 %v12022, %v12035
        %12037 = vdwg.mxu0
        %12038 = vmatpush.bf16.msra.mxu0 %v7699
        %12039 = vmatpush.bf16.msra.mxu0 %v7697
        %12040 = vmatpush.bf16.msra.mxu0 %v7695
        %12041 = vmatpush.bf16.msra.mxu0 %v7693
        %12042 = vmatpush.bf16.msra.mxu0 %v7691
        %12043 = vmatpush.bf16.msra.mxu0 %v7689
        %12044 = vmatpush.bf16.msra.mxu0 %v7687
        %12045 = vmatpush.bf16.msra.mxu0 %v7685
        %12046 = vmatmul.bf16.gmra.mxu0 %v2419
        %v12047 = vpop.f32.mrf.mxu0
        %v12048 = vadd.f32 %v12034, %v12047
        %v12049 = vpop.f32.mrf.mxu0
        %v12050 = vadd.f32 %v12036, %v12049
        %12051 = vdwg.mxu0
        %12052 = vmatpush.bf16.msra.mxu0 %v7715
        %12053 = vmatpush.bf16.msra.mxu0 %v7713
        %12054 = vmatpush.bf16.msra.mxu0 %v7711
        %12055 = vmatpush.bf16.msra.mxu0 %v7709
        %12056 = vmatpush.bf16.msra.mxu0 %v7707
        %12057 = vmatpush.bf16.msra.mxu0 %v7705
        %12058 = vmatpush.bf16.msra.mxu0 %v7703
        %12059 = vmatpush.bf16.msra.mxu0 %v7701
        %12060 = vmatmul.bf16.gmra.mxu0 %v2420
        %v12061 = vpop.f32.mrf.mxu0
        %v12062 = vadd.f32 %v12048, %v12061
        %v12063 = vpop.f32.mrf.mxu0
        %v12064 = vadd.f32 %v12050, %v12063
        %12065 = vdwg.mxu0
        %12066 = vmatpush.bf16.msra.mxu0 %v7731
        %12067 = vmatpush.bf16.msra.mxu0 %v7729
        %12068 = vmatpush.bf16.msra.mxu0 %v7727
        %12069 = vmatpush.bf16.msra.mxu0 %v7725
        %12070 = vmatpush.bf16.msra.mxu0 %v7723
        %12071 = vmatpush.bf16.msra.mxu0 %v7721
        %12072 = vmatpush.bf16.msra.mxu0 %v7719
        %12073 = vmatpush.bf16.msra.mxu0 %v7717
        %12074 = vmatmul.bf16.gmra.mxu0 %v2421
        %v12075 = vpop.f32.mrf.mxu0
        %v12076 = vadd.f32 %v12062, %v12075
        %v12077 = vpop.f32.mrf.mxu0
        %v12078 = vadd.f32 %v12064, %v12077
        %12079 = vdwg.mxu0
        %12080 = vmatpush.bf16.msra.mxu0 %v7747
        %12081 = vmatpush.bf16.msra.mxu0 %v7745
        %12082 = vmatpush.bf16.msra.mxu0 %v7743
        %12083 = vmatpush.bf16.msra.mxu0 %v7741
        %12084 = vmatpush.bf16.msra.mxu0 %v7739
        %12085 = vmatpush.bf16.msra.mxu0 %v7737
        %12086 = vmatpush.bf16.msra.mxu0 %v7735
        %12087 = vmatpush.bf16.msra.mxu0 %v7733
        %12088 = vmatmul.bf16.gmra.mxu0 %v2422
        %v12089 = vpop.f32.mrf.mxu0
        %v12090 = vadd.f32 %v12076, %v12089
        %v12091 = vpop.f32.mrf.mxu0
        %v12092 = vadd.f32 %v12078, %v12091
        %12093 = vdwg.mxu0
        %12094 = vmatpush.bf16.msra.mxu0 %v7763
        %12095 = vmatpush.bf16.msra.mxu0 %v7761
        %12096 = vmatpush.bf16.msra.mxu0 %v7759
        %12097 = vmatpush.bf16.msra.mxu0 %v7757
        %12098 = vmatpush.bf16.msra.mxu0 %v7755
        %12099 = vmatpush.bf16.msra.mxu0 %v7753
        %12100 = vmatpush.bf16.msra.mxu0 %v7751
        %12101 = vmatpush.bf16.msra.mxu0 %v7749
        %12102 = vmatmul.bf16.gmra.mxu0 %v2423
        %v12103 = vpop.f32.mrf.mxu0
        %v12104 = vadd.f32 %v12090, %v12103
        %v12105 = vpop.f32.mrf.mxu0
        %v12106 = vadd.f32 %v12092, %v12105
        %12107 = vdwg.mxu0
        %12108 = vmatpush.bf16.msra.mxu0 %v7779
        %12109 = vmatpush.bf16.msra.mxu0 %v7777
        %12110 = vmatpush.bf16.msra.mxu0 %v7775
        %12111 = vmatpush.bf16.msra.mxu0 %v7773
        %12112 = vmatpush.bf16.msra.mxu0 %v7771
        %12113 = vmatpush.bf16.msra.mxu0 %v7769
        %12114 = vmatpush.bf16.msra.mxu0 %v7767
        %12115 = vmatpush.bf16.msra.mxu0 %v7765
        %12116 = vmatmul.bf16.gmra.mxu0 %v2424
        %v12117 = vpop.f32.mrf.mxu0
        %v12118 = vadd.f32 %v12104, %v12117
        %v12119 = vpop.f32.mrf.mxu0
        %v12120 = vadd.f32 %v12106, %v12119
        %12121 = vdwg.mxu0
        %12122 = vmatpush.bf16.msra.mxu0 %v7795
        %12123 = vmatpush.bf16.msra.mxu0 %v7793
        %12124 = vmatpush.bf16.msra.mxu0 %v7791
        %12125 = vmatpush.bf16.msra.mxu0 %v7789
        %12126 = vmatpush.bf16.msra.mxu0 %v7787
        %12127 = vmatpush.bf16.msra.mxu0 %v7785
        %12128 = vmatpush.bf16.msra.mxu0 %v7783
        %12129 = vmatpush.bf16.msra.mxu0 %v7781
        %12130 = vmatmul.bf16.gmra.mxu0 %v2425
        %v12131 = vpop.f32.mrf.mxu0
        %v12132 = vadd.f32 %v12118, %v12131
        %v12133 = vpop.f32.mrf.mxu0
        %v12134 = vadd.f32 %v12120, %v12133
        %12135 = vdwg.mxu0
        %12136 = vmatpush.bf16.msra.mxu0 %v7811
        %12137 = vmatpush.bf16.msra.mxu0 %v7809
        %12138 = vmatpush.bf16.msra.mxu0 %v7807
        %12139 = vmatpush.bf16.msra.mxu0 %v7805
        %12140 = vmatpush.bf16.msra.mxu0 %v7803
        %12141 = vmatpush.bf16.msra.mxu0 %v7801
        %12142 = vmatpush.bf16.msra.mxu0 %v7799
        %12143 = vmatpush.bf16.msra.mxu0 %v7797
        %12144 = vmatmul.bf16.gmra.mxu0 %v2426
        %v12145 = vpop.f32.mrf.mxu0
        %v12146 = vadd.f32 %v12132, %v12145
        %v12147 = vpop.f32.mrf.mxu0
        %v12148 = vadd.f32 %v12134, %v12147
        %12149 = vdwg.mxu0
        %12150 = vmatpush.bf16.msra.mxu0 %v7827
        %12151 = vmatpush.bf16.msra.mxu0 %v7825
        %12152 = vmatpush.bf16.msra.mxu0 %v7823
        %12153 = vmatpush.bf16.msra.mxu0 %v7821
        %12154 = vmatpush.bf16.msra.mxu0 %v7819
        %12155 = vmatpush.bf16.msra.mxu0 %v7817
        %12156 = vmatpush.bf16.msra.mxu0 %v7815
        %12157 = vmatpush.bf16.msra.mxu0 %v7813
        %12158 = vmatmul.bf16.gmra.mxu0 %v2427
        %v12159 = vpop.f32.mrf.mxu0
        %v12160 = vadd.f32 %v12146, %v12159
        %v12161 = vpop.f32.mrf.mxu0
        %v12162 = vadd.f32 %v12148, %v12161
        %12163 = vdwg.mxu0
        %12164 = vmatpush.bf16.msra.mxu0 %v7843
        %12165 = vmatpush.bf16.msra.mxu0 %v7841
        %12166 = vmatpush.bf16.msra.mxu0 %v7839
        %12167 = vmatpush.bf16.msra.mxu0 %v7837
        %12168 = vmatpush.bf16.msra.mxu0 %v7835
        %12169 = vmatpush.bf16.msra.mxu0 %v7833
        %12170 = vmatpush.bf16.msra.mxu0 %v7831
        %12171 = vmatpush.bf16.msra.mxu0 %v7829
        %12172 = vmatmul.bf16.gmra.mxu0 %v2428
        %v12173 = vpop.f32.mrf.mxu0
        %v12174 = vadd.f32 %v12160, %v12173
        %v12175 = vpop.f32.mrf.mxu0
        %v12176 = vadd.f32 %v12162, %v12175
        %12177 = vdwg.mxu0
        %12178 = vmatpush.bf16.msra.mxu0 %v7859
        %12179 = vmatpush.bf16.msra.mxu0 %v7857
        %12180 = vmatpush.bf16.msra.mxu0 %v7855
        %12181 = vmatpush.bf16.msra.mxu0 %v7853
        %12182 = vmatpush.bf16.msra.mxu0 %v7851
        %12183 = vmatpush.bf16.msra.mxu0 %v7849
        %12184 = vmatpush.bf16.msra.mxu0 %v7847
        %12185 = vmatpush.bf16.msra.mxu0 %v7845
        %12186 = vmatmul.bf16.gmra.mxu0 %v2429
        %v12187 = vpop.f32.mrf.mxu0
        %v12188 = vadd.f32 %v12174, %v12187
        %v12189 = vpop.f32.mrf.mxu0
        %v12190 = vadd.f32 %v12176, %v12189
        %12191 = vdwg.mxu0
        %12192 = vmatpush.bf16.msra.mxu0 %v7875
        %12193 = vmatpush.bf16.msra.mxu0 %v7873
        %12194 = vmatpush.bf16.msra.mxu0 %v7871
        %12195 = vmatpush.bf16.msra.mxu0 %v7869
        %12196 = vmatpush.bf16.msra.mxu0 %v7867
        %12197 = vmatpush.bf16.msra.mxu0 %v7865
        %12198 = vmatpush.bf16.msra.mxu0 %v7863
        %12199 = vmatpush.bf16.msra.mxu0 %v7861
        %12200 = vmatmul.bf16.gmra.mxu0 %v2430
        %v12201 = vpop.f32.mrf.mxu0
        %v12202 = vadd.f32 %v12188, %v12201
        %v12203 = vpop.f32.mrf.mxu0
        %v12204 = vadd.f32 %v12190, %v12203
        %12205 = vdwg.mxu0
        %12206 = vmatpush.bf16.msra.mxu0 %v7891
        %12207 = vmatpush.bf16.msra.mxu0 %v7889
        %12208 = vmatpush.bf16.msra.mxu0 %v7887
        %12209 = vmatpush.bf16.msra.mxu0 %v7885
        %12210 = vmatpush.bf16.msra.mxu0 %v7883
        %12211 = vmatpush.bf16.msra.mxu0 %v7881
        %12212 = vmatpush.bf16.msra.mxu0 %v7879
        %12213 = vmatpush.bf16.msra.mxu0 %v7877
        %12214 = vmatmul.bf16.gmra.mxu0 %v2431
        %v12215 = vpop.f32.mrf.mxu0
        %v12216 = vadd.f32 %v12202, %v12215
        %v12217 = vpop.f32.mrf.mxu0
        %v12218 = vadd.f32 %v12204, %v12217
        %12219 = vdwg.mxu0
        %12220 = vmatpush.bf16.msra.mxu0 %v7907
        %12221 = vmatpush.bf16.msra.mxu0 %v7905
        %12222 = vmatpush.bf16.msra.mxu0 %v7903
        %12223 = vmatpush.bf16.msra.mxu0 %v7901
        %12224 = vmatpush.bf16.msra.mxu0 %v7899
        %12225 = vmatpush.bf16.msra.mxu0 %v7897
        %12226 = vmatpush.bf16.msra.mxu0 %v7895
        %12227 = vmatpush.bf16.msra.mxu0 %v7893
        %12228 = vmatmul.bf16.gmra.mxu0 %v2432
        %v12229 = vpop.f32.mrf.mxu0
        %v12230 = vadd.f32 %v12216, %v12229
        %v12231 = vpop.f32.mrf.mxu0
        %v12232 = vadd.f32 %v12218, %v12231
        %12233 = vdwg.mxu0
        %12234 = vmatpush.bf16.msra.mxu0 %v7923
        %12235 = vmatpush.bf16.msra.mxu0 %v7921
        %12236 = vmatpush.bf16.msra.mxu0 %v7919
        %12237 = vmatpush.bf16.msra.mxu0 %v7917
        %12238 = vmatpush.bf16.msra.mxu0 %v7915
        %12239 = vmatpush.bf16.msra.mxu0 %v7913
        %12240 = vmatpush.bf16.msra.mxu0 %v7911
        %12241 = vmatpush.bf16.msra.mxu0 %v7909
        %12242 = vmatmul.bf16.gmra.mxu0 %v2433
        %v12243 = vpop.f32.mrf.mxu0
        %v12244 = vadd.f32 %v12230, %v12243
        %v12245 = vpop.f32.mrf.mxu0
        %v12246 = vadd.f32 %v12232, %v12245
        %12247 = vdwg.mxu0
        %12248 = vmatpush.bf16.msra.mxu0 %v7939
        %12249 = vmatpush.bf16.msra.mxu0 %v7937
        %12250 = vmatpush.bf16.msra.mxu0 %v7935
        %12251 = vmatpush.bf16.msra.mxu0 %v7933
        %12252 = vmatpush.bf16.msra.mxu0 %v7931
        %12253 = vmatpush.bf16.msra.mxu0 %v7929
        %12254 = vmatpush.bf16.msra.mxu0 %v7927
        %12255 = vmatpush.bf16.msra.mxu0 %v7925
        %12256 = vmatmul.bf16.gmra.mxu0 %v2434
        %v12257 = vpop.f32.mrf.mxu0
        %v12258 = vadd.f32 %v12244, %v12257
        %v12259 = vpop.f32.mrf.mxu0
        %v12260 = vadd.f32 %v12246, %v12259
        %12261 = vdwg.mxu0
        %12262 = vmatpush.bf16.msra.mxu0 %v7955
        %12263 = vmatpush.bf16.msra.mxu0 %v7953
        %12264 = vmatpush.bf16.msra.mxu0 %v7951
        %12265 = vmatpush.bf16.msra.mxu0 %v7949
        %12266 = vmatpush.bf16.msra.mxu0 %v7947
        %12267 = vmatpush.bf16.msra.mxu0 %v7945
        %12268 = vmatpush.bf16.msra.mxu0 %v7943
        %12269 = vmatpush.bf16.msra.mxu0 %v7941
        %12270 = vmatmul.bf16.gmra.mxu0 %v2435
        %v12271 = vpop.f32.mrf.mxu0
        %v12272 = vadd.f32 %v12258, %v12271
        %v12273 = vpop.f32.mrf.mxu0
        %v12274 = vadd.f32 %v12260, %v12273
        %12275 = vdwg.mxu0
        %12276 = vmatpush.bf16.msra.mxu0 %v7971
        %12277 = vmatpush.bf16.msra.mxu0 %v7969
        %12278 = vmatpush.bf16.msra.mxu0 %v7967
        %12279 = vmatpush.bf16.msra.mxu0 %v7965
        %12280 = vmatpush.bf16.msra.mxu0 %v7963
        %12281 = vmatpush.bf16.msra.mxu0 %v7961
        %12282 = vmatpush.bf16.msra.mxu0 %v7959
        %12283 = vmatpush.bf16.msra.mxu0 %v7957
        %12284 = vmatmul.bf16.gmra.mxu0 %v2436
        %v12285 = vpop.f32.mrf.mxu0
        %v12286 = vadd.f32 %v12272, %v12285
        %v12287 = vpop.f32.mrf.mxu0
        %v12288 = vadd.f32 %v12274, %v12287
        %12289 = vdwg.mxu0
        %12290 = vmatpush.bf16.msra.mxu0 %v7987
        %12291 = vmatpush.bf16.msra.mxu0 %v7985
        %12292 = vmatpush.bf16.msra.mxu0 %v7983
        %12293 = vmatpush.bf16.msra.mxu0 %v7981
        %12294 = vmatpush.bf16.msra.mxu0 %v7979
        %12295 = vmatpush.bf16.msra.mxu0 %v7977
        %12296 = vmatpush.bf16.msra.mxu0 %v7975
        %12297 = vmatpush.bf16.msra.mxu0 %v7973
        %12298 = vmatmul.bf16.gmra.mxu0 %v2437
        %v12299 = vpop.f32.mrf.mxu0
        %v12300 = vadd.f32 %v12286, %v12299
        %v12301 = vpop.f32.mrf.mxu0
        %v12302 = vadd.f32 %v12288, %v12301
        %12303 = vdwg.mxu0
        %12304 = vmatpush.bf16.msra.mxu0 %v8003
        %12305 = vmatpush.bf16.msra.mxu0 %v8001
        %12306 = vmatpush.bf16.msra.mxu0 %v7999
        %12307 = vmatpush.bf16.msra.mxu0 %v7997
        %12308 = vmatpush.bf16.msra.mxu0 %v7995
        %12309 = vmatpush.bf16.msra.mxu0 %v7993
        %12310 = vmatpush.bf16.msra.mxu0 %v7991
        %12311 = vmatpush.bf16.msra.mxu0 %v7989
        %12312 = vmatmul.bf16.gmra.mxu0 %v2438
        %v12313 = vpop.f32.mrf.mxu0
        %v12314 = vadd.f32 %v12300, %v12313
        %v12315 = vpop.f32.mrf.mxu0
        %v12316 = vadd.f32 %v12302, %v12315
        %12317 = vdwg.mxu0
        %12318 = vmatpush.bf16.msra.mxu0 %v8019
        %12319 = vmatpush.bf16.msra.mxu0 %v8017
        %12320 = vmatpush.bf16.msra.mxu0 %v8015
        %12321 = vmatpush.bf16.msra.mxu0 %v8013
        %12322 = vmatpush.bf16.msra.mxu0 %v8011
        %12323 = vmatpush.bf16.msra.mxu0 %v8009
        %12324 = vmatpush.bf16.msra.mxu0 %v8007
        %12325 = vmatpush.bf16.msra.mxu0 %v8005
        %12326 = vmatmul.bf16.gmra.mxu0 %v2439
        %v12327 = vpop.f32.mrf.mxu0
        %v12328 = vadd.f32 %v12314, %v12327
        %v12329 = vpop.f32.mrf.mxu0
        %v12330 = vadd.f32 %v12316, %v12329
        %12331 = vdwg.mxu0
        %12332 = vmatpush.bf16.msra.mxu0 %v8035
        %12333 = vmatpush.bf16.msra.mxu0 %v8033
        %12334 = vmatpush.bf16.msra.mxu0 %v8031
        %12335 = vmatpush.bf16.msra.mxu0 %v8029
        %12336 = vmatpush.bf16.msra.mxu0 %v8027
        %12337 = vmatpush.bf16.msra.mxu0 %v8025
        %12338 = vmatpush.bf16.msra.mxu0 %v8023
        %12339 = vmatpush.bf16.msra.mxu0 %v8021
        %12340 = vmatmul.bf16.gmra.mxu0 %v2440
        %v12341 = vpop.f32.mrf.mxu0
        %v12342 = vadd.f32 %v12328, %v12341
        %v12343 = vpop.f32.mrf.mxu0
        %v12344 = vadd.f32 %v12330, %v12343
        %12345 = vdwg.mxu0
        %12346 = vmatpush.bf16.msra.mxu0 %v8051
        %12347 = vmatpush.bf16.msra.mxu0 %v8049
        %12348 = vmatpush.bf16.msra.mxu0 %v8047
        %12349 = vmatpush.bf16.msra.mxu0 %v8045
        %12350 = vmatpush.bf16.msra.mxu0 %v8043
        %12351 = vmatpush.bf16.msra.mxu0 %v8041
        %12352 = vmatpush.bf16.msra.mxu0 %v8039
        %12353 = vmatpush.bf16.msra.mxu0 %v8037
        %12354 = vmatmul.bf16.gmra.mxu0 %v2441
        %v12355 = vpop.f32.mrf.mxu0
        %v12356 = vadd.f32 %v12342, %v12355
        %v12357 = vpop.f32.mrf.mxu0
        %v12358 = vadd.f32 %v12344, %v12357
        %12359 = vdwg.mxu0
        %12360 = vmatpush.bf16.msra.mxu0 %v8067
        %12361 = vmatpush.bf16.msra.mxu0 %v8065
        %12362 = vmatpush.bf16.msra.mxu0 %v8063
        %12363 = vmatpush.bf16.msra.mxu0 %v8061
        %12364 = vmatpush.bf16.msra.mxu0 %v8059
        %12365 = vmatpush.bf16.msra.mxu0 %v8057
        %12366 = vmatpush.bf16.msra.mxu0 %v8055
        %12367 = vmatpush.bf16.msra.mxu0 %v8053
        %12368 = vmatmul.bf16.gmra.mxu0 %v2442
        %v12369 = vpop.f32.mrf.mxu0
        %v12370 = vadd.f32 %v12356, %v12369
        %v12371 = vpop.f32.mrf.mxu0
        %v12372 = vadd.f32 %v12358, %v12371
        %12373 = vdwg.mxu0
        %12374 = vmatpush.bf16.msra.mxu0 %v8083
        %12375 = vmatpush.bf16.msra.mxu0 %v8081
        %12376 = vmatpush.bf16.msra.mxu0 %v8079
        %12377 = vmatpush.bf16.msra.mxu0 %v8077
        %12378 = vmatpush.bf16.msra.mxu0 %v8075
        %12379 = vmatpush.bf16.msra.mxu0 %v8073
        %12380 = vmatpush.bf16.msra.mxu0 %v8071
        %12381 = vmatpush.bf16.msra.mxu0 %v8069
        %12382 = vmatmul.bf16.gmra.mxu0 %v2443
        %v12383 = vpop.f32.mrf.mxu0
        %v12384 = vadd.f32 %v12370, %v12383
        %v12385 = vpop.f32.mrf.mxu0
        %v12386 = vadd.f32 %v12372, %v12385
        %12387 = vdwg.mxu0
        %12388 = vmatpush.bf16.msra.mxu0 %v8099
        %12389 = vmatpush.bf16.msra.mxu0 %v8097
        %12390 = vmatpush.bf16.msra.mxu0 %v8095
        %12391 = vmatpush.bf16.msra.mxu0 %v8093
        %12392 = vmatpush.bf16.msra.mxu0 %v8091
        %12393 = vmatpush.bf16.msra.mxu0 %v8089
        %12394 = vmatpush.bf16.msra.mxu0 %v8087
        %12395 = vmatpush.bf16.msra.mxu0 %v8085
        %12396 = vmatmul.bf16.gmra.mxu0 %v2444
        %v12397 = vpop.f32.mrf.mxu0
        %v12398 = vadd.f32 %v12384, %v12397
        %v12399 = vpop.f32.mrf.mxu0
        %v12400 = vadd.f32 %v12386, %v12399
        %12401 = vdwg.mxu0
        %12402 = vmatpush.bf16.msra.mxu0 %v8115
        %12403 = vmatpush.bf16.msra.mxu0 %v8113
        %12404 = vmatpush.bf16.msra.mxu0 %v8111
        %12405 = vmatpush.bf16.msra.mxu0 %v8109
        %12406 = vmatpush.bf16.msra.mxu0 %v8107
        %12407 = vmatpush.bf16.msra.mxu0 %v8105
        %12408 = vmatpush.bf16.msra.mxu0 %v8103
        %12409 = vmatpush.bf16.msra.mxu0 %v8101
        %12410 = vmatmul.bf16.gmra.mxu0 %v2445
        %v12411 = vpop.f32.mrf.mxu0
        %v12412 = vadd.f32 %v12398, %v12411
        %v12413 = vpop.f32.mrf.mxu0
        %v12414 = vadd.f32 %v12400, %v12413
        %12415 = vdwg.mxu0
        %12416 = vmatpush.bf16.msra.mxu0 %v8131
        %12417 = vmatpush.bf16.msra.mxu0 %v8129
        %12418 = vmatpush.bf16.msra.mxu0 %v8127
        %12419 = vmatpush.bf16.msra.mxu0 %v8125
        %12420 = vmatpush.bf16.msra.mxu0 %v8123
        %12421 = vmatpush.bf16.msra.mxu0 %v8121
        %12422 = vmatpush.bf16.msra.mxu0 %v8119
        %12423 = vmatpush.bf16.msra.mxu0 %v8117
        %12424 = vmatmul.bf16.gmra.mxu0 %v2446
        %v12425 = vpop.f32.mrf.mxu0
        %v12426 = vadd.f32 %v12412, %v12425
        %v12427 = vpop.f32.mrf.mxu0
        %v12428 = vadd.f32 %v12414, %v12427
        %12429 = vdwg.mxu0
        %12430 = vmatpush.bf16.msra.mxu0 %v8147
        %12431 = vmatpush.bf16.msra.mxu0 %v8145
        %12432 = vmatpush.bf16.msra.mxu0 %v8143
        %12433 = vmatpush.bf16.msra.mxu0 %v8141
        %12434 = vmatpush.bf16.msra.mxu0 %v8139
        %12435 = vmatpush.bf16.msra.mxu0 %v8137
        %12436 = vmatpush.bf16.msra.mxu0 %v8135
        %12437 = vmatpush.bf16.msra.mxu0 %v8133
        %12438 = vmatmul.bf16.gmra.mxu0 %v2447
        %v12439 = vpop.f32.mrf.mxu0
        %v12440 = vadd.f32 %v12426, %v12439
        %v12441 = vpop.f32.mrf.mxu0
        %v12442 = vadd.f32 %v12428, %v12441
        %12443 = vdwg.mxu0
        %12444 = vmatpush.bf16.msra.mxu0 %v8163
        %12445 = vmatpush.bf16.msra.mxu0 %v8161
        %12446 = vmatpush.bf16.msra.mxu0 %v8159
        %12447 = vmatpush.bf16.msra.mxu0 %v8157
        %12448 = vmatpush.bf16.msra.mxu0 %v8155
        %12449 = vmatpush.bf16.msra.mxu0 %v8153
        %12450 = vmatpush.bf16.msra.mxu0 %v8151
        %12451 = vmatpush.bf16.msra.mxu0 %v8149
        %12452 = vmatmul.bf16.gmra.mxu0 %v2448
        %v12453 = vpop.f32.mrf.mxu0
        %v12454 = vadd.f32 %v12440, %v12453
        %v12455 = vpop.f32.mrf.mxu0
        %v12456 = vadd.f32 %v12442, %v12455
        %12457 = vdwg.mxu0
        %12458 = vmatpush.bf16.msra.mxu0 %v8179
        %12459 = vmatpush.bf16.msra.mxu0 %v8177
        %12460 = vmatpush.bf16.msra.mxu0 %v8175
        %12461 = vmatpush.bf16.msra.mxu0 %v8173
        %12462 = vmatpush.bf16.msra.mxu0 %v8171
        %12463 = vmatpush.bf16.msra.mxu0 %v8169
        %12464 = vmatpush.bf16.msra.mxu0 %v8167
        %12465 = vmatpush.bf16.msra.mxu0 %v8165
        %12466 = vmatmul.bf16.gmra.mxu0 %v2449
        %v12467 = vpop.f32.mrf.mxu0
        %v12468 = vadd.f32 %v12454, %v12467
        %v12469 = vpop.f32.mrf.mxu0
        %v12470 = vadd.f32 %v12456, %v12469
        %12471 = vdwg.mxu0
        %12472 = vmatpush.bf16.msra.mxu0 %v8195
        %12473 = vmatpush.bf16.msra.mxu0 %v8193
        %12474 = vmatpush.bf16.msra.mxu0 %v8191
        %12475 = vmatpush.bf16.msra.mxu0 %v8189
        %12476 = vmatpush.bf16.msra.mxu0 %v8187
        %12477 = vmatpush.bf16.msra.mxu0 %v8185
        %12478 = vmatpush.bf16.msra.mxu0 %v8183
        %12479 = vmatpush.bf16.msra.mxu0 %v8181
        %12480 = vmatmul.bf16.gmra.mxu0 %v2450
        %v12481 = vpop.f32.mrf.mxu0
        %v12482 = vadd.f32 %v12468, %v12481
        %v12483 = vpop.f32.mrf.mxu0
        %v12484 = vadd.f32 %v12470, %v12483
        %12485 = vdwg.mxu0
        %12486 = vmatpush.bf16.msra.mxu0 %v8211
        %12487 = vmatpush.bf16.msra.mxu0 %v8209
        %12488 = vmatpush.bf16.msra.mxu0 %v8207
        %12489 = vmatpush.bf16.msra.mxu0 %v8205
        %12490 = vmatpush.bf16.msra.mxu0 %v8203
        %12491 = vmatpush.bf16.msra.mxu0 %v8201
        %12492 = vmatpush.bf16.msra.mxu0 %v8199
        %12493 = vmatpush.bf16.msra.mxu0 %v8197
        %12494 = vmatmul.bf16.gmra.mxu0 %v2451
        %v12495 = vpop.f32.mrf.mxu0
        %v12496 = vadd.f32 %v12482, %v12495
        %v12497 = vpop.f32.mrf.mxu0
        %v12498 = vadd.f32 %v12484, %v12497
        %12499 = vdwg.mxu0
        %12500 = vmatpush.bf16.msra.mxu0 %v8227
        %12501 = vmatpush.bf16.msra.mxu0 %v8225
        %12502 = vmatpush.bf16.msra.mxu0 %v8223
        %12503 = vmatpush.bf16.msra.mxu0 %v8221
        %12504 = vmatpush.bf16.msra.mxu0 %v8219
        %12505 = vmatpush.bf16.msra.mxu0 %v8217
        %12506 = vmatpush.bf16.msra.mxu0 %v8215
        %12507 = vmatpush.bf16.msra.mxu0 %v8213
        %12508 = vmatmul.bf16.gmra.mxu0 %v2452
        %v12509 = vpop.f32.mrf.mxu0
        %v12510 = vadd.f32 %v12496, %v12509
        %v12511 = vpop.f32.mrf.mxu0
        %v12512 = vadd.f32 %v12498, %v12511
        %12513 = vdwg.mxu0
        %12514 = vmatpush.bf16.msra.mxu0 %v8243
        %12515 = vmatpush.bf16.msra.mxu0 %v8241
        %12516 = vmatpush.bf16.msra.mxu0 %v8239
        %12517 = vmatpush.bf16.msra.mxu0 %v8237
        %12518 = vmatpush.bf16.msra.mxu0 %v8235
        %12519 = vmatpush.bf16.msra.mxu0 %v8233
        %12520 = vmatpush.bf16.msra.mxu0 %v8231
        %12521 = vmatpush.bf16.msra.mxu0 %v8229
        %12522 = vmatmul.bf16.gmra.mxu0 %v2453
        %v12523 = vpop.f32.mrf.mxu0
        %v12524 = vadd.f32 %v12510, %v12523
        %v12525 = vpop.f32.mrf.mxu0
        %v12526 = vadd.f32 %v12512, %v12525
        %12527 = vdwg.mxu0
        %12528 = vmatpush.bf16.msra.mxu0 %v8259
        %12529 = vmatpush.bf16.msra.mxu0 %v8257
        %12530 = vmatpush.bf16.msra.mxu0 %v8255
        %12531 = vmatpush.bf16.msra.mxu0 %v8253
        %12532 = vmatpush.bf16.msra.mxu0 %v8251
        %12533 = vmatpush.bf16.msra.mxu0 %v8249
        %12534 = vmatpush.bf16.msra.mxu0 %v8247
        %12535 = vmatpush.bf16.msra.mxu0 %v8245
        %12536 = vmatmul.bf16.gmra.mxu0 %v2454
        %v12537 = vpop.f32.mrf.mxu0
        %v12538 = vadd.f32 %v12524, %v12537
        %v12539 = vpop.f32.mrf.mxu0
        %v12540 = vadd.f32 %v12526, %v12539
        %12541 = vdwg.mxu0
        %12542 = vmatpush.bf16.msra.mxu0 %v8275
        %12543 = vmatpush.bf16.msra.mxu0 %v8273
        %12544 = vmatpush.bf16.msra.mxu0 %v8271
        %12545 = vmatpush.bf16.msra.mxu0 %v8269
        %12546 = vmatpush.bf16.msra.mxu0 %v8267
        %12547 = vmatpush.bf16.msra.mxu0 %v8265
        %12548 = vmatpush.bf16.msra.mxu0 %v8263
        %12549 = vmatpush.bf16.msra.mxu0 %v8261
        %12550 = vmatmul.bf16.gmra.mxu0 %v2455
        %v12551 = vpop.f32.mrf.mxu0
        %v12552 = vadd.f32 %v12538, %v12551
        %v12553 = vpop.f32.mrf.mxu0
        %v12554 = vadd.f32 %v12540, %v12553
        %12555 = vdwg.mxu0
        %12556 = vmatpush.bf16.msra.mxu0 %v8291
        %12557 = vmatpush.bf16.msra.mxu0 %v8289
        %12558 = vmatpush.bf16.msra.mxu0 %v8287
        %12559 = vmatpush.bf16.msra.mxu0 %v8285
        %12560 = vmatpush.bf16.msra.mxu0 %v8283
        %12561 = vmatpush.bf16.msra.mxu0 %v8281
        %12562 = vmatpush.bf16.msra.mxu0 %v8279
        %12563 = vmatpush.bf16.msra.mxu0 %v8277
        %12564 = vmatmul.bf16.gmra.mxu0 %v2456
        %v12565 = vpop.f32.mrf.mxu0
        %v12566 = vadd.f32 %v12552, %v12565
        %v12567 = vpop.f32.mrf.mxu0
        %v12568 = vadd.f32 %v12554, %v12567
        %12569 = vdwg.mxu0
        %12570 = vmatpush.bf16.msra.mxu0 %v8307
        %12571 = vmatpush.bf16.msra.mxu0 %v8305
        %12572 = vmatpush.bf16.msra.mxu0 %v8303
        %12573 = vmatpush.bf16.msra.mxu0 %v8301
        %12574 = vmatpush.bf16.msra.mxu0 %v8299
        %12575 = vmatpush.bf16.msra.mxu0 %v8297
        %12576 = vmatpush.bf16.msra.mxu0 %v8295
        %12577 = vmatpush.bf16.msra.mxu0 %v8293
        %12578 = vmatmul.bf16.gmra.mxu0 %v2457
        %v12579 = vpop.f32.mrf.mxu0
        %v12580 = vadd.f32 %v12566, %v12579
        %v12581 = vpop.f32.mrf.mxu0
        %v12582 = vadd.f32 %v12568, %v12581
        %12583 = vdwg.mxu0
        %12584 = vmatpush.bf16.msra.mxu0 %v8323
        %12585 = vmatpush.bf16.msra.mxu0 %v8321
        %12586 = vmatpush.bf16.msra.mxu0 %v8319
        %12587 = vmatpush.bf16.msra.mxu0 %v8317
        %12588 = vmatpush.bf16.msra.mxu0 %v8315
        %12589 = vmatpush.bf16.msra.mxu0 %v8313
        %12590 = vmatpush.bf16.msra.mxu0 %v8311
        %12591 = vmatpush.bf16.msra.mxu0 %v8309
        %12592 = vmatmul.bf16.gmra.mxu0 %v2458
        %v12593 = vpop.f32.mrf.mxu0
        %v12594 = vadd.f32 %v12580, %v12593
        %v12595 = vpop.f32.mrf.mxu0
        %v12596 = vadd.f32 %v12582, %v12595
        %12597 = vdwg.mxu0
        %12598 = vmatpush.bf16.msra.mxu0 %v8339
        %12599 = vmatpush.bf16.msra.mxu0 %v8337
        %12600 = vmatpush.bf16.msra.mxu0 %v8335
        %12601 = vmatpush.bf16.msra.mxu0 %v8333
        %12602 = vmatpush.bf16.msra.mxu0 %v8331
        %12603 = vmatpush.bf16.msra.mxu0 %v8329
        %12604 = vmatpush.bf16.msra.mxu0 %v8327
        %12605 = vmatpush.bf16.msra.mxu0 %v8325
        %12606 = vmatmul.bf16.gmra.mxu0 %v2459
        %v12607 = vpop.f32.mrf.mxu0
        %v12608 = vadd.f32 %v12594, %v12607
        %v12609 = vpop.f32.mrf.mxu0
        %v12610 = vadd.f32 %v12596, %v12609
        %12611 = vdwg.mxu0
        %12612 = vmatpush.bf16.msra.mxu0 %v8355
        %12613 = vmatpush.bf16.msra.mxu0 %v8353
        %12614 = vmatpush.bf16.msra.mxu0 %v8351
        %12615 = vmatpush.bf16.msra.mxu0 %v8349
        %12616 = vmatpush.bf16.msra.mxu0 %v8347
        %12617 = vmatpush.bf16.msra.mxu0 %v8345
        %12618 = vmatpush.bf16.msra.mxu0 %v8343
        %12619 = vmatpush.bf16.msra.mxu0 %v8341
        %12620 = vmatmul.bf16.gmra.mxu0 %v2460
        %v12621 = vpop.f32.mrf.mxu0
        %v12622 = vadd.f32 %v12608, %v12621
        %v12623 = vpop.f32.mrf.mxu0
        %v12624 = vadd.f32 %v12610, %v12623
        %12625 = vdwg.mxu0
        %12626 = vmatpush.bf16.msra.mxu0 %v8371
        %12627 = vmatpush.bf16.msra.mxu0 %v8369
        %12628 = vmatpush.bf16.msra.mxu0 %v8367
        %12629 = vmatpush.bf16.msra.mxu0 %v8365
        %12630 = vmatpush.bf16.msra.mxu0 %v8363
        %12631 = vmatpush.bf16.msra.mxu0 %v8361
        %12632 = vmatpush.bf16.msra.mxu0 %v8359
        %12633 = vmatpush.bf16.msra.mxu0 %v8357
        %12634 = vmatmul.bf16.gmra.mxu0 %v2461
        %v12635 = vpop.f32.mrf.mxu0
        %v12636 = vadd.f32 %v12622, %v12635
        %v12637 = vpop.f32.mrf.mxu0
        %v12638 = vadd.f32 %v12624, %v12637
        %12639 = vdwg.mxu0
        %12640 = vmatpush.bf16.msra.mxu0 %v8387
        %12641 = vmatpush.bf16.msra.mxu0 %v8385
        %12642 = vmatpush.bf16.msra.mxu0 %v8383
        %12643 = vmatpush.bf16.msra.mxu0 %v8381
        %12644 = vmatpush.bf16.msra.mxu0 %v8379
        %12645 = vmatpush.bf16.msra.mxu0 %v8377
        %12646 = vmatpush.bf16.msra.mxu0 %v8375
        %12647 = vmatpush.bf16.msra.mxu0 %v8373
        %12648 = vmatmul.bf16.gmra.mxu0 %v2462
        %v12649 = vpop.f32.mrf.mxu0
        %v12650 = vadd.f32 %v12636, %v12649
        %v12651 = vpop.f32.mrf.mxu0
        %v12652 = vadd.f32 %v12638, %v12651
        %12653 = vdwg.mxu0
        %12654 = vmatpush.bf16.msra.mxu0 %v8403
        %12655 = vmatpush.bf16.msra.mxu0 %v8401
        %12656 = vmatpush.bf16.msra.mxu0 %v8399
        %12657 = vmatpush.bf16.msra.mxu0 %v8397
        %12658 = vmatpush.bf16.msra.mxu0 %v8395
        %12659 = vmatpush.bf16.msra.mxu0 %v8393
        %12660 = vmatpush.bf16.msra.mxu0 %v8391
        %12661 = vmatpush.bf16.msra.mxu0 %v8389
        %12662 = vmatmul.bf16.gmra.mxu0 %v2463
        %v12663 = vpop.f32.mrf.mxu0
        %v12664 = vadd.f32 %v12650, %v12663
        %v12665 = vpop.f32.mrf.mxu0
        %v12666 = vadd.f32 %v12652, %v12665
        %12667 = vdwg.mxu0
        %12668 = vmatpush.bf16.msra.mxu0 %v8419
        %12669 = vmatpush.bf16.msra.mxu0 %v8417
        %12670 = vmatpush.bf16.msra.mxu0 %v8415
        %12671 = vmatpush.bf16.msra.mxu0 %v8413
        %12672 = vmatpush.bf16.msra.mxu0 %v8411
        %12673 = vmatpush.bf16.msra.mxu0 %v8409
        %12674 = vmatpush.bf16.msra.mxu0 %v8407
        %12675 = vmatpush.bf16.msra.mxu0 %v8405
        %12676 = vmatmul.bf16.gmra.mxu0 %v2464
        %v12677 = vpop.f32.mrf.mxu0
        %v12678 = vadd.f32 %v12664, %v12677
        %v12679 = vpop.f32.mrf.mxu0
        %v12680 = vadd.f32 %v12666, %v12679
        %12681 = vdwg.mxu0
        %12682 = vmatpush.bf16.msra.mxu0 %v8435
        %12683 = vmatpush.bf16.msra.mxu0 %v8433
        %12684 = vmatpush.bf16.msra.mxu0 %v8431
        %12685 = vmatpush.bf16.msra.mxu0 %v8429
        %12686 = vmatpush.bf16.msra.mxu0 %v8427
        %12687 = vmatpush.bf16.msra.mxu0 %v8425
        %12688 = vmatpush.bf16.msra.mxu0 %v8423
        %12689 = vmatpush.bf16.msra.mxu0 %v8421
        %12690 = vmatmul.bf16.gmra.mxu0 %v2465
        %v12691 = vpop.f32.mrf.mxu0
        %v12692 = vadd.f32 %v12678, %v12691
        %v12693 = vpop.f32.mrf.mxu0
        %v12694 = vadd.f32 %v12680, %v12693
        %12695 = vdwg.mxu0
        %12696 = vmatpush.bf16.msra.mxu0 %v8451
        %12697 = vmatpush.bf16.msra.mxu0 %v8449
        %12698 = vmatpush.bf16.msra.mxu0 %v8447
        %12699 = vmatpush.bf16.msra.mxu0 %v8445
        %12700 = vmatpush.bf16.msra.mxu0 %v8443
        %12701 = vmatpush.bf16.msra.mxu0 %v8441
        %12702 = vmatpush.bf16.msra.mxu0 %v8439
        %12703 = vmatpush.bf16.msra.mxu0 %v8437
        %12704 = vmatmul.bf16.gmra.mxu0 %v2466
        %v12705 = vpop.f32.mrf.mxu0
        %v12706 = vadd.f32 %v12692, %v12705
        %v12707 = vpop.f32.mrf.mxu0
        %v12708 = vadd.f32 %v12694, %v12707
        %12709 = vdwg.mxu0
        %12710 = vmatpush.bf16.msra.mxu0 %v8467
        %12711 = vmatpush.bf16.msra.mxu0 %v8465
        %12712 = vmatpush.bf16.msra.mxu0 %v8463
        %12713 = vmatpush.bf16.msra.mxu0 %v8461
        %12714 = vmatpush.bf16.msra.mxu0 %v8459
        %12715 = vmatpush.bf16.msra.mxu0 %v8457
        %12716 = vmatpush.bf16.msra.mxu0 %v8455
        %12717 = vmatpush.bf16.msra.mxu0 %v8453
        %12718 = vmatmul.bf16.gmra.mxu0 %v2467
        %v12719 = vpop.f32.mrf.mxu0
        %v12720 = vadd.f32 %v12706, %v12719
        %v12721 = vpop.f32.mrf.mxu0
        %v12722 = vadd.f32 %v12708, %v12721
        %12723 = vdwg.mxu0
        %12724 = vmatpush.bf16.msra.mxu0 %v8483
        %12725 = vmatpush.bf16.msra.mxu0 %v8481
        %12726 = vmatpush.bf16.msra.mxu0 %v8479
        %12727 = vmatpush.bf16.msra.mxu0 %v8477
        %12728 = vmatpush.bf16.msra.mxu0 %v8475
        %12729 = vmatpush.bf16.msra.mxu0 %v8473
        %12730 = vmatpush.bf16.msra.mxu0 %v8471
        %12731 = vmatpush.bf16.msra.mxu0 %v8469
        %12732 = vmatmul.bf16.gmra.mxu0 %v2468
        %v12733 = vpop.f32.mrf.mxu0
        %v12734 = vadd.f32 %v12720, %v12733
        %v12735 = vpop.f32.mrf.mxu0
        %v12736 = vadd.f32 %v12722, %v12735
        %12737 = vdwg.mxu0
        %12738 = vmatpush.bf16.msra.mxu0 %v8499
        %12739 = vmatpush.bf16.msra.mxu0 %v8497
        %12740 = vmatpush.bf16.msra.mxu0 %v8495
        %12741 = vmatpush.bf16.msra.mxu0 %v8493
        %12742 = vmatpush.bf16.msra.mxu0 %v8491
        %12743 = vmatpush.bf16.msra.mxu0 %v8489
        %12744 = vmatpush.bf16.msra.mxu0 %v8487
        %12745 = vmatpush.bf16.msra.mxu0 %v8485
        %12746 = vmatmul.bf16.gmra.mxu0 %v2469
        %v12747 = vpop.f32.mrf.mxu0
        %v12748 = vadd.f32 %v12734, %v12747
        %v12749 = vpop.f32.mrf.mxu0
        %v12750 = vadd.f32 %v12736, %v12749
        %12751 = vdwg.mxu0
        %12752 = vmatpush.bf16.msra.mxu0 %v8515
        %12753 = vmatpush.bf16.msra.mxu0 %v8513
        %12754 = vmatpush.bf16.msra.mxu0 %v8511
        %12755 = vmatpush.bf16.msra.mxu0 %v8509
        %12756 = vmatpush.bf16.msra.mxu0 %v8507
        %12757 = vmatpush.bf16.msra.mxu0 %v8505
        %12758 = vmatpush.bf16.msra.mxu0 %v8503
        %12759 = vmatpush.bf16.msra.mxu0 %v8501
        %12760 = vmatmul.bf16.gmra.mxu0 %v2470
        %v12761 = vpop.f32.mrf.mxu0
        %v12762 = vadd.f32 %v12748, %v12761
        %v12763 = vpop.f32.mrf.mxu0
        %v12764 = vadd.f32 %v12750, %v12763
        %12765 = vdwg.mxu0
        %12766 = vmatpush.bf16.msra.mxu0 %v8531
        %12767 = vmatpush.bf16.msra.mxu0 %v8529
        %12768 = vmatpush.bf16.msra.mxu0 %v8527
        %12769 = vmatpush.bf16.msra.mxu0 %v8525
        %12770 = vmatpush.bf16.msra.mxu0 %v8523
        %12771 = vmatpush.bf16.msra.mxu0 %v8521
        %12772 = vmatpush.bf16.msra.mxu0 %v8519
        %12773 = vmatpush.bf16.msra.mxu0 %v8517
        %12774 = vmatmul.bf16.gmra.mxu0 %v2471
        %v12775 = vpop.f32.mrf.mxu0
        %v12776 = vadd.f32 %v12762, %v12775
        %v12777 = vpop.f32.mrf.mxu0
        %v12778 = vadd.f32 %v12764, %v12777
        %12779 = vdwg.mxu0
        %12780 = vmatpush.bf16.msra.mxu0 %v8547
        %12781 = vmatpush.bf16.msra.mxu0 %v8545
        %12782 = vmatpush.bf16.msra.mxu0 %v8543
        %12783 = vmatpush.bf16.msra.mxu0 %v8541
        %12784 = vmatpush.bf16.msra.mxu0 %v8539
        %12785 = vmatpush.bf16.msra.mxu0 %v8537
        %12786 = vmatpush.bf16.msra.mxu0 %v8535
        %12787 = vmatpush.bf16.msra.mxu0 %v8533
        %12788 = vmatmul.bf16.gmra.mxu0 %v2472
        %v12789 = vpop.f32.mrf.mxu0
        %v12790 = vadd.f32 %v12776, %v12789
        %v12791 = vpop.f32.mrf.mxu0
        %v12792 = vadd.f32 %v12778, %v12791
        %12793 = vdwg.mxu0
        %12794 = vmatpush.bf16.msra.mxu0 %v8563
        %12795 = vmatpush.bf16.msra.mxu0 %v8561
        %12796 = vmatpush.bf16.msra.mxu0 %v8559
        %12797 = vmatpush.bf16.msra.mxu0 %v8557
        %12798 = vmatpush.bf16.msra.mxu0 %v8555
        %12799 = vmatpush.bf16.msra.mxu0 %v8553
        %12800 = vmatpush.bf16.msra.mxu0 %v8551
        %12801 = vmatpush.bf16.msra.mxu0 %v8549
        %12802 = vmatmul.bf16.gmra.mxu0 %v2473
        %v12803 = vpop.f32.mrf.mxu0
        %v12804 = vadd.f32 %v12790, %v12803
        %v12805 = vpop.f32.mrf.mxu0
        %v12806 = vadd.f32 %v12792, %v12805
        %12807 = vdwg.mxu0
        %12808 = vmatpush.bf16.msra.mxu0 %v8579
        %12809 = vmatpush.bf16.msra.mxu0 %v8577
        %12810 = vmatpush.bf16.msra.mxu0 %v8575
        %12811 = vmatpush.bf16.msra.mxu0 %v8573
        %12812 = vmatpush.bf16.msra.mxu0 %v8571
        %12813 = vmatpush.bf16.msra.mxu0 %v8569
        %12814 = vmatpush.bf16.msra.mxu0 %v8567
        %12815 = vmatpush.bf16.msra.mxu0 %v8565
        %12816 = vmatmul.bf16.gmra.mxu0 %v2474
        %v12817 = vpop.f32.mrf.mxu0
        %v12818 = vadd.f32 %v12804, %v12817
        %v12819 = vpop.f32.mrf.mxu0
        %v12820 = vadd.f32 %v12806, %v12819
        %12821 = vdwg.mxu0
        %12822 = vmatpush.bf16.msra.mxu0 %v8595
        %12823 = vmatpush.bf16.msra.mxu0 %v8593
        %12824 = vmatpush.bf16.msra.mxu0 %v8591
        %12825 = vmatpush.bf16.msra.mxu0 %v8589
        %12826 = vmatpush.bf16.msra.mxu0 %v8587
        %12827 = vmatpush.bf16.msra.mxu0 %v8585
        %12828 = vmatpush.bf16.msra.mxu0 %v8583
        %12829 = vmatpush.bf16.msra.mxu0 %v8581
        %12830 = vmatmul.bf16.gmra.mxu0 %v2475
        %v12831 = vpop.f32.mrf.mxu0
        %v12832 = vadd.f32 %v12818, %v12831
        %v12833 = vpop.f32.mrf.mxu0
        %v12834 = vadd.f32 %v12820, %v12833
        %12835 = vdwg.mxu0
        %12836 = vmatpush.bf16.msra.mxu0 %v8611
        %12837 = vmatpush.bf16.msra.mxu0 %v8609
        %12838 = vmatpush.bf16.msra.mxu0 %v8607
        %12839 = vmatpush.bf16.msra.mxu0 %v8605
        %12840 = vmatpush.bf16.msra.mxu0 %v8603
        %12841 = vmatpush.bf16.msra.mxu0 %v8601
        %12842 = vmatpush.bf16.msra.mxu0 %v8599
        %12843 = vmatpush.bf16.msra.mxu0 %v8597
        %12844 = vmatmul.bf16.gmra.mxu0 %v2476
        %v12845 = vpop.f32.mrf.mxu0
        %v12846 = vadd.f32 %v12832, %v12845
        %v12847 = vpop.f32.mrf.mxu0
        %v12848 = vadd.f32 %v12834, %v12847
        %12849 = vdwg.mxu0
        %12850 = vmatpush.bf16.msra.mxu0 %v8627
        %12851 = vmatpush.bf16.msra.mxu0 %v8625
        %12852 = vmatpush.bf16.msra.mxu0 %v8623
        %12853 = vmatpush.bf16.msra.mxu0 %v8621
        %12854 = vmatpush.bf16.msra.mxu0 %v8619
        %12855 = vmatpush.bf16.msra.mxu0 %v8617
        %12856 = vmatpush.bf16.msra.mxu0 %v8615
        %12857 = vmatpush.bf16.msra.mxu0 %v8613
        %12858 = vmatmul.bf16.gmra.mxu0 %v2477
        %v12859 = vpop.f32.mrf.mxu0
        %v12860 = vadd.f32 %v12846, %v12859
        %v12861 = vpop.f32.mrf.mxu0
        %v12862 = vadd.f32 %v12848, %v12861
        %12863 = vdwg.mxu0
        %12864 = vmatpush.bf16.msra.mxu0 %v8643
        %12865 = vmatpush.bf16.msra.mxu0 %v8641
        %12866 = vmatpush.bf16.msra.mxu0 %v8639
        %12867 = vmatpush.bf16.msra.mxu0 %v8637
        %12868 = vmatpush.bf16.msra.mxu0 %v8635
        %12869 = vmatpush.bf16.msra.mxu0 %v8633
        %12870 = vmatpush.bf16.msra.mxu0 %v8631
        %12871 = vmatpush.bf16.msra.mxu0 %v8629
        %12872 = vmatmul.bf16.gmra.mxu0 %v2478
        %v12873 = vpop.f32.mrf.mxu0
        %v12874 = vadd.f32 %v12860, %v12873
        %v12875 = vpop.f32.mrf.mxu0
        %v12876 = vadd.f32 %v12862, %v12875
        %12877 = vdwg.mxu0
        %12878 = vmatpush.bf16.msra.mxu0 %v8659
        %12879 = vmatpush.bf16.msra.mxu0 %v8657
        %12880 = vmatpush.bf16.msra.mxu0 %v8655
        %12881 = vmatpush.bf16.msra.mxu0 %v8653
        %12882 = vmatpush.bf16.msra.mxu0 %v8651
        %12883 = vmatpush.bf16.msra.mxu0 %v8649
        %12884 = vmatpush.bf16.msra.mxu0 %v8647
        %12885 = vmatpush.bf16.msra.mxu0 %v8645
        %12886 = vmatmul.bf16.gmra.mxu0 %v2479
        %v12887 = vpop.f32.mrf.mxu0
        %v12888 = vadd.f32 %v12874, %v12887
        %v12889 = vpop.f32.mrf.mxu0
        %v12890 = vadd.f32 %v12876, %v12889
        %12891 = vdwg.mxu0
        %12892 = vmatpush.bf16.msra.mxu0 %v8675
        %12893 = vmatpush.bf16.msra.mxu0 %v8673
        %12894 = vmatpush.bf16.msra.mxu0 %v8671
        %12895 = vmatpush.bf16.msra.mxu0 %v8669
        %12896 = vmatpush.bf16.msra.mxu0 %v8667
        %12897 = vmatpush.bf16.msra.mxu0 %v8665
        %12898 = vmatpush.bf16.msra.mxu0 %v8663
        %12899 = vmatpush.bf16.msra.mxu0 %v8661
        %12900 = vmatmul.bf16.gmra.mxu0 %v2480
        %v12901 = vpop.f32.mrf.mxu0
        %v12902 = vadd.f32 %v12888, %v12901
        %v12903 = vpop.f32.mrf.mxu0
        %v12904 = vadd.f32 %v12890, %v12903
        %12905 = vdwg.mxu0
        %12906 = vmatpush.bf16.msra.mxu0 %v8691
        %12907 = vmatpush.bf16.msra.mxu0 %v8689
        %12908 = vmatpush.bf16.msra.mxu0 %v8687
        %12909 = vmatpush.bf16.msra.mxu0 %v8685
        %12910 = vmatpush.bf16.msra.mxu0 %v8683
        %12911 = vmatpush.bf16.msra.mxu0 %v8681
        %12912 = vmatpush.bf16.msra.mxu0 %v8679
        %12913 = vmatpush.bf16.msra.mxu0 %v8677
        %12914 = vmatmul.bf16.gmra.mxu0 %v2481
        %v12915 = vpop.f32.mrf.mxu0
        %v12916 = vadd.f32 %v12902, %v12915
        %v12917 = vpop.f32.mrf.mxu0
        %v12918 = vadd.f32 %v12904, %v12917
        %12919 = vdwg.mxu0
        %12920 = vmatpush.bf16.msra.mxu0 %v8707
        %12921 = vmatpush.bf16.msra.mxu0 %v8705
        %12922 = vmatpush.bf16.msra.mxu0 %v8703
        %12923 = vmatpush.bf16.msra.mxu0 %v8701
        %12924 = vmatpush.bf16.msra.mxu0 %v8699
        %12925 = vmatpush.bf16.msra.mxu0 %v8697
        %12926 = vmatpush.bf16.msra.mxu0 %v8695
        %12927 = vmatpush.bf16.msra.mxu0 %v8693
        %12928 = vmatmul.bf16.gmra.mxu0 %v2482
        %v12929 = vpop.f32.mrf.mxu0
        %v12930 = vadd.f32 %v12916, %v12929
        %v12931 = vpop.f32.mrf.mxu0
        %v12932 = vadd.f32 %v12918, %v12931
        %12933 = vdwg.mxu0
        %12934 = vmatpush.bf16.msra.mxu0 %v8723
        %12935 = vmatpush.bf16.msra.mxu0 %v8721
        %12936 = vmatpush.bf16.msra.mxu0 %v8719
        %12937 = vmatpush.bf16.msra.mxu0 %v8717
        %12938 = vmatpush.bf16.msra.mxu0 %v8715
        %12939 = vmatpush.bf16.msra.mxu0 %v8713
        %12940 = vmatpush.bf16.msra.mxu0 %v8711
        %12941 = vmatpush.bf16.msra.mxu0 %v8709
        %12942 = vmatmul.bf16.gmra.mxu0 %v2483
        %v12943 = vpop.f32.mrf.mxu0
        %v12944 = vadd.f32 %v12930, %v12943
        %v12945 = vpop.f32.mrf.mxu0
        %v12946 = vadd.f32 %v12932, %v12945
        %12947 = vdwg.mxu0
        %v12948 = vadd.f32 %v464, %v11600
        %v12949 = vadd.f32 %v465, %v12944
        %v12950 = vadd.f32 %v466, %v11602
        %v12951 = vadd.f32 %v467, %v12946
        %12952 = vst [vmem:[%s447] sm:$0xff] %v12948
        %12953 = vst [vmem:[%s447 + $0x8] sm:$0xff] %v12949
        %12954 = vst [vmem:[%s447 + $0x10] sm:$0xff] %v12950
        %12955 = vst [vmem:[%s447 + $0x18] sm:$0xff] %v12951
        %p12956 = scmp.eq.s32.totalorder %s22, 3
        // Predicated region
        $region64: #{onlyaudio_forward.1} parent=50 // pred_check
          %p12957 = pneg %p12956
        $region65: #{onlyaudio_forward.1} parent=50 // pred_check_branch
          %12959 = sbr.rel (%p12957) target = $region67
        $region66: #{onlyaudio_forward.1} parent=50 // pred_region
          %v12960 = vld [vmem:[%s447] sm:$0xff]
          %v12961 = vld [vmem:[%s447 + $0x8] sm:$0xff]
          %v12962 = vld [vmem:[%s447 + $0x10] sm:$0xff]
          %v12963 = vld [vmem:[%s447 + $0x18] sm:$0xff]
          %v12964 = vld [vmem:[%s453] sm:$0x3]
          %v12966 = vperm.slane %v12964, 0
          %v12967 = vperm.slane %v12964, 1
          %v12970 = vadd.f32 %v12960, %v12966
          %v12971 = vadd.f32 %v12961, %v12967
          %v12972 = vadd.f32 %v12962, %v12966
          %v12973 = vadd.f32 %v12963, %v12967
          %12974 = vst [vmem:[%s447] sm:$0xff] %v12970
          %12975 = vst [vmem:[%s447 + $0x8] sm:$0xff] %v12971
          %12976 = vst [vmem:[%s447 + $0x10] sm:$0xff] %v12972
          %12977 = vst [vmem:[%s447 + $0x18] sm:$0xff] %v12973
        $region67: #{onlyaudio_forward.1} parent=50 // pred_fallthru
          _
        %s12978 = sand.u32 %s117, 1
        %s12979 = sand.u32 %s117, 1
        %s12980 = smul.addr %s12979, 32
        %s12981 = scalar_lea.vmem [#allocation5], %s12980
        // Predicated region
        $region68: #{onlyaudio_forward.1} parent=50 // pred_check
          %p12982 = pneg %p127
        $region69: #{onlyaudio_forward.1} parent=50 // pred_check_branch
          %12984 = sbr.rel (%p12982) target = $region71
        $region70: #{onlyaudio_forward.1} parent=50 // pred_region
          %s12985 = smul.u32 2, %s21
          %s12986 = smul.addr %s12985, 8
          %s12987 = scalar_lea.vmem %s3, %s12986
          // Predicated region
          $region72: #{onlyaudio_forward.1} parent=70 // pred_check
            _
          $region73: #{onlyaudio_forward.1} parent=70 // pred_check_branch
            %12989 = sbr.rel (0) target = $region75
          $region74: #{onlyaudio_forward.1} parent=70 // pred_region
            // Predicated region
            $region76: #{onlyaudio_forward.1} parent=74 // pred_check
              _
            $region77: #{onlyaudio_forward.1} parent=74 // pred_check_branch
              %12991 = sbr.rel (0) target = $region79
            $region78: #{onlyaudio_forward.1} parent=74 // pred_region
              loop: start=0, step=1, limit=1
              $region80: #{onlyaudio_forward.1} parent=78 // loop_pre_header
                _
              $region81: #{onlyaudio_forward.1} parent=78 // loop_header
                %s12993 = sphi 0, %s12997
                %p12994 = scmp.ge.s32.totalorder %s12993, 1
                %s12998 = sphi %s12981, %s12981
                %s12999 = sphi %s12987, %s12987
              $region82: #{onlyaudio_forward.1} parent=78 // loop_header_branch
                %12996 = sbr.rel (%p12994) target = $region86
              $region83: #{onlyaudio_forward.1} parent=78 // loop_body
                %v13000 = vld [vmem:[%s12998] sm:$0xff]
                %13001 = vst [vmem:[%s12999] sm:$0xff] %v13000
                %v13002 = vld [vmem:[%s12998 + $0x8] sm:$0xff]
                %13003 = vst [vmem:[%s12999 + $0x8] sm:$0xff] %v13002
                %v13004 = vld [vmem:[%s12998 + $0x10] sm:$0xff]
                %13005 = vst [vmem:[%s12999 + $0x20] sm:$0xff] %v13004
                %v13006 = vld [vmem:[%s12998 + $0x18] sm:$0xff]
                %13007 = vst [vmem:[%s12999 + $0x28] sm:$0xff] %v13006
              $region84: #{onlyaudio_forward.1} parent=78 // loop_footer
                %s12997 = sadd.s32 1, %s12993
              $region85: #{onlyaudio_forward.1} parent=78 // loop_footer_branch
                %12992 = sbr.rel target = $region81
              $region86: #{onlyaudio_forward.1} parent=78 // loop_exit
                _
            $region79: #{onlyaudio_forward.1} parent=74 // pred_fallthru
              _
            // Predicated region
            $region87: #{onlyaudio_forward.1} parent=74 // pred_check
              _
            $region88: #{onlyaudio_forward.1} parent=74 // pred_check_branch
              %13009 = sbr.rel target = $region90
            $region89: #{onlyaudio_forward.1} parent=74 // pred_region
              _
            $region90: #{onlyaudio_forward.1} parent=74 // pred_fallthru
              _
          $region75: #{onlyaudio_forward.1} parent=70 // pred_fallthru
            _
          %13010 = vnop
        $region71: #{onlyaudio_forward.1} parent=50 // pred_fallthru
          _
      $region51: #{onlyaudio_forward.1} parent=5 // pred_fallthru
        _
      %p13011 = scmp.le.s32.totalorder 2, %s12
      // Predicated region
      $region91: #{onlyaudio_forward.1} parent=5 // pred_check
        %p13012 = pneg %p13011
      $region92: #{onlyaudio_forward.1} parent=5 // pred_check_branch
        %13014 = sbr.rel (%p13012) target = $region94
      $region93: #{onlyaudio_forward.1} parent=5 // pred_region
        %s13015 = ssub.s32 %s12, 2
        // Predicated region
        $region95: #{onlyaudio_forward.1} parent=93 // pred_check
          %p13016 = pneg %p133
        $region96: #{onlyaudio_forward.1} parent=93 // pred_check_branch
          %13018 = sbr.rel (%p13016) target = $region98
        $region97: #{onlyaudio_forward.1} parent=93 // pred_region
          %s13019 = sand.u32 %s118, 1
          %s13020 = sand.u32 %s118, 1
          %s13021 = smul.addr %s13020, 32
          %s13022 = scalar_lea.vmem [#allocation5], %s13021
        $region98: #{onlyaudio_forward.1} parent=93 // pred_fallthru
          _
      $region94: #{onlyaudio_forward.1} parent=5 // pred_fallthru
        _
    $region6: #{onlyaudio_forward.1} parent=1 // loop_footer
      %s16 = sadd.s32 1, %s12
    $region7: #{onlyaudio_forward.1} parent=1 // loop_footer_branch
      %11 = sbr.rel target = $region3
    $region8: #{onlyaudio_forward.1} parent=1 // loop_exit
      _
    %13023 = vsyncpa [#allocation4], 1
    %s13024 = scalar_lea.sflag [#allocation4], 1
    %13025 = vsyncpa %s13024, 1

</llo_original>
